<compile_context>
chip_gen: v6e
topology: v6e:2x2x1
jax: 0.10.0
libtpu: 0.0.40
codegen_flags: <defaults>
</compile_context>

<pallas_src>
import math

import jax
import jax.numpy as jnp
from jax.experimental import pallas as pl
from jax.experimental.pallas import tpu as pltpu

N_SPLIT = 2  # hidden-dim halves: one per v7x TensorCore; sequential on v5e/v6e


# ----------------------------- Pallas kernel -------------------------------
def _decoder_half_kernel(x_ref, w3_ref, b3_ref, w2_ref, b2_ref, w1_ref, part_ref):
    """One hidden-half of the fused decoder: emits the layer-1 partial sum."""
    # Layer 3 (512 -> 1024). Recomputed per half: compute is ~free at this batch
    # and its operands are grid-invariant (block index never changes -> no
    # re-DMA across grid steps on a single core).
    h3 = jnp.dot(x_ref[...], w3_ref[...], preferred_element_type=jnp.float32)
    h3 = h3 + b3_ref[...]
    h3 = jnp.where(h3 >= 0, h3, jnp.float32(0.01) * h3)      # LeakyReLU(0.01)
    h3 = h3.astype(jnp.bfloat16)

    # Layer 2: this half's contiguous (1024, tn) weight block.
    h2 = jnp.dot(h3, w2_ref[...], preferred_element_type=jnp.float32)
    h2 = h2 + b2_ref[...]
    h2 = jnp.where(h2 >= 0, h2, jnp.float32(0.01) * h2)
    h2 = h2.astype(jnp.bfloat16)

    # Layer 1: partial contraction over this half's hidden rows (f32 partial).
    part_ref[...] = jnp.dot(h2, w1_ref[...], preferred_element_type=jnp.float32)


# ----------------------------- host wrapper --------------------------------
def prepare_decoder_params(raw_params, n_split=N_SPLIT):
    """Pad 4089->4096, pre-block w2 for contiguous per-half DMAs, cast to bf16.

    Done once on the host; the returned params are what decoder_forward expects.
    """
    (w3, b3), (w2, b2), (w1, b1) = raw_params          # (in, out) layout, f32
    H3 = w3.shape[1]
    H2 = w2.shape[1]
    N = w1.shape[1]
    quantum = 128 * n_split
    H2p = -(-H2 // quantum) * quantum                  # 4089 -> 4096
    pad = H2p - H2
    w2p = jnp.pad(w2, ((0, 0), (0, pad)))
    b2p = jnp.pad(b2, (0, pad))
    w1p = jnp.pad(w1, ((0, pad), (0, 0)))
    tn = H2p // n_split
    # Pre-block w2 so each hidden-half tile is one contiguous HBM run
    # (avoids the 1024 x 4 KiB strided DMA of a raw column slice).
    w2_blk = w2p.reshape(H3, n_split, tn).transpose(1, 0, 2)
    return (
        (w3.astype(jnp.bfloat16), b3.reshape(1, H3).astype(jnp.float32)),
        (w2_blk.astype(jnp.bfloat16), b2p.reshape(1, H2p).astype(jnp.float32)),
        (w1p.astype(jnp.bfloat16), b1.astype(jnp.float32)),
    )


def decoder_forward(x, params):
    """Pallas-backed Decoder forward. `params` from prepare_decoder_params."""
    (w3, b3), (w2_blk, b2), (w1, b1) = params
    B, K = x.shape
    n_split, H3, tn = w2_blk.shape
    H2p = n_split * tn
    N = w1.shape[1]
    assert w3.shape == (K, H3) and w1.shape[0] == H2p
    assert N % 128 == 0, "outdim must be lane-aligned (pad it if not)"

    # Pad batch to 16 rows: bf16 packs two rows per sublane, so 16-row tiles are
    # fully dense packed vregs (compute is free here, padding costs nothing).
    Bp = max(16, -(-B // 16) * 16)
    x_bf = jnp.pad(x, ((0, Bp - B), (0, 0))).astype(jnp.bfloat16)

    partials = pl.pallas_call(
        _decoder_half_kernel,
        out_shape=jax.ShapeDtypeStruct((n_split, Bp, N), jnp.float32),
        grid=(n_split,),
        in_specs=[
            # Grid-invariant blocks (fetched once per core, never re-DMA'd).
            pl.BlockSpec((Bp, K), lambda j: (0, 0)),        # x        (~16 KB)
            pl.BlockSpec((K, H3), lambda j: (0, 0)),        # w3       (~1 MiB bf16)
            pl.BlockSpec((1, H3), lambda j: (0, 0)),        # b3
            # Per-half weight streams, both fully contiguous DMAs.
            pl.BlockSpec((None, H3, tn), lambda j: (j, 0, 0)),  # w2 half (~4 MiB)
            pl.BlockSpec((1, tn), lambda j: (0, j)),            # b2 half
            pl.BlockSpec((tn, N), lambda j: (j, 0)),            # w1 half (~1 MiB)
        ],
        out_specs=pl.BlockSpec((None, Bp, N), lambda j: (j, 0, 0)),
        compiler_params=pltpu.CompilerParams(
            # Independent hidden halves: megacore-shardable on v7x (2 TCs each
            # stream ~half the weight bytes); sequential on v5e/v6e.
            dimension_semantics=("parallel",),
            # ~12 MiB actual footprint; explicit limit keeps v5e (16 MiB default
            # scoped VMEM) safe and is harmless on v6e/v7x.
            vmem_limit_bytes=32 * 1024 * 1024,
        ),
    )(x_bf, w3, b3, w2_blk, b2, w1)

    # Tiny epilogue (Bp x N): combine per-half partial sums, THEN bias + sigmoid.
    y = jax.nn.sigmoid(partials.sum(axis=0) + b1[None, :])
    return y[:B]


# ----------------------------- parameter setup ------------------------------
def init_linear(key, in_dim, out_dim):
    """PyTorch nn.Linear default init (uniform +-1/sqrt(in)), stored as (in, out)."""
    kw, kb = jax.random.split(key)
    bound = 1.0 / math.sqrt(in_dim)
    w = jax.random.uniform(kw, (in_dim, out_dim), jnp.float32, -bound, bound)
    b = jax.random.uniform(kb, (out_dim,), jnp.float32, -bound, bound)
    return w, b


def decoder_forward_ref(x, raw_params):
    """Pure-JAX reference (unpadded 4089 hidden, f32 math) for correctness."""
    (w3, b3), (w2, b2), (w1, b1) = raw_params
    lrelu = lambda v: jnp.where(v >= 0, v, 0.01 * v)
    h = lrelu(x @ w3 + b3)
    h = lrelu(h @ w2 + b2)
    return jax.nn.sigmoid(h @ w1 + b1)


if __name__ == "__main__":
    indim, hidden3, hidden2, outdim = 512, 1024, 4089, 256
    batch = 4

    key = jax.random.PRNGKey(0)
    k3, k2, k1, kx = jax.random.split(key, 4)

    # Deterministic synthetic parameters (shapes from the module __init__).
    w3, b3 = init_linear(k3, indim, hidden3)        # linear3: 512  -> 1024
    w2, b2 = init_linear(k2, hidden3, hidden2)      # linear2: 1024 -> 4089
    w1, b1 = init_linear(k1, hidden2, outdim)       # linear1: 4089 -> outdim
    raw_params = ((w3, b3), (w2, b2), (w1, b1))

    params = prepare_decoder_params(raw_params)     # pad, pre-block, bf16-cast

    x = jax.random.normal(kx, (batch, indim), jnp.float32)
    y = jax.block_until_ready(decoder_forward(x, params))

    # Reference with the same bf16-rounded weights (upcast to f32, unpadded);
    # the kernel additionally rounds activations to bf16 at the MXU inputs.
    (w3b, _), (w2b_blk, _), (w1b, _) = params
    H2p = w1b.shape[0]
    w2b = w2b_blk.transpose(1, 0, 2).reshape(hidden3, H2p)[:, :hidden2]
    ref_params = ((w3b.astype(jnp.float32), b3),
                  (w2b.astype(jnp.float32), b2),
                  (w1b[:hidden2].astype(jnp.float32), b1))
    y_ref = decoder_forward_ref(x, ref_params)

    assert y.shape == (batch, outdim)
    assert jnp.allclose(y, y_ref, atol=1e-2, rtol=1e-2), \
        float(jnp.max(jnp.abs(y - y_ref)))

    print("KERNEL_OK")
</pallas_src>

<mosaic_0001>
module attributes {stable_mosaic.version = 11 : i64} {
  func.func @_decoder_half_kernel(%arg0: i32, %arg1: memref<16x512xbf16, #tpu.memory_space<vmem>>, %arg2: memref<512x1024xbf16, #tpu.memory_space<vmem>>, %arg3: memref<1x1024xf32, #tpu.memory_space<vmem>>, %arg4: memref<1x1024x2048xbf16, #tpu.memory_space<vmem>>, %arg5: memref<1x2048xf32, #tpu.memory_space<vmem>>, %arg6: memref<2048x256xbf16, #tpu.memory_space<vmem>>, %arg7: memref<1x16x256xf32, #tpu.memory_space<vmem>>) attributes {dimension_semantics = [#tpu.dimension_semantics<parallel>], iteration_bounds = array<i64: 2>, scalar_prefetch = 0 : i64, scratch_operands = 0 : i64, tpu.core_type = #tpu.core_type<tc>, window_params = [{pipeline_mode = #tpu.pipeline_mode<synchronous>, transform_indices = @transform_0, window_bounds = array<i64: 16, 512>}, {pipeline_mode = #tpu.pipeline_mode<synchronous>, transform_indices = @transform_1, window_bounds = array<i64: 512, 1024>}, {pipeline_mode = #tpu.pipeline_mode<synchronous>, transform_indices = @transform_2, window_bounds = array<i64: 1, 1024>}, {transform_indices = @transform_3, window_bounds = array<i64: 1, 1024, 2048>}, {transform_indices = @transform_4, window_bounds = array<i64: 1, 2048>}, {transform_indices = @transform_5, window_bounds = array<i64: 2048, 256>}, {transform_indices = @transform_6, window_bounds = array<i64: 1, 16, 256>}]} {
    %c0 = arith.constant 0 : index
    %c0_0 = arith.constant 0 : index
    %0 = vector.load %arg1[%c0, %c0_0] : memref<16x512xbf16, #tpu.memory_space<vmem>>, vector<16x512xbf16>
    %c0_1 = arith.constant 0 : index
    %c0_2 = arith.constant 0 : index
    %1 = vector.load %arg2[%c0_1, %c0_2] : memref<512x1024xbf16, #tpu.memory_space<vmem>>, vector<512x1024xbf16>
    %cst = arith.constant dense<0.000000e+00> : vector<16x1024xf32>
    %2 = tpu.matmul %0, %1, %cst {dimension_numbers = #tpu.dot_dimension_numbers<[1], [0], [0], [1], [0, 0, 1, 1], [], []>} : vector<16x512xbf16>, vector<512x1024xbf16>, vector<16x1024xf32> -> vector<16x1024xf32>
    %c0_3 = arith.constant 0 : index
    %c0_4 = arith.constant 0 : index
    %3 = vector.load %arg3[%c0_3, %c0_4] : memref<1x1024xf32, #tpu.memory_space<vmem>>, vector<1x1024xf32>
    %4 = vector.broadcast %3 : vector<1x1024xf32> to vector<16x1024xf32>
    %5 = arith.addf %2, %4 : vector<16x1024xf32>
    %cst_5 = arith.constant 0.000000e+00 : f32
    %6 = vector.broadcast %cst_5 : f32 to vector<16x1024xf32>
    %7 = arith.cmpf oge, %5, %6 : vector<16x1024xf32>
    %cst_6 = arith.constant 0.00999999977 : f32
    %8 = vector.broadcast %cst_6 : f32 to vector<16x1024xf32>
    %9 = arith.mulf %8, %5 : vector<16x1024xf32>
    %10 = arith.select %7, %5, %9 : vector<16x1024xi1>, vector<16x1024xf32>
    %11 = arith.truncf %10 : vector<16x1024xf32> to vector<16x1024xbf16>
    %c0_7 = arith.constant 0 : index
    %c0_8 = arith.constant 0 : index
    %c0_9 = arith.constant 0 : index
    %12 = vector.load %arg4[%c0_7, %c0_8, %c0_9] : memref<1x1024x2048xbf16, #tpu.memory_space<vmem>>, vector<1x1024x2048xbf16>
    %13 = vector.shape_cast %12 : vector<1x1024x2048xbf16> to vector<1024x2048xbf16>
    %cst_10 = arith.constant dense<0.000000e+00> : vector<16x2048xf32>
    %14 = tpu.matmul %11, %13, %cst_10 {dimension_numbers = #tpu.dot_dimension_numbers<[1], [0], [0], [1], [0, 0, 1, 1], [], []>} : vector<16x1024xbf16>, vector<1024x2048xbf16>, vector<16x2048xf32> -> vector<16x2048xf32>
    %c0_11 = arith.constant 0 : index
    %c0_12 = arith.constant 0 : index
    %15 = vector.load %arg5[%c0_11, %c0_12] : memref<1x2048xf32, #tpu.memory_space<vmem>>, vector<1x2048xf32>
    %16 = vector.broadcast %15 : vector<1x2048xf32> to vector<16x2048xf32>
    %17 = arith.addf %14, %16 : vector<16x2048xf32>
    %cst_13 = arith.constant 0.000000e+00 : f32
    %18 = vector.broadcast %cst_13 : f32 to vector<16x2048xf32>
    %19 = arith.cmpf oge, %17, %18 : vector<16x2048xf32>
    %cst_14 = arith.constant 0.00999999977 : f32
    %20 = vector.broadcast %cst_14 : f32 to vector<16x2048xf32>
    %21 = arith.mulf %20, %17 : vector<16x2048xf32>
    %22 = arith.select %19, %17, %21 : vector<16x2048xi1>, vector<16x2048xf32>
    %23 = arith.truncf %22 : vector<16x2048xf32> to vector<16x2048xbf16>
    %c0_15 = arith.constant 0 : index
    %c0_16 = arith.constant 0 : index
    %24 = vector.load %arg6[%c0_15, %c0_16] : memref<2048x256xbf16, #tpu.memory_space<vmem>>, vector<2048x256xbf16>
    %cst_17 = arith.constant dense<0.000000e+00> : vector<16x256xf32>
    %25 = tpu.matmul %23, %24, %cst_17 {dimension_numbers = #tpu.dot_dimension_numbers<[1], [0], [0], [1], [0, 0, 1, 1], [], []>} : vector<16x2048xbf16>, vector<2048x256xbf16>, vector<16x256xf32> -> vector<16x256xf32>
    %c0_18 = arith.constant 0 : index
    %c0_19 = arith.constant 0 : index
    %c0_20 = arith.constant 0 : index
    %26 = vector.load %arg7[%c0_18, %c0_19, %c0_20] : memref<1x16x256xf32, #tpu.memory_space<vmem>>, vector<1x16x256xf32>
    %27 = vector.shape_cast %26 : vector<1x16x256xf32> to vector<16x256xf32>
    %28 = vector.shape_cast %25 : vector<16x256xf32> to vector<1x16x256xf32>
    tpu.vector_store %arg7[%c0_18, %c0_19, %c0_20], %28 {strides = array<i32>} : memref<1x16x256xf32, #tpu.memory_space<vmem>>, vector<1x16x256xf32>,
    return
  }
  func.func @transform_0(%arg0: i32) -> (i32, i32) {
    %c0_i32 = arith.constant 0 : i32
    %c0_i32_0 = arith.constant 0 : i32
    %c0_i32_1 = arith.constant 0 : i32
    return %c0_i32, %c0_i32_0 : i32, i32
  }
  func.func @transform_1(%arg0: i32) -> (i32, i32) {
    %c0_i32 = arith.constant 0 : i32
    %c0_i32_0 = arith.constant 0 : i32
    %c0_i32_1 = arith.constant 0 : i32
    return %c0_i32, %c0_i32_0 : i32, i32
  }
  func.func @transform_2(%arg0: i32) -> (i32, i32) {
    %c0_i32 = arith.constant 0 : i32
    %c0_i32_0 = arith.constant 0 : i32
    %c0_i32_1 = arith.constant 0 : i32
    return %c0_i32, %c0_i32_0 : i32, i32
  }
  func.func @transform_3(%arg0: i32) -> (i32, i32, i32) {
    %c0_i32 = arith.constant 0 : i32
    %c0_i32_0 = arith.constant 0 : i32
    %c0_i32_1 = arith.constant 0 : i32
    return %arg0, %c0_i32, %c0_i32_0 : i32, i32, i32
  }
  func.func @transform_4(%arg0: i32) -> (i32, i32) {
    %c0_i32 = arith.constant 0 : i32
    %c0_i32_0 = arith.constant 0 : i32
    return %c0_i32, %arg0 : i32, i32
  }
  func.func @transform_5(%arg0: i32) -> (i32, i32) {
    %c0_i32 = arith.constant 0 : i32
    %c0_i32_0 = arith.constant 0 : i32
    return %arg0, %c0_i32 : i32, i32
  }
  func.func @transform_6(%arg0: i32) -> (i32, i32, i32) {
    %c0_i32 = arith.constant 0 : i32
    %c0_i32_0 = arith.constant 0 : i32
    %c0_i32_1 = arith.constant 0 : i32
    return %arg0, %c0_i32, %c0_i32_0 : i32, i32, i32
  }
}

</mosaic_0001>

<llo_original>
// kernel: tpu_custom_call.1
$region0: #{tpu_custom_call.1}
  #allocation0 [shape = 'u32[]', space=smem, size = 0x4, offset = 0x4, fixed_abs, tag = 'smem constant byte address 0x4 - core index']
  #allocation1 [shape = 'u32[144,128]{1,0:T(1,128)}', space=vmem, size = 0x12000, scoped, tag = 'internal scratch']
  %s0 = inlined_call_operand.hbm [shape: bf16[16,512], index: 0, kind: input, shape index: {}]
  %s1 = inlined_call_operand.hbm [shape: bf16[512,1024], index: 1, kind: input, shape index: {}]
  %s2 = inlined_call_operand.hbm [shape: f32[1,1024], index: 2, kind: input, shape index: {}]
  %s3 = inlined_call_operand.hbm [shape: bf16[2,1024,2048], index: 3, kind: input, shape index: {}]
  %s4 = inlined_call_operand.hbm [shape: f32[1,4096], index: 4, kind: input, shape index: {}]
  %s5 = inlined_call_operand.hbm [shape: bf16[4096,256], index: 5, kind: input, shape index: {}]
  %s6 = inlined_call_operand.hbm [shape: f32[2,16,256], index: 6, kind: output, shape index: {}]
  %s7 = sld [smem:[#allocation0]]
  $region81: #{tpu_custom_call.1} parent=0
    _
  %s9 = ssub.s32 1, %s7
  %s10 = scalar_select 0, %s9, %s7
  $region1: #{tpu_custom_call.1} parent=0
    #allocation2 [shape = 'u8[16384]{0}', space=vmem, size = 0x4000, scoped, tag = 'input window, operand 0, single buffered']
    #allocation3 [shape = 's32[2]{0}', space=sflag, size = 0x8, scoped, tag = 'scoped memory for tpu_custom_call.1']
    #allocation4 [shape = 's32[2]{0}', space=sflag, size = 0x8, scoped, tag = 'scoped memory for tpu_custom_call.1']
    #allocation5 [shape = 'u8[1048576]{0}', space=vmem, size = 0x100000, scoped, tag = 'input window, operand 1, single buffered']
    #allocation6 [shape = 's32[1]{0}', space=sflag, size = 0x4, scoped, tag = 'scoped memory for tpu_custom_call.1']
    #allocation7 [shape = 'u8[4096]{0}', space=vmem, size = 0x1000, scoped, tag = 'input window, operand 2, single buffered']
    #allocation8 [shape = 'u8[8388608]{0}', space=vmem, size = 0x800000, scoped, tag = 'input window, operand 3']
    #allocation9 [shape = 's32[2]{0}', space=sflag, size = 0x8, scoped, tag = 'scoped memory for tpu_custom_call.1']
    #allocation10 [shape = 'u8[16384]{0}', space=vmem, size = 0x4000, scoped, tag = 'input window, operand 4']
    #allocation11 [shape = 'u8[2097152]{0}', space=vmem, size = 0x200000, scoped, tag = 'input window, operand 5']
    #allocation12 [shape = 's32[2]{0}', space=sflag, size = 0x8, scoped, tag = 'scoped memory for tpu_custom_call.1']
    #allocation13 [shape = 'u8[32768]{0}', space=vmem, size = 0x8000, scoped, tag = 'output window, operand 0']
    %11 = vsyncpa [#allocation3], 0
    %12 = vsyncpa [#allocation6], 0
    %13 = vsyncpa [#allocation9], 0
    %s14 = scalar_lea.sflag [#allocation9], 1
    %15 = vsyncpa %s14, 0
    %16 = vsyncpa [#allocation12], 0
    %s17 = scalar_lea.sflag [#allocation12], 1
    %18 = vsyncpa %s17, 0
    %19 = vsyncpa [#allocation4], 0
    %s20 = scalar_lea.sflag [#allocation4], 1
    %21 = vsyncpa %s20, 0
    loop: start=0, step=1, limit=4
    $region2: #{tpu_custom_call.1} parent=1 // loop_pre_header
      _
    $region3: #{tpu_custom_call.1} parent=1 // loop_header
      %s23 = sphi 0, %s27
      %p24 = scmp.ge.s32.totalorder %s23, 4
      %s31 = sphi 0, %s31
      %s33 = sphi 0, %s31
      %s34 = sphi 0, %s33
      %s48 = sphi 0, %s34
      %s52 = sphi 0, %s52
      %s54 = sphi 0, %s52
      %s55 = sphi 0, %s54
      %s69 = sphi 0, %s55
      %s73 = sphi 0, %s73
      %s75 = sphi 0, %s73
      %s76 = sphi 0, %s75
      %s90 = sphi 0, %s76
      %s96 = sphi 0, %s98
      %s99 = sphi 0, %s96
      %s100 = sphi 0, %s99
      %s116 = sphi 0, %s100
      %s122 = sphi 0, %s124
      %s125 = sphi 0, %s122
      %s126 = sphi 0, %s125
      %s142 = sphi 0, %s126
      %s148 = sphi 0, %s150
      %s151 = sphi 0, %s148
      %s152 = sphi 0, %s151
      %s168 = sphi 0, %s152
      %s174 = sphi 0, %s176
      %s177 = sphi 0, %s174
      %s178 = sphi 0, %s177
      %s194 = sphi 0, %s178
    $region4: #{tpu_custom_call.1} parent=1 // loop_header_branch
      %26 = sbr.rel (%p24) target = $region8
    $region5: #{tpu_custom_call.1} parent=1 // loop_body
      %s28 = ssub.s32 %s23, 1
      %s29 = ssub.s32 %s23, 2
      %s30 = sadd.s32 %s23, 1
      %s32 = sadd.s32 %s31, 1
      %p35 = scmp.eq.s32.totalorder %s23, 1
      %p36 = scmp.ne.s32.totalorder %s31, %s33
      %p37 = scmp.eq.s32.totalorder %s23, 0
      %p38 = por %p36, %p37
      %p39 = scmp.ne.s32.totalorder %s31, %s33
      %p40 = scmp.eq.s32.totalorder %s28, 1
      %p41 = por %p39, %p40
      %p42 = scmp.ne.s32.totalorder %s33, %s34
      %p43 = scmp.eq.s32.totalorder %s28, 0
      %p44 = por %p42, %p43
      %p45 = scmp.ne.s32.totalorder %s33, %s34
      %p46 = scmp.eq.s32.totalorder %s29, 1
      %p47 = por %p45, %p46
      %p49 = scmp.ne.s32.totalorder %s34, %s48
      %p50 = scmp.eq.s32.totalorder %s29, 0
      %p51 = por %p49, %p50
      %s53 = sadd.s32 %s52, 1
      %p56 = scmp.eq.s32.totalorder %s23, 1
      %p57 = scmp.ne.s32.totalorder %s52, %s54
      %p58 = scmp.eq.s32.totalorder %s23, 0
      %p59 = por %p57, %p58
      %p60 = scmp.ne.s32.totalorder %s52, %s54
      %p61 = scmp.eq.s32.totalorder %s28, 1
      %p62 = por %p60, %p61
      %p63 = scmp.ne.s32.totalorder %s54, %s55
      %p64 = scmp.eq.s32.totalorder %s28, 0
      %p65 = por %p63, %p64
      %p66 = scmp.ne.s32.totalorder %s54, %s55
      %p67 = scmp.eq.s32.totalorder %s29, 1
      %p68 = por %p66, %p67
      %p70 = scmp.ne.s32.totalorder %s55, %s69
      %p71 = scmp.eq.s32.totalorder %s29, 0
      %p72 = por %p70, %p71
      %s74 = sadd.s32 %s73, 1
      %p77 = scmp.eq.s32.totalorder %s23, 1
      %p78 = scmp.ne.s32.totalorder %s73, %s75
      %p79 = scmp.eq.s32.totalorder %s23, 0
      %p80 = por %p78, %p79
      %p81 = scmp.ne.s32.totalorder %s73, %s75
      %p82 = scmp.eq.s32.totalorder %s28, 1
      %p83 = por %p81, %p82
      %p84 = scmp.ne.s32.totalorder %s75, %s76
      %p85 = scmp.eq.s32.totalorder %s28, 0
      %p86 = por %p84, %p85
      %p87 = scmp.ne.s32.totalorder %s75, %s76
      %p88 = scmp.eq.s32.totalorder %s29, 1
      %p89 = por %p87, %p88
      %p91 = scmp.ne.s32.totalorder %s76, %s90
      %p92 = scmp.eq.s32.totalorder %s29, 0
      %p93 = por %p91, %p92
      %s94 = ssub.s32 %s23, %s30
      %p95 = scmp.eq.s32.totalorder %s94, 0
      %s97 = sadd.s32 %s96, 1
      %s98 = scalar_select %p95, %s96, %s97
      %p101 = pneg %p95
      %p102 = scmp.eq.s32.totalorder %s23, 1
      %p103 = por %p101, %p102
      %p104 = scmp.ne.s32.totalorder %s96, %s99
      %p105 = scmp.eq.s32.totalorder %s23, 0
      %p106 = por %p104, %p105
      %p107 = scmp.ne.s32.totalorder %s96, %s99
      %p108 = scmp.eq.s32.totalorder %s28, 1
      %p109 = por %p107, %p108
      %p110 = scmp.ne.s32.totalorder %s99, %s100
      %p111 = scmp.eq.s32.totalorder %s28, 0
      %p112 = por %p110, %p111
      %p113 = scmp.ne.s32.totalorder %s99, %s100
      %p114 = scmp.eq.s32.totalorder %s29, 1
      %p115 = por %p113, %p114
      %p117 = scmp.ne.s32.totalorder %s100, %s116
      %p118 = scmp.eq.s32.totalorder %s29, 0
      %p119 = por %p117, %p118
      %s120 = ssub.s32 %s23, %s30
      %p121 = scmp.eq.s32.totalorder %s120, 0
      %s123 = sadd.s32 %s122, 1
      %s124 = scalar_select %p121, %s122, %s123
      %p127 = pneg %p121
      %p128 = scmp.eq.s32.totalorder %s23, 1
      %p129 = por %p127, %p128
      %p130 = scmp.ne.s32.totalorder %s122, %s125
      %p131 = scmp.eq.s32.totalorder %s23, 0
      %p132 = por %p130, %p131
      %p133 = scmp.ne.s32.totalorder %s122, %s125
      %p134 = scmp.eq.s32.totalorder %s28, 1
      %p135 = por %p133, %p134
      %p136 = scmp.ne.s32.totalorder %s125, %s126
      %p137 = scmp.eq.s32.totalorder %s28, 0
      %p138 = por %p136, %p137
      %p139 = scmp.ne.s32.totalorder %s125, %s126
      %p140 = scmp.eq.s32.totalorder %s29, 1
      %p141 = por %p139, %p140
      %p143 = scmp.ne.s32.totalorder %s126, %s142
      %p144 = scmp.eq.s32.totalorder %s29, 0
      %p145 = por %p143, %p144
      %s146 = ssub.s32 %s23, %s30
      %p147 = scmp.eq.s32.totalorder %s146, 0
      %s149 = sadd.s32 %s148, 1
      %s150 = scalar_select %p147, %s148, %s149
      %p153 = pneg %p147
      %p154 = scmp.eq.s32.totalorder %s23, 1
      %p155 = por %p153, %p154
      %p156 = scmp.ne.s32.totalorder %s148, %s151
      %p157 = scmp.eq.s32.totalorder %s23, 0
      %p158 = por %p156, %p157
      %p159 = scmp.ne.s32.totalorder %s148, %s151
      %p160 = scmp.eq.s32.totalorder %s28, 1
      %p161 = por %p159, %p160
      %p162 = scmp.ne.s32.totalorder %s151, %s152
      %p163 = scmp.eq.s32.totalorder %s28, 0
      %p164 = por %p162, %p163
      %p165 = scmp.ne.s32.totalorder %s151, %s152
      %p166 = scmp.eq.s32.totalorder %s29, 1
      %p167 = por %p165, %p166
      %p169 = scmp.ne.s32.totalorder %s152, %s168
      %p170 = scmp.eq.s32.totalorder %s29, 0
      %p171 = por %p169, %p170
      %s172 = ssub.s32 %s23, %s30
      %p173 = scmp.eq.s32.totalorder %s172, 0
      %s175 = sadd.s32 %s174, 1
      %s176 = scalar_select %p173, %s174, %s175
      %p179 = pneg %p173
      %p180 = scmp.eq.s32.totalorder %s23, 1
      %p181 = por %p179, %p180
      %p182 = scmp.ne.s32.totalorder %s174, %s177
      %p183 = scmp.eq.s32.totalorder %s23, 0
      %p184 = por %p182, %p183
      %p185 = scmp.ne.s32.totalorder %s174, %s177
      %p186 = scmp.eq.s32.totalorder %s28, 1
      %p187 = por %p185, %p186
      %p188 = scmp.ne.s32.totalorder %s177, %s178
      %p189 = scmp.eq.s32.totalorder %s28, 0
      %p190 = por %p188, %p189
      %p191 = scmp.ne.s32.totalorder %s177, %s178
      %p192 = scmp.eq.s32.totalorder %s29, 1
      %p193 = por %p191, %p192
      %p195 = scmp.ne.s32.totalorder %s178, %s194
      %p196 = scmp.eq.s32.totalorder %s29, 0
      %p197 = por %p195, %p196
      %p198 = scmp.le.s32.totalorder 1, %s23
      %p199 = scmp.lt.s32.totalorder %s23, 3
      %p200 = pnand %p198, %p199
      %p201 = pneg %p200
      // Predicated region
      $region9: #{tpu_custom_call.1} parent=5 // pred_check
        _
      $region10: #{tpu_custom_call.1} parent=5 // pred_check_branch
        %203 = sbr.rel (%p200) target = $region12
      $region11: #{tpu_custom_call.1} parent=5 // pred_region
        %s204 = ssub.s32 %s23, 1
        // Predicated region
        $region13: #{tpu_custom_call.1} parent=11 // pred_check
          %p205 = pneg %p44
        $region14: #{tpu_custom_call.1} parent=11 // pred_check_branch
          %207 = sbr.rel (%p205) target = $region16
        $region15: #{tpu_custom_call.1} parent=11 // pred_region
          %s209 = ssub.s32 512, 512
          %210 = vsyncadd [#allocation3], %s209
          %s211 = sshll.u32 [#allocation2], 4
          %s212 = int_to_ptr.vmem [resolvable:$true] %s211
          %217 = dma.hbm_to_vmem [thread:$0]  %s0, 512, %s212, [#allocation3], 256, 256, 16
        $region16: #{tpu_custom_call.1} parent=11 // pred_fallthru
          _
        // Predicated region
        $region17: #{tpu_custom_call.1} parent=11 // pred_check
          %p218 = pneg %p65
        $region18: #{tpu_custom_call.1} parent=11 // pred_check_branch
          %220 = sbr.rel (%p218) target = $region20
        $region19: #{tpu_custom_call.1} parent=11 // pred_region
          %s222 = ssub.s32 32768, 32768
          %223 = vsyncadd [#allocation6], %s222
          %s224 = sshll.u32 [#allocation5], 4
          %s225 = int_to_ptr.vmem [resolvable:$true] %s224
          %230 = dma.hbm_to_vmem [thread:$0]  %s1, 32768, %s225, [#allocation6], 512, 512, 32
        $region20: #{tpu_custom_call.1} parent=11 // pred_fallthru
          _
        // Predicated region
        $region21: #{tpu_custom_call.1} parent=11 // pred_check
          %p231 = pneg %p86
        $region22: #{tpu_custom_call.1} parent=11 // pred_check_branch
          %233 = sbr.rel (%p231) target = $region24
        $region23: #{tpu_custom_call.1} parent=11 // pred_region
          %s235 = ssub.s32 128, 128
          %236 = vsyncadd [#allocation6], %s235
          %s238 = sshll.u32 [#allocation7], 4
          %s239 = int_to_ptr.vmem [resolvable:$true] %s238
          %241 = dma.hbm_to_vmem [thread:$0]  %s2, 128, %s239, [#allocation6]
        $region24: #{tpu_custom_call.1} parent=11 // pred_fallthru
          _
      $region12: #{tpu_custom_call.1} parent=5 // pred_fallthru
        _
      %p242 = scmp.lt.s32.totalorder %s23, 2
      // Predicated region
      $region25: #{tpu_custom_call.1} parent=5 // pred_check
        %p243 = pneg %p242
      $region26: #{tpu_custom_call.1} parent=5 // pred_check_branch
        %245 = sbr.rel (%p243) target = $region28
      $region27: #{tpu_custom_call.1} parent=5 // pred_region
        // Predicated region
        $region29: #{tpu_custom_call.1} parent=27 // pred_check
          %p246 = pneg %p106
        $region30: #{tpu_custom_call.1} parent=27 // pred_check_branch
          %248 = sbr.rel (%p246) target = $region32
        $region31: #{tpu_custom_call.1} parent=27 // pred_region
          %s249 = sand.u32 %s23, 1
          %s250 = scalar_lea.sflag [#allocation9], %s249
          %s251 = sand.u32 %s96, 1
          %s252 = smul.addr %s251, 8192
          %s253 = scalar_lea.vmem [#allocation8], %s252
          %s255 = ssub.s32 131072, 131072
          %256 = vsyncadd %s250, %s255
          %s257 = smul.addr %s23, 2048
          %s258 = smul.addr %s257, 64
          %s259 = scalar_lea.hbm %s3, %s258
          %s260 = sshll.u32 %s253, 4
          %s261 = int_to_ptr.vmem [resolvable:$true] %s260
          %266 = dma.hbm_to_vmem [thread:$0]  %s259, 131072, %s261, %s250, 1024, 1024, 64
        $region32: #{tpu_custom_call.1} parent=27 // pred_fallthru
          _
        // Predicated region
        $region33: #{tpu_custom_call.1} parent=27 // pred_check
          %p267 = pneg %p132
        $region34: #{tpu_custom_call.1} parent=27 // pred_check_branch
          %269 = sbr.rel (%p267) target = $region36
        $region35: #{tpu_custom_call.1} parent=27 // pred_region
          %s270 = sand.u32 %s23, 1
          %s271 = scalar_lea.sflag [#allocation9], %s270
          %s272 = sand.u32 %s122, 1
          %s273 = smul.addr %s272, 16
          %s274 = scalar_lea.vmem [#allocation10], %s273
          %s275 = smul.u32 16, %s23
          %s277 = ssub.s32 256, 256
          %278 = vsyncadd %s271, %s277
          %s279 = smul.addr %s275, 16
          %s280 = scalar_lea.hbm %s4, %s279
          %s282 = sshll.u32 %s274, 4
          %s283 = int_to_ptr.vmem [resolvable:$true] %s282
          %285 = dma.hbm_to_vmem [thread:$0]  %s280, 256, %s283, %s271
        $region36: #{tpu_custom_call.1} parent=27 // pred_fallthru
          _
        // Predicated region
        $region37: #{tpu_custom_call.1} parent=27 // pred_check
          %p286 = pneg %p158
        $region38: #{tpu_custom_call.1} parent=27 // pred_check_branch
          %288 = sbr.rel (%p286) target = $region40
        $region39: #{tpu_custom_call.1} parent=27 // pred_region
          %s289 = sand.u32 %s148, 1
          %s290 = scalar_lea.sflag [#allocation12], %s289
          %s291 = sand.u32 %s148, 1
          %s292 = smul.addr %s291, 2048
          %s293 = scalar_lea.vmem [#allocation11], %s292
          %s294 = smul.u32 256, %s23
          %s296 = ssub.s32 32768, 32768
          %297 = vsyncadd %s290, %s296
          %s298 = smul.addr %s294, 2
          %s299 = smul.addr %s298, 64
          %s300 = scalar_lea.hbm %s5, %s299
          %s301 = sshll.u32 %s293, 4
          %s302 = int_to_ptr.vmem [resolvable:$true] %s301
          %307 = dma.hbm_to_vmem [thread:$0]  %s300, 32768, %s302, %s290, 128, 128, 8
        $region40: #{tpu_custom_call.1} parent=27 // pred_fallthru
          _
      $region28: #{tpu_custom_call.1} parent=5 // pred_fallthru
        _
      %p308 = scmp.le.s32.totalorder 1, %s23
      %p309 = scmp.lt.s32.totalorder %s23, 3
      %p310 = pnand %p308, %p309
      %p311 = pneg %p310
      // Predicated region
      $region41: #{tpu_custom_call.1} parent=5 // pred_check
        _
      $region42: #{tpu_custom_call.1} parent=5 // pred_check_branch
        %313 = sbr.rel (%p310) target = $region44
      $region43: #{tpu_custom_call.1} parent=5 // pred_region
        %s314 = ssub.s32 %s23, 1
        // Predicated region
        $region45: #{tpu_custom_call.1} parent=43 // pred_check
          %p315 = pneg %p44
        $region46: #{tpu_custom_call.1} parent=43 // pred_check_branch
          %317 = sbr.rel (%p315) target = $region48
        $region47: #{tpu_custom_call.1} parent=43 // pred_region
          %318 = dma.done [#allocation3], 512
        $region48: #{tpu_custom_call.1} parent=43 // pred_fallthru
          _
        // Predicated region
        $region49: #{tpu_custom_call.1} parent=43 // pred_check
          %p319 = pneg %p65
        $region50: #{tpu_custom_call.1} parent=43 // pred_check_branch
          %321 = sbr.rel (%p319) target = $region52
        $region51: #{tpu_custom_call.1} parent=43 // pred_region
          %322 = dma.done [#allocation6], 32768
        $region52: #{tpu_custom_call.1} parent=43 // pred_fallthru
          _
        // Predicated region
        $region53: #{tpu_custom_call.1} parent=43 // pred_check
          %p323 = pneg %p86
        $region54: #{tpu_custom_call.1} parent=43 // pred_check_branch
          %325 = sbr.rel (%p323) target = $region56
        $region55: #{tpu_custom_call.1} parent=43 // pred_region
          %326 = dma.done [#allocation6], 128
        $region56: #{tpu_custom_call.1} parent=43 // pred_fallthru
          _
        %s327 = sand.u32 %s28, 1
        %s328 = scalar_lea.sflag [#allocation9], %s327
        %s329 = sand.u32 %s99, 1
        %s330 = smul.addr %s329, 8192
        %s331 = scalar_lea.vmem [#allocation8], %s330
        // Predicated region
        $region57: #{tpu_custom_call.1} parent=43 // pred_check
          %p332 = pneg %p112
        $region58: #{tpu_custom_call.1} parent=43 // pred_check_branch
          %334 = sbr.rel (%p332) target = $region60
        $region59: #{tpu_custom_call.1} parent=43 // pred_region
          %335 = dma.done %s328, 131072
        $region60: #{tpu_custom_call.1} parent=43 // pred_fallthru
          _
        %s336 = sand.u32 %s28, 1
        %s337 = scalar_lea.sflag [#allocation9], %s336
        %s338 = sand.u32 %s125, 1
        %s339 = smul.addr %s338, 16
        %s340 = scalar_lea.vmem [#allocation10], %s339
        // Predicated region
        $region61: #{tpu_custom_call.1} parent=43 // pred_check
          %p341 = pneg %p138
        $region62: #{tpu_custom_call.1} parent=43 // pred_check_branch
          %343 = sbr.rel (%p341) target = $region64
        $region63: #{tpu_custom_call.1} parent=43 // pred_region
          %344 = dma.done %s337, 256
        $region64: #{tpu_custom_call.1} parent=43 // pred_fallthru
          _
        %s345 = sand.u32 %s151, 1
        %s346 = scalar_lea.sflag [#allocation12], %s345
        %s347 = sand.u32 %s151, 1
        %s348 = smul.addr %s347, 2048
        %s349 = scalar_lea.vmem [#allocation11], %s348
        // Predicated region
        $region65: #{tpu_custom_call.1} parent=43 // pred_check
          %p350 = pneg %p164
        $region66: #{tpu_custom_call.1} parent=43 // pred_check_branch
          %352 = sbr.rel (%p350) target = $region68
        $region67: #{tpu_custom_call.1} parent=43 // pred_region
          %353 = dma.done %s346, 32768
        $region68: #{tpu_custom_call.1} parent=43 // pred_fallthru
          _
        %p354 = pneg %p44
        %p355 = pneg %p41
        %p356 = pneg %p65
        %p357 = pneg %p62
        %p358 = pneg %p86
        %p359 = pneg %p83
        %s360 = sand.u32 %s28, 1
        %s361 = scalar_lea.sflag [#allocation9], %s360
        %s362 = sand.u32 %s99, 1
        %s363 = smul.addr %s362, 8192
        %s364 = scalar_lea.vmem [#allocation8], %s363
        %p365 = pneg %p112
        %p366 = pneg %p109
        %s367 = sand.u32 %s28, 1
        %s368 = scalar_lea.sflag [#allocation9], %s367
        %s369 = sand.u32 %s125, 1
        %s370 = smul.addr %s369, 16
        %s371 = scalar_lea.vmem [#allocation10], %s370
        %p372 = pneg %p138
        %p373 = pneg %p135
        %s374 = sand.u32 %s151, 1
        %s375 = scalar_lea.sflag [#allocation12], %s374
        %s376 = sand.u32 %s151, 1
        %s377 = smul.addr %s376, 2048
        %s378 = scalar_lea.vmem [#allocation11], %s377
        %p379 = pneg %p164
        %p380 = pneg %p161
        %p381 = pneg %p190
        %p382 = pneg %p187
        %s383 = sand.u32 %s177, 1
        %s384 = scalar_lea.sflag [#allocation4], %s383
        %s385 = sand.u32 %s177, 1
        %s386 = smul.addr %s385, 32
        %s387 = scalar_lea.vmem [#allocation13], %s386
        %s388 = smul.u32 16, %s28
        %s389 = smul.u32 256, %s28
        %v390 = vld [vmem:[#allocation2] sm:$0xff]
        %v391 = vld [vmem:[#allocation2 + $0x8] sm:$0xff]
        %v392 = vld [vmem:[#allocation2 + $0x10] sm:$0xff]
        %v393 = vld [vmem:[#allocation2 + $0x18] sm:$0xff]
        %v394 = vld [vmem:[#allocation5] sm:$0xff]
        %v395 = vld [vmem:[#allocation5 + $0x8] sm:$0xff]
        %v396 = vld [vmem:[#allocation5 + $0x10] sm:$0xff]
        %v397 = vld [vmem:[#allocation5 + $0x18] sm:$0xff]
        %v398 = vld [vmem:[#allocation5 + $0x20] sm:$0xff]
        %v399 = vld [vmem:[#allocation5 + $0x28] sm:$0xff]
        %v400 = vld [vmem:[#allocation5 + $0x30] sm:$0xff]
        %v401 = vld [vmem:[#allocation5 + $0x38] sm:$0xff]
        %v402 = vld [vmem:[#allocation5 + $0x40] sm:$0xff]
        %v403 = vld [vmem:[#allocation5 + $0x48] sm:$0xff]
        %v404 = vld [vmem:[#allocation5 + $0x50] sm:$0xff]
        %v405 = vld [vmem:[#allocation5 + $0x58] sm:$0xff]
        %v406 = vld [vmem:[#allocation5 + $0x60] sm:$0xff]
        %v407 = vld [vmem:[#allocation5 + $0x68] sm:$0xff]
        %v408 = vld [vmem:[#allocation5 + $0x70] sm:$0xff]
        %v409 = vld [vmem:[#allocation5 + $0x78] sm:$0xff]
        %v410 = vld [vmem:[#allocation5 + $0x80] sm:$0xff]
        %v411 = vld [vmem:[#allocation5 + $0x88] sm:$0xff]
        %v412 = vld [vmem:[#allocation5 + $0x90] sm:$0xff]
        %v413 = vld [vmem:[#allocation5 + $0x98] sm:$0xff]
        %v414 = vld [vmem:[#allocation5 + $0xa0] sm:$0xff]
        %v415 = vld [vmem:[#allocation5 + $0xa8] sm:$0xff]
        %v416 = vld [vmem:[#allocation5 + $0xb0] sm:$0xff]
        %v417 = vld [vmem:[#allocation5 + $0xb8] sm:$0xff]
        %v418 = vld [vmem:[#allocation5 + $0xc0] sm:$0xff]
        %v419 = vld [vmem:[#allocation5 + $0xc8] sm:$0xff]
        %v420 = vld [vmem:[#allocation5 + $0xd0] sm:$0xff]
        %v421 = vld [vmem:[#allocation5 + $0xd8] sm:$0xff]
        %v422 = vld [vmem:[#allocation5 + $0xe0] sm:$0xff]
        %v423 = vld [vmem:[#allocation5 + $0xe8] sm:$0xff]
        %v424 = vld [vmem:[#allocation5 + $0xf0] sm:$0xff]
        %v425 = vld [vmem:[#allocation5 + $0xf8] sm:$0xff]
        %v426 = vld [vmem:[#allocation5 + $0x100] sm:$0xff]
        %v427 = vld [vmem:[#allocation5 + $0x108] sm:$0xff]
        %v428 = vld [vmem:[#allocation5 + $0x110] sm:$0xff]
        %v429 = vld [vmem:[#allocation5 + $0x118] sm:$0xff]
        %v430 = vld [vmem:[#allocation5 + $0x120] sm:$0xff]
        %v431 = vld [vmem:[#allocation5 + $0x128] sm:$0xff]
        %v432 = vld [vmem:[#allocation5 + $0x130] sm:$0xff]
        %v433 = vld [vmem:[#allocation5 + $0x138] sm:$0xff]
        %v434 = vld [vmem:[#allocation5 + $0x140] sm:$0xff]
        %v435 = vld [vmem:[#allocation5 + $0x148] sm:$0xff]
        %v436 = vld [vmem:[#allocation5 + $0x150] sm:$0xff]
        %v437 = vld [vmem:[#allocation5 + $0x158] sm:$0xff]
        %v438 = vld [vmem:[#allocation5 + $0x160] sm:$0xff]
        %v439 = vld [vmem:[#allocation5 + $0x168] sm:$0xff]
        %v440 = vld [vmem:[#allocation5 + $0x170] sm:$0xff]
        %v441 = vld [vmem:[#allocation5 + $0x178] sm:$0xff]
        %v442 = vld [vmem:[#allocation5 + $0x180] sm:$0xff]
        %v443 = vld [vmem:[#allocation5 + $0x188] sm:$0xff]
        %v444 = vld [vmem:[#allocation5 + $0x190] sm:$0xff]
        %v445 = vld [vmem:[#allocation5 + $0x198] sm:$0xff]
        %v446 = vld [vmem:[#allocation5 + $0x1a0] sm:$0xff]
        %v447 = vld [vmem:[#allocation5 + $0x1a8] sm:$0xff]
        %v448 = vld [vmem:[#allocation5 + $0x1b0] sm:$0xff]
        %v449 = vld [vmem:[#allocation5 + $0x1b8] sm:$0xff]
        %v450 = vld [vmem:[#allocation5 + $0x1c0] sm:$0xff]
        %v451 = vld [vmem:[#allocation5 + $0x1c8] sm:$0xff]
        %v452 = vld [vmem:[#allocation5 + $0x1d0] sm:$0xff]
        %v453 = vld [vmem:[#allocation5 + $0x1d8] sm:$0xff]
        %v454 = vld [vmem:[#allocation5 + $0x1e0] sm:$0xff]
        %v455 = vld [vmem:[#allocation5 + $0x1e8] sm:$0xff]
        %v456 = vld [vmem:[#allocation5 + $0x1f0] sm:$0xff]
        %v457 = vld [vmem:[#allocation5 + $0x1f8] sm:$0xff]
        %v458 = vld [vmem:[#allocation5 + $0x200] sm:$0xff]
        %v459 = vld [vmem:[#allocation5 + $0x208] sm:$0xff]
        %v460 = vld [vmem:[#allocation5 + $0x210] sm:$0xff]
        %v461 = vld [vmem:[#allocation5 + $0x218] sm:$0xff]
        %v462 = vld [vmem:[#allocation5 + $0x220] sm:$0xff]
        %v463 = vld [vmem:[#allocation5 + $0x228] sm:$0xff]
        %v464 = vld [vmem:[#allocation5 + $0x230] sm:$0xff]
        %v465 = vld [vmem:[#allocation5 + $0x238] sm:$0xff]
        %v466 = vld [vmem:[#allocation5 + $0x240] sm:$0xff]
        %v467 = vld [vmem:[#allocation5 + $0x248] sm:$0xff]
        %v468 = vld [vmem:[#allocation5 + $0x250] sm:$0xff]
        %v469 = vld [vmem:[#allocation5 + $0x258] sm:$0xff]
        %v470 = vld [vmem:[#allocation5 + $0x260] sm:$0xff]
        %v471 = vld [vmem:[#allocation5 + $0x268] sm:$0xff]
        %v472 = vld [vmem:[#allocation5 + $0x270] sm:$0xff]
        %v473 = vld [vmem:[#allocation5 + $0x278] sm:$0xff]
        %v474 = vld [vmem:[#allocation5 + $0x280] sm:$0xff]
        %v475 = vld [vmem:[#allocation5 + $0x288] sm:$0xff]
        %v476 = vld [vmem:[#allocation5 + $0x290] sm:$0xff]
        %v477 = vld [vmem:[#allocation5 + $0x298] sm:$0xff]
        %v478 = vld [vmem:[#allocation5 + $0x2a0] sm:$0xff]
        %v479 = vld [vmem:[#allocation5 + $0x2a8] sm:$0xff]
        %v480 = vld [vmem:[#allocation5 + $0x2b0] sm:$0xff]
        %v481 = vld [vmem:[#allocation5 + $0x2b8] sm:$0xff]
        %v482 = vld [vmem:[#allocation5 + $0x2c0] sm:$0xff]
        %v483 = vld [vmem:[#allocation5 + $0x2c8] sm:$0xff]
        %v484 = vld [vmem:[#allocation5 + $0x2d0] sm:$0xff]
        %v485 = vld [vmem:[#allocation5 + $0x2d8] sm:$0xff]
        %v486 = vld [vmem:[#allocation5 + $0x2e0] sm:$0xff]
        %v487 = vld [vmem:[#allocation5 + $0x2e8] sm:$0xff]
        %v488 = vld [vmem:[#allocation5 + $0x2f0] sm:$0xff]
        %v489 = vld [vmem:[#allocation5 + $0x2f8] sm:$0xff]
        %v490 = vld [vmem:[#allocation5 + $0x300] sm:$0xff]
        %v491 = vld [vmem:[#allocation5 + $0x308] sm:$0xff]
        %v492 = vld [vmem:[#allocation5 + $0x310] sm:$0xff]
        %v493 = vld [vmem:[#allocation5 + $0x318] sm:$0xff]
        %v494 = vld [vmem:[#allocation5 + $0x320] sm:$0xff]
        %v495 = vld [vmem:[#allocation5 + $0x328] sm:$0xff]
        %v496 = vld [vmem:[#allocation5 + $0x330] sm:$0xff]
        %v497 = vld [vmem:[#allocation5 + $0x338] sm:$0xff]
        %v498 = vld [vmem:[#allocation5 + $0x340] sm:$0xff]
        %v499 = vld [vmem:[#allocation5 + $0x348] sm:$0xff]
        %v500 = vld [vmem:[#allocation5 + $0x350] sm:$0xff]
        %v501 = vld [vmem:[#allocation5 + $0x358] sm:$0xff]
        %v502 = vld [vmem:[#allocation5 + $0x360] sm:$0xff]
        %v503 = vld [vmem:[#allocation5 + $0x368] sm:$0xff]
        %v504 = vld [vmem:[#allocation5 + $0x370] sm:$0xff]
        %v505 = vld [vmem:[#allocation5 + $0x378] sm:$0xff]
        %v506 = vld [vmem:[#allocation5 + $0x380] sm:$0xff]
        %v507 = vld [vmem:[#allocation5 + $0x388] sm:$0xff]
        %v508 = vld [vmem:[#allocation5 + $0x390] sm:$0xff]
        %v509 = vld [vmem:[#allocation5 + $0x398] sm:$0xff]
        %v510 = vld [vmem:[#allocation5 + $0x3a0] sm:$0xff]
        %v511 = vld [vmem:[#allocation5 + $0x3a8] sm:$0xff]
        %v512 = vld [vmem:[#allocation5 + $0x3b0] sm:$0xff]
        %v513 = vld [vmem:[#allocation5 + $0x3b8] sm:$0xff]
        %v514 = vld [vmem:[#allocation5 + $0x3c0] sm:$0xff]
        %v515 = vld [vmem:[#allocation5 + $0x3c8] sm:$0xff]
        %v516 = vld [vmem:[#allocation5 + $0x3d0] sm:$0xff]
        %v517 = vld [vmem:[#allocation5 + $0x3d8] sm:$0xff]
        %v518 = vld [vmem:[#allocation5 + $0x3e0] sm:$0xff]
        %v519 = vld [vmem:[#allocation5 + $0x3e8] sm:$0xff]
        %v520 = vld [vmem:[#allocation5 + $0x3f0] sm:$0xff]
        %v521 = vld [vmem:[#allocation5 + $0x3f8] sm:$0xff]
        %v522 = vld [vmem:[#allocation5 + $0x400] sm:$0xff]
        %v523 = vld [vmem:[#allocation5 + $0x408] sm:$0xff]
        %v524 = vld [vmem:[#allocation5 + $0x410] sm:$0xff]
        %v525 = vld [vmem:[#allocation5 + $0x418] sm:$0xff]
        %v526 = vld [vmem:[#allocation5 + $0x420] sm:$0xff]
        %v527 = vld [vmem:[#allocation5 + $0x428] sm:$0xff]
        %v528 = vld [vmem:[#allocation5 + $0x430] sm:$0xff]
        %v529 = vld [vmem:[#allocation5 + $0x438] sm:$0xff]
        %v530 = vld [vmem:[#allocation5 + $0x440] sm:$0xff]
        %v531 = vld [vmem:[#allocation5 + $0x448] sm:$0xff]
        %v532 = vld [vmem:[#allocation5 + $0x450] sm:$0xff]
        %v533 = vld [vmem:[#allocation5 + $0x458] sm:$0xff]
        %v534 = vld [vmem:[#allocation5 + $0x460] sm:$0xff]
        %v535 = vld [vmem:[#allocation5 + $0x468] sm:$0xff]
        %v536 = vld [vmem:[#allocation5 + $0x470] sm:$0xff]
        %v537 = vld [vmem:[#allocation5 + $0x478] sm:$0xff]
        %v538 = vld [vmem:[#allocation5 + $0x480] sm:$0xff]
        %v539 = vld [vmem:[#allocation5 + $0x488] sm:$0xff]
        %v540 = vld [vmem:[#allocation5 + $0x490] sm:$0xff]
        %v541 = vld [vmem:[#allocation5 + $0x498] sm:$0xff]
        %v542 = vld [vmem:[#allocation5 + $0x4a0] sm:$0xff]
        %v543 = vld [vmem:[#allocation5 + $0x4a8] sm:$0xff]
        %v544 = vld [vmem:[#allocation5 + $0x4b0] sm:$0xff]
        %v545 = vld [vmem:[#allocation5 + $0x4b8] sm:$0xff]
        %v546 = vld [vmem:[#allocation5 + $0x4c0] sm:$0xff]
        %v547 = vld [vmem:[#allocation5 + $0x4c8] sm:$0xff]
        %v548 = vld [vmem:[#allocation5 + $0x4d0] sm:$0xff]
        %v549 = vld [vmem:[#allocation5 + $0x4d8] sm:$0xff]
        %v550 = vld [vmem:[#allocation5 + $0x4e0] sm:$0xff]
        %v551 = vld [vmem:[#allocation5 + $0x4e8] sm:$0xff]
        %v552 = vld [vmem:[#allocation5 + $0x4f0] sm:$0xff]
        %v553 = vld [vmem:[#allocation5 + $0x4f8] sm:$0xff]
        %v554 = vld [vmem:[#allocation5 + $0x500] sm:$0xff]
        %v555 = vld [vmem:[#allocation5 + $0x508] sm:$0xff]
        %v556 = vld [vmem:[#allocation5 + $0x510] sm:$0xff]
        %v557 = vld [vmem:[#allocation5 + $0x518] sm:$0xff]
        %v558 = vld [vmem:[#allocation5 + $0x520] sm:$0xff]
        %v559 = vld [vmem:[#allocation5 + $0x528] sm:$0xff]
        %v560 = vld [vmem:[#allocation5 + $0x530] sm:$0xff]
        %v561 = vld [vmem:[#allocation5 + $0x538] sm:$0xff]
        %v562 = vld [vmem:[#allocation5 + $0x540] sm:$0xff]
        %v563 = vld [vmem:[#allocation5 + $0x548] sm:$0xff]
        %v564 = vld [vmem:[#allocation5 + $0x550] sm:$0xff]
        %v565 = vld [vmem:[#allocation5 + $0x558] sm:$0xff]
        %v566 = vld [vmem:[#allocation5 + $0x560] sm:$0xff]
        %v567 = vld [vmem:[#allocation5 + $0x568] sm:$0xff]
        %v568 = vld [vmem:[#allocation5 + $0x570] sm:$0xff]
        %v569 = vld [vmem:[#allocation5 + $0x578] sm:$0xff]
        %v570 = vld [vmem:[#allocation5 + $0x580] sm:$0xff]
        %v571 = vld [vmem:[#allocation5 + $0x588] sm:$0xff]
        %v572 = vld [vmem:[#allocation5 + $0x590] sm:$0xff]
        %v573 = vld [vmem:[#allocation5 + $0x598] sm:$0xff]
        %v574 = vld [vmem:[#allocation5 + $0x5a0] sm:$0xff]
        %v575 = vld [vmem:[#allocation5 + $0x5a8] sm:$0xff]
        %v576 = vld [vmem:[#allocation5 + $0x5b0] sm:$0xff]
        %v577 = vld [vmem:[#allocation5 + $0x5b8] sm:$0xff]
        %v578 = vld [vmem:[#allocation5 + $0x5c0] sm:$0xff]
        %v579 = vld [vmem:[#allocation5 + $0x5c8] sm:$0xff]
        %v580 = vld [vmem:[#allocation5 + $0x5d0] sm:$0xff]
        %v581 = vld [vmem:[#allocation5 + $0x5d8] sm:$0xff]
        %v582 = vld [vmem:[#allocation5 + $0x5e0] sm:$0xff]
        %v583 = vld [vmem:[#allocation5 + $0x5e8] sm:$0xff]
        %v584 = vld [vmem:[#allocation5 + $0x5f0] sm:$0xff]
        %v585 = vld [vmem:[#allocation5 + $0x5f8] sm:$0xff]
        %v586 = vld [vmem:[#allocation5 + $0x600] sm:$0xff]
        %v587 = vld [vmem:[#allocation5 + $0x608] sm:$0xff]
        %v588 = vld [vmem:[#allocation5 + $0x610] sm:$0xff]
        %v589 = vld [vmem:[#allocation5 + $0x618] sm:$0xff]
        %v590 = vld [vmem:[#allocation5 + $0x620] sm:$0xff]
        %v591 = vld [vmem:[#allocation5 + $0x628] sm:$0xff]
        %v592 = vld [vmem:[#allocation5 + $0x630] sm:$0xff]
        %v593 = vld [vmem:[#allocation5 + $0x638] sm:$0xff]
        %v594 = vld [vmem:[#allocation5 + $0x640] sm:$0xff]
        %v595 = vld [vmem:[#allocation5 + $0x648] sm:$0xff]
        %v596 = vld [vmem:[#allocation5 + $0x650] sm:$0xff]
        %v597 = vld [vmem:[#allocation5 + $0x658] sm:$0xff]
        %v598 = vld [vmem:[#allocation5 + $0x660] sm:$0xff]
        %v599 = vld [vmem:[#allocation5 + $0x668] sm:$0xff]
        %v600 = vld [vmem:[#allocation5 + $0x670] sm:$0xff]
        %v601 = vld [vmem:[#allocation5 + $0x678] sm:$0xff]
        %v602 = vld [vmem:[#allocation5 + $0x680] sm:$0xff]
        %v603 = vld [vmem:[#allocation5 + $0x688] sm:$0xff]
        %v604 = vld [vmem:[#allocation5 + $0x690] sm:$0xff]
        %v605 = vld [vmem:[#allocation5 + $0x698] sm:$0xff]
        %v606 = vld [vmem:[#allocation5 + $0x6a0] sm:$0xff]
        %v607 = vld [vmem:[#allocation5 + $0x6a8] sm:$0xff]
        %v608 = vld [vmem:[#allocation5 + $0x6b0] sm:$0xff]
        %v609 = vld [vmem:[#allocation5 + $0x6b8] sm:$0xff]
        %v610 = vld [vmem:[#allocation5 + $0x6c0] sm:$0xff]
        %v611 = vld [vmem:[#allocation5 + $0x6c8] sm:$0xff]
        %v612 = vld [vmem:[#allocation5 + $0x6d0] sm:$0xff]
        %v613 = vld [vmem:[#allocation5 + $0x6d8] sm:$0xff]
        %v614 = vld [vmem:[#allocation5 + $0x6e0] sm:$0xff]
        %v615 = vld [vmem:[#allocation5 + $0x6e8] sm:$0xff]
        %v616 = vld [vmem:[#allocation5 + $0x6f0] sm:$0xff]
        %v617 = vld [vmem:[#allocation5 + $0x6f8] sm:$0xff]
        %v618 = vld [vmem:[#allocation5 + $0x700] sm:$0xff]
        %v619 = vld [vmem:[#allocation5 + $0x708] sm:$0xff]
        %v620 = vld [vmem:[#allocation5 + $0x710] sm:$0xff]
        %v621 = vld [vmem:[#allocation5 + $0x718] sm:$0xff]
        %v622 = vld [vmem:[#allocation5 + $0x720] sm:$0xff]
        %v623 = vld [vmem:[#allocation5 + $0x728] sm:$0xff]
        %v624 = vld [vmem:[#allocation5 + $0x730] sm:$0xff]
        %v625 = vld [vmem:[#allocation5 + $0x738] sm:$0xff]
        %v626 = vld [vmem:[#allocation5 + $0x740] sm:$0xff]
        %v627 = vld [vmem:[#allocation5 + $0x748] sm:$0xff]
        %v628 = vld [vmem:[#allocation5 + $0x750] sm:$0xff]
        %v629 = vld [vmem:[#allocation5 + $0x758] sm:$0xff]
        %v630 = vld [vmem:[#allocation5 + $0x760] sm:$0xff]
        %v631 = vld [vmem:[#allocation5 + $0x768] sm:$0xff]
        %v632 = vld [vmem:[#allocation5 + $0x770] sm:$0xff]
        %v633 = vld [vmem:[#allocation5 + $0x778] sm:$0xff]
        %v634 = vld [vmem:[#allocation5 + $0x780] sm:$0xff]
        %v635 = vld [vmem:[#allocation5 + $0x788] sm:$0xff]
        %v636 = vld [vmem:[#allocation5 + $0x790] sm:$0xff]
        %v637 = vld [vmem:[#allocation5 + $0x798] sm:$0xff]
        %v638 = vld [vmem:[#allocation5 + $0x7a0] sm:$0xff]
        %v639 = vld [vmem:[#allocation5 + $0x7a8] sm:$0xff]
        %v640 = vld [vmem:[#allocation5 + $0x7b0] sm:$0xff]
        %v641 = vld [vmem:[#allocation5 + $0x7b8] sm:$0xff]
        %v642 = vld [vmem:[#allocation5 + $0x7c0] sm:$0xff]
        %v643 = vld [vmem:[#allocation5 + $0x7c8] sm:$0xff]
        %v644 = vld [vmem:[#allocation5 + $0x7d0] sm:$0xff]
        %v645 = vld [vmem:[#allocation5 + $0x7d8] sm:$0xff]
        %v646 = vld [vmem:[#allocation5 + $0x7e0] sm:$0xff]
        %v647 = vld [vmem:[#allocation5 + $0x7e8] sm:$0xff]
        %v648 = vld [vmem:[#allocation5 + $0x7f0] sm:$0xff]
        %v649 = vld [vmem:[#allocation5 + $0x7f8] sm:$0xff]
        %v650 = vld [vmem:[#allocation7] sm:$0xff]
        %v652 = vlaneseq
        %v653 = vshrl.u32 %v652, 7
        %v654 = vsub.s32 0, %v653
        %v655 = vrot.slane %v650, %v654
        %v656 = vlaneseq
        %v657 = vshrl.u32 %v656, 7
        %v658 = vsub.s32 1, %v657
        %v659 = vrot.slane %v650, %v658
        %v660 = vlaneseq
        %v661 = vshrl.u32 %v660, 7
        %v662 = vsub.s32 2, %v661
        %v663 = vrot.slane %v650, %v662
        %v664 = vlaneseq
        %v665 = vshrl.u32 %v664, 7
        %v666 = vsub.s32 3, %v665
        %v667 = vrot.slane %v650, %v666
        %v668 = vlaneseq
        %v669 = vshrl.u32 %v668, 7
        %v670 = vsub.s32 4, %v669
        %v671 = vrot.slane %v650, %v670
        %v672 = vlaneseq
        %v673 = vshrl.u32 %v672, 7
        %v674 = vsub.s32 5, %v673
        %v675 = vrot.slane %v650, %v674
        %v676 = vlaneseq
        %v677 = vshrl.u32 %v676, 7
        %v678 = vsub.s32 6, %v677
        %v679 = vrot.slane %v650, %v678
        %v680 = vlaneseq
        %v681 = vshrl.u32 %v680, 7
        %v682 = vsub.s32 7, %v681
        %v683 = vrot.slane %v650, %v682
        %v696 = vunpack.c.l.b16 %v390
        %v697 = vunpack.c.h.b16 %v390
        %v698 = vunpack.c.l.b16 %v391
        %v699 = vunpack.c.h.b16 %v391
        %v700 = vunpack.c.l.b16 %v392
        %v701 = vunpack.c.h.b16 %v392
        %v702 = vunpack.c.l.b16 %v393
        %v703 = vunpack.c.h.b16 %v393
        %v704 = vpack.c.b16 %v700, %v696
        %v705 = vpack.c.b16 %v701, %v697
        %v706 = vpack.c.b16 %v702, %v698
        %v707 = vpack.c.b16 %v703, %v699
        %v968 = vunpack.c.l.b16 %v394
        %v969 = vunpack.c.h.b16 %v394
        %v970 = vunpack.c.l.b16 %v395
        %v971 = vunpack.c.h.b16 %v395
        %v972 = vunpack.c.l.b16 %v396
        %v973 = vunpack.c.h.b16 %v396
        %v974 = vunpack.c.l.b16 %v397
        %v975 = vunpack.c.h.b16 %v397
        %v976 = vunpack.c.l.b16 %v398
        %v977 = vunpack.c.h.b16 %v398
        %v978 = vunpack.c.l.b16 %v399
        %v979 = vunpack.c.h.b16 %v399
        %v980 = vunpack.c.l.b16 %v400
        %v981 = vunpack.c.h.b16 %v400
        %v982 = vunpack.c.l.b16 %v401
        %v983 = vunpack.c.h.b16 %v401
        %v984 = vunpack.c.l.b16 %v402
        %v985 = vunpack.c.h.b16 %v402
        %v986 = vunpack.c.l.b16 %v403
        %v987 = vunpack.c.h.b16 %v403
        %v988 = vunpack.c.l.b16 %v404
        %v989 = vunpack.c.h.b16 %v404
        %v990 = vunpack.c.l.b16 %v405
        %v991 = vunpack.c.h.b16 %v405
        %v992 = vunpack.c.l.b16 %v406
        %v993 = vunpack.c.h.b16 %v406
        %v994 = vunpack.c.l.b16 %v407
        %v995 = vunpack.c.h.b16 %v407
        %v996 = vunpack.c.l.b16 %v408
        %v997 = vunpack.c.h.b16 %v408
        %v998 = vunpack.c.l.b16 %v409
        %v999 = vunpack.c.h.b16 %v409
        %v1000 = vunpack.c.l.b16 %v410
        %v1001 = vunpack.c.h.b16 %v410
        %v1002 = vunpack.c.l.b16 %v411
        %v1003 = vunpack.c.h.b16 %v411
        %v1004 = vunpack.c.l.b16 %v412
        %v1005 = vunpack.c.h.b16 %v412
        %v1006 = vunpack.c.l.b16 %v413
        %v1007 = vunpack.c.h.b16 %v413
        %v1008 = vunpack.c.l.b16 %v414
        %v1009 = vunpack.c.h.b16 %v414
        %v1010 = vunpack.c.l.b16 %v415
        %v1011 = vunpack.c.h.b16 %v415
        %v1012 = vunpack.c.l.b16 %v416
        %v1013 = vunpack.c.h.b16 %v416
        %v1014 = vunpack.c.l.b16 %v417
        %v1015 = vunpack.c.h.b16 %v417
        %v1016 = vunpack.c.l.b16 %v418
        %v1017 = vunpack.c.h.b16 %v418
        %v1018 = vunpack.c.l.b16 %v419
        %v1019 = vunpack.c.h.b16 %v419
        %v1020 = vunpack.c.l.b16 %v420
        %v1021 = vunpack.c.h.b16 %v420
        %v1022 = vunpack.c.l.b16 %v421
        %v1023 = vunpack.c.h.b16 %v421
        %v1024 = vunpack.c.l.b16 %v422
        %v1025 = vunpack.c.h.b16 %v422
        %v1026 = vunpack.c.l.b16 %v423
        %v1027 = vunpack.c.h.b16 %v423
        %v1028 = vunpack.c.l.b16 %v424
        %v1029 = vunpack.c.h.b16 %v424
        %v1030 = vunpack.c.l.b16 %v425
        %v1031 = vunpack.c.h.b16 %v425
        %v1032 = vunpack.c.l.b16 %v426
        %v1033 = vunpack.c.h.b16 %v426
        %v1034 = vunpack.c.l.b16 %v427
        %v1035 = vunpack.c.h.b16 %v427
        %v1036 = vunpack.c.l.b16 %v428
        %v1037 = vunpack.c.h.b16 %v428
        %v1038 = vunpack.c.l.b16 %v429
        %v1039 = vunpack.c.h.b16 %v429
        %v1040 = vunpack.c.l.b16 %v430
        %v1041 = vunpack.c.h.b16 %v430
        %v1042 = vunpack.c.l.b16 %v431
        %v1043 = vunpack.c.h.b16 %v431
        %v1044 = vunpack.c.l.b16 %v432
        %v1045 = vunpack.c.h.b16 %v432
        %v1046 = vunpack.c.l.b16 %v433
        %v1047 = vunpack.c.h.b16 %v433
        %v1048 = vunpack.c.l.b16 %v434
        %v1049 = vunpack.c.h.b16 %v434
        %v1050 = vunpack.c.l.b16 %v435
        %v1051 = vunpack.c.h.b16 %v435
        %v1052 = vunpack.c.l.b16 %v436
        %v1053 = vunpack.c.h.b16 %v436
        %v1054 = vunpack.c.l.b16 %v437
        %v1055 = vunpack.c.h.b16 %v437
        %v1056 = vunpack.c.l.b16 %v438
        %v1057 = vunpack.c.h.b16 %v438
        %v1058 = vunpack.c.l.b16 %v439
        %v1059 = vunpack.c.h.b16 %v439
        %v1060 = vunpack.c.l.b16 %v440
        %v1061 = vunpack.c.h.b16 %v440
        %v1062 = vunpack.c.l.b16 %v441
        %v1063 = vunpack.c.h.b16 %v441
        %v1064 = vunpack.c.l.b16 %v442
        %v1065 = vunpack.c.h.b16 %v442
        %v1066 = vunpack.c.l.b16 %v443
        %v1067 = vunpack.c.h.b16 %v443
        %v1068 = vunpack.c.l.b16 %v444
        %v1069 = vunpack.c.h.b16 %v444
        %v1070 = vunpack.c.l.b16 %v445
        %v1071 = vunpack.c.h.b16 %v445
        %v1072 = vunpack.c.l.b16 %v446
        %v1073 = vunpack.c.h.b16 %v446
        %v1074 = vunpack.c.l.b16 %v447
        %v1075 = vunpack.c.h.b16 %v447
        %v1076 = vunpack.c.l.b16 %v448
        %v1077 = vunpack.c.h.b16 %v448
        %v1078 = vunpack.c.l.b16 %v449
        %v1079 = vunpack.c.h.b16 %v449
        %v1080 = vunpack.c.l.b16 %v450
        %v1081 = vunpack.c.h.b16 %v450
        %v1082 = vunpack.c.l.b16 %v451
        %v1083 = vunpack.c.h.b16 %v451
        %v1084 = vunpack.c.l.b16 %v452
        %v1085 = vunpack.c.h.b16 %v452
        %v1086 = vunpack.c.l.b16 %v453
        %v1087 = vunpack.c.h.b16 %v453
        %v1088 = vunpack.c.l.b16 %v454
        %v1089 = vunpack.c.h.b16 %v454
        %v1090 = vunpack.c.l.b16 %v455
        %v1091 = vunpack.c.h.b16 %v455
        %v1092 = vunpack.c.l.b16 %v456
        %v1093 = vunpack.c.h.b16 %v456
        %v1094 = vunpack.c.l.b16 %v457
        %v1095 = vunpack.c.h.b16 %v457
        %v1096 = vunpack.c.l.b16 %v458
        %v1097 = vunpack.c.h.b16 %v458
        %v1098 = vunpack.c.l.b16 %v459
        %v1099 = vunpack.c.h.b16 %v459
        %v1100 = vunpack.c.l.b16 %v460
        %v1101 = vunpack.c.h.b16 %v460
        %v1102 = vunpack.c.l.b16 %v461
        %v1103 = vunpack.c.h.b16 %v461
        %v1104 = vunpack.c.l.b16 %v462
        %v1105 = vunpack.c.h.b16 %v462
        %v1106 = vunpack.c.l.b16 %v463
        %v1107 = vunpack.c.h.b16 %v463
        %v1108 = vunpack.c.l.b16 %v464
        %v1109 = vunpack.c.h.b16 %v464
        %v1110 = vunpack.c.l.b16 %v465
        %v1111 = vunpack.c.h.b16 %v465
        %v1112 = vunpack.c.l.b16 %v466
        %v1113 = vunpack.c.h.b16 %v466
        %v1114 = vunpack.c.l.b16 %v467
        %v1115 = vunpack.c.h.b16 %v467
        %v1116 = vunpack.c.l.b16 %v468
        %v1117 = vunpack.c.h.b16 %v468
        %v1118 = vunpack.c.l.b16 %v469
        %v1119 = vunpack.c.h.b16 %v469
        %v1120 = vunpack.c.l.b16 %v470
        %v1121 = vunpack.c.h.b16 %v470
        %v1122 = vunpack.c.l.b16 %v471
        %v1123 = vunpack.c.h.b16 %v471
        %v1124 = vunpack.c.l.b16 %v472
        %v1125 = vunpack.c.h.b16 %v472
        %v1126 = vunpack.c.l.b16 %v473
        %v1127 = vunpack.c.h.b16 %v473
        %v1128 = vunpack.c.l.b16 %v474
        %v1129 = vunpack.c.h.b16 %v474
        %v1130 = vunpack.c.l.b16 %v475
        %v1131 = vunpack.c.h.b16 %v475
        %v1132 = vunpack.c.l.b16 %v476
        %v1133 = vunpack.c.h.b16 %v476
        %v1134 = vunpack.c.l.b16 %v477
        %v1135 = vunpack.c.h.b16 %v477
        %v1136 = vunpack.c.l.b16 %v478
        %v1137 = vunpack.c.h.b16 %v478
        %v1138 = vunpack.c.l.b16 %v479
        %v1139 = vunpack.c.h.b16 %v479
        %v1140 = vunpack.c.l.b16 %v480
        %v1141 = vunpack.c.h.b16 %v480
        %v1142 = vunpack.c.l.b16 %v481
        %v1143 = vunpack.c.h.b16 %v481
        %v1144 = vunpack.c.l.b16 %v482
        %v1145 = vunpack.c.h.b16 %v482
        %v1146 = vunpack.c.l.b16 %v483
        %v1147 = vunpack.c.h.b16 %v483
        %v1148 = vunpack.c.l.b16 %v484
        %v1149 = vunpack.c.h.b16 %v484
        %v1150 = vunpack.c.l.b16 %v485
        %v1151 = vunpack.c.h.b16 %v485
        %v1152 = vunpack.c.l.b16 %v486
        %v1153 = vunpack.c.h.b16 %v486
        %v1154 = vunpack.c.l.b16 %v487
        %v1155 = vunpack.c.h.b16 %v487
        %v1156 = vunpack.c.l.b16 %v488
        %v1157 = vunpack.c.h.b16 %v488
        %v1158 = vunpack.c.l.b16 %v489
        %v1159 = vunpack.c.h.b16 %v489
        %v1160 = vunpack.c.l.b16 %v490
        %v1161 = vunpack.c.h.b16 %v490
        %v1162 = vunpack.c.l.b16 %v491
        %v1163 = vunpack.c.h.b16 %v491
        %v1164 = vunpack.c.l.b16 %v492
        %v1165 = vunpack.c.h.b16 %v492
        %v1166 = vunpack.c.l.b16 %v493
        %v1167 = vunpack.c.h.b16 %v493
        %v1168 = vunpack.c.l.b16 %v494
        %v1169 = vunpack.c.h.b16 %v494
        %v1170 = vunpack.c.l.b16 %v495
        %v1171 = vunpack.c.h.b16 %v495
        %v1172 = vunpack.c.l.b16 %v496
        %v1173 = vunpack.c.h.b16 %v496
        %v1174 = vunpack.c.l.b16 %v497
        %v1175 = vunpack.c.h.b16 %v497
        %v1176 = vunpack.c.l.b16 %v498
        %v1177 = vunpack.c.h.b16 %v498
        %v1178 = vunpack.c.l.b16 %v499
        %v1179 = vunpack.c.h.b16 %v499
        %v1180 = vunpack.c.l.b16 %v500
        %v1181 = vunpack.c.h.b16 %v500
        %v1182 = vunpack.c.l.b16 %v501
        %v1183 = vunpack.c.h.b16 %v501
        %v1184 = vunpack.c.l.b16 %v502
        %v1185 = vunpack.c.h.b16 %v502
        %v1186 = vunpack.c.l.b16 %v503
        %v1187 = vunpack.c.h.b16 %v503
        %v1188 = vunpack.c.l.b16 %v504
        %v1189 = vunpack.c.h.b16 %v504
        %v1190 = vunpack.c.l.b16 %v505
        %v1191 = vunpack.c.h.b16 %v505
        %v1192 = vunpack.c.l.b16 %v506
        %v1193 = vunpack.c.h.b16 %v506
        %v1194 = vunpack.c.l.b16 %v507
        %v1195 = vunpack.c.h.b16 %v507
        %v1196 = vunpack.c.l.b16 %v508
        %v1197 = vunpack.c.h.b16 %v508
        %v1198 = vunpack.c.l.b16 %v509
        %v1199 = vunpack.c.h.b16 %v509
        %v1200 = vunpack.c.l.b16 %v510
        %v1201 = vunpack.c.h.b16 %v510
        %v1202 = vunpack.c.l.b16 %v511
        %v1203 = vunpack.c.h.b16 %v511
        %v1204 = vunpack.c.l.b16 %v512
        %v1205 = vunpack.c.h.b16 %v512
        %v1206 = vunpack.c.l.b16 %v513
        %v1207 = vunpack.c.h.b16 %v513
        %v1208 = vunpack.c.l.b16 %v514
        %v1209 = vunpack.c.h.b16 %v514
        %v1210 = vunpack.c.l.b16 %v515
        %v1211 = vunpack.c.h.b16 %v515
        %v1212 = vunpack.c.l.b16 %v516
        %v1213 = vunpack.c.h.b16 %v516
        %v1214 = vunpack.c.l.b16 %v517
        %v1215 = vunpack.c.h.b16 %v517
        %v1216 = vunpack.c.l.b16 %v518
        %v1217 = vunpack.c.h.b16 %v518
        %v1218 = vunpack.c.l.b16 %v519
        %v1219 = vunpack.c.h.b16 %v519
        %v1220 = vunpack.c.l.b16 %v520
        %v1221 = vunpack.c.h.b16 %v520
        %v1222 = vunpack.c.l.b16 %v521
        %v1223 = vunpack.c.h.b16 %v521
        %v1224 = vunpack.c.l.b16 %v522
        %v1225 = vunpack.c.h.b16 %v522
        %v1226 = vunpack.c.l.b16 %v523
        %v1227 = vunpack.c.h.b16 %v523
        %v1228 = vunpack.c.l.b16 %v524
        %v1229 = vunpack.c.h.b16 %v524
        %v1230 = vunpack.c.l.b16 %v525
        %v1231 = vunpack.c.h.b16 %v525
        %v1232 = vunpack.c.l.b16 %v526
        %v1233 = vunpack.c.h.b16 %v526
        %v1234 = vunpack.c.l.b16 %v527
        %v1235 = vunpack.c.h.b16 %v527
        %v1236 = vunpack.c.l.b16 %v528
        %v1237 = vunpack.c.h.b16 %v528
        %v1238 = vunpack.c.l.b16 %v529
        %v1239 = vunpack.c.h.b16 %v529
        %v1240 = vunpack.c.l.b16 %v530
        %v1241 = vunpack.c.h.b16 %v530
        %v1242 = vunpack.c.l.b16 %v531
        %v1243 = vunpack.c.h.b16 %v531
        %v1244 = vunpack.c.l.b16 %v532
        %v1245 = vunpack.c.h.b16 %v532
        %v1246 = vunpack.c.l.b16 %v533
        %v1247 = vunpack.c.h.b16 %v533
        %v1248 = vunpack.c.l.b16 %v534
        %v1249 = vunpack.c.h.b16 %v534
        %v1250 = vunpack.c.l.b16 %v535
        %v1251 = vunpack.c.h.b16 %v535
        %v1252 = vunpack.c.l.b16 %v536
        %v1253 = vunpack.c.h.b16 %v536
        %v1254 = vunpack.c.l.b16 %v537
        %v1255 = vunpack.c.h.b16 %v537
        %v1256 = vunpack.c.l.b16 %v538
        %v1257 = vunpack.c.h.b16 %v538
        %v1258 = vunpack.c.l.b16 %v539
        %v1259 = vunpack.c.h.b16 %v539
        %v1260 = vunpack.c.l.b16 %v540
        %v1261 = vunpack.c.h.b16 %v540
        %v1262 = vunpack.c.l.b16 %v541
        %v1263 = vunpack.c.h.b16 %v541
        %v1264 = vunpack.c.l.b16 %v542
        %v1265 = vunpack.c.h.b16 %v542
        %v1266 = vunpack.c.l.b16 %v543
        %v1267 = vunpack.c.h.b16 %v543
        %v1268 = vunpack.c.l.b16 %v544
        %v1269 = vunpack.c.h.b16 %v544
        %v1270 = vunpack.c.l.b16 %v545
        %v1271 = vunpack.c.h.b16 %v545
        %v1272 = vunpack.c.l.b16 %v546
        %v1273 = vunpack.c.h.b16 %v546
        %v1274 = vunpack.c.l.b16 %v547
        %v1275 = vunpack.c.h.b16 %v547
        %v1276 = vunpack.c.l.b16 %v548
        %v1277 = vunpack.c.h.b16 %v548
        %v1278 = vunpack.c.l.b16 %v549
        %v1279 = vunpack.c.h.b16 %v549
        %v1280 = vunpack.c.l.b16 %v550
        %v1281 = vunpack.c.h.b16 %v550
        %v1282 = vunpack.c.l.b16 %v551
        %v1283 = vunpack.c.h.b16 %v551
        %v1284 = vunpack.c.l.b16 %v552
        %v1285 = vunpack.c.h.b16 %v552
        %v1286 = vunpack.c.l.b16 %v553
        %v1287 = vunpack.c.h.b16 %v553
        %v1288 = vunpack.c.l.b16 %v554
        %v1289 = vunpack.c.h.b16 %v554
        %v1290 = vunpack.c.l.b16 %v555
        %v1291 = vunpack.c.h.b16 %v555
        %v1292 = vunpack.c.l.b16 %v556
        %v1293 = vunpack.c.h.b16 %v556
        %v1294 = vunpack.c.l.b16 %v557
        %v1295 = vunpack.c.h.b16 %v557
        %v1296 = vunpack.c.l.b16 %v558
        %v1297 = vunpack.c.h.b16 %v558
        %v1298 = vunpack.c.l.b16 %v559
        %v1299 = vunpack.c.h.b16 %v559
        %v1300 = vunpack.c.l.b16 %v560
        %v1301 = vunpack.c.h.b16 %v560
        %v1302 = vunpack.c.l.b16 %v561
        %v1303 = vunpack.c.h.b16 %v561
        %v1304 = vunpack.c.l.b16 %v562
        %v1305 = vunpack.c.h.b16 %v562
        %v1306 = vunpack.c.l.b16 %v563
        %v1307 = vunpack.c.h.b16 %v563
        %v1308 = vunpack.c.l.b16 %v564
        %v1309 = vunpack.c.h.b16 %v564
        %v1310 = vunpack.c.l.b16 %v565
        %v1311 = vunpack.c.h.b16 %v565
        %v1312 = vunpack.c.l.b16 %v566
        %v1313 = vunpack.c.h.b16 %v566
        %v1314 = vunpack.c.l.b16 %v567
        %v1315 = vunpack.c.h.b16 %v567
        %v1316 = vunpack.c.l.b16 %v568
        %v1317 = vunpack.c.h.b16 %v568
        %v1318 = vunpack.c.l.b16 %v569
        %v1319 = vunpack.c.h.b16 %v569
        %v1320 = vunpack.c.l.b16 %v570
        %v1321 = vunpack.c.h.b16 %v570
        %v1322 = vunpack.c.l.b16 %v571
        %v1323 = vunpack.c.h.b16 %v571
        %v1324 = vunpack.c.l.b16 %v572
        %v1325 = vunpack.c.h.b16 %v572
        %v1326 = vunpack.c.l.b16 %v573
        %v1327 = vunpack.c.h.b16 %v573
        %v1328 = vunpack.c.l.b16 %v574
        %v1329 = vunpack.c.h.b16 %v574
        %v1330 = vunpack.c.l.b16 %v575
        %v1331 = vunpack.c.h.b16 %v575
        %v1332 = vunpack.c.l.b16 %v576
        %v1333 = vunpack.c.h.b16 %v576
        %v1334 = vunpack.c.l.b16 %v577
        %v1335 = vunpack.c.h.b16 %v577
        %v1336 = vunpack.c.l.b16 %v578
        %v1337 = vunpack.c.h.b16 %v578
        %v1338 = vunpack.c.l.b16 %v579
        %v1339 = vunpack.c.h.b16 %v579
        %v1340 = vunpack.c.l.b16 %v580
        %v1341 = vunpack.c.h.b16 %v580
        %v1342 = vunpack.c.l.b16 %v581
        %v1343 = vunpack.c.h.b16 %v581
        %v1344 = vunpack.c.l.b16 %v582
        %v1345 = vunpack.c.h.b16 %v582
        %v1346 = vunpack.c.l.b16 %v583
        %v1347 = vunpack.c.h.b16 %v583
        %v1348 = vunpack.c.l.b16 %v584
        %v1349 = vunpack.c.h.b16 %v584
        %v1350 = vunpack.c.l.b16 %v585
        %v1351 = vunpack.c.h.b16 %v585
        %v1352 = vunpack.c.l.b16 %v586
        %v1353 = vunpack.c.h.b16 %v586
        %v1354 = vunpack.c.l.b16 %v587
        %v1355 = vunpack.c.h.b16 %v587
        %v1356 = vunpack.c.l.b16 %v588
        %v1357 = vunpack.c.h.b16 %v588
        %v1358 = vunpack.c.l.b16 %v589
        %v1359 = vunpack.c.h.b16 %v589
        %v1360 = vunpack.c.l.b16 %v590
        %v1361 = vunpack.c.h.b16 %v590
        %v1362 = vunpack.c.l.b16 %v591
        %v1363 = vunpack.c.h.b16 %v591
        %v1364 = vunpack.c.l.b16 %v592
        %v1365 = vunpack.c.h.b16 %v592
        %v1366 = vunpack.c.l.b16 %v593
        %v1367 = vunpack.c.h.b16 %v593
        %v1368 = vunpack.c.l.b16 %v594
        %v1369 = vunpack.c.h.b16 %v594
        %v1370 = vunpack.c.l.b16 %v595
        %v1371 = vunpack.c.h.b16 %v595
        %v1372 = vunpack.c.l.b16 %v596
        %v1373 = vunpack.c.h.b16 %v596
        %v1374 = vunpack.c.l.b16 %v597
        %v1375 = vunpack.c.h.b16 %v597
        %v1376 = vunpack.c.l.b16 %v598
        %v1377 = vunpack.c.h.b16 %v598
        %v1378 = vunpack.c.l.b16 %v599
        %v1379 = vunpack.c.h.b16 %v599
        %v1380 = vunpack.c.l.b16 %v600
        %v1381 = vunpack.c.h.b16 %v600
        %v1382 = vunpack.c.l.b16 %v601
        %v1383 = vunpack.c.h.b16 %v601
        %v1384 = vunpack.c.l.b16 %v602
        %v1385 = vunpack.c.h.b16 %v602
        %v1386 = vunpack.c.l.b16 %v603
        %v1387 = vunpack.c.h.b16 %v603
        %v1388 = vunpack.c.l.b16 %v604
        %v1389 = vunpack.c.h.b16 %v604
        %v1390 = vunpack.c.l.b16 %v605
        %v1391 = vunpack.c.h.b16 %v605
        %v1392 = vunpack.c.l.b16 %v606
        %v1393 = vunpack.c.h.b16 %v606
        %v1394 = vunpack.c.l.b16 %v607
        %v1395 = vunpack.c.h.b16 %v607
        %v1396 = vunpack.c.l.b16 %v608
        %v1397 = vunpack.c.h.b16 %v608
        %v1398 = vunpack.c.l.b16 %v609
        %v1399 = vunpack.c.h.b16 %v609
        %v1400 = vunpack.c.l.b16 %v610
        %v1401 = vunpack.c.h.b16 %v610
        %v1402 = vunpack.c.l.b16 %v611
        %v1403 = vunpack.c.h.b16 %v611
        %v1404 = vunpack.c.l.b16 %v612
        %v1405 = vunpack.c.h.b16 %v612
        %v1406 = vunpack.c.l.b16 %v613
        %v1407 = vunpack.c.h.b16 %v613
        %v1408 = vunpack.c.l.b16 %v614
        %v1409 = vunpack.c.h.b16 %v614
        %v1410 = vunpack.c.l.b16 %v615
        %v1411 = vunpack.c.h.b16 %v615
        %v1412 = vunpack.c.l.b16 %v616
        %v1413 = vunpack.c.h.b16 %v616
        %v1414 = vunpack.c.l.b16 %v617
        %v1415 = vunpack.c.h.b16 %v617
        %v1416 = vunpack.c.l.b16 %v618
        %v1417 = vunpack.c.h.b16 %v618
        %v1418 = vunpack.c.l.b16 %v619
        %v1419 = vunpack.c.h.b16 %v619
        %v1420 = vunpack.c.l.b16 %v620
        %v1421 = vunpack.c.h.b16 %v620
        %v1422 = vunpack.c.l.b16 %v621
        %v1423 = vunpack.c.h.b16 %v621
        %v1424 = vunpack.c.l.b16 %v622
        %v1425 = vunpack.c.h.b16 %v622
        %v1426 = vunpack.c.l.b16 %v623
        %v1427 = vunpack.c.h.b16 %v623
        %v1428 = vunpack.c.l.b16 %v624
        %v1429 = vunpack.c.h.b16 %v624
        %v1430 = vunpack.c.l.b16 %v625
        %v1431 = vunpack.c.h.b16 %v625
        %v1432 = vunpack.c.l.b16 %v626
        %v1433 = vunpack.c.h.b16 %v626
        %v1434 = vunpack.c.l.b16 %v627
        %v1435 = vunpack.c.h.b16 %v627
        %v1436 = vunpack.c.l.b16 %v628
        %v1437 = vunpack.c.h.b16 %v628
        %v1438 = vunpack.c.l.b16 %v629
        %v1439 = vunpack.c.h.b16 %v629
        %v1440 = vunpack.c.l.b16 %v630
        %v1441 = vunpack.c.h.b16 %v630
        %v1442 = vunpack.c.l.b16 %v631
        %v1443 = vunpack.c.h.b16 %v631
        %v1444 = vunpack.c.l.b16 %v632
        %v1445 = vunpack.c.h.b16 %v632
        %v1446 = vunpack.c.l.b16 %v633
        %v1447 = vunpack.c.h.b16 %v633
        %v1448 = vunpack.c.l.b16 %v634
        %v1449 = vunpack.c.h.b16 %v634
        %v1450 = vunpack.c.l.b16 %v635
        %v1451 = vunpack.c.h.b16 %v635
        %v1452 = vunpack.c.l.b16 %v636
        %v1453 = vunpack.c.h.b16 %v636
        %v1454 = vunpack.c.l.b16 %v637
        %v1455 = vunpack.c.h.b16 %v637
        %v1456 = vunpack.c.l.b16 %v638
        %v1457 = vunpack.c.h.b16 %v638
        %v1458 = vunpack.c.l.b16 %v639
        %v1459 = vunpack.c.h.b16 %v639
        %v1460 = vunpack.c.l.b16 %v640
        %v1461 = vunpack.c.h.b16 %v640
        %v1462 = vunpack.c.l.b16 %v641
        %v1463 = vunpack.c.h.b16 %v641
        %v1464 = vunpack.c.l.b16 %v642
        %v1465 = vunpack.c.h.b16 %v642
        %v1466 = vunpack.c.l.b16 %v643
        %v1467 = vunpack.c.h.b16 %v643
        %v1468 = vunpack.c.l.b16 %v644
        %v1469 = vunpack.c.h.b16 %v644
        %v1470 = vunpack.c.l.b16 %v645
        %v1471 = vunpack.c.h.b16 %v645
        %v1472 = vunpack.c.l.b16 %v646
        %v1473 = vunpack.c.h.b16 %v646
        %v1474 = vunpack.c.l.b16 %v647
        %v1475 = vunpack.c.h.b16 %v647
        %v1476 = vunpack.c.l.b16 %v648
        %v1477 = vunpack.c.h.b16 %v648
        %v1478 = vunpack.c.l.b16 %v649
        %v1479 = vunpack.c.h.b16 %v649
        %v1480 = vpack.c.b16 %v976, %v968
        %v1481 = vpack.c.b16 %v977, %v969
        %v1482 = vpack.c.b16 %v978, %v970
        %v1483 = vpack.c.b16 %v979, %v971
        %v1484 = vpack.c.b16 %v980, %v972
        %v1485 = vpack.c.b16 %v981, %v973
        %v1486 = vpack.c.b16 %v982, %v974
        %v1487 = vpack.c.b16 %v983, %v975
        %v1488 = vpack.c.b16 %v992, %v984
        %v1489 = vpack.c.b16 %v993, %v985
        %v1490 = vpack.c.b16 %v994, %v986
        %v1491 = vpack.c.b16 %v995, %v987
        %v1492 = vpack.c.b16 %v996, %v988
        %v1493 = vpack.c.b16 %v997, %v989
        %v1494 = vpack.c.b16 %v998, %v990
        %v1495 = vpack.c.b16 %v999, %v991
        %v1496 = vpack.c.b16 %v1008, %v1000
        %v1497 = vpack.c.b16 %v1009, %v1001
        %v1498 = vpack.c.b16 %v1010, %v1002
        %v1499 = vpack.c.b16 %v1011, %v1003
        %v1500 = vpack.c.b16 %v1012, %v1004
        %v1501 = vpack.c.b16 %v1013, %v1005
        %v1502 = vpack.c.b16 %v1014, %v1006
        %v1503 = vpack.c.b16 %v1015, %v1007
        %v1504 = vpack.c.b16 %v1024, %v1016
        %v1505 = vpack.c.b16 %v1025, %v1017
        %v1506 = vpack.c.b16 %v1026, %v1018
        %v1507 = vpack.c.b16 %v1027, %v1019
        %v1508 = vpack.c.b16 %v1028, %v1020
        %v1509 = vpack.c.b16 %v1029, %v1021
        %v1510 = vpack.c.b16 %v1030, %v1022
        %v1511 = vpack.c.b16 %v1031, %v1023
        %v1512 = vpack.c.b16 %v1040, %v1032
        %v1513 = vpack.c.b16 %v1041, %v1033
        %v1514 = vpack.c.b16 %v1042, %v1034
        %v1515 = vpack.c.b16 %v1043, %v1035
        %v1516 = vpack.c.b16 %v1044, %v1036
        %v1517 = vpack.c.b16 %v1045, %v1037
        %v1518 = vpack.c.b16 %v1046, %v1038
        %v1519 = vpack.c.b16 %v1047, %v1039
        %v1520 = vpack.c.b16 %v1056, %v1048
        %v1521 = vpack.c.b16 %v1057, %v1049
        %v1522 = vpack.c.b16 %v1058, %v1050
        %v1523 = vpack.c.b16 %v1059, %v1051
        %v1524 = vpack.c.b16 %v1060, %v1052
        %v1525 = vpack.c.b16 %v1061, %v1053
        %v1526 = vpack.c.b16 %v1062, %v1054
        %v1527 = vpack.c.b16 %v1063, %v1055
        %v1528 = vpack.c.b16 %v1072, %v1064
        %v1529 = vpack.c.b16 %v1073, %v1065
        %v1530 = vpack.c.b16 %v1074, %v1066
        %v1531 = vpack.c.b16 %v1075, %v1067
        %v1532 = vpack.c.b16 %v1076, %v1068
        %v1533 = vpack.c.b16 %v1077, %v1069
        %v1534 = vpack.c.b16 %v1078, %v1070
        %v1535 = vpack.c.b16 %v1079, %v1071
        %v1536 = vpack.c.b16 %v1088, %v1080
        %v1537 = vpack.c.b16 %v1089, %v1081
        %v1538 = vpack.c.b16 %v1090, %v1082
        %v1539 = vpack.c.b16 %v1091, %v1083
        %v1540 = vpack.c.b16 %v1092, %v1084
        %v1541 = vpack.c.b16 %v1093, %v1085
        %v1542 = vpack.c.b16 %v1094, %v1086
        %v1543 = vpack.c.b16 %v1095, %v1087
        %v1544 = vpack.c.b16 %v1104, %v1096
        %v1545 = vpack.c.b16 %v1105, %v1097
        %v1546 = vpack.c.b16 %v1106, %v1098
        %v1547 = vpack.c.b16 %v1107, %v1099
        %v1548 = vpack.c.b16 %v1108, %v1100
        %v1549 = vpack.c.b16 %v1109, %v1101
        %v1550 = vpack.c.b16 %v1110, %v1102
        %v1551 = vpack.c.b16 %v1111, %v1103
        %v1552 = vpack.c.b16 %v1120, %v1112
        %v1553 = vpack.c.b16 %v1121, %v1113
        %v1554 = vpack.c.b16 %v1122, %v1114
        %v1555 = vpack.c.b16 %v1123, %v1115
        %v1556 = vpack.c.b16 %v1124, %v1116
        %v1557 = vpack.c.b16 %v1125, %v1117
        %v1558 = vpack.c.b16 %v1126, %v1118
        %v1559 = vpack.c.b16 %v1127, %v1119
        %v1560 = vpack.c.b16 %v1136, %v1128
        %v1561 = vpack.c.b16 %v1137, %v1129
        %v1562 = vpack.c.b16 %v1138, %v1130
        %v1563 = vpack.c.b16 %v1139, %v1131
        %v1564 = vpack.c.b16 %v1140, %v1132
        %v1565 = vpack.c.b16 %v1141, %v1133
        %v1566 = vpack.c.b16 %v1142, %v1134
        %v1567 = vpack.c.b16 %v1143, %v1135
        %v1568 = vpack.c.b16 %v1152, %v1144
        %v1569 = vpack.c.b16 %v1153, %v1145
        %v1570 = vpack.c.b16 %v1154, %v1146
        %v1571 = vpack.c.b16 %v1155, %v1147
        %v1572 = vpack.c.b16 %v1156, %v1148
        %v1573 = vpack.c.b16 %v1157, %v1149
        %v1574 = vpack.c.b16 %v1158, %v1150
        %v1575 = vpack.c.b16 %v1159, %v1151
        %v1576 = vpack.c.b16 %v1168, %v1160
        %v1577 = vpack.c.b16 %v1169, %v1161
        %v1578 = vpack.c.b16 %v1170, %v1162
        %v1579 = vpack.c.b16 %v1171, %v1163
        %v1580 = vpack.c.b16 %v1172, %v1164
        %v1581 = vpack.c.b16 %v1173, %v1165
        %v1582 = vpack.c.b16 %v1174, %v1166
        %v1583 = vpack.c.b16 %v1175, %v1167
        %v1584 = vpack.c.b16 %v1184, %v1176
        %v1585 = vpack.c.b16 %v1185, %v1177
        %v1586 = vpack.c.b16 %v1186, %v1178
        %v1587 = vpack.c.b16 %v1187, %v1179
        %v1588 = vpack.c.b16 %v1188, %v1180
        %v1589 = vpack.c.b16 %v1189, %v1181
        %v1590 = vpack.c.b16 %v1190, %v1182
        %v1591 = vpack.c.b16 %v1191, %v1183
        %v1592 = vpack.c.b16 %v1200, %v1192
        %v1593 = vpack.c.b16 %v1201, %v1193
        %v1594 = vpack.c.b16 %v1202, %v1194
        %v1595 = vpack.c.b16 %v1203, %v1195
        %v1596 = vpack.c.b16 %v1204, %v1196
        %v1597 = vpack.c.b16 %v1205, %v1197
        %v1598 = vpack.c.b16 %v1206, %v1198
        %v1599 = vpack.c.b16 %v1207, %v1199
        %v1600 = vpack.c.b16 %v1216, %v1208
        %v1601 = vpack.c.b16 %v1217, %v1209
        %v1602 = vpack.c.b16 %v1218, %v1210
        %v1603 = vpack.c.b16 %v1219, %v1211
        %v1604 = vpack.c.b16 %v1220, %v1212
        %v1605 = vpack.c.b16 %v1221, %v1213
        %v1606 = vpack.c.b16 %v1222, %v1214
        %v1607 = vpack.c.b16 %v1223, %v1215
        %v1608 = vpack.c.b16 %v1232, %v1224
        %v1609 = vpack.c.b16 %v1233, %v1225
        %v1610 = vpack.c.b16 %v1234, %v1226
        %v1611 = vpack.c.b16 %v1235, %v1227
        %v1612 = vpack.c.b16 %v1236, %v1228
        %v1613 = vpack.c.b16 %v1237, %v1229
        %v1614 = vpack.c.b16 %v1238, %v1230
        %v1615 = vpack.c.b16 %v1239, %v1231
        %v1616 = vpack.c.b16 %v1248, %v1240
        %v1617 = vpack.c.b16 %v1249, %v1241
        %v1618 = vpack.c.b16 %v1250, %v1242
        %v1619 = vpack.c.b16 %v1251, %v1243
        %v1620 = vpack.c.b16 %v1252, %v1244
        %v1621 = vpack.c.b16 %v1253, %v1245
        %v1622 = vpack.c.b16 %v1254, %v1246
        %v1623 = vpack.c.b16 %v1255, %v1247
        %v1624 = vpack.c.b16 %v1264, %v1256
        %v1625 = vpack.c.b16 %v1265, %v1257
        %v1626 = vpack.c.b16 %v1266, %v1258
        %v1627 = vpack.c.b16 %v1267, %v1259
        %v1628 = vpack.c.b16 %v1268, %v1260
        %v1629 = vpack.c.b16 %v1269, %v1261
        %v1630 = vpack.c.b16 %v1270, %v1262
        %v1631 = vpack.c.b16 %v1271, %v1263
        %v1632 = vpack.c.b16 %v1280, %v1272
        %v1633 = vpack.c.b16 %v1281, %v1273
        %v1634 = vpack.c.b16 %v1282, %v1274
        %v1635 = vpack.c.b16 %v1283, %v1275
        %v1636 = vpack.c.b16 %v1284, %v1276
        %v1637 = vpack.c.b16 %v1285, %v1277
        %v1638 = vpack.c.b16 %v1286, %v1278
        %v1639 = vpack.c.b16 %v1287, %v1279
        %v1640 = vpack.c.b16 %v1296, %v1288
        %v1641 = vpack.c.b16 %v1297, %v1289
        %v1642 = vpack.c.b16 %v1298, %v1290
        %v1643 = vpack.c.b16 %v1299, %v1291
        %v1644 = vpack.c.b16 %v1300, %v1292
        %v1645 = vpack.c.b16 %v1301, %v1293
        %v1646 = vpack.c.b16 %v1302, %v1294
        %v1647 = vpack.c.b16 %v1303, %v1295
        %v1648 = vpack.c.b16 %v1312, %v1304
        %v1649 = vpack.c.b16 %v1313, %v1305
        %v1650 = vpack.c.b16 %v1314, %v1306
        %v1651 = vpack.c.b16 %v1315, %v1307
        %v1652 = vpack.c.b16 %v1316, %v1308
        %v1653 = vpack.c.b16 %v1317, %v1309
        %v1654 = vpack.c.b16 %v1318, %v1310
        %v1655 = vpack.c.b16 %v1319, %v1311
        %v1656 = vpack.c.b16 %v1328, %v1320
        %v1657 = vpack.c.b16 %v1329, %v1321
        %v1658 = vpack.c.b16 %v1330, %v1322
        %v1659 = vpack.c.b16 %v1331, %v1323
        %v1660 = vpack.c.b16 %v1332, %v1324
        %v1661 = vpack.c.b16 %v1333, %v1325
        %v1662 = vpack.c.b16 %v1334, %v1326
        %v1663 = vpack.c.b16 %v1335, %v1327
        %v1664 = vpack.c.b16 %v1344, %v1336
        %v1665 = vpack.c.b16 %v1345, %v1337
        %v1666 = vpack.c.b16 %v1346, %v1338
        %v1667 = vpack.c.b16 %v1347, %v1339
        %v1668 = vpack.c.b16 %v1348, %v1340
        %v1669 = vpack.c.b16 %v1349, %v1341
        %v1670 = vpack.c.b16 %v1350, %v1342
        %v1671 = vpack.c.b16 %v1351, %v1343
        %v1672 = vpack.c.b16 %v1360, %v1352
        %v1673 = vpack.c.b16 %v1361, %v1353
        %v1674 = vpack.c.b16 %v1362, %v1354
        %v1675 = vpack.c.b16 %v1363, %v1355
        %v1676 = vpack.c.b16 %v1364, %v1356
        %v1677 = vpack.c.b16 %v1365, %v1357
        %v1678 = vpack.c.b16 %v1366, %v1358
        %v1679 = vpack.c.b16 %v1367, %v1359
        %v1680 = vpack.c.b16 %v1376, %v1368
        %v1681 = vpack.c.b16 %v1377, %v1369
        %v1682 = vpack.c.b16 %v1378, %v1370
        %v1683 = vpack.c.b16 %v1379, %v1371
        %v1684 = vpack.c.b16 %v1380, %v1372
        %v1685 = vpack.c.b16 %v1381, %v1373
        %v1686 = vpack.c.b16 %v1382, %v1374
        %v1687 = vpack.c.b16 %v1383, %v1375
        %v1688 = vpack.c.b16 %v1392, %v1384
        %v1689 = vpack.c.b16 %v1393, %v1385
        %v1690 = vpack.c.b16 %v1394, %v1386
        %v1691 = vpack.c.b16 %v1395, %v1387
        %v1692 = vpack.c.b16 %v1396, %v1388
        %v1693 = vpack.c.b16 %v1397, %v1389
        %v1694 = vpack.c.b16 %v1398, %v1390
        %v1695 = vpack.c.b16 %v1399, %v1391
        %v1696 = vpack.c.b16 %v1408, %v1400
        %v1697 = vpack.c.b16 %v1409, %v1401
        %v1698 = vpack.c.b16 %v1410, %v1402
        %v1699 = vpack.c.b16 %v1411, %v1403
        %v1700 = vpack.c.b16 %v1412, %v1404
        %v1701 = vpack.c.b16 %v1413, %v1405
        %v1702 = vpack.c.b16 %v1414, %v1406
        %v1703 = vpack.c.b16 %v1415, %v1407
        %v1704 = vpack.c.b16 %v1424, %v1416
        %v1705 = vpack.c.b16 %v1425, %v1417
        %v1706 = vpack.c.b16 %v1426, %v1418
        %v1707 = vpack.c.b16 %v1427, %v1419
        %v1708 = vpack.c.b16 %v1428, %v1420
        %v1709 = vpack.c.b16 %v1429, %v1421
        %v1710 = vpack.c.b16 %v1430, %v1422
        %v1711 = vpack.c.b16 %v1431, %v1423
        %v1712 = vpack.c.b16 %v1440, %v1432
        %v1713 = vpack.c.b16 %v1441, %v1433
        %v1714 = vpack.c.b16 %v1442, %v1434
        %v1715 = vpack.c.b16 %v1443, %v1435
        %v1716 = vpack.c.b16 %v1444, %v1436
        %v1717 = vpack.c.b16 %v1445, %v1437
        %v1718 = vpack.c.b16 %v1446, %v1438
        %v1719 = vpack.c.b16 %v1447, %v1439
        %v1720 = vpack.c.b16 %v1456, %v1448
        %v1721 = vpack.c.b16 %v1457, %v1449
        %v1722 = vpack.c.b16 %v1458, %v1450
        %v1723 = vpack.c.b16 %v1459, %v1451
        %v1724 = vpack.c.b16 %v1460, %v1452
        %v1725 = vpack.c.b16 %v1461, %v1453
        %v1726 = vpack.c.b16 %v1462, %v1454
        %v1727 = vpack.c.b16 %v1463, %v1455
        %v1728 = vpack.c.b16 %v1472, %v1464
        %v1729 = vpack.c.b16 %v1473, %v1465
        %v1730 = vpack.c.b16 %v1474, %v1466
        %v1731 = vpack.c.b16 %v1475, %v1467
        %v1732 = vpack.c.b16 %v1476, %v1468
        %v1733 = vpack.c.b16 %v1477, %v1469
        %v1734 = vpack.c.b16 %v1478, %v1470
        %v1735 = vpack.c.b16 %v1479, %v1471
        %1992 = vmatprep.subr.bf16.mxu0 %v1537
        %1993 = vmatpush1.bf16.msra.mxu0 %v1536
        %1994 = vmatprep.subr.bf16.mxu0 %v1529
        %1995 = vmatpush1.bf16.msra.mxu0 %v1528
        %1996 = vmatprep.subr.bf16.mxu0 %v1521
        %1997 = vmatpush1.bf16.msra.mxu0 %v1520
        %1998 = vmatprep.subr.bf16.mxu0 %v1513
        %1999 = vmatpush1.bf16.msra.mxu0 %v1512
        %2000 = vmatprep.subr.bf16.mxu0 %v1505
        %2001 = vmatpush1.bf16.msra.mxu0 %v1504
        %2002 = vmatprep.subr.bf16.mxu0 %v1497
        %2003 = vmatpush1.bf16.msra.mxu0 %v1496
        %2004 = vmatprep.subr.bf16.mxu0 %v1489
        %2005 = vmatpush1.bf16.msra.mxu0 %v1488
        %2006 = vmatprep.subr.bf16.mxu0 %v1481
        %2007 = vmatpush1.bf16.msra.mxu0 %v1480
        %2008 = vmatprep.subr.bf16.mxu0 %v1601
        %2009 = vmatpush2.bf16.msra.mxu0 %v1600
        %2010 = vmatprep.subr.bf16.mxu0 %v1593
        %2011 = vmatpush2.bf16.msra.mxu0 %v1592
        %2012 = vmatprep.subr.bf16.mxu0 %v1585
        %2013 = vmatpush2.bf16.msra.mxu0 %v1584
        %2014 = vmatprep.subr.bf16.mxu0 %v1577
        %2015 = vmatpush2.bf16.msra.mxu0 %v1576
        %2016 = vmatprep.subr.bf16.mxu0 %v1569
        %2017 = vmatpush2.bf16.msra.mxu0 %v1568
        %2018 = vmatprep.subr.bf16.mxu0 %v1561
        %2019 = vmatpush2.bf16.msra.mxu0 %v1560
        %2020 = vmatprep.subr.bf16.mxu0 %v1553
        %2021 = vmatpush2.bf16.msra.mxu0 %v1552
        %2022 = vmatprep.subr.bf16.mxu0 %v1545
        %2023 = vmatpush2.bf16.msra.mxu0 %v1544
        %2024 = vmatprep.mubr.bf16.mxu0 %v705
        %2025 = vmatmul.mubr.bf16.gmra.mxu0 %v704
        %v2026 = vpop.f32.mrf.mxu0
        %v2027 = vadd.f32 %v655, %v2026
        %v2028 = vpop.f32.mrf.mxu0
        %v2029 = vadd.f32 %v659, %v2028
        %v2030 = vpop.f32.mrf.mxu0
        %v2031 = vadd.f32 %v655, %v2030
        %v2032 = vpop.f32.mrf.mxu0
        %v2033 = vadd.f32 %v659, %v2032
        %2034 = vdwg.mxu0
        %2035 = vmatprep.subr.bf16.mxu0 %v1665
        %2036 = vmatpush1.bf16.msra.mxu0 %v1664
        %2037 = vmatprep.subr.bf16.mxu0 %v1657
        %2038 = vmatpush1.bf16.msra.mxu0 %v1656
        %2039 = vmatprep.subr.bf16.mxu0 %v1649
        %2040 = vmatpush1.bf16.msra.mxu0 %v1648
        %2041 = vmatprep.subr.bf16.mxu0 %v1641
        %2042 = vmatpush1.bf16.msra.mxu0 %v1640
        %2043 = vmatprep.subr.bf16.mxu0 %v1633
        %2044 = vmatpush1.bf16.msra.mxu0 %v1632
        %2045 = vmatprep.subr.bf16.mxu0 %v1625
        %2046 = vmatpush1.bf16.msra.mxu0 %v1624
        %2047 = vmatprep.subr.bf16.mxu0 %v1617
        %2048 = vmatpush1.bf16.msra.mxu0 %v1616
        %2049 = vmatprep.subr.bf16.mxu0 %v1609
        %2050 = vmatpush1.bf16.msra.mxu0 %v1608
        %2051 = vmatprep.subr.bf16.mxu0 %v1729
        %2052 = vmatpush2.bf16.msra.mxu0 %v1728
        %2053 = vmatprep.subr.bf16.mxu0 %v1721
        %2054 = vmatpush2.bf16.msra.mxu0 %v1720
        %2055 = vmatprep.subr.bf16.mxu0 %v1713
        %2056 = vmatpush2.bf16.msra.mxu0 %v1712
        %2057 = vmatprep.subr.bf16.mxu0 %v1705
        %2058 = vmatpush2.bf16.msra.mxu0 %v1704
        %2059 = vmatprep.subr.bf16.mxu0 %v1697
        %2060 = vmatpush2.bf16.msra.mxu0 %v1696
        %2061 = vmatprep.subr.bf16.mxu0 %v1689
        %2062 = vmatpush2.bf16.msra.mxu0 %v1688
        %2063 = vmatprep.subr.bf16.mxu0 %v1681
        %2064 = vmatpush2.bf16.msra.mxu0 %v1680
        %2065 = vmatprep.subr.bf16.mxu0 %v1673
        %2066 = vmatpush2.bf16.msra.mxu0 %v1672
        %2067 = vmatprep.mubr.bf16.mxu0 %v707
        %2068 = vmatmul.mubr.bf16.gmra.mxu0 %v706
        %v2069 = vpop.f32.mrf.mxu0
        %v2070 = vadd.f32 %v2027, %v2069
        %v2071 = vpop.f32.mrf.mxu0
        %v2072 = vadd.f32 %v2029, %v2071
        %v2073 = vpop.f32.mrf.mxu0
        %v2074 = vadd.f32 %v2031, %v2073
        %v2075 = vpop.f32.mrf.mxu0
        %v2076 = vadd.f32 %v2033, %v2075
        %2077 = vdwg.mxu0
        %2078 = vmatprep.subr.bf16.mxu0 %v1539
        %2079 = vmatpush1.bf16.msra.mxu0 %v1538
        %2080 = vmatprep.subr.bf16.mxu0 %v1531
        %2081 = vmatpush1.bf16.msra.mxu0 %v1530
        %2082 = vmatprep.subr.bf16.mxu0 %v1523
        %2083 = vmatpush1.bf16.msra.mxu0 %v1522
        %2084 = vmatprep.subr.bf16.mxu0 %v1515
        %2085 = vmatpush1.bf16.msra.mxu0 %v1514
        %2086 = vmatprep.subr.bf16.mxu0 %v1507
        %2087 = vmatpush1.bf16.msra.mxu0 %v1506
        %2088 = vmatprep.subr.bf16.mxu0 %v1499
        %2089 = vmatpush1.bf16.msra.mxu0 %v1498
        %2090 = vmatprep.subr.bf16.mxu0 %v1491
        %2091 = vmatpush1.bf16.msra.mxu0 %v1490
        %2092 = vmatprep.subr.bf16.mxu0 %v1483
        %2093 = vmatpush1.bf16.msra.mxu0 %v1482
        %2094 = vmatprep.subr.bf16.mxu0 %v1603
        %2095 = vmatpush2.bf16.msra.mxu0 %v1602
        %2096 = vmatprep.subr.bf16.mxu0 %v1595
        %2097 = vmatpush2.bf16.msra.mxu0 %v1594
        %2098 = vmatprep.subr.bf16.mxu0 %v1587
        %2099 = vmatpush2.bf16.msra.mxu0 %v1586
        %2100 = vmatprep.subr.bf16.mxu0 %v1579
        %2101 = vmatpush2.bf16.msra.mxu0 %v1578
        %2102 = vmatprep.subr.bf16.mxu0 %v1571
        %2103 = vmatpush2.bf16.msra.mxu0 %v1570
        %2104 = vmatprep.subr.bf16.mxu0 %v1563
        %2105 = vmatpush2.bf16.msra.mxu0 %v1562
        %2106 = vmatprep.subr.bf16.mxu0 %v1555
        %2107 = vmatpush2.bf16.msra.mxu0 %v1554
        %2108 = vmatprep.subr.bf16.mxu0 %v1547
        %2109 = vmatpush2.bf16.msra.mxu0 %v1546
        %2110 = vmatprep.mubr.bf16.mxu0 %v705
        %2111 = vmatmul.mubr.bf16.gmra.mxu0 %v704
        %v2112 = vpop.f32.mrf.mxu0
        %v2113 = vadd.f32 %v663, %v2112
        %v2114 = vpop.f32.mrf.mxu0
        %v2115 = vadd.f32 %v667, %v2114
        %v2116 = vpop.f32.mrf.mxu0
        %v2117 = vadd.f32 %v663, %v2116
        %v2118 = vpop.f32.mrf.mxu0
        %v2119 = vadd.f32 %v667, %v2118
        %2120 = vdwg.mxu0
        %2121 = vmatprep.subr.bf16.mxu0 %v1667
        %2122 = vmatpush1.bf16.msra.mxu0 %v1666
        %2123 = vmatprep.subr.bf16.mxu0 %v1659
        %2124 = vmatpush1.bf16.msra.mxu0 %v1658
        %2125 = vmatprep.subr.bf16.mxu0 %v1651
        %2126 = vmatpush1.bf16.msra.mxu0 %v1650
        %2127 = vmatprep.subr.bf16.mxu0 %v1643
        %2128 = vmatpush1.bf16.msra.mxu0 %v1642
        %2129 = vmatprep.subr.bf16.mxu0 %v1635
        %2130 = vmatpush1.bf16.msra.mxu0 %v1634
        %2131 = vmatprep.subr.bf16.mxu0 %v1627
        %2132 = vmatpush1.bf16.msra.mxu0 %v1626
        %2133 = vmatprep.subr.bf16.mxu0 %v1619
        %2134 = vmatpush1.bf16.msra.mxu0 %v1618
        %2135 = vmatprep.subr.bf16.mxu0 %v1611
        %2136 = vmatpush1.bf16.msra.mxu0 %v1610
        %2137 = vmatprep.subr.bf16.mxu0 %v1731
        %2138 = vmatpush2.bf16.msra.mxu0 %v1730
        %2139 = vmatprep.subr.bf16.mxu0 %v1723
        %2140 = vmatpush2.bf16.msra.mxu0 %v1722
        %2141 = vmatprep.subr.bf16.mxu0 %v1715
        %2142 = vmatpush2.bf16.msra.mxu0 %v1714
        %2143 = vmatprep.subr.bf16.mxu0 %v1707
        %2144 = vmatpush2.bf16.msra.mxu0 %v1706
        %2145 = vmatprep.subr.bf16.mxu0 %v1699
        %2146 = vmatpush2.bf16.msra.mxu0 %v1698
        %2147 = vmatprep.subr.bf16.mxu0 %v1691
        %2148 = vmatpush2.bf16.msra.mxu0 %v1690
        %2149 = vmatprep.subr.bf16.mxu0 %v1683
        %2150 = vmatpush2.bf16.msra.mxu0 %v1682
        %2151 = vmatprep.subr.bf16.mxu0 %v1675
        %2152 = vmatpush2.bf16.msra.mxu0 %v1674
        %2153 = vmatprep.mubr.bf16.mxu0 %v707
        %2154 = vmatmul.mubr.bf16.gmra.mxu0 %v706
        %v2155 = vpop.f32.mrf.mxu0
        %v2156 = vadd.f32 %v2113, %v2155
        %v2157 = vpop.f32.mrf.mxu0
        %v2158 = vadd.f32 %v2115, %v2157
        %v2159 = vpop.f32.mrf.mxu0
        %v2160 = vadd.f32 %v2117, %v2159
        %v2161 = vpop.f32.mrf.mxu0
        %v2162 = vadd.f32 %v2119, %v2161
        %2163 = vdwg.mxu0
        %2164 = vmatprep.subr.bf16.mxu0 %v1541
        %2165 = vmatpush1.bf16.msra.mxu0 %v1540
        %2166 = vmatprep.subr.bf16.mxu0 %v1533
        %2167 = vmatpush1.bf16.msra.mxu0 %v1532
        %2168 = vmatprep.subr.bf16.mxu0 %v1525
        %2169 = vmatpush1.bf16.msra.mxu0 %v1524
        %2170 = vmatprep.subr.bf16.mxu0 %v1517
        %2171 = vmatpush1.bf16.msra.mxu0 %v1516
        %2172 = vmatprep.subr.bf16.mxu0 %v1509
        %2173 = vmatpush1.bf16.msra.mxu0 %v1508
        %2174 = vmatprep.subr.bf16.mxu0 %v1501
        %2175 = vmatpush1.bf16.msra.mxu0 %v1500
        %2176 = vmatprep.subr.bf16.mxu0 %v1493
        %2177 = vmatpush1.bf16.msra.mxu0 %v1492
        %2178 = vmatprep.subr.bf16.mxu0 %v1485
        %2179 = vmatpush1.bf16.msra.mxu0 %v1484
        %2180 = vmatprep.subr.bf16.mxu0 %v1605
        %2181 = vmatpush2.bf16.msra.mxu0 %v1604
        %2182 = vmatprep.subr.bf16.mxu0 %v1597
        %2183 = vmatpush2.bf16.msra.mxu0 %v1596
        %2184 = vmatprep.subr.bf16.mxu0 %v1589
        %2185 = vmatpush2.bf16.msra.mxu0 %v1588
        %2186 = vmatprep.subr.bf16.mxu0 %v1581
        %2187 = vmatpush2.bf16.msra.mxu0 %v1580
        %2188 = vmatprep.subr.bf16.mxu0 %v1573
        %2189 = vmatpush2.bf16.msra.mxu0 %v1572
        %2190 = vmatprep.subr.bf16.mxu0 %v1565
        %2191 = vmatpush2.bf16.msra.mxu0 %v1564
        %2192 = vmatprep.subr.bf16.mxu0 %v1557
        %2193 = vmatpush2.bf16.msra.mxu0 %v1556
        %2194 = vmatprep.subr.bf16.mxu0 %v1549
        %2195 = vmatpush2.bf16.msra.mxu0 %v1548
        %2196 = vmatprep.mubr.bf16.mxu0 %v705
        %2197 = vmatmul.mubr.bf16.gmra.mxu0 %v704
        %v2198 = vpop.f32.mrf.mxu0
        %v2199 = vadd.f32 %v671, %v2198
        %v2200 = vpop.f32.mrf.mxu0
        %v2201 = vadd.f32 %v675, %v2200
        %v2202 = vpop.f32.mrf.mxu0
        %v2203 = vadd.f32 %v671, %v2202
        %v2204 = vpop.f32.mrf.mxu0
        %v2205 = vadd.f32 %v675, %v2204
        %2206 = vdwg.mxu0
        %2207 = vmatprep.subr.bf16.mxu0 %v1669
        %2208 = vmatpush1.bf16.msra.mxu0 %v1668
        %2209 = vmatprep.subr.bf16.mxu0 %v1661
        %2210 = vmatpush1.bf16.msra.mxu0 %v1660
        %2211 = vmatprep.subr.bf16.mxu0 %v1653
        %2212 = vmatpush1.bf16.msra.mxu0 %v1652
        %2213 = vmatprep.subr.bf16.mxu0 %v1645
        %2214 = vmatpush1.bf16.msra.mxu0 %v1644
        %2215 = vmatprep.subr.bf16.mxu0 %v1637
        %2216 = vmatpush1.bf16.msra.mxu0 %v1636
        %2217 = vmatprep.subr.bf16.mxu0 %v1629
        %2218 = vmatpush1.bf16.msra.mxu0 %v1628
        %2219 = vmatprep.subr.bf16.mxu0 %v1621
        %2220 = vmatpush1.bf16.msra.mxu0 %v1620
        %2221 = vmatprep.subr.bf16.mxu0 %v1613
        %2222 = vmatpush1.bf16.msra.mxu0 %v1612
        %2223 = vmatprep.subr.bf16.mxu0 %v1733
        %2224 = vmatpush2.bf16.msra.mxu0 %v1732
        %2225 = vmatprep.subr.bf16.mxu0 %v1725
        %2226 = vmatpush2.bf16.msra.mxu0 %v1724
        %2227 = vmatprep.subr.bf16.mxu0 %v1717
        %2228 = vmatpush2.bf16.msra.mxu0 %v1716
        %2229 = vmatprep.subr.bf16.mxu0 %v1709
        %2230 = vmatpush2.bf16.msra.mxu0 %v1708
        %2231 = vmatprep.subr.bf16.mxu0 %v1701
        %2232 = vmatpush2.bf16.msra.mxu0 %v1700
        %2233 = vmatprep.subr.bf16.mxu0 %v1693
        %2234 = vmatpush2.bf16.msra.mxu0 %v1692
        %2235 = vmatprep.subr.bf16.mxu0 %v1685
        %2236 = vmatpush2.bf16.msra.mxu0 %v1684
        %2237 = vmatprep.subr.bf16.mxu0 %v1677
        %2238 = vmatpush2.bf16.msra.mxu0 %v1676
        %2239 = vmatprep.mubr.bf16.mxu0 %v707
        %2240 = vmatmul.mubr.bf16.gmra.mxu0 %v706
        %v2241 = vpop.f32.mrf.mxu0
        %v2242 = vadd.f32 %v2199, %v2241
        %v2243 = vpop.f32.mrf.mxu0
        %v2244 = vadd.f32 %v2201, %v2243
        %v2245 = vpop.f32.mrf.mxu0
        %v2246 = vadd.f32 %v2203, %v2245
        %v2247 = vpop.f32.mrf.mxu0
        %v2248 = vadd.f32 %v2205, %v2247
        %2249 = vdwg.mxu0
        %2250 = vmatprep.subr.bf16.mxu0 %v1543
        %2251 = vmatpush1.bf16.msra.mxu0 %v1542
        %2252 = vmatprep.subr.bf16.mxu0 %v1535
        %2253 = vmatpush1.bf16.msra.mxu0 %v1534
        %2254 = vmatprep.subr.bf16.mxu0 %v1527
        %2255 = vmatpush1.bf16.msra.mxu0 %v1526
        %2256 = vmatprep.subr.bf16.mxu0 %v1519
        %2257 = vmatpush1.bf16.msra.mxu0 %v1518
        %2258 = vmatprep.subr.bf16.mxu0 %v1511
        %2259 = vmatpush1.bf16.msra.mxu0 %v1510
        %2260 = vmatprep.subr.bf16.mxu0 %v1503
        %2261 = vmatpush1.bf16.msra.mxu0 %v1502
        %2262 = vmatprep.subr.bf16.mxu0 %v1495
        %2263 = vmatpush1.bf16.msra.mxu0 %v1494
        %2264 = vmatprep.subr.bf16.mxu0 %v1487
        %2265 = vmatpush1.bf16.msra.mxu0 %v1486
        %2266 = vmatprep.subr.bf16.mxu0 %v1607
        %2267 = vmatpush2.bf16.msra.mxu0 %v1606
        %2268 = vmatprep.subr.bf16.mxu0 %v1599
        %2269 = vmatpush2.bf16.msra.mxu0 %v1598
        %2270 = vmatprep.subr.bf16.mxu0 %v1591
        %2271 = vmatpush2.bf16.msra.mxu0 %v1590
        %2272 = vmatprep.subr.bf16.mxu0 %v1583
        %2273 = vmatpush2.bf16.msra.mxu0 %v1582
        %2274 = vmatprep.subr.bf16.mxu0 %v1575
        %2275 = vmatpush2.bf16.msra.mxu0 %v1574
        %2276 = vmatprep.subr.bf16.mxu0 %v1567
        %2277 = vmatpush2.bf16.msra.mxu0 %v1566
        %2278 = vmatprep.subr.bf16.mxu0 %v1559
        %2279 = vmatpush2.bf16.msra.mxu0 %v1558
        %2280 = vmatprep.subr.bf16.mxu0 %v1551
        %2281 = vmatpush2.bf16.msra.mxu0 %v1550
        %2282 = vmatprep.mubr.bf16.mxu0 %v705
        %2283 = vmatmul.mubr.bf16.gmra.mxu0 %v704
        %v2284 = vpop.f32.mrf.mxu0
        %v2285 = vadd.f32 %v679, %v2284
        %v2286 = vpop.f32.mrf.mxu0
        %v2287 = vadd.f32 %v683, %v2286
        %v2288 = vpop.f32.mrf.mxu0
        %v2289 = vadd.f32 %v679, %v2288
        %v2290 = vpop.f32.mrf.mxu0
        %v2291 = vadd.f32 %v683, %v2290
        %2292 = vdwg.mxu0
        %2293 = vmatprep.subr.bf16.mxu0 %v1671
        %2294 = vmatpush1.bf16.msra.mxu0 %v1670
        %2295 = vmatprep.subr.bf16.mxu0 %v1663
        %2296 = vmatpush1.bf16.msra.mxu0 %v1662
        %2297 = vmatprep.subr.bf16.mxu0 %v1655
        %2298 = vmatpush1.bf16.msra.mxu0 %v1654
        %2299 = vmatprep.subr.bf16.mxu0 %v1647
        %2300 = vmatpush1.bf16.msra.mxu0 %v1646
        %2301 = vmatprep.subr.bf16.mxu0 %v1639
        %2302 = vmatpush1.bf16.msra.mxu0 %v1638
        %2303 = vmatprep.subr.bf16.mxu0 %v1631
        %2304 = vmatpush1.bf16.msra.mxu0 %v1630
        %2305 = vmatprep.subr.bf16.mxu0 %v1623
        %2306 = vmatpush1.bf16.msra.mxu0 %v1622
        %2307 = vmatprep.subr.bf16.mxu0 %v1615
        %2308 = vmatpush1.bf16.msra.mxu0 %v1614
        %2309 = vmatprep.subr.bf16.mxu0 %v1735
        %2310 = vmatpush2.bf16.msra.mxu0 %v1734
        %2311 = vmatprep.subr.bf16.mxu0 %v1727
        %2312 = vmatpush2.bf16.msra.mxu0 %v1726
        %2313 = vmatprep.subr.bf16.mxu0 %v1719
        %2314 = vmatpush2.bf16.msra.mxu0 %v1718
        %2315 = vmatprep.subr.bf16.mxu0 %v1711
        %2316 = vmatpush2.bf16.msra.mxu0 %v1710
        %2317 = vmatprep.subr.bf16.mxu0 %v1703
        %2318 = vmatpush2.bf16.msra.mxu0 %v1702
        %2319 = vmatprep.subr.bf16.mxu0 %v1695
        %2320 = vmatpush2.bf16.msra.mxu0 %v1694
        %2321 = vmatprep.subr.bf16.mxu0 %v1687
        %2322 = vmatpush2.bf16.msra.mxu0 %v1686
        %2323 = vmatprep.subr.bf16.mxu0 %v1679
        %2324 = vmatpush2.bf16.msra.mxu0 %v1678
        %2325 = vmatprep.mubr.bf16.mxu0 %v707
        %2326 = vmatmul.mubr.bf16.gmra.mxu0 %v706
        %v2327 = vpop.f32.mrf.mxu0
        %v2328 = vadd.f32 %v2285, %v2327
        %v2329 = vpop.f32.mrf.mxu0
        %v2330 = vadd.f32 %v2287, %v2329
        %v2331 = vpop.f32.mrf.mxu0
        %v2332 = vadd.f32 %v2289, %v2331
        %v2333 = vpop.f32.mrf.mxu0
        %v2334 = vadd.f32 %v2291, %v2333
        %2335 = vdwg.mxu0
        %vm2336 = vcmp.ge.f32.partialorder %v2070, 0.0
        %vm2337 = vcmp.ge.f32.partialorder %v2072, 0.0
        %vm2338 = vcmp.ge.f32.partialorder %v2156, 0.0
        %vm2339 = vcmp.ge.f32.partialorder %v2158, 0.0
        %vm2340 = vcmp.ge.f32.partialorder %v2242, 0.0
        %vm2341 = vcmp.ge.f32.partialorder %v2244, 0.0
        %vm2342 = vcmp.ge.f32.partialorder %v2328, 0.0
        %vm2343 = vcmp.ge.f32.partialorder %v2330, 0.0
        %vm2344 = vcmp.ge.f32.partialorder %v2074, 0.0
        %vm2345 = vcmp.ge.f32.partialorder %v2076, 0.0
        %vm2346 = vcmp.ge.f32.partialorder %v2160, 0.0
        %vm2347 = vcmp.ge.f32.partialorder %v2162, 0.0
        %vm2348 = vcmp.ge.f32.partialorder %v2246, 0.0
        %vm2349 = vcmp.ge.f32.partialorder %v2248, 0.0
        %vm2350 = vcmp.ge.f32.partialorder %v2332, 0.0
        %vm2351 = vcmp.ge.f32.partialorder %v2334, 0.0
        %v2352 = vmul.f32 %v2070, 0.01
        %v2353 = vmul.f32 %v2072, 0.01
        %v2354 = vmul.f32 %v2156, 0.01
        %v2355 = vmul.f32 %v2158, 0.01
        %v2356 = vmul.f32 %v2242, 0.01
        %v2357 = vmul.f32 %v2244, 0.01
        %v2358 = vmul.f32 %v2328, 0.01
        %v2359 = vmul.f32 %v2330, 0.01
        %v2360 = vmul.f32 %v2074, 0.01
        %v2361 = vmul.f32 %v2076, 0.01
        %v2362 = vmul.f32 %v2160, 0.01
        %v2363 = vmul.f32 %v2162, 0.01
        %v2364 = vmul.f32 %v2246, 0.01
        %v2365 = vmul.f32 %v2248, 0.01
        %v2366 = vmul.f32 %v2332, 0.01
        %v2367 = vmul.f32 %v2334, 0.01
        %v2368 = vsel %vm2336, %v2070, %v2352
        %v2369 = vsel %vm2337, %v2072, %v2353
        %v2370 = vsel %vm2338, %v2156, %v2354
        %v2371 = vsel %vm2339, %v2158, %v2355
        %v2372 = vsel %vm2340, %v2242, %v2356
        %v2373 = vsel %vm2341, %v2244, %v2357
        %v2374 = vsel %vm2342, %v2328, %v2358
        %v2375 = vsel %vm2343, %v2330, %v2359
        %v2376 = vsel %vm2344, %v2074, %v2360
        %v2377 = vsel %vm2345, %v2076, %v2361
        %v2378 = vsel %vm2346, %v2160, %v2362
        %v2379 = vsel %vm2347, %v2162, %v2363
        %v2380 = vsel %vm2348, %v2246, %v2364
        %v2381 = vsel %vm2349, %v2248, %v2365
        %v2382 = vsel %vm2350, %v2332, %v2366
        %v2383 = vsel %vm2351, %v2334, %v2367
        %v2384 = vpack.c.bf16 %v2376, %v2368
        %v2385 = vpack.c.bf16 %v2377, %v2369
        %v2386 = vpack.c.bf16 %v2378, %v2370
        %v2387 = vpack.c.bf16 %v2379, %v2371
        %v2388 = vpack.c.bf16 %v2380, %v2372
        %v2389 = vpack.c.bf16 %v2381, %v2373
        %v2390 = vpack.c.bf16 %v2382, %v2374
        %v2391 = vpack.c.bf16 %v2383, %v2375
        %v2392 = vld [vmem:[%s331] sm:$0xff]
        %v2393 = vld [vmem:[%s331 + $0x8] sm:$0xff]
        %v2394 = vld [vmem:[%s331 + $0x10] sm:$0xff]
        %v2395 = vld [vmem:[%s331 + $0x18] sm:$0xff]
        %v2396 = vld [vmem:[%s331 + $0x20] sm:$0xff]
        %v2397 = vld [vmem:[%s331 + $0x28] sm:$0xff]
        %v2398 = vld [vmem:[%s331 + $0x30] sm:$0xff]
        %v2399 = vld [vmem:[%s331 + $0x38] sm:$0xff]
        %v2400 = vld [vmem:[%s331 + $0x40] sm:$0xff]
        %v2401 = vld [vmem:[%s331 + $0x48] sm:$0xff]
        %v2402 = vld [vmem:[%s331 + $0x50] sm:$0xff]
        %v2403 = vld [vmem:[%s331 + $0x58] sm:$0xff]
        %v2404 = vld [vmem:[%s331 + $0x60] sm:$0xff]
        %v2405 = vld [vmem:[%s331 + $0x68] sm:$0xff]
        %v2406 = vld [vmem:[%s331 + $0x70] sm:$0xff]
        %v2407 = vld [vmem:[%s331 + $0x78] sm:$0xff]
        %v2408 = vld [vmem:[%s331 + $0x80] sm:$0xff]
        %v2409 = vld [vmem:[%s331 + $0x88] sm:$0xff]
        %v2410 = vld [vmem:[%s331 + $0x90] sm:$0xff]
        %v2411 = vld [vmem:[%s331 + $0x98] sm:$0xff]
        %v2412 = vld [vmem:[%s331 + $0xa0] sm:$0xff]
        %v2413 = vld [vmem:[%s331 + $0xa8] sm:$0xff]
        %v2414 = vld [vmem:[%s331 + $0xb0] sm:$0xff]
        %v2415 = vld [vmem:[%s331 + $0xb8] sm:$0xff]
        %v2416 = vld [vmem:[%s331 + $0xc0] sm:$0xff]
        %v2417 = vld [vmem:[%s331 + $0xc8] sm:$0xff]
        %v2418 = vld [vmem:[%s331 + $0xd0] sm:$0xff]
        %v2419 = vld [vmem:[%s331 + $0xd8] sm:$0xff]
        %v2420 = vld [vmem:[%s331 + $0xe0] sm:$0xff]
        %v2421 = vld [vmem:[%s331 + $0xe8] sm:$0xff]
        %v2422 = vld [vmem:[%s331 + $0xf0] sm:$0xff]
        %v2423 = vld [vmem:[%s331 + $0xf8] sm:$0xff]
        %v2424 = vld [vmem:[%s331 + $0x100] sm:$0xff]
        %v2425 = vld [vmem:[%s331 + $0x108] sm:$0xff]
        %v2426 = vld [vmem:[%s331 + $0x110] sm:$0xff]
        %v2427 = vld [vmem:[%s331 + $0x118] sm:$0xff]
        %v2428 = vld [vmem:[%s331 + $0x120] sm:$0xff]
        %v2429 = vld [vmem:[%s331 + $0x128] sm:$0xff]
        %v2430 = vld [vmem:[%s331 + $0x130] sm:$0xff]
        %v2431 = vld [vmem:[%s331 + $0x138] sm:$0xff]
        %v2432 = vld [vmem:[%s331 + $0x140] sm:$0xff]
        %v2433 = vld [vmem:[%s331 + $0x148] sm:$0xff]
        %v2434 = vld [vmem:[%s331 + $0x150] sm:$0xff]
        %v2435 = vld [vmem:[%s331 + $0x158] sm:$0xff]
        %v2436 = vld [vmem:[%s331 + $0x160] sm:$0xff]
        %v2437 = vld [vmem:[%s331 + $0x168] sm:$0xff]
        %v2438 = vld [vmem:[%s331 + $0x170] sm:$0xff]
        %v2439 = vld [vmem:[%s331 + $0x178] sm:$0xff]
        %v2440 = vld [vmem:[%s331 + $0x180] sm:$0xff]
        %v2441 = vld [vmem:[%s331 + $0x188] sm:$0xff]
        %v2442 = vld [vmem:[%s331 + $0x190] sm:$0xff]
        %v2443 = vld [vmem:[%s331 + $0x198] sm:$0xff]
        %v2444 = vld [vmem:[%s331 + $0x1a0] sm:$0xff]
        %v2445 = vld [vmem:[%s331 + $0x1a8] sm:$0xff]
        %v2446 = vld [vmem:[%s331 + $0x1b0] sm:$0xff]
        %v2447 = vld [vmem:[%s331 + $0x1b8] sm:$0xff]
        %v2448 = vld [vmem:[%s331 + $0x1c0] sm:$0xff]
        %v2449 = vld [vmem:[%s331 + $0x1c8] sm:$0xff]
        %v2450 = vld [vmem:[%s331 + $0x1d0] sm:$0xff]
        %v2451 = vld [vmem:[%s331 + $0x1d8] sm:$0xff]
        %v2452 = vld [vmem:[%s331 + $0x1e0] sm:$0xff]
        %v2453 = vld [vmem:[%s331 + $0x1e8] sm:$0xff]
        %v2454 = vld [vmem:[%s331 + $0x1f0] sm:$0xff]
        %v2455 = vld [vmem:[%s331 + $0x1f8] sm:$0xff]
        %v2456 = vld [vmem:[%s331 + $0x200] sm:$0xff]
        %v2457 = vld [vmem:[%s331 + $0x208] sm:$0xff]
        %v2458 = vld [vmem:[%s331 + $0x210] sm:$0xff]
        %v2459 = vld [vmem:[%s331 + $0x218] sm:$0xff]
        %v2460 = vld [vmem:[%s331 + $0x220] sm:$0xff]
        %v2461 = vld [vmem:[%s331 + $0x228] sm:$0xff]
        %v2462 = vld [vmem:[%s331 + $0x230] sm:$0xff]
        %v2463 = vld [vmem:[%s331 + $0x238] sm:$0xff]
        %v2464 = vld [vmem:[%s331 + $0x240] sm:$0xff]
        %v2465 = vld [vmem:[%s331 + $0x248] sm:$0xff]
        %v2466 = vld [vmem:[%s331 + $0x250] sm:$0xff]
        %v2467 = vld [vmem:[%s331 + $0x258] sm:$0xff]
        %v2468 = vld [vmem:[%s331 + $0x260] sm:$0xff]
        %v2469 = vld [vmem:[%s331 + $0x268] sm:$0xff]
        %v2470 = vld [vmem:[%s331 + $0x270] sm:$0xff]
        %v2471 = vld [vmem:[%s331 + $0x278] sm:$0xff]
        %v2472 = vld [vmem:[%s331 + $0x280] sm:$0xff]
        %v2473 = vld [vmem:[%s331 + $0x288] sm:$0xff]
        %v2474 = vld [vmem:[%s331 + $0x290] sm:$0xff]
        %v2475 = vld [vmem:[%s331 + $0x298] sm:$0xff]
        %v2476 = vld [vmem:[%s331 + $0x2a0] sm:$0xff]
        %v2477 = vld [vmem:[%s331 + $0x2a8] sm:$0xff]
        %v2478 = vld [vmem:[%s331 + $0x2b0] sm:$0xff]
        %v2479 = vld [vmem:[%s331 + $0x2b8] sm:$0xff]
        %v2480 = vld [vmem:[%s331 + $0x2c0] sm:$0xff]
        %v2481 = vld [vmem:[%s331 + $0x2c8] sm:$0xff]
        %v2482 = vld [vmem:[%s331 + $0x2d0] sm:$0xff]
        %v2483 = vld [vmem:[%s331 + $0x2d8] sm:$0xff]
        %v2484 = vld [vmem:[%s331 + $0x2e0] sm:$0xff]
        %v2485 = vld [vmem:[%s331 + $0x2e8] sm:$0xff]
        %v2486 = vld [vmem:[%s331 + $0x2f0] sm:$0xff]
        %v2487 = vld [vmem:[%s331 + $0x2f8] sm:$0xff]
        %v2488 = vld [vmem:[%s331 + $0x300] sm:$0xff]
        %v2489 = vld [vmem:[%s331 + $0x308] sm:$0xff]
        %v2490 = vld [vmem:[%s331 + $0x310] sm:$0xff]
        %v2491 = vld [vmem:[%s331 + $0x318] sm:$0xff]
        %v2492 = vld [vmem:[%s331 + $0x320] sm:$0xff]
        %v2493 = vld [vmem:[%s331 + $0x328] sm:$0xff]
        %v2494 = vld [vmem:[%s331 + $0x330] sm:$0xff]
        %v2495 = vld [vmem:[%s331 + $0x338] sm:$0xff]
        %v2496 = vld [vmem:[%s331 + $0x340] sm:$0xff]
        %v2497 = vld [vmem:[%s331 + $0x348] sm:$0xff]
        %v2498 = vld [vmem:[%s331 + $0x350] sm:$0xff]
        %v2499 = vld [vmem:[%s331 + $0x358] sm:$0xff]
        %v2500 = vld [vmem:[%s331 + $0x360] sm:$0xff]
        %v2501 = vld [vmem:[%s331 + $0x368] sm:$0xff]
        %v2502 = vld [vmem:[%s331 + $0x370] sm:$0xff]
        %v2503 = vld [vmem:[%s331 + $0x378] sm:$0xff]
        %v2504 = vld [vmem:[%s331 + $0x380] sm:$0xff]
        %v2505 = vld [vmem:[%s331 + $0x388] sm:$0xff]
        %v2506 = vld [vmem:[%s331 + $0x390] sm:$0xff]
        %v2507 = vld [vmem:[%s331 + $0x398] sm:$0xff]
        %v2508 = vld [vmem:[%s331 + $0x3a0] sm:$0xff]
        %v2509 = vld [vmem:[%s331 + $0x3a8] sm:$0xff]
        %v2510 = vld [vmem:[%s331 + $0x3b0] sm:$0xff]
        %v2511 = vld [vmem:[%s331 + $0x3b8] sm:$0xff]
        %v2512 = vld [vmem:[%s331 + $0x3c0] sm:$0xff]
        %v2513 = vld [vmem:[%s331 + $0x3c8] sm:$0xff]
        %v2514 = vld [vmem:[%s331 + $0x3d0] sm:$0xff]
        %v2515 = vld [vmem:[%s331 + $0x3d8] sm:$0xff]
        %v2516 = vld [vmem:[%s331 + $0x3e0] sm:$0xff]
        %v2517 = vld [vmem:[%s331 + $0x3e8] sm:$0xff]
        %v2518 = vld [vmem:[%s331 + $0x3f0] sm:$0xff]
        %v2519 = vld [vmem:[%s331 + $0x3f8] sm:$0xff]
        %v2520 = vld [vmem:[%s331 + $0x400] sm:$0xff]
        %v2521 = vld [vmem:[%s331 + $0x408] sm:$0xff]
        %v2522 = vld [vmem:[%s331 + $0x410] sm:$0xff]
        %v2523 = vld [vmem:[%s331 + $0x418] sm:$0xff]
        %v2524 = vld [vmem:[%s331 + $0x420] sm:$0xff]
        %v2525 = vld [vmem:[%s331 + $0x428] sm:$0xff]
        %v2526 = vld [vmem:[%s331 + $0x430] sm:$0xff]
        %v2527 = vld [vmem:[%s331 + $0x438] sm:$0xff]
        %v2528 = vld [vmem:[%s331 + $0x440] sm:$0xff]
        %v2529 = vld [vmem:[%s331 + $0x448] sm:$0xff]
        %v2530 = vld [vmem:[%s331 + $0x450] sm:$0xff]
        %v2531 = vld [vmem:[%s331 + $0x458] sm:$0xff]
        %v2532 = vld [vmem:[%s331 + $0x460] sm:$0xff]
        %v2533 = vld [vmem:[%s331 + $0x468] sm:$0xff]
        %v2534 = vld [vmem:[%s331 + $0x470] sm:$0xff]
        %v2535 = vld [vmem:[%s331 + $0x478] sm:$0xff]
        %v2536 = vld [vmem:[%s331 + $0x480] sm:$0xff]
        %v2537 = vld [vmem:[%s331 + $0x488] sm:$0xff]
        %v2538 = vld [vmem:[%s331 + $0x490] sm:$0xff]
        %v2539 = vld [vmem:[%s331 + $0x498] sm:$0xff]
        %v2540 = vld [vmem:[%s331 + $0x4a0] sm:$0xff]
        %v2541 = vld [vmem:[%s331 + $0x4a8] sm:$0xff]
        %v2542 = vld [vmem:[%s331 + $0x4b0] sm:$0xff]
        %v2543 = vld [vmem:[%s331 + $0x4b8] sm:$0xff]
        %v2544 = vld [vmem:[%s331 + $0x4c0] sm:$0xff]
        %v2545 = vld [vmem:[%s331 + $0x4c8] sm:$0xff]
        %v2546 = vld [vmem:[%s331 + $0x4d0] sm:$0xff]
        %v2547 = vld [vmem:[%s331 + $0x4d8] sm:$0xff]
        %v2548 = vld [vmem:[%s331 + $0x4e0] sm:$0xff]
        %v2549 = vld [vmem:[%s331 + $0x4e8] sm:$0xff]
        %v2550 = vld [vmem:[%s331 + $0x4f0] sm:$0xff]
        %v2551 = vld [vmem:[%s331 + $0x4f8] sm:$0xff]
        %v2552 = vld [vmem:[%s331 + $0x500] sm:$0xff]
        %v2553 = vld [vmem:[%s331 + $0x508] sm:$0xff]
        %v2554 = vld [vmem:[%s331 + $0x510] sm:$0xff]
        %v2555 = vld [vmem:[%s331 + $0x518] sm:$0xff]
        %v2556 = vld [vmem:[%s331 + $0x520] sm:$0xff]
        %v2557 = vld [vmem:[%s331 + $0x528] sm:$0xff]
        %v2558 = vld [vmem:[%s331 + $0x530] sm:$0xff]
        %v2559 = vld [vmem:[%s331 + $0x538] sm:$0xff]
        %v2560 = vld [vmem:[%s331 + $0x540] sm:$0xff]
        %v2561 = vld [vmem:[%s331 + $0x548] sm:$0xff]
        %v2562 = vld [vmem:[%s331 + $0x550] sm:$0xff]
        %v2563 = vld [vmem:[%s331 + $0x558] sm:$0xff]
        %v2564 = vld [vmem:[%s331 + $0x560] sm:$0xff]
        %v2565 = vld [vmem:[%s331 + $0x568] sm:$0xff]
        %v2566 = vld [vmem:[%s331 + $0x570] sm:$0xff]
        %v2567 = vld [vmem:[%s331 + $0x578] sm:$0xff]
        %v2568 = vld [vmem:[%s331 + $0x580] sm:$0xff]
        %v2569 = vld [vmem:[%s331 + $0x588] sm:$0xff]
        %v2570 = vld [vmem:[%s331 + $0x590] sm:$0xff]
        %v2571 = vld [vmem:[%s331 + $0x598] sm:$0xff]
        %v2572 = vld [vmem:[%s331 + $0x5a0] sm:$0xff]
        %v2573 = vld [vmem:[%s331 + $0x5a8] sm:$0xff]
        %v2574 = vld [vmem:[%s331 + $0x5b0] sm:$0xff]
        %v2575 = vld [vmem:[%s331 + $0x5b8] sm:$0xff]
        %v2576 = vld [vmem:[%s331 + $0x5c0] sm:$0xff]
        %v2577 = vld [vmem:[%s331 + $0x5c8] sm:$0xff]
        %v2578 = vld [vmem:[%s331 + $0x5d0] sm:$0xff]
        %v2579 = vld [vmem:[%s331 + $0x5d8] sm:$0xff]
        %v2580 = vld [vmem:[%s331 + $0x5e0] sm:$0xff]
        %v2581 = vld [vmem:[%s331 + $0x5e8] sm:$0xff]
        %v2582 = vld [vmem:[%s331 + $0x5f0] sm:$0xff]
        %v2583 = vld [vmem:[%s331 + $0x5f8] sm:$0xff]
        %v2584 = vld [vmem:[%s331 + $0x600] sm:$0xff]
        %v2585 = vld [vmem:[%s331 + $0x608] sm:$0xff]
        %v2586 = vld [vmem:[%s331 + $0x610] sm:$0xff]
        %v2587 = vld [vmem:[%s331 + $0x618] sm:$0xff]
        %v2588 = vld [vmem:[%s331 + $0x620] sm:$0xff]
        %v2589 = vld [vmem:[%s331 + $0x628] sm:$0xff]
        %v2590 = vld [vmem:[%s331 + $0x630] sm:$0xff]
        %v2591 = vld [vmem:[%s331 + $0x638] sm:$0xff]
        %v2592 = vld [vmem:[%s331 + $0x640] sm:$0xff]
        %v2593 = vld [vmem:[%s331 + $0x648] sm:$0xff]
        %v2594 = vld [vmem:[%s331 + $0x650] sm:$0xff]
        %v2595 = vld [vmem:[%s331 + $0x658] sm:$0xff]
        %v2596 = vld [vmem:[%s331 + $0x660] sm:$0xff]
        %v2597 = vld [vmem:[%s331 + $0x668] sm:$0xff]
        %v2598 = vld [vmem:[%s331 + $0x670] sm:$0xff]
        %v2599 = vld [vmem:[%s331 + $0x678] sm:$0xff]
        %v2600 = vld [vmem:[%s331 + $0x680] sm:$0xff]
        %v2601 = vld [vmem:[%s331 + $0x688] sm:$0xff]
        %v2602 = vld [vmem:[%s331 + $0x690] sm:$0xff]
        %v2603 = vld [vmem:[%s331 + $0x698] sm:$0xff]
        %v2604 = vld [vmem:[%s331 + $0x6a0] sm:$0xff]
        %v2605 = vld [vmem:[%s331 + $0x6a8] sm:$0xff]
        %v2606 = vld [vmem:[%s331 + $0x6b0] sm:$0xff]
        %v2607 = vld [vmem:[%s331 + $0x6b8] sm:$0xff]
        %v2608 = vld [vmem:[%s331 + $0x6c0] sm:$0xff]
        %v2609 = vld [vmem:[%s331 + $0x6c8] sm:$0xff]
        %v2610 = vld [vmem:[%s331 + $0x6d0] sm:$0xff]
        %v2611 = vld [vmem:[%s331 + $0x6d8] sm:$0xff]
        %v2612 = vld [vmem:[%s331 + $0x6e0] sm:$0xff]
        %v2613 = vld [vmem:[%s331 + $0x6e8] sm:$0xff]
        %v2614 = vld [vmem:[%s331 + $0x6f0] sm:$0xff]
        %v2615 = vld [vmem:[%s331 + $0x6f8] sm:$0xff]
        %v2616 = vld [vmem:[%s331 + $0x700] sm:$0xff]
        %v2617 = vld [vmem:[%s331 + $0x708] sm:$0xff]
        %v2618 = vld [vmem:[%s331 + $0x710] sm:$0xff]
        %v2619 = vld [vmem:[%s331 + $0x718] sm:$0xff]
        %v2620 = vld [vmem:[%s331 + $0x720] sm:$0xff]
        %v2621 = vld [vmem:[%s331 + $0x728] sm:$0xff]
        %v2622 = vld [vmem:[%s331 + $0x730] sm:$0xff]
        %v2623 = vld [vmem:[%s331 + $0x738] sm:$0xff]
        %v2624 = vld [vmem:[%s331 + $0x740] sm:$0xff]
        %v2625 = vld [vmem:[%s331 + $0x748] sm:$0xff]
        %v2626 = vld [vmem:[%s331 + $0x750] sm:$0xff]
        %v2627 = vld [vmem:[%s331 + $0x758] sm:$0xff]
        %v2628 = vld [vmem:[%s331 + $0x760] sm:$0xff]
        %v2629 = vld [vmem:[%s331 + $0x768] sm:$0xff]
        %v2630 = vld [vmem:[%s331 + $0x770] sm:$0xff]
        %v2631 = vld [vmem:[%s331 + $0x778] sm:$0xff]
        %v2632 = vld [vmem:[%s331 + $0x780] sm:$0xff]
        %v2633 = vld [vmem:[%s331 + $0x788] sm:$0xff]
        %v2634 = vld [vmem:[%s331 + $0x790] sm:$0xff]
        %v2635 = vld [vmem:[%s331 + $0x798] sm:$0xff]
        %v2636 = vld [vmem:[%s331 + $0x7a0] sm:$0xff]
        %v2637 = vld [vmem:[%s331 + $0x7a8] sm:$0xff]
        %v2638 = vld [vmem:[%s331 + $0x7b0] sm:$0xff]
        %v2639 = vld [vmem:[%s331 + $0x7b8] sm:$0xff]
        %v2640 = vld [vmem:[%s331 + $0x7c0] sm:$0xff]
        %v2641 = vld [vmem:[%s331 + $0x7c8] sm:$0xff]
        %v2642 = vld [vmem:[%s331 + $0x7d0] sm:$0xff]
        %v2643 = vld [vmem:[%s331 + $0x7d8] sm:$0xff]
        %v2644 = vld [vmem:[%s331 + $0x7e0] sm:$0xff]
        %v2645 = vld [vmem:[%s331 + $0x7e8] sm:$0xff]
        %v2646 = vld [vmem:[%s331 + $0x7f0] sm:$0xff]
        %v2647 = vld [vmem:[%s331 + $0x7f8] sm:$0xff]
        %v2648 = vld [vmem:[%s331 + $0x800] sm:$0xff]
        %v2649 = vld [vmem:[%s331 + $0x808] sm:$0xff]
        %v2650 = vld [vmem:[%s331 + $0x810] sm:$0xff]
        %v2651 = vld [vmem:[%s331 + $0x818] sm:$0xff]
        %v2652 = vld [vmem:[%s331 + $0x820] sm:$0xff]
        %v2653 = vld [vmem:[%s331 + $0x828] sm:$0xff]
        %v2654 = vld [vmem:[%s331 + $0x830] sm:$0xff]
        %v2655 = vld [vmem:[%s331 + $0x838] sm:$0xff]
        %v2656 = vld [vmem:[%s331 + $0x840] sm:$0xff]
        %v2657 = vld [vmem:[%s331 + $0x848] sm:$0xff]
        %v2658 = vld [vmem:[%s331 + $0x850] sm:$0xff]
        %v2659 = vld [vmem:[%s331 + $0x858] sm:$0xff]
        %v2660 = vld [vmem:[%s331 + $0x860] sm:$0xff]
        %v2661 = vld [vmem:[%s331 + $0x868] sm:$0xff]
        %v2662 = vld [vmem:[%s331 + $0x870] sm:$0xff]
        %v2663 = vld [vmem:[%s331 + $0x878] sm:$0xff]
        %v2664 = vld [vmem:[%s331 + $0x880] sm:$0xff]
        %v2665 = vld [vmem:[%s331 + $0x888] sm:$0xff]
        %v2666 = vld [vmem:[%s331 + $0x890] sm:$0xff]
        %v2667 = vld [vmem:[%s331 + $0x898] sm:$0xff]
        %v2668 = vld [vmem:[%s331 + $0x8a0] sm:$0xff]
        %v2669 = vld [vmem:[%s331 + $0x8a8] sm:$0xff]
        %v2670 = vld [vmem:[%s331 + $0x8b0] sm:$0xff]
        %v2671 = vld [vmem:[%s331 + $0x8b8] sm:$0xff]
        %v2672 = vld [vmem:[%s331 + $0x8c0] sm:$0xff]
        %v2673 = vld [vmem:[%s331 + $0x8c8] sm:$0xff]
        %v2674 = vld [vmem:[%s331 + $0x8d0] sm:$0xff]
        %v2675 = vld [vmem:[%s331 + $0x8d8] sm:$0xff]
        %v2676 = vld [vmem:[%s331 + $0x8e0] sm:$0xff]
        %v2677 = vld [vmem:[%s331 + $0x8e8] sm:$0xff]
        %v2678 = vld [vmem:[%s331 + $0x8f0] sm:$0xff]
        %v2679 = vld [vmem:[%s331 + $0x8f8] sm:$0xff]
        %v2680 = vld [vmem:[%s331 + $0x900] sm:$0xff]
        %v2681 = vld [vmem:[%s331 + $0x908] sm:$0xff]
        %v2682 = vld [vmem:[%s331 + $0x910] sm:$0xff]
        %v2683 = vld [vmem:[%s331 + $0x918] sm:$0xff]
        %v2684 = vld [vmem:[%s331 + $0x920] sm:$0xff]
        %v2685 = vld [vmem:[%s331 + $0x928] sm:$0xff]
        %v2686 = vld [vmem:[%s331 + $0x930] sm:$0xff]
        %v2687 = vld [vmem:[%s331 + $0x938] sm:$0xff]
        %v2688 = vld [vmem:[%s331 + $0x940] sm:$0xff]
        %v2689 = vld [vmem:[%s331 + $0x948] sm:$0xff]
        %v2690 = vld [vmem:[%s331 + $0x950] sm:$0xff]
        %v2691 = vld [vmem:[%s331 + $0x958] sm:$0xff]
        %v2692 = vld [vmem:[%s331 + $0x960] sm:$0xff]
        %v2693 = vld [vmem:[%s331 + $0x968] sm:$0xff]
        %v2694 = vld [vmem:[%s331 + $0x970] sm:$0xff]
        %v2695 = vld [vmem:[%s331 + $0x978] sm:$0xff]
        %v2696 = vld [vmem:[%s331 + $0x980] sm:$0xff]
        %v2697 = vld [vmem:[%s331 + $0x988] sm:$0xff]
        %v2698 = vld [vmem:[%s331 + $0x990] sm:$0xff]
        %v2699 = vld [vmem:[%s331 + $0x998] sm:$0xff]
        %v2700 = vld [vmem:[%s331 + $0x9a0] sm:$0xff]
        %v2701 = vld [vmem:[%s331 + $0x9a8] sm:$0xff]
        %v2702 = vld [vmem:[%s331 + $0x9b0] sm:$0xff]
        %v2703 = vld [vmem:[%s331 + $0x9b8] sm:$0xff]
        %v2704 = vld [vmem:[%s331 + $0x9c0] sm:$0xff]
        %v2705 = vld [vmem:[%s331 + $0x9c8] sm:$0xff]
        %v2706 = vld [vmem:[%s331 + $0x9d0] sm:$0xff]
        %v2707 = vld [vmem:[%s331 + $0x9d8] sm:$0xff]
        %v2708 = vld [vmem:[%s331 + $0x9e0] sm:$0xff]
        %v2709 = vld [vmem:[%s331 + $0x9e8] sm:$0xff]
        %v2710 = vld [vmem:[%s331 + $0x9f0] sm:$0xff]
        %v2711 = vld [vmem:[%s331 + $0x9f8] sm:$0xff]
        %v2712 = vld [vmem:[%s331 + $0xa00] sm:$0xff]
        %v2713 = vld [vmem:[%s331 + $0xa08] sm:$0xff]
        %v2714 = vld [vmem:[%s331 + $0xa10] sm:$0xff]
        %v2715 = vld [vmem:[%s331 + $0xa18] sm:$0xff]
        %v2716 = vld [vmem:[%s331 + $0xa20] sm:$0xff]
        %v2717 = vld [vmem:[%s331 + $0xa28] sm:$0xff]
        %v2718 = vld [vmem:[%s331 + $0xa30] sm:$0xff]
        %v2719 = vld [vmem:[%s331 + $0xa38] sm:$0xff]
        %v2720 = vld [vmem:[%s331 + $0xa40] sm:$0xff]
        %v2721 = vld [vmem:[%s331 + $0xa48] sm:$0xff]
        %v2722 = vld [vmem:[%s331 + $0xa50] sm:$0xff]
        %v2723 = vld [vmem:[%s331 + $0xa58] sm:$0xff]
        %v2724 = vld [vmem:[%s331 + $0xa60] sm:$0xff]
        %v2725 = vld [vmem:[%s331 + $0xa68] sm:$0xff]
        %v2726 = vld [vmem:[%s331 + $0xa70] sm:$0xff]
        %v2727 = vld [vmem:[%s331 + $0xa78] sm:$0xff]
        %v2728 = vld [vmem:[%s331 + $0xa80] sm:$0xff]
        %v2729 = vld [vmem:[%s331 + $0xa88] sm:$0xff]
        %v2730 = vld [vmem:[%s331 + $0xa90] sm:$0xff]
        %v2731 = vld [vmem:[%s331 + $0xa98] sm:$0xff]
        %v2732 = vld [vmem:[%s331 + $0xaa0] sm:$0xff]
        %v2733 = vld [vmem:[%s331 + $0xaa8] sm:$0xff]
        %v2734 = vld [vmem:[%s331 + $0xab0] sm:$0xff]
        %v2735 = vld [vmem:[%s331 + $0xab8] sm:$0xff]
        %v2736 = vld [vmem:[%s331 + $0xac0] sm:$0xff]
        %v2737 = vld [vmem:[%s331 + $0xac8] sm:$0xff]
        %v2738 = vld [vmem:[%s331 + $0xad0] sm:$0xff]
        %v2739 = vld [vmem:[%s331 + $0xad8] sm:$0xff]
        %v2740 = vld [vmem:[%s331 + $0xae0] sm:$0xff]
        %v2741 = vld [vmem:[%s331 + $0xae8] sm:$0xff]
        %v2742 = vld [vmem:[%s331 + $0xaf0] sm:$0xff]
        %v2743 = vld [vmem:[%s331 + $0xaf8] sm:$0xff]
        %v2744 = vld [vmem:[%s331 + $0xb00] sm:$0xff]
        %v2745 = vld [vmem:[%s331 + $0xb08] sm:$0xff]
        %v2746 = vld [vmem:[%s331 + $0xb10] sm:$0xff]
        %v2747 = vld [vmem:[%s331 + $0xb18] sm:$0xff]
        %v2748 = vld [vmem:[%s331 + $0xb20] sm:$0xff]
        %v2749 = vld [vmem:[%s331 + $0xb28] sm:$0xff]
        %v2750 = vld [vmem:[%s331 + $0xb30] sm:$0xff]
        %v2751 = vld [vmem:[%s331 + $0xb38] sm:$0xff]
        %v2752 = vld [vmem:[%s331 + $0xb40] sm:$0xff]
        %v2753 = vld [vmem:[%s331 + $0xb48] sm:$0xff]
        %v2754 = vld [vmem:[%s331 + $0xb50] sm:$0xff]
        %v2755 = vld [vmem:[%s331 + $0xb58] sm:$0xff]
        %v2756 = vld [vmem:[%s331 + $0xb60] sm:$0xff]
        %v2757 = vld [vmem:[%s331 + $0xb68] sm:$0xff]
        %v2758 = vld [vmem:[%s331 + $0xb70] sm:$0xff]
        %v2759 = vld [vmem:[%s331 + $0xb78] sm:$0xff]
        %v2760 = vld [vmem:[%s331 + $0xb80] sm:$0xff]
        %v2761 = vld [vmem:[%s331 + $0xb88] sm:$0xff]
        %v2762 = vld [vmem:[%s331 + $0xb90] sm:$0xff]
        %v2763 = vld [vmem:[%s331 + $0xb98] sm:$0xff]
        %v2764 = vld [vmem:[%s331 + $0xba0] sm:$0xff]
        %v2765 = vld [vmem:[%s331 + $0xba8] sm:$0xff]
        %v2766 = vld [vmem:[%s331 + $0xbb0] sm:$0xff]
        %v2767 = vld [vmem:[%s331 + $0xbb8] sm:$0xff]
        %v2768 = vld [vmem:[%s331 + $0xbc0] sm:$0xff]
        %v2769 = vld [vmem:[%s331 + $0xbc8] sm:$0xff]
        %v2770 = vld [vmem:[%s331 + $0xbd0] sm:$0xff]
        %v2771 = vld [vmem:[%s331 + $0xbd8] sm:$0xff]
        %v2772 = vld [vmem:[%s331 + $0xbe0] sm:$0xff]
        %v2773 = vld [vmem:[%s331 + $0xbe8] sm:$0xff]
        %v2774 = vld [vmem:[%s331 + $0xbf0] sm:$0xff]
        %v2775 = vld [vmem:[%s331 + $0xbf8] sm:$0xff]
        %v2776 = vld [vmem:[%s331 + $0xc00] sm:$0xff]
        %v2777 = vld [vmem:[%s331 + $0xc08] sm:$0xff]
        %v2778 = vld [vmem:[%s331 + $0xc10] sm:$0xff]
        %v2779 = vld [vmem:[%s331 + $0xc18] sm:$0xff]
        %v2780 = vld [vmem:[%s331 + $0xc20] sm:$0xff]
        %v2781 = vld [vmem:[%s331 + $0xc28] sm:$0xff]
        %v2782 = vld [vmem:[%s331 + $0xc30] sm:$0xff]
        %v2783 = vld [vmem:[%s331 + $0xc38] sm:$0xff]
        %v2784 = vld [vmem:[%s331 + $0xc40] sm:$0xff]
        %v2785 = vld [vmem:[%s331 + $0xc48] sm:$0xff]
        %v2786 = vld [vmem:[%s331 + $0xc50] sm:$0xff]
        %v2787 = vld [vmem:[%s331 + $0xc58] sm:$0xff]
        %v2788 = vld [vmem:[%s331 + $0xc60] sm:$0xff]
        %v2789 = vld [vmem:[%s331 + $0xc68] sm:$0xff]
        %v2790 = vld [vmem:[%s331 + $0xc70] sm:$0xff]
        %v2791 = vld [vmem:[%s331 + $0xc78] sm:$0xff]
        %v2792 = vld [vmem:[%s331 + $0xc80] sm:$0xff]
        %v2793 = vld [vmem:[%s331 + $0xc88] sm:$0xff]
        %v2794 = vld [vmem:[%s331 + $0xc90] sm:$0xff]
        %v2795 = vld [vmem:[%s331 + $0xc98] sm:$0xff]
        %v2796 = vld [vmem:[%s331 + $0xca0] sm:$0xff]
        %v2797 = vld [vmem:[%s331 + $0xca8] sm:$0xff]
        %v2798 = vld [vmem:[%s331 + $0xcb0] sm:$0xff]
        %v2799 = vld [vmem:[%s331 + $0xcb8] sm:$0xff]
        %v2800 = vld [vmem:[%s331 + $0xcc0] sm:$0xff]
        %v2801 = vld [vmem:[%s331 + $0xcc8] sm:$0xff]
        %v2802 = vld [vmem:[%s331 + $0xcd0] sm:$0xff]
        %v2803 = vld [vmem:[%s331 + $0xcd8] sm:$0xff]
        %v2804 = vld [vmem:[%s331 + $0xce0] sm:$0xff]
        %v2805 = vld [vmem:[%s331 + $0xce8] sm:$0xff]
        %v2806 = vld [vmem:[%s331 + $0xcf0] sm:$0xff]
        %v2807 = vld [vmem:[%s331 + $0xcf8] sm:$0xff]
        %v2808 = vld [vmem:[%s331 + $0xd00] sm:$0xff]
        %v2809 = vld [vmem:[%s331 + $0xd08] sm:$0xff]
        %v2810 = vld [vmem:[%s331 + $0xd10] sm:$0xff]
        %v2811 = vld [vmem:[%s331 + $0xd18] sm:$0xff]
        %v2812 = vld [vmem:[%s331 + $0xd20] sm:$0xff]
        %v2813 = vld [vmem:[%s331 + $0xd28] sm:$0xff]
        %v2814 = vld [vmem:[%s331 + $0xd30] sm:$0xff]
        %v2815 = vld [vmem:[%s331 + $0xd38] sm:$0xff]
        %v2816 = vld [vmem:[%s331 + $0xd40] sm:$0xff]
        %v2817 = vld [vmem:[%s331 + $0xd48] sm:$0xff]
        %v2818 = vld [vmem:[%s331 + $0xd50] sm:$0xff]
        %v2819 = vld [vmem:[%s331 + $0xd58] sm:$0xff]
        %v2820 = vld [vmem:[%s331 + $0xd60] sm:$0xff]
        %v2821 = vld [vmem:[%s331 + $0xd68] sm:$0xff]
        %v2822 = vld [vmem:[%s331 + $0xd70] sm:$0xff]
        %v2823 = vld [vmem:[%s331 + $0xd78] sm:$0xff]
        %v2824 = vld [vmem:[%s331 + $0xd80] sm:$0xff]
        %v2825 = vld [vmem:[%s331 + $0xd88] sm:$0xff]
        %v2826 = vld [vmem:[%s331 + $0xd90] sm:$0xff]
        %v2827 = vld [vmem:[%s331 + $0xd98] sm:$0xff]
        %v2828 = vld [vmem:[%s331 + $0xda0] sm:$0xff]
        %v2829 = vld [vmem:[%s331 + $0xda8] sm:$0xff]
        %v2830 = vld [vmem:[%s331 + $0xdb0] sm:$0xff]
        %v2831 = vld [vmem:[%s331 + $0xdb8] sm:$0xff]
        %v2832 = vld [vmem:[%s331 + $0xdc0] sm:$0xff]
        %v2833 = vld [vmem:[%s331 + $0xdc8] sm:$0xff]
        %v2834 = vld [vmem:[%s331 + $0xdd0] sm:$0xff]
        %v2835 = vld [vmem:[%s331 + $0xdd8] sm:$0xff]
        %v2836 = vld [vmem:[%s331 + $0xde0] sm:$0xff]
        %v2837 = vld [vmem:[%s331 + $0xde8] sm:$0xff]
        %v2838 = vld [vmem:[%s331 + $0xdf0] sm:$0xff]
        %v2839 = vld [vmem:[%s331 + $0xdf8] sm:$0xff]
        %v2840 = vld [vmem:[%s331 + $0xe00] sm:$0xff]
        %v2841 = vld [vmem:[%s331 + $0xe08] sm:$0xff]
        %v2842 = vld [vmem:[%s331 + $0xe10] sm:$0xff]
        %v2843 = vld [vmem:[%s331 + $0xe18] sm:$0xff]
        %v2844 = vld [vmem:[%s331 + $0xe20] sm:$0xff]
        %v2845 = vld [vmem:[%s331 + $0xe28] sm:$0xff]
        %v2846 = vld [vmem:[%s331 + $0xe30] sm:$0xff]
        %v2847 = vld [vmem:[%s331 + $0xe38] sm:$0xff]
        %v2848 = vld [vmem:[%s331 + $0xe40] sm:$0xff]
        %v2849 = vld [vmem:[%s331 + $0xe48] sm:$0xff]
        %v2850 = vld [vmem:[%s331 + $0xe50] sm:$0xff]
        %v2851 = vld [vmem:[%s331 + $0xe58] sm:$0xff]
        %v2852 = vld [vmem:[%s331 + $0xe60] sm:$0xff]
        %v2853 = vld [vmem:[%s331 + $0xe68] sm:$0xff]
        %v2854 = vld [vmem:[%s331 + $0xe70] sm:$0xff]
        %v2855 = vld [vmem:[%s331 + $0xe78] sm:$0xff]
        %v2856 = vld [vmem:[%s331 + $0xe80] sm:$0xff]
        %v2857 = vld [vmem:[%s331 + $0xe88] sm:$0xff]
        %v2858 = vld [vmem:[%s331 + $0xe90] sm:$0xff]
        %v2859 = vld [vmem:[%s331 + $0xe98] sm:$0xff]
        %v2860 = vld [vmem:[%s331 + $0xea0] sm:$0xff]
        %v2861 = vld [vmem:[%s331 + $0xea8] sm:$0xff]
        %v2862 = vld [vmem:[%s331 + $0xeb0] sm:$0xff]
        %v2863 = vld [vmem:[%s331 + $0xeb8] sm:$0xff]
        %v2864 = vld [vmem:[%s331 + $0xec0] sm:$0xff]
        %v2865 = vld [vmem:[%s331 + $0xec8] sm:$0xff]
        %v2866 = vld [vmem:[%s331 + $0xed0] sm:$0xff]
        %v2867 = vld [vmem:[%s331 + $0xed8] sm:$0xff]
        %v2868 = vld [vmem:[%s331 + $0xee0] sm:$0xff]
        %v2869 = vld [vmem:[%s331 + $0xee8] sm:$0xff]
        %v2870 = vld [vmem:[%s331 + $0xef0] sm:$0xff]
        %v2871 = vld [vmem:[%s331 + $0xef8] sm:$0xff]
        %v2872 = vld [vmem:[%s331 + $0xf00] sm:$0xff]
        %v2873 = vld [vmem:[%s331 + $0xf08] sm:$0xff]
        %v2874 = vld [vmem:[%s331 + $0xf10] sm:$0xff]
        %v2875 = vld [vmem:[%s331 + $0xf18] sm:$0xff]
        %v2876 = vld [vmem:[%s331 + $0xf20] sm:$0xff]
        %v2877 = vld [vmem:[%s331 + $0xf28] sm:$0xff]
        %v2878 = vld [vmem:[%s331 + $0xf30] sm:$0xff]
        %v2879 = vld [vmem:[%s331 + $0xf38] sm:$0xff]
        %v2880 = vld [vmem:[%s331 + $0xf40] sm:$0xff]
        %v2881 = vld [vmem:[%s331 + $0xf48] sm:$0xff]
        %v2882 = vld [vmem:[%s331 + $0xf50] sm:$0xff]
        %v2883 = vld [vmem:[%s331 + $0xf58] sm:$0xff]
        %v2884 = vld [vmem:[%s331 + $0xf60] sm:$0xff]
        %v2885 = vld [vmem:[%s331 + $0xf68] sm:$0xff]
        %v2886 = vld [vmem:[%s331 + $0xf70] sm:$0xff]
        %v2887 = vld [vmem:[%s331 + $0xf78] sm:$0xff]
        %v2888 = vld [vmem:[%s331 + $0xf80] sm:$0xff]
        %v2889 = vld [vmem:[%s331 + $0xf88] sm:$0xff]
        %v2890 = vld [vmem:[%s331 + $0xf90] sm:$0xff]
        %v2891 = vld [vmem:[%s331 + $0xf98] sm:$0xff]
        %v2892 = vld [vmem:[%s331 + $0xfa0] sm:$0xff]
        %v2893 = vld [vmem:[%s331 + $0xfa8] sm:$0xff]
        %v2894 = vld [vmem:[%s331 + $0xfb0] sm:$0xff]
        %v2895 = vld [vmem:[%s331 + $0xfb8] sm:$0xff]
        %v2896 = vld [vmem:[%s331 + $0xfc0] sm:$0xff]
        %v2897 = vld [vmem:[%s331 + $0xfc8] sm:$0xff]
        %v2898 = vld [vmem:[%s331 + $0xfd0] sm:$0xff]
        %v2899 = vld [vmem:[%s331 + $0xfd8] sm:$0xff]
        %v2900 = vld [vmem:[%s331 + $0xfe0] sm:$0xff]
        %v2901 = vld [vmem:[%s331 + $0xfe8] sm:$0xff]
        %v2902 = vld [vmem:[%s331 + $0xff0] sm:$0xff]
        %v2903 = vld [vmem:[%s331 + $0xff8] sm:$0xff]
        %v2904 = vld [vmem:[%s331 + $0x1000] sm:$0xff]
        %v2905 = vld [vmem:[%s331 + $0x1008] sm:$0xff]
        %v2906 = vld [vmem:[%s331 + $0x1010] sm:$0xff]
        %v2907 = vld [vmem:[%s331 + $0x1018] sm:$0xff]
        %v2908 = vld [vmem:[%s331 + $0x1020] sm:$0xff]
        %v2909 = vld [vmem:[%s331 + $0x1028] sm:$0xff]
        %v2910 = vld [vmem:[%s331 + $0x1030] sm:$0xff]
        %v2911 = vld [vmem:[%s331 + $0x1038] sm:$0xff]
        %v2912 = vld [vmem:[%s331 + $0x1040] sm:$0xff]
        %v2913 = vld [vmem:[%s331 + $0x1048] sm:$0xff]
        %v2914 = vld [vmem:[%s331 + $0x1050] sm:$0xff]
        %v2915 = vld [vmem:[%s331 + $0x1058] sm:$0xff]
        %v2916 = vld [vmem:[%s331 + $0x1060] sm:$0xff]
        %v2917 = vld [vmem:[%s331 + $0x1068] sm:$0xff]
        %v2918 = vld [vmem:[%s331 + $0x1070] sm:$0xff]
        %v2919 = vld [vmem:[%s331 + $0x1078] sm:$0xff]
        %v2920 = vld [vmem:[%s331 + $0x1080] sm:$0xff]
        %v2921 = vld [vmem:[%s331 + $0x1088] sm:$0xff]
        %v2922 = vld [vmem:[%s331 + $0x1090] sm:$0xff]
        %v2923 = vld [vmem:[%s331 + $0x1098] sm:$0xff]
        %v2924 = vld [vmem:[%s331 + $0x10a0] sm:$0xff]
        %v2925 = vld [vmem:[%s331 + $0x10a8] sm:$0xff]
        %v2926 = vld [vmem:[%s331 + $0x10b0] sm:$0xff]
        %v2927 = vld [vmem:[%s331 + $0x10b8] sm:$0xff]
        %v2928 = vld [vmem:[%s331 + $0x10c0] sm:$0xff]
        %v2929 = vld [vmem:[%s331 + $0x10c8] sm:$0xff]
        %v2930 = vld [vmem:[%s331 + $0x10d0] sm:$0xff]
        %v2931 = vld [vmem:[%s331 + $0x10d8] sm:$0xff]
        %v2932 = vld [vmem:[%s331 + $0x10e0] sm:$0xff]
        %v2933 = vld [vmem:[%s331 + $0x10e8] sm:$0xff]
        %v2934 = vld [vmem:[%s331 + $0x10f0] sm:$0xff]
        %v2935 = vld [vmem:[%s331 + $0x10f8] sm:$0xff]
        %v2936 = vld [vmem:[%s331 + $0x1100] sm:$0xff]
        %v2937 = vld [vmem:[%s331 + $0x1108] sm:$0xff]
        %v2938 = vld [vmem:[%s331 + $0x1110] sm:$0xff]
        %v2939 = vld [vmem:[%s331 + $0x1118] sm:$0xff]
        %v2940 = vld [vmem:[%s331 + $0x1120] sm:$0xff]
        %v2941 = vld [vmem:[%s331 + $0x1128] sm:$0xff]
        %v2942 = vld [vmem:[%s331 + $0x1130] sm:$0xff]
        %v2943 = vld [vmem:[%s331 + $0x1138] sm:$0xff]
        %v2944 = vld [vmem:[%s331 + $0x1140] sm:$0xff]
        %v2945 = vld [vmem:[%s331 + $0x1148] sm:$0xff]
        %v2946 = vld [vmem:[%s331 + $0x1150] sm:$0xff]
        %v2947 = vld [vmem:[%s331 + $0x1158] sm:$0xff]
        %v2948 = vld [vmem:[%s331 + $0x1160] sm:$0xff]
        %v2949 = vld [vmem:[%s331 + $0x1168] sm:$0xff]
        %v2950 = vld [vmem:[%s331 + $0x1170] sm:$0xff]
        %v2951 = vld [vmem:[%s331 + $0x1178] sm:$0xff]
        %v2952 = vld [vmem:[%s331 + $0x1180] sm:$0xff]
        %v2953 = vld [vmem:[%s331 + $0x1188] sm:$0xff]
        %v2954 = vld [vmem:[%s331 + $0x1190] sm:$0xff]
        %v2955 = vld [vmem:[%s331 + $0x1198] sm:$0xff]
        %v2956 = vld [vmem:[%s331 + $0x11a0] sm:$0xff]
        %v2957 = vld [vmem:[%s331 + $0x11a8] sm:$0xff]
        %v2958 = vld [vmem:[%s331 + $0x11b0] sm:$0xff]
        %v2959 = vld [vmem:[%s331 + $0x11b8] sm:$0xff]
        %v2960 = vld [vmem:[%s331 + $0x11c0] sm:$0xff]
        %v2961 = vld [vmem:[%s331 + $0x11c8] sm:$0xff]
        %v2962 = vld [vmem:[%s331 + $0x11d0] sm:$0xff]
        %v2963 = vld [vmem:[%s331 + $0x11d8] sm:$0xff]
        %v2964 = vld [vmem:[%s331 + $0x11e0] sm:$0xff]
        %v2965 = vld [vmem:[%s331 + $0x11e8] sm:$0xff]
        %v2966 = vld [vmem:[%s331 + $0x11f0] sm:$0xff]
        %v2967 = vld [vmem:[%s331 + $0x11f8] sm:$0xff]
        %v2968 = vld [vmem:[%s331 + $0x1200] sm:$0xff]
        %v2969 = vld [vmem:[%s331 + $0x1208] sm:$0xff]
        %v2970 = vld [vmem:[%s331 + $0x1210] sm:$0xff]
        %v2971 = vld [vmem:[%s331 + $0x1218] sm:$0xff]
        %v2972 = vld [vmem:[%s331 + $0x1220] sm:$0xff]
        %v2973 = vld [vmem:[%s331 + $0x1228] sm:$0xff]
        %v2974 = vld [vmem:[%s331 + $0x1230] sm:$0xff]
        %v2975 = vld [vmem:[%s331 + $0x1238] sm:$0xff]
        %v2976 = vld [vmem:[%s331 + $0x1240] sm:$0xff]
        %v2977 = vld [vmem:[%s331 + $0x1248] sm:$0xff]
        %v2978 = vld [vmem:[%s331 + $0x1250] sm:$0xff]
        %v2979 = vld [vmem:[%s331 + $0x1258] sm:$0xff]
        %v2980 = vld [vmem:[%s331 + $0x1260] sm:$0xff]
        %v2981 = vld [vmem:[%s331 + $0x1268] sm:$0xff]
        %v2982 = vld [vmem:[%s331 + $0x1270] sm:$0xff]
        %v2983 = vld [vmem:[%s331 + $0x1278] sm:$0xff]
        %v2984 = vld [vmem:[%s331 + $0x1280] sm:$0xff]
        %v2985 = vld [vmem:[%s331 + $0x1288] sm:$0xff]
        %v2986 = vld [vmem:[%s331 + $0x1290] sm:$0xff]
        %v2987 = vld [vmem:[%s331 + $0x1298] sm:$0xff]
        %v2988 = vld [vmem:[%s331 + $0x12a0] sm:$0xff]
        %v2989 = vld [vmem:[%s331 + $0x12a8] sm:$0xff]
        %v2990 = vld [vmem:[%s331 + $0x12b0] sm:$0xff]
        %v2991 = vld [vmem:[%s331 + $0x12b8] sm:$0xff]
        %v2992 = vld [vmem:[%s331 + $0x12c0] sm:$0xff]
        %v2993 = vld [vmem:[%s331 + $0x12c8] sm:$0xff]
        %v2994 = vld [vmem:[%s331 + $0x12d0] sm:$0xff]
        %v2995 = vld [vmem:[%s331 + $0x12d8] sm:$0xff]
        %v2996 = vld [vmem:[%s331 + $0x12e0] sm:$0xff]
        %v2997 = vld [vmem:[%s331 + $0x12e8] sm:$0xff]
        %v2998 = vld [vmem:[%s331 + $0x12f0] sm:$0xff]
        %v2999 = vld [vmem:[%s331 + $0x12f8] sm:$0xff]
        %v3000 = vld [vmem:[%s331 + $0x1300] sm:$0xff]
        %v3001 = vld [vmem:[%s331 + $0x1308] sm:$0xff]
        %v3002 = vld [vmem:[%s331 + $0x1310] sm:$0xff]
        %v3003 = vld [vmem:[%s331 + $0x1318] sm:$0xff]
        %v3004 = vld [vmem:[%s331 + $0x1320] sm:$0xff]
        %v3005 = vld [vmem:[%s331 + $0x1328] sm:$0xff]
        %v3006 = vld [vmem:[%s331 + $0x1330] sm:$0xff]
        %v3007 = vld [vmem:[%s331 + $0x1338] sm:$0xff]
        %v3008 = vld [vmem:[%s331 + $0x1340] sm:$0xff]
        %v3009 = vld [vmem:[%s331 + $0x1348] sm:$0xff]
        %v3010 = vld [vmem:[%s331 + $0x1350] sm:$0xff]
        %v3011 = vld [vmem:[%s331 + $0x1358] sm:$0xff]
        %v3012 = vld [vmem:[%s331 + $0x1360] sm:$0xff]
        %v3013 = vld [vmem:[%s331 + $0x1368] sm:$0xff]
        %v3014 = vld [vmem:[%s331 + $0x1370] sm:$0xff]
        %v3015 = vld [vmem:[%s331 + $0x1378] sm:$0xff]
        %v3016 = vld [vmem:[%s331 + $0x1380] sm:$0xff]
        %v3017 = vld [vmem:[%s331 + $0x1388] sm:$0xff]
        %v3018 = vld [vmem:[%s331 + $0x1390] sm:$0xff]
        %v3019 = vld [vmem:[%s331 + $0x1398] sm:$0xff]
        %v3020 = vld [vmem:[%s331 + $0x13a0] sm:$0xff]
        %v3021 = vld [vmem:[%s331 + $0x13a8] sm:$0xff]
        %v3022 = vld [vmem:[%s331 + $0x13b0] sm:$0xff]
        %v3023 = vld [vmem:[%s331 + $0x13b8] sm:$0xff]
        %v3024 = vld [vmem:[%s331 + $0x13c0] sm:$0xff]
        %v3025 = vld [vmem:[%s331 + $0x13c8] sm:$0xff]
        %v3026 = vld [vmem:[%s331 + $0x13d0] sm:$0xff]
        %v3027 = vld [vmem:[%s331 + $0x13d8] sm:$0xff]
        %v3028 = vld [vmem:[%s331 + $0x13e0] sm:$0xff]
        %v3029 = vld [vmem:[%s331 + $0x13e8] sm:$0xff]
        %v3030 = vld [vmem:[%s331 + $0x13f0] sm:$0xff]
        %v3031 = vld [vmem:[%s331 + $0x13f8] sm:$0xff]
        %v3032 = vld [vmem:[%s331 + $0x1400] sm:$0xff]
        %v3033 = vld [vmem:[%s331 + $0x1408] sm:$0xff]
        %v3034 = vld [vmem:[%s331 + $0x1410] sm:$0xff]
        %v3035 = vld [vmem:[%s331 + $0x1418] sm:$0xff]
        %v3036 = vld [vmem:[%s331 + $0x1420] sm:$0xff]
        %v3037 = vld [vmem:[%s331 + $0x1428] sm:$0xff]
        %v3038 = vld [vmem:[%s331 + $0x1430] sm:$0xff]
        %v3039 = vld [vmem:[%s331 + $0x1438] sm:$0xff]
        %v3040 = vld [vmem:[%s331 + $0x1440] sm:$0xff]
        %v3041 = vld [vmem:[%s331 + $0x1448] sm:$0xff]
        %v3042 = vld [vmem:[%s331 + $0x1450] sm:$0xff]
        %v3043 = vld [vmem:[%s331 + $0x1458] sm:$0xff]
        %v3044 = vld [vmem:[%s331 + $0x1460] sm:$0xff]
        %v3045 = vld [vmem:[%s331 + $0x1468] sm:$0xff]
        %v3046 = vld [vmem:[%s331 + $0x1470] sm:$0xff]
        %v3047 = vld [vmem:[%s331 + $0x1478] sm:$0xff]
        %v3048 = vld [vmem:[%s331 + $0x1480] sm:$0xff]
        %v3049 = vld [vmem:[%s331 + $0x1488] sm:$0xff]
        %v3050 = vld [vmem:[%s331 + $0x1490] sm:$0xff]
        %v3051 = vld [vmem:[%s331 + $0x1498] sm:$0xff]
        %v3052 = vld [vmem:[%s331 + $0x14a0] sm:$0xff]
        %v3053 = vld [vmem:[%s331 + $0x14a8] sm:$0xff]
        %v3054 = vld [vmem:[%s331 + $0x14b0] sm:$0xff]
        %v3055 = vld [vmem:[%s331 + $0x14b8] sm:$0xff]
        %v3056 = vld [vmem:[%s331 + $0x14c0] sm:$0xff]
        %v3057 = vld [vmem:[%s331 + $0x14c8] sm:$0xff]
        %v3058 = vld [vmem:[%s331 + $0x14d0] sm:$0xff]
        %v3059 = vld [vmem:[%s331 + $0x14d8] sm:$0xff]
        %v3060 = vld [vmem:[%s331 + $0x14e0] sm:$0xff]
        %v3061 = vld [vmem:[%s331 + $0x14e8] sm:$0xff]
        %v3062 = vld [vmem:[%s331 + $0x14f0] sm:$0xff]
        %v3063 = vld [vmem:[%s331 + $0x14f8] sm:$0xff]
        %v3064 = vld [vmem:[%s331 + $0x1500] sm:$0xff]
        %v3065 = vld [vmem:[%s331 + $0x1508] sm:$0xff]
        %v3066 = vld [vmem:[%s331 + $0x1510] sm:$0xff]
        %v3067 = vld [vmem:[%s331 + $0x1518] sm:$0xff]
        %v3068 = vld [vmem:[%s331 + $0x1520] sm:$0xff]
        %v3069 = vld [vmem:[%s331 + $0x1528] sm:$0xff]
        %v3070 = vld [vmem:[%s331 + $0x1530] sm:$0xff]
        %v3071 = vld [vmem:[%s331 + $0x1538] sm:$0xff]
        %v3072 = vld [vmem:[%s331 + $0x1540] sm:$0xff]
        %v3073 = vld [vmem:[%s331 + $0x1548] sm:$0xff]
        %v3074 = vld [vmem:[%s331 + $0x1550] sm:$0xff]
        %v3075 = vld [vmem:[%s331 + $0x1558] sm:$0xff]
        %v3076 = vld [vmem:[%s331 + $0x1560] sm:$0xff]
        %v3077 = vld [vmem:[%s331 + $0x1568] sm:$0xff]
        %v3078 = vld [vmem:[%s331 + $0x1570] sm:$0xff]
        %v3079 = vld [vmem:[%s331 + $0x1578] sm:$0xff]
        %v3080 = vld [vmem:[%s331 + $0x1580] sm:$0xff]
        %v3081 = vld [vmem:[%s331 + $0x1588] sm:$0xff]
        %v3082 = vld [vmem:[%s331 + $0x1590] sm:$0xff]
        %v3083 = vld [vmem:[%s331 + $0x1598] sm:$0xff]
        %v3084 = vld [vmem:[%s331 + $0x15a0] sm:$0xff]
        %v3085 = vld [vmem:[%s331 + $0x15a8] sm:$0xff]
        %v3086 = vld [vmem:[%s331 + $0x15b0] sm:$0xff]
        %v3087 = vld [vmem:[%s331 + $0x15b8] sm:$0xff]
        %v3088 = vld [vmem:[%s331 + $0x15c0] sm:$0xff]
        %v3089 = vld [vmem:[%s331 + $0x15c8] sm:$0xff]
        %v3090 = vld [vmem:[%s331 + $0x15d0] sm:$0xff]
        %v3091 = vld [vmem:[%s331 + $0x15d8] sm:$0xff]
        %v3092 = vld [vmem:[%s331 + $0x15e0] sm:$0xff]
        %v3093 = vld [vmem:[%s331 + $0x15e8] sm:$0xff]
        %v3094 = vld [vmem:[%s331 + $0x15f0] sm:$0xff]
        %v3095 = vld [vmem:[%s331 + $0x15f8] sm:$0xff]
        %v3096 = vld [vmem:[%s331 + $0x1600] sm:$0xff]
        %v3097 = vld [vmem:[%s331 + $0x1608] sm:$0xff]
        %v3098 = vld [vmem:[%s331 + $0x1610] sm:$0xff]
        %v3099 = vld [vmem:[%s331 + $0x1618] sm:$0xff]
        %v3100 = vld [vmem:[%s331 + $0x1620] sm:$0xff]
        %v3101 = vld [vmem:[%s331 + $0x1628] sm:$0xff]
        %v3102 = vld [vmem:[%s331 + $0x1630] sm:$0xff]
        %v3103 = vld [vmem:[%s331 + $0x1638] sm:$0xff]
        %v3104 = vld [vmem:[%s331 + $0x1640] sm:$0xff]
        %v3105 = vld [vmem:[%s331 + $0x1648] sm:$0xff]
        %v3106 = vld [vmem:[%s331 + $0x1650] sm:$0xff]
        %v3107 = vld [vmem:[%s331 + $0x1658] sm:$0xff]
        %v3108 = vld [vmem:[%s331 + $0x1660] sm:$0xff]
        %v3109 = vld [vmem:[%s331 + $0x1668] sm:$0xff]
        %v3110 = vld [vmem:[%s331 + $0x1670] sm:$0xff]
        %v3111 = vld [vmem:[%s331 + $0x1678] sm:$0xff]
        %v3112 = vld [vmem:[%s331 + $0x1680] sm:$0xff]
        %v3113 = vld [vmem:[%s331 + $0x1688] sm:$0xff]
        %v3114 = vld [vmem:[%s331 + $0x1690] sm:$0xff]
        %v3115 = vld [vmem:[%s331 + $0x1698] sm:$0xff]
        %v3116 = vld [vmem:[%s331 + $0x16a0] sm:$0xff]
        %v3117 = vld [vmem:[%s331 + $0x16a8] sm:$0xff]
        %v3118 = vld [vmem:[%s331 + $0x16b0] sm:$0xff]
        %v3119 = vld [vmem:[%s331 + $0x16b8] sm:$0xff]
        %v3120 = vld [vmem:[%s331 + $0x16c0] sm:$0xff]
        %v3121 = vld [vmem:[%s331 + $0x16c8] sm:$0xff]
        %v3122 = vld [vmem:[%s331 + $0x16d0] sm:$0xff]
        %v3123 = vld [vmem:[%s331 + $0x16d8] sm:$0xff]
        %v3124 = vld [vmem:[%s331 + $0x16e0] sm:$0xff]
        %v3125 = vld [vmem:[%s331 + $0x16e8] sm:$0xff]
        %v3126 = vld [vmem:[%s331 + $0x16f0] sm:$0xff]
        %v3127 = vld [vmem:[%s331 + $0x16f8] sm:$0xff]
        %v3128 = vld [vmem:[%s331 + $0x1700] sm:$0xff]
        %v3129 = vld [vmem:[%s331 + $0x1708] sm:$0xff]
        %v3130 = vld [vmem:[%s331 + $0x1710] sm:$0xff]
        %v3131 = vld [vmem:[%s331 + $0x1718] sm:$0xff]
        %v3132 = vld [vmem:[%s331 + $0x1720] sm:$0xff]
        %v3133 = vld [vmem:[%s331 + $0x1728] sm:$0xff]
        %v3134 = vld [vmem:[%s331 + $0x1730] sm:$0xff]
        %v3135 = vld [vmem:[%s331 + $0x1738] sm:$0xff]
        %v3136 = vld [vmem:[%s331 + $0x1740] sm:$0xff]
        %v3137 = vld [vmem:[%s331 + $0x1748] sm:$0xff]
        %v3138 = vld [vmem:[%s331 + $0x1750] sm:$0xff]
        %v3139 = vld [vmem:[%s331 + $0x1758] sm:$0xff]
        %v3140 = vld [vmem:[%s331 + $0x1760] sm:$0xff]
        %v3141 = vld [vmem:[%s331 + $0x1768] sm:$0xff]
        %v3142 = vld [vmem:[%s331 + $0x1770] sm:$0xff]
        %v3143 = vld [vmem:[%s331 + $0x1778] sm:$0xff]
        %v3144 = vld [vmem:[%s331 + $0x1780] sm:$0xff]
        %v3145 = vld [vmem:[%s331 + $0x1788] sm:$0xff]
        %v3146 = vld [vmem:[%s331 + $0x1790] sm:$0xff]
        %v3147 = vld [vmem:[%s331 + $0x1798] sm:$0xff]
        %v3148 = vld [vmem:[%s331 + $0x17a0] sm:$0xff]
        %v3149 = vld [vmem:[%s331 + $0x17a8] sm:$0xff]
        %v3150 = vld [vmem:[%s331 + $0x17b0] sm:$0xff]
        %v3151 = vld [vmem:[%s331 + $0x17b8] sm:$0xff]
        %v3152 = vld [vmem:[%s331 + $0x17c0] sm:$0xff]
        %v3153 = vld [vmem:[%s331 + $0x17c8] sm:$0xff]
        %v3154 = vld [vmem:[%s331 + $0x17d0] sm:$0xff]
        %v3155 = vld [vmem:[%s331 + $0x17d8] sm:$0xff]
        %v3156 = vld [vmem:[%s331 + $0x17e0] sm:$0xff]
        %v3157 = vld [vmem:[%s331 + $0x17e8] sm:$0xff]
        %v3158 = vld [vmem:[%s331 + $0x17f0] sm:$0xff]
        %v3159 = vld [vmem:[%s331 + $0x17f8] sm:$0xff]
        %v3160 = vld [vmem:[%s331 + $0x1800] sm:$0xff]
        %v3161 = vld [vmem:[%s331 + $0x1808] sm:$0xff]
        %v3162 = vld [vmem:[%s331 + $0x1810] sm:$0xff]
        %v3163 = vld [vmem:[%s331 + $0x1818] sm:$0xff]
        %v3164 = vld [vmem:[%s331 + $0x1820] sm:$0xff]
        %v3165 = vld [vmem:[%s331 + $0x1828] sm:$0xff]
        %v3166 = vld [vmem:[%s331 + $0x1830] sm:$0xff]
        %v3167 = vld [vmem:[%s331 + $0x1838] sm:$0xff]
        %v3168 = vld [vmem:[%s331 + $0x1840] sm:$0xff]
        %v3169 = vld [vmem:[%s331 + $0x1848] sm:$0xff]
        %v3170 = vld [vmem:[%s331 + $0x1850] sm:$0xff]
        %v3171 = vld [vmem:[%s331 + $0x1858] sm:$0xff]
        %v3172 = vld [vmem:[%s331 + $0x1860] sm:$0xff]
        %v3173 = vld [vmem:[%s331 + $0x1868] sm:$0xff]
        %v3174 = vld [vmem:[%s331 + $0x1870] sm:$0xff]
        %v3175 = vld [vmem:[%s331 + $0x1878] sm:$0xff]
        %v3176 = vld [vmem:[%s331 + $0x1880] sm:$0xff]
        %v3177 = vld [vmem:[%s331 + $0x1888] sm:$0xff]
        %v3178 = vld [vmem:[%s331 + $0x1890] sm:$0xff]
        %v3179 = vld [vmem:[%s331 + $0x1898] sm:$0xff]
        %v3180 = vld [vmem:[%s331 + $0x18a0] sm:$0xff]
        %v3181 = vld [vmem:[%s331 + $0x18a8] sm:$0xff]
        %v3182 = vld [vmem:[%s331 + $0x18b0] sm:$0xff]
        %v3183 = vld [vmem:[%s331 + $0x18b8] sm:$0xff]
        %v3184 = vld [vmem:[%s331 + $0x18c0] sm:$0xff]
        %v3185 = vld [vmem:[%s331 + $0x18c8] sm:$0xff]
        %v3186 = vld [vmem:[%s331 + $0x18d0] sm:$0xff]
        %v3187 = vld [vmem:[%s331 + $0x18d8] sm:$0xff]
        %v3188 = vld [vmem:[%s331 + $0x18e0] sm:$0xff]
        %v3189 = vld [vmem:[%s331 + $0x18e8] sm:$0xff]
        %v3190 = vld [vmem:[%s331 + $0x18f0] sm:$0xff]
        %v3191 = vld [vmem:[%s331 + $0x18f8] sm:$0xff]
        %v3192 = vld [vmem:[%s331 + $0x1900] sm:$0xff]
        %v3193 = vld [vmem:[%s331 + $0x1908] sm:$0xff]
        %v3194 = vld [vmem:[%s331 + $0x1910] sm:$0xff]
        %v3195 = vld [vmem:[%s331 + $0x1918] sm:$0xff]
        %v3196 = vld [vmem:[%s331 + $0x1920] sm:$0xff]
        %v3197 = vld [vmem:[%s331 + $0x1928] sm:$0xff]
        %v3198 = vld [vmem:[%s331 + $0x1930] sm:$0xff]
        %v3199 = vld [vmem:[%s331 + $0x1938] sm:$0xff]
        %v3200 = vld [vmem:[%s331 + $0x1940] sm:$0xff]
        %v3201 = vld [vmem:[%s331 + $0x1948] sm:$0xff]
        %v3202 = vld [vmem:[%s331 + $0x1950] sm:$0xff]
        %v3203 = vld [vmem:[%s331 + $0x1958] sm:$0xff]
        %v3204 = vld [vmem:[%s331 + $0x1960] sm:$0xff]
        %v3205 = vld [vmem:[%s331 + $0x1968] sm:$0xff]
        %v3206 = vld [vmem:[%s331 + $0x1970] sm:$0xff]
        %v3207 = vld [vmem:[%s331 + $0x1978] sm:$0xff]
        %v3208 = vld [vmem:[%s331 + $0x1980] sm:$0xff]
        %v3209 = vld [vmem:[%s331 + $0x1988] sm:$0xff]
        %v3210 = vld [vmem:[%s331 + $0x1990] sm:$0xff]
        %v3211 = vld [vmem:[%s331 + $0x1998] sm:$0xff]
        %v3212 = vld [vmem:[%s331 + $0x19a0] sm:$0xff]
        %v3213 = vld [vmem:[%s331 + $0x19a8] sm:$0xff]
        %v3214 = vld [vmem:[%s331 + $0x19b0] sm:$0xff]
        %v3215 = vld [vmem:[%s331 + $0x19b8] sm:$0xff]
        %v3216 = vld [vmem:[%s331 + $0x19c0] sm:$0xff]
        %v3217 = vld [vmem:[%s331 + $0x19c8] sm:$0xff]
        %v3218 = vld [vmem:[%s331 + $0x19d0] sm:$0xff]
        %v3219 = vld [vmem:[%s331 + $0x19d8] sm:$0xff]
        %v3220 = vld [vmem:[%s331 + $0x19e0] sm:$0xff]
        %v3221 = vld [vmem:[%s331 + $0x19e8] sm:$0xff]
        %v3222 = vld [vmem:[%s331 + $0x19f0] sm:$0xff]
        %v3223 = vld [vmem:[%s331 + $0x19f8] sm:$0xff]
        %v3224 = vld [vmem:[%s331 + $0x1a00] sm:$0xff]
        %v3225 = vld [vmem:[%s331 + $0x1a08] sm:$0xff]
        %v3226 = vld [vmem:[%s331 + $0x1a10] sm:$0xff]
        %v3227 = vld [vmem:[%s331 + $0x1a18] sm:$0xff]
        %v3228 = vld [vmem:[%s331 + $0x1a20] sm:$0xff]
        %v3229 = vld [vmem:[%s331 + $0x1a28] sm:$0xff]
        %v3230 = vld [vmem:[%s331 + $0x1a30] sm:$0xff]
        %v3231 = vld [vmem:[%s331 + $0x1a38] sm:$0xff]
        %v3232 = vld [vmem:[%s331 + $0x1a40] sm:$0xff]
        %v3233 = vld [vmem:[%s331 + $0x1a48] sm:$0xff]
        %v3234 = vld [vmem:[%s331 + $0x1a50] sm:$0xff]
        %v3235 = vld [vmem:[%s331 + $0x1a58] sm:$0xff]
        %v3236 = vld [vmem:[%s331 + $0x1a60] sm:$0xff]
        %v3237 = vld [vmem:[%s331 + $0x1a68] sm:$0xff]
        %v3238 = vld [vmem:[%s331 + $0x1a70] sm:$0xff]
        %v3239 = vld [vmem:[%s331 + $0x1a78] sm:$0xff]
        %v3240 = vld [vmem:[%s331 + $0x1a80] sm:$0xff]
        %v3241 = vld [vmem:[%s331 + $0x1a88] sm:$0xff]
        %v3242 = vld [vmem:[%s331 + $0x1a90] sm:$0xff]
        %v3243 = vld [vmem:[%s331 + $0x1a98] sm:$0xff]
        %v3244 = vld [vmem:[%s331 + $0x1aa0] sm:$0xff]
        %v3245 = vld [vmem:[%s331 + $0x1aa8] sm:$0xff]
        %v3246 = vld [vmem:[%s331 + $0x1ab0] sm:$0xff]
        %v3247 = vld [vmem:[%s331 + $0x1ab8] sm:$0xff]
        %v3248 = vld [vmem:[%s331 + $0x1ac0] sm:$0xff]
        %v3249 = vld [vmem:[%s331 + $0x1ac8] sm:$0xff]
        %v3250 = vld [vmem:[%s331 + $0x1ad0] sm:$0xff]
        %v3251 = vld [vmem:[%s331 + $0x1ad8] sm:$0xff]
        %v3252 = vld [vmem:[%s331 + $0x1ae0] sm:$0xff]
        %v3253 = vld [vmem:[%s331 + $0x1ae8] sm:$0xff]
        %v3254 = vld [vmem:[%s331 + $0x1af0] sm:$0xff]
        %v3255 = vld [vmem:[%s331 + $0x1af8] sm:$0xff]
        %v3256 = vld [vmem:[%s331 + $0x1b00] sm:$0xff]
        %v3257 = vld [vmem:[%s331 + $0x1b08] sm:$0xff]
        %v3258 = vld [vmem:[%s331 + $0x1b10] sm:$0xff]
        %v3259 = vld [vmem:[%s331 + $0x1b18] sm:$0xff]
        %v3260 = vld [vmem:[%s331 + $0x1b20] sm:$0xff]
        %v3261 = vld [vmem:[%s331 + $0x1b28] sm:$0xff]
        %v3262 = vld [vmem:[%s331 + $0x1b30] sm:$0xff]
        %v3263 = vld [vmem:[%s331 + $0x1b38] sm:$0xff]
        %v3264 = vld [vmem:[%s331 + $0x1b40] sm:$0xff]
        %v3265 = vld [vmem:[%s331 + $0x1b48] sm:$0xff]
        %v3266 = vld [vmem:[%s331 + $0x1b50] sm:$0xff]
        %v3267 = vld [vmem:[%s331 + $0x1b58] sm:$0xff]
        %v3268 = vld [vmem:[%s331 + $0x1b60] sm:$0xff]
        %v3269 = vld [vmem:[%s331 + $0x1b68] sm:$0xff]
        %v3270 = vld [vmem:[%s331 + $0x1b70] sm:$0xff]
        %v3271 = vld [vmem:[%s331 + $0x1b78] sm:$0xff]
        %v3272 = vld [vmem:[%s331 + $0x1b80] sm:$0xff]
        %v3273 = vld [vmem:[%s331 + $0x1b88] sm:$0xff]
        %v3274 = vld [vmem:[%s331 + $0x1b90] sm:$0xff]
        %v3275 = vld [vmem:[%s331 + $0x1b98] sm:$0xff]
        %v3276 = vld [vmem:[%s331 + $0x1ba0] sm:$0xff]
        %v3277 = vld [vmem:[%s331 + $0x1ba8] sm:$0xff]
        %v3278 = vld [vmem:[%s331 + $0x1bb0] sm:$0xff]
        %v3279 = vld [vmem:[%s331 + $0x1bb8] sm:$0xff]
        %v3280 = vld [vmem:[%s331 + $0x1bc0] sm:$0xff]
        %v3281 = vld [vmem:[%s331 + $0x1bc8] sm:$0xff]
        %v3282 = vld [vmem:[%s331 + $0x1bd0] sm:$0xff]
        %v3283 = vld [vmem:[%s331 + $0x1bd8] sm:$0xff]
        %v3284 = vld [vmem:[%s331 + $0x1be0] sm:$0xff]
        %v3285 = vld [vmem:[%s331 + $0x1be8] sm:$0xff]
        %v3286 = vld [vmem:[%s331 + $0x1bf0] sm:$0xff]
        %v3287 = vld [vmem:[%s331 + $0x1bf8] sm:$0xff]
        %v3288 = vld [vmem:[%s331 + $0x1c00] sm:$0xff]
        %v3289 = vld [vmem:[%s331 + $0x1c08] sm:$0xff]
        %v3290 = vld [vmem:[%s331 + $0x1c10] sm:$0xff]
        %v3291 = vld [vmem:[%s331 + $0x1c18] sm:$0xff]
        %v3292 = vld [vmem:[%s331 + $0x1c20] sm:$0xff]
        %v3293 = vld [vmem:[%s331 + $0x1c28] sm:$0xff]
        %v3294 = vld [vmem:[%s331 + $0x1c30] sm:$0xff]
        %v3295 = vld [vmem:[%s331 + $0x1c38] sm:$0xff]
        %v3296 = vld [vmem:[%s331 + $0x1c40] sm:$0xff]
        %v3297 = vld [vmem:[%s331 + $0x1c48] sm:$0xff]
        %v3298 = vld [vmem:[%s331 + $0x1c50] sm:$0xff]
        %v3299 = vld [vmem:[%s331 + $0x1c58] sm:$0xff]
        %v3300 = vld [vmem:[%s331 + $0x1c60] sm:$0xff]
        %v3301 = vld [vmem:[%s331 + $0x1c68] sm:$0xff]
        %v3302 = vld [vmem:[%s331 + $0x1c70] sm:$0xff]
        %v3303 = vld [vmem:[%s331 + $0x1c78] sm:$0xff]
        %v3304 = vld [vmem:[%s331 + $0x1c80] sm:$0xff]
        %v3305 = vld [vmem:[%s331 + $0x1c88] sm:$0xff]
        %v3306 = vld [vmem:[%s331 + $0x1c90] sm:$0xff]
        %v3307 = vld [vmem:[%s331 + $0x1c98] sm:$0xff]
        %v3308 = vld [vmem:[%s331 + $0x1ca0] sm:$0xff]
        %v3309 = vld [vmem:[%s331 + $0x1ca8] sm:$0xff]
        %v3310 = vld [vmem:[%s331 + $0x1cb0] sm:$0xff]
        %v3311 = vld [vmem:[%s331 + $0x1cb8] sm:$0xff]
        %v3312 = vld [vmem:[%s331 + $0x1cc0] sm:$0xff]
        %v3313 = vld [vmem:[%s331 + $0x1cc8] sm:$0xff]
        %v3314 = vld [vmem:[%s331 + $0x1cd0] sm:$0xff]
        %v3315 = vld [vmem:[%s331 + $0x1cd8] sm:$0xff]
        %v3316 = vld [vmem:[%s331 + $0x1ce0] sm:$0xff]
        %v3317 = vld [vmem:[%s331 + $0x1ce8] sm:$0xff]
        %v3318 = vld [vmem:[%s331 + $0x1cf0] sm:$0xff]
        %v3319 = vld [vmem:[%s331 + $0x1cf8] sm:$0xff]
        %v3320 = vld [vmem:[%s331 + $0x1d00] sm:$0xff]
        %v3321 = vld [vmem:[%s331 + $0x1d08] sm:$0xff]
        %v3322 = vld [vmem:[%s331 + $0x1d10] sm:$0xff]
        %v3323 = vld [vmem:[%s331 + $0x1d18] sm:$0xff]
        %v3324 = vld [vmem:[%s331 + $0x1d20] sm:$0xff]
        %v3325 = vld [vmem:[%s331 + $0x1d28] sm:$0xff]
        %v3326 = vld [vmem:[%s331 + $0x1d30] sm:$0xff]
        %v3327 = vld [vmem:[%s331 + $0x1d38] sm:$0xff]
        %v3328 = vld [vmem:[%s331 + $0x1d40] sm:$0xff]
        %v3329 = vld [vmem:[%s331 + $0x1d48] sm:$0xff]
        %v3330 = vld [vmem:[%s331 + $0x1d50] sm:$0xff]
        %v3331 = vld [vmem:[%s331 + $0x1d58] sm:$0xff]
        %v3332 = vld [vmem:[%s331 + $0x1d60] sm:$0xff]
        %v3333 = vld [vmem:[%s331 + $0x1d68] sm:$0xff]
        %v3334 = vld [vmem:[%s331 + $0x1d70] sm:$0xff]
        %v3335 = vld [vmem:[%s331 + $0x1d78] sm:$0xff]
        %v3336 = vld [vmem:[%s331 + $0x1d80] sm:$0xff]
        %v3337 = vld [vmem:[%s331 + $0x1d88] sm:$0xff]
        %v3338 = vld [vmem:[%s331 + $0x1d90] sm:$0xff]
        %v3339 = vld [vmem:[%s331 + $0x1d98] sm:$0xff]
        %v3340 = vld [vmem:[%s331 + $0x1da0] sm:$0xff]
        %v3341 = vld [vmem:[%s331 + $0x1da8] sm:$0xff]
        %v3342 = vld [vmem:[%s331 + $0x1db0] sm:$0xff]
        %v3343 = vld [vmem:[%s331 + $0x1db8] sm:$0xff]
        %v3344 = vld [vmem:[%s331 + $0x1dc0] sm:$0xff]
        %v3345 = vld [vmem:[%s331 + $0x1dc8] sm:$0xff]
        %v3346 = vld [vmem:[%s331 + $0x1dd0] sm:$0xff]
        %v3347 = vld [vmem:[%s331 + $0x1dd8] sm:$0xff]
        %v3348 = vld [vmem:[%s331 + $0x1de0] sm:$0xff]
        %v3349 = vld [vmem:[%s331 + $0x1de8] sm:$0xff]
        %v3350 = vld [vmem:[%s331 + $0x1df0] sm:$0xff]
        %v3351 = vld [vmem:[%s331 + $0x1df8] sm:$0xff]
        %v3352 = vld [vmem:[%s331 + $0x1e00] sm:$0xff]
        %v3353 = vld [vmem:[%s331 + $0x1e08] sm:$0xff]
        %v3354 = vld [vmem:[%s331 + $0x1e10] sm:$0xff]
        %v3355 = vld [vmem:[%s331 + $0x1e18] sm:$0xff]
        %v3356 = vld [vmem:[%s331 + $0x1e20] sm:$0xff]
        %v3357 = vld [vmem:[%s331 + $0x1e28] sm:$0xff]
        %v3358 = vld [vmem:[%s331 + $0x1e30] sm:$0xff]
        %v3359 = vld [vmem:[%s331 + $0x1e38] sm:$0xff]
        %v3360 = vld [vmem:[%s331 + $0x1e40] sm:$0xff]
        %v3361 = vld [vmem:[%s331 + $0x1e48] sm:$0xff]
        %v3362 = vld [vmem:[%s331 + $0x1e50] sm:$0xff]
        %v3363 = vld [vmem:[%s331 + $0x1e58] sm:$0xff]
        %v3364 = vld [vmem:[%s331 + $0x1e60] sm:$0xff]
        %v3365 = vld [vmem:[%s331 + $0x1e68] sm:$0xff]
        %v3366 = vld [vmem:[%s331 + $0x1e70] sm:$0xff]
        %v3367 = vld [vmem:[%s331 + $0x1e78] sm:$0xff]
        %v3368 = vld [vmem:[%s331 + $0x1e80] sm:$0xff]
        %v3369 = vld [vmem:[%s331 + $0x1e88] sm:$0xff]
        %v3370 = vld [vmem:[%s331 + $0x1e90] sm:$0xff]
        %v3371 = vld [vmem:[%s331 + $0x1e98] sm:$0xff]
        %v3372 = vld [vmem:[%s331 + $0x1ea0] sm:$0xff]
        %v3373 = vld [vmem:[%s331 + $0x1ea8] sm:$0xff]
        %v3374 = vld [vmem:[%s331 + $0x1eb0] sm:$0xff]
        %v3375 = vld [vmem:[%s331 + $0x1eb8] sm:$0xff]
        %v3376 = vld [vmem:[%s331 + $0x1ec0] sm:$0xff]
        %v3377 = vld [vmem:[%s331 + $0x1ec8] sm:$0xff]
        %v3378 = vld [vmem:[%s331 + $0x1ed0] sm:$0xff]
        %v3379 = vld [vmem:[%s331 + $0x1ed8] sm:$0xff]
        %v3380 = vld [vmem:[%s331 + $0x1ee0] sm:$0xff]
        %v3381 = vld [vmem:[%s331 + $0x1ee8] sm:$0xff]
        %v3382 = vld [vmem:[%s331 + $0x1ef0] sm:$0xff]
        %v3383 = vld [vmem:[%s331 + $0x1ef8] sm:$0xff]
        %v3384 = vld [vmem:[%s331 + $0x1f00] sm:$0xff]
        %v3385 = vld [vmem:[%s331 + $0x1f08] sm:$0xff]
        %v3386 = vld [vmem:[%s331 + $0x1f10] sm:$0xff]
        %v3387 = vld [vmem:[%s331 + $0x1f18] sm:$0xff]
        %v3388 = vld [vmem:[%s331 + $0x1f20] sm:$0xff]
        %v3389 = vld [vmem:[%s331 + $0x1f28] sm:$0xff]
        %v3390 = vld [vmem:[%s331 + $0x1f30] sm:$0xff]
        %v3391 = vld [vmem:[%s331 + $0x1f38] sm:$0xff]
        %v3392 = vld [vmem:[%s331 + $0x1f40] sm:$0xff]
        %v3393 = vld [vmem:[%s331 + $0x1f48] sm:$0xff]
        %v3394 = vld [vmem:[%s331 + $0x1f50] sm:$0xff]
        %v3395 = vld [vmem:[%s331 + $0x1f58] sm:$0xff]
        %v3396 = vld [vmem:[%s331 + $0x1f60] sm:$0xff]
        %v3397 = vld [vmem:[%s331 + $0x1f68] sm:$0xff]
        %v3398 = vld [vmem:[%s331 + $0x1f70] sm:$0xff]
        %v3399 = vld [vmem:[%s331 + $0x1f78] sm:$0xff]
        %v3400 = vld [vmem:[%s331 + $0x1f80] sm:$0xff]
        %v3401 = vld [vmem:[%s331 + $0x1f88] sm:$0xff]
        %v3402 = vld [vmem:[%s331 + $0x1f90] sm:$0xff]
        %v3403 = vld [vmem:[%s331 + $0x1f98] sm:$0xff]
        %v3404 = vld [vmem:[%s331 + $0x1fa0] sm:$0xff]
        %v3405 = vld [vmem:[%s331 + $0x1fa8] sm:$0xff]
        %v3406 = vld [vmem:[%s331 + $0x1fb0] sm:$0xff]
        %v3407 = vld [vmem:[%s331 + $0x1fb8] sm:$0xff]
        %v3408 = vld [vmem:[%s331 + $0x1fc0] sm:$0xff]
        %v3409 = vld [vmem:[%s331 + $0x1fc8] sm:$0xff]
        %v3410 = vld [vmem:[%s331 + $0x1fd0] sm:$0xff]
        %v3411 = vld [vmem:[%s331 + $0x1fd8] sm:$0xff]
        %v3412 = vld [vmem:[%s331 + $0x1fe0] sm:$0xff]
        %v3413 = vld [vmem:[%s331 + $0x1fe8] sm:$0xff]
        %v3414 = vld [vmem:[%s331 + $0x1ff0] sm:$0xff]
        %v3415 = vld [vmem:[%s331 + $0x1ff8] sm:$0xff]
        %v3416 = vld [vmem:[%s340] sm:$0xff]
        %v3417 = vld [vmem:[%s340 + $0x8] sm:$0xff]
        %v3420 = vlaneseq
        %v3421 = vshrl.u32 %v3420, 7
        %v3422 = vsub.s32 0, %v3421
        %v3423 = vrot.slane %v3416, %v3422
        %v3424 = vlaneseq
        %v3425 = vshrl.u32 %v3424, 7
        %v3426 = vsub.s32 1, %v3425
        %v3427 = vrot.slane %v3416, %v3426
        %v3428 = vlaneseq
        %v3429 = vshrl.u32 %v3428, 7
        %v3430 = vsub.s32 2, %v3429
        %v3431 = vrot.slane %v3416, %v3430
        %v3432 = vlaneseq
        %v3433 = vshrl.u32 %v3432, 7
        %v3434 = vsub.s32 3, %v3433
        %v3435 = vrot.slane %v3416, %v3434
        %v3436 = vlaneseq
        %v3437 = vshrl.u32 %v3436, 7
        %v3438 = vsub.s32 4, %v3437
        %v3439 = vrot.slane %v3416, %v3438
        %v3440 = vlaneseq
        %v3441 = vshrl.u32 %v3440, 7
        %v3442 = vsub.s32 5, %v3441
        %v3443 = vrot.slane %v3416, %v3442
        %v3444 = vlaneseq
        %v3445 = vshrl.u32 %v3444, 7
        %v3446 = vsub.s32 6, %v3445
        %v3447 = vrot.slane %v3416, %v3446
        %v3448 = vlaneseq
        %v3449 = vshrl.u32 %v3448, 7
        %v3450 = vsub.s32 7, %v3449
        %v3451 = vrot.slane %v3416, %v3450
        %v3452 = vlaneseq
        %v3453 = vshrl.u32 %v3452, 7
        %v3454 = vsub.s32 0, %v3453
        %v3455 = vrot.slane %v3417, %v3454
        %v3456 = vlaneseq
        %v3457 = vshrl.u32 %v3456, 7
        %v3458 = vsub.s32 1, %v3457
        %v3459 = vrot.slane %v3417, %v3458
        %v3460 = vlaneseq
        %v3461 = vshrl.u32 %v3460, 7
        %v3462 = vsub.s32 2, %v3461
        %v3463 = vrot.slane %v3417, %v3462
        %v3464 = vlaneseq
        %v3465 = vshrl.u32 %v3464, 7
        %v3466 = vsub.s32 3, %v3465
        %v3467 = vrot.slane %v3417, %v3466
        %v3468 = vlaneseq
        %v3469 = vshrl.u32 %v3468, 7
        %v3470 = vsub.s32 4, %v3469
        %v3471 = vrot.slane %v3417, %v3470
        %v3472 = vlaneseq
        %v3473 = vshrl.u32 %v3472, 7
        %v3474 = vsub.s32 5, %v3473
        %v3475 = vrot.slane %v3417, %v3474
        %v3476 = vlaneseq
        %v3477 = vshrl.u32 %v3476, 7
        %v3478 = vsub.s32 6, %v3477
        %v3479 = vrot.slane %v3417, %v3478
        %v3480 = vlaneseq
        %v3481 = vshrl.u32 %v3480, 7
        %v3482 = vsub.s32 7, %v3481
        %v3483 = vrot.slane %v3417, %v3482
        %v4524 = vunpack.c.l.b16 %v2392
        %v4525 = vunpack.c.h.b16 %v2392
        %v4526 = vunpack.c.l.b16 %v2393
        %v4527 = vunpack.c.h.b16 %v2393
        %v4528 = vunpack.c.l.b16 %v2394
        %v4529 = vunpack.c.h.b16 %v2394
        %v4530 = vunpack.c.l.b16 %v2395
        %v4531 = vunpack.c.h.b16 %v2395
        %v4532 = vunpack.c.l.b16 %v2396
        %v4533 = vunpack.c.h.b16 %v2396
        %v4534 = vunpack.c.l.b16 %v2397
        %v4535 = vunpack.c.h.b16 %v2397
        %v4536 = vunpack.c.l.b16 %v2398
        %v4537 = vunpack.c.h.b16 %v2398
        %v4538 = vunpack.c.l.b16 %v2399
        %v4539 = vunpack.c.h.b16 %v2399
        %v4540 = vunpack.c.l.b16 %v2400
        %v4541 = vunpack.c.h.b16 %v2400
        %v4542 = vunpack.c.l.b16 %v2401
        %v4543 = vunpack.c.h.b16 %v2401
        %v4544 = vunpack.c.l.b16 %v2402
        %v4545 = vunpack.c.h.b16 %v2402
        %v4546 = vunpack.c.l.b16 %v2403
        %v4547 = vunpack.c.h.b16 %v2403
        %v4548 = vunpack.c.l.b16 %v2404
        %v4549 = vunpack.c.h.b16 %v2404
        %v4550 = vunpack.c.l.b16 %v2405
        %v4551 = vunpack.c.h.b16 %v2405
        %v4552 = vunpack.c.l.b16 %v2406
        %v4553 = vunpack.c.h.b16 %v2406
        %v4554 = vunpack.c.l.b16 %v2407
        %v4555 = vunpack.c.h.b16 %v2407
        %v4556 = vunpack.c.l.b16 %v2408
        %v4557 = vunpack.c.h.b16 %v2408
        %v4558 = vunpack.c.l.b16 %v2409
        %v4559 = vunpack.c.h.b16 %v2409
        %v4560 = vunpack.c.l.b16 %v2410
        %v4561 = vunpack.c.h.b16 %v2410
        %v4562 = vunpack.c.l.b16 %v2411
        %v4563 = vunpack.c.h.b16 %v2411
        %v4564 = vunpack.c.l.b16 %v2412
        %v4565 = vunpack.c.h.b16 %v2412
        %v4566 = vunpack.c.l.b16 %v2413
        %v4567 = vunpack.c.h.b16 %v2413
        %v4568 = vunpack.c.l.b16 %v2414
        %v4569 = vunpack.c.h.b16 %v2414
        %v4570 = vunpack.c.l.b16 %v2415
        %v4571 = vunpack.c.h.b16 %v2415
        %v4572 = vunpack.c.l.b16 %v2416
        %v4573 = vunpack.c.h.b16 %v2416
        %v4574 = vunpack.c.l.b16 %v2417
        %v4575 = vunpack.c.h.b16 %v2417
        %v4576 = vunpack.c.l.b16 %v2418
        %v4577 = vunpack.c.h.b16 %v2418
        %v4578 = vunpack.c.l.b16 %v2419
        %v4579 = vunpack.c.h.b16 %v2419
        %v4580 = vunpack.c.l.b16 %v2420
        %v4581 = vunpack.c.h.b16 %v2420
        %v4582 = vunpack.c.l.b16 %v2421
        %v4583 = vunpack.c.h.b16 %v2421
        %v4584 = vunpack.c.l.b16 %v2422
        %v4585 = vunpack.c.h.b16 %v2422
        %v4586 = vunpack.c.l.b16 %v2423
        %v4587 = vunpack.c.h.b16 %v2423
        %v4588 = vunpack.c.l.b16 %v2424
        %v4589 = vunpack.c.h.b16 %v2424
        %v4590 = vunpack.c.l.b16 %v2425
        %v4591 = vunpack.c.h.b16 %v2425
        %v4592 = vunpack.c.l.b16 %v2426
        %v4593 = vunpack.c.h.b16 %v2426
        %v4594 = vunpack.c.l.b16 %v2427
        %v4595 = vunpack.c.h.b16 %v2427
        %v4596 = vunpack.c.l.b16 %v2428
        %v4597 = vunpack.c.h.b16 %v2428
        %v4598 = vunpack.c.l.b16 %v2429
        %v4599 = vunpack.c.h.b16 %v2429
        %v4600 = vunpack.c.l.b16 %v2430
        %v4601 = vunpack.c.h.b16 %v2430
        %v4602 = vunpack.c.l.b16 %v2431
        %v4603 = vunpack.c.h.b16 %v2431
        %v4604 = vunpack.c.l.b16 %v2432
        %v4605 = vunpack.c.h.b16 %v2432
        %v4606 = vunpack.c.l.b16 %v2433
        %v4607 = vunpack.c.h.b16 %v2433
        %v4608 = vunpack.c.l.b16 %v2434
        %v4609 = vunpack.c.h.b16 %v2434
        %v4610 = vunpack.c.l.b16 %v2435
        %v4611 = vunpack.c.h.b16 %v2435
        %v4612 = vunpack.c.l.b16 %v2436
        %v4613 = vunpack.c.h.b16 %v2436
        %v4614 = vunpack.c.l.b16 %v2437
        %v4615 = vunpack.c.h.b16 %v2437
        %v4616 = vunpack.c.l.b16 %v2438
        %v4617 = vunpack.c.h.b16 %v2438
        %v4618 = vunpack.c.l.b16 %v2439
        %v4619 = vunpack.c.h.b16 %v2439
        %v4620 = vunpack.c.l.b16 %v2440
        %v4621 = vunpack.c.h.b16 %v2440
        %v4622 = vunpack.c.l.b16 %v2441
        %v4623 = vunpack.c.h.b16 %v2441
        %v4624 = vunpack.c.l.b16 %v2442
        %v4625 = vunpack.c.h.b16 %v2442
        %v4626 = vunpack.c.l.b16 %v2443
        %v4627 = vunpack.c.h.b16 %v2443
        %v4628 = vunpack.c.l.b16 %v2444
        %v4629 = vunpack.c.h.b16 %v2444
        %v4630 = vunpack.c.l.b16 %v2445
        %v4631 = vunpack.c.h.b16 %v2445
        %v4632 = vunpack.c.l.b16 %v2446
        %v4633 = vunpack.c.h.b16 %v2446
        %v4634 = vunpack.c.l.b16 %v2447
        %v4635 = vunpack.c.h.b16 %v2447
        %v4636 = vunpack.c.l.b16 %v2448
        %v4637 = vunpack.c.h.b16 %v2448
        %v4638 = vunpack.c.l.b16 %v2449
        %v4639 = vunpack.c.h.b16 %v2449
        %v4640 = vunpack.c.l.b16 %v2450
        %v4641 = vunpack.c.h.b16 %v2450
        %v4642 = vunpack.c.l.b16 %v2451
        %v4643 = vunpack.c.h.b16 %v2451
        %v4644 = vunpack.c.l.b16 %v2452
        %v4645 = vunpack.c.h.b16 %v2452
        %v4646 = vunpack.c.l.b16 %v2453
        %v4647 = vunpack.c.h.b16 %v2453
        %v4648 = vunpack.c.l.b16 %v2454
        %v4649 = vunpack.c.h.b16 %v2454
        %v4650 = vunpack.c.l.b16 %v2455
        %v4651 = vunpack.c.h.b16 %v2455
        %v4652 = vunpack.c.l.b16 %v2456
        %v4653 = vunpack.c.h.b16 %v2456
        %v4654 = vunpack.c.l.b16 %v2457
        %v4655 = vunpack.c.h.b16 %v2457
        %v4656 = vunpack.c.l.b16 %v2458
        %v4657 = vunpack.c.h.b16 %v2458
        %v4658 = vunpack.c.l.b16 %v2459
        %v4659 = vunpack.c.h.b16 %v2459
        %v4660 = vunpack.c.l.b16 %v2460
        %v4661 = vunpack.c.h.b16 %v2460
        %v4662 = vunpack.c.l.b16 %v2461
        %v4663 = vunpack.c.h.b16 %v2461
        %v4664 = vunpack.c.l.b16 %v2462
        %v4665 = vunpack.c.h.b16 %v2462
        %v4666 = vunpack.c.l.b16 %v2463
        %v4667 = vunpack.c.h.b16 %v2463
        %v4668 = vunpack.c.l.b16 %v2464
        %v4669 = vunpack.c.h.b16 %v2464
        %v4670 = vunpack.c.l.b16 %v2465
        %v4671 = vunpack.c.h.b16 %v2465
        %v4672 = vunpack.c.l.b16 %v2466
        %v4673 = vunpack.c.h.b16 %v2466
        %v4674 = vunpack.c.l.b16 %v2467
        %v4675 = vunpack.c.h.b16 %v2467
        %v4676 = vunpack.c.l.b16 %v2468
        %v4677 = vunpack.c.h.b16 %v2468
        %v4678 = vunpack.c.l.b16 %v2469
        %v4679 = vunpack.c.h.b16 %v2469
        %v4680 = vunpack.c.l.b16 %v2470
        %v4681 = vunpack.c.h.b16 %v2470
        %v4682 = vunpack.c.l.b16 %v2471
        %v4683 = vunpack.c.h.b16 %v2471
        %v4684 = vunpack.c.l.b16 %v2472
        %v4685 = vunpack.c.h.b16 %v2472
        %v4686 = vunpack.c.l.b16 %v2473
        %v4687 = vunpack.c.h.b16 %v2473
        %v4688 = vunpack.c.l.b16 %v2474
        %v4689 = vunpack.c.h.b16 %v2474
        %v4690 = vunpack.c.l.b16 %v2475
        %v4691 = vunpack.c.h.b16 %v2475
        %v4692 = vunpack.c.l.b16 %v2476
        %v4693 = vunpack.c.h.b16 %v2476
        %v4694 = vunpack.c.l.b16 %v2477
        %v4695 = vunpack.c.h.b16 %v2477
        %v4696 = vunpack.c.l.b16 %v2478
        %v4697 = vunpack.c.h.b16 %v2478
        %v4698 = vunpack.c.l.b16 %v2479
        %v4699 = vunpack.c.h.b16 %v2479
        %v4700 = vunpack.c.l.b16 %v2480
        %v4701 = vunpack.c.h.b16 %v2480
        %v4702 = vunpack.c.l.b16 %v2481
        %v4703 = vunpack.c.h.b16 %v2481
        %v4704 = vunpack.c.l.b16 %v2482
        %v4705 = vunpack.c.h.b16 %v2482
        %v4706 = vunpack.c.l.b16 %v2483
        %v4707 = vunpack.c.h.b16 %v2483
        %v4708 = vunpack.c.l.b16 %v2484
        %v4709 = vunpack.c.h.b16 %v2484
        %v4710 = vunpack.c.l.b16 %v2485
        %v4711 = vunpack.c.h.b16 %v2485
        %v4712 = vunpack.c.l.b16 %v2486
        %v4713 = vunpack.c.h.b16 %v2486
        %v4714 = vunpack.c.l.b16 %v2487
        %v4715 = vunpack.c.h.b16 %v2487
        %v4716 = vunpack.c.l.b16 %v2488
        %v4717 = vunpack.c.h.b16 %v2488
        %v4718 = vunpack.c.l.b16 %v2489
        %v4719 = vunpack.c.h.b16 %v2489
        %v4720 = vunpack.c.l.b16 %v2490
        %v4721 = vunpack.c.h.b16 %v2490
        %v4722 = vunpack.c.l.b16 %v2491
        %v4723 = vunpack.c.h.b16 %v2491
        %v4724 = vunpack.c.l.b16 %v2492
        %v4725 = vunpack.c.h.b16 %v2492
        %v4726 = vunpack.c.l.b16 %v2493
        %v4727 = vunpack.c.h.b16 %v2493
        %v4728 = vunpack.c.l.b16 %v2494
        %v4729 = vunpack.c.h.b16 %v2494
        %v4730 = vunpack.c.l.b16 %v2495
        %v4731 = vunpack.c.h.b16 %v2495
        %v4732 = vunpack.c.l.b16 %v2496
        %v4733 = vunpack.c.h.b16 %v2496
        %v4734 = vunpack.c.l.b16 %v2497
        %v4735 = vunpack.c.h.b16 %v2497
        %v4736 = vunpack.c.l.b16 %v2498
        %v4737 = vunpack.c.h.b16 %v2498
        %v4738 = vunpack.c.l.b16 %v2499
        %v4739 = vunpack.c.h.b16 %v2499
        %v4740 = vunpack.c.l.b16 %v2500
        %v4741 = vunpack.c.h.b16 %v2500
        %v4742 = vunpack.c.l.b16 %v2501
        %v4743 = vunpack.c.h.b16 %v2501
        %v4744 = vunpack.c.l.b16 %v2502
        %v4745 = vunpack.c.h.b16 %v2502
        %v4746 = vunpack.c.l.b16 %v2503
        %v4747 = vunpack.c.h.b16 %v2503
        %v4748 = vunpack.c.l.b16 %v2504
        %v4749 = vunpack.c.h.b16 %v2504
        %v4750 = vunpack.c.l.b16 %v2505
        %v4751 = vunpack.c.h.b16 %v2505
        %v4752 = vunpack.c.l.b16 %v2506
        %v4753 = vunpack.c.h.b16 %v2506
        %v4754 = vunpack.c.l.b16 %v2507
        %v4755 = vunpack.c.h.b16 %v2507
        %v4756 = vunpack.c.l.b16 %v2508
        %v4757 = vunpack.c.h.b16 %v2508
        %v4758 = vunpack.c.l.b16 %v2509
        %v4759 = vunpack.c.h.b16 %v2509
        %v4760 = vunpack.c.l.b16 %v2510
        %v4761 = vunpack.c.h.b16 %v2510
        %v4762 = vunpack.c.l.b16 %v2511
        %v4763 = vunpack.c.h.b16 %v2511
        %v4764 = vunpack.c.l.b16 %v2512
        %v4765 = vunpack.c.h.b16 %v2512
        %v4766 = vunpack.c.l.b16 %v2513
        %v4767 = vunpack.c.h.b16 %v2513
        %v4768 = vunpack.c.l.b16 %v2514
        %v4769 = vunpack.c.h.b16 %v2514
        %v4770 = vunpack.c.l.b16 %v2515
        %v4771 = vunpack.c.h.b16 %v2515
        %v4772 = vunpack.c.l.b16 %v2516
        %v4773 = vunpack.c.h.b16 %v2516
        %v4774 = vunpack.c.l.b16 %v2517
        %v4775 = vunpack.c.h.b16 %v2517
        %v4776 = vunpack.c.l.b16 %v2518
        %v4777 = vunpack.c.h.b16 %v2518
        %v4778 = vunpack.c.l.b16 %v2519
        %v4779 = vunpack.c.h.b16 %v2519
        %v4780 = vunpack.c.l.b16 %v2520
        %v4781 = vunpack.c.h.b16 %v2520
        %v4782 = vunpack.c.l.b16 %v2521
        %v4783 = vunpack.c.h.b16 %v2521
        %v4784 = vunpack.c.l.b16 %v2522
        %v4785 = vunpack.c.h.b16 %v2522
        %v4786 = vunpack.c.l.b16 %v2523
        %v4787 = vunpack.c.h.b16 %v2523
        %v4788 = vunpack.c.l.b16 %v2524
        %v4789 = vunpack.c.h.b16 %v2524
        %v4790 = vunpack.c.l.b16 %v2525
        %v4791 = vunpack.c.h.b16 %v2525
        %v4792 = vunpack.c.l.b16 %v2526
        %v4793 = vunpack.c.h.b16 %v2526
        %v4794 = vunpack.c.l.b16 %v2527
        %v4795 = vunpack.c.h.b16 %v2527
        %v4796 = vunpack.c.l.b16 %v2528
        %v4797 = vunpack.c.h.b16 %v2528
        %v4798 = vunpack.c.l.b16 %v2529
        %v4799 = vunpack.c.h.b16 %v2529
        %v4800 = vunpack.c.l.b16 %v2530
        %v4801 = vunpack.c.h.b16 %v2530
        %v4802 = vunpack.c.l.b16 %v2531
        %v4803 = vunpack.c.h.b16 %v2531
        %v4804 = vunpack.c.l.b16 %v2532
        %v4805 = vunpack.c.h.b16 %v2532
        %v4806 = vunpack.c.l.b16 %v2533
        %v4807 = vunpack.c.h.b16 %v2533
        %v4808 = vunpack.c.l.b16 %v2534
        %v4809 = vunpack.c.h.b16 %v2534
        %v4810 = vunpack.c.l.b16 %v2535
        %v4811 = vunpack.c.h.b16 %v2535
        %v4812 = vunpack.c.l.b16 %v2536
        %v4813 = vunpack.c.h.b16 %v2536
        %v4814 = vunpack.c.l.b16 %v2537
        %v4815 = vunpack.c.h.b16 %v2537
        %v4816 = vunpack.c.l.b16 %v2538
        %v4817 = vunpack.c.h.b16 %v2538
        %v4818 = vunpack.c.l.b16 %v2539
        %v4819 = vunpack.c.h.b16 %v2539
        %v4820 = vunpack.c.l.b16 %v2540
        %v4821 = vunpack.c.h.b16 %v2540
        %v4822 = vunpack.c.l.b16 %v2541
        %v4823 = vunpack.c.h.b16 %v2541
        %v4824 = vunpack.c.l.b16 %v2542
        %v4825 = vunpack.c.h.b16 %v2542
        %v4826 = vunpack.c.l.b16 %v2543
        %v4827 = vunpack.c.h.b16 %v2543
        %v4828 = vunpack.c.l.b16 %v2544
        %v4829 = vunpack.c.h.b16 %v2544
        %v4830 = vunpack.c.l.b16 %v2545
        %v4831 = vunpack.c.h.b16 %v2545
        %v4832 = vunpack.c.l.b16 %v2546
        %v4833 = vunpack.c.h.b16 %v2546
        %v4834 = vunpack.c.l.b16 %v2547
        %v4835 = vunpack.c.h.b16 %v2547
        %v4836 = vunpack.c.l.b16 %v2548
        %v4837 = vunpack.c.h.b16 %v2548
        %v4838 = vunpack.c.l.b16 %v2549
        %v4839 = vunpack.c.h.b16 %v2549
        %v4840 = vunpack.c.l.b16 %v2550
        %v4841 = vunpack.c.h.b16 %v2550
        %v4842 = vunpack.c.l.b16 %v2551
        %v4843 = vunpack.c.h.b16 %v2551
        %v4844 = vunpack.c.l.b16 %v2552
        %v4845 = vunpack.c.h.b16 %v2552
        %v4846 = vunpack.c.l.b16 %v2553
        %v4847 = vunpack.c.h.b16 %v2553
        %v4848 = vunpack.c.l.b16 %v2554
        %v4849 = vunpack.c.h.b16 %v2554
        %v4850 = vunpack.c.l.b16 %v2555
        %v4851 = vunpack.c.h.b16 %v2555
        %v4852 = vunpack.c.l.b16 %v2556
        %v4853 = vunpack.c.h.b16 %v2556
        %v4854 = vunpack.c.l.b16 %v2557
        %v4855 = vunpack.c.h.b16 %v2557
        %v4856 = vunpack.c.l.b16 %v2558
        %v4857 = vunpack.c.h.b16 %v2558
        %v4858 = vunpack.c.l.b16 %v2559
        %v4859 = vunpack.c.h.b16 %v2559
        %v4860 = vunpack.c.l.b16 %v2560
        %v4861 = vunpack.c.h.b16 %v2560
        %v4862 = vunpack.c.l.b16 %v2561
        %v4863 = vunpack.c.h.b16 %v2561
        %v4864 = vunpack.c.l.b16 %v2562
        %v4865 = vunpack.c.h.b16 %v2562
        %v4866 = vunpack.c.l.b16 %v2563
        %v4867 = vunpack.c.h.b16 %v2563
        %v4868 = vunpack.c.l.b16 %v2564
        %v4869 = vunpack.c.h.b16 %v2564
        %v4870 = vunpack.c.l.b16 %v2565
        %v4871 = vunpack.c.h.b16 %v2565
        %v4872 = vunpack.c.l.b16 %v2566
        %v4873 = vunpack.c.h.b16 %v2566
        %v4874 = vunpack.c.l.b16 %v2567
        %v4875 = vunpack.c.h.b16 %v2567
        %v4876 = vunpack.c.l.b16 %v2568
        %v4877 = vunpack.c.h.b16 %v2568
        %v4878 = vunpack.c.l.b16 %v2569
        %v4879 = vunpack.c.h.b16 %v2569
        %v4880 = vunpack.c.l.b16 %v2570
        %v4881 = vunpack.c.h.b16 %v2570
        %v4882 = vunpack.c.l.b16 %v2571
        %v4883 = vunpack.c.h.b16 %v2571
        %v4884 = vunpack.c.l.b16 %v2572
        %v4885 = vunpack.c.h.b16 %v2572
        %v4886 = vunpack.c.l.b16 %v2573
        %v4887 = vunpack.c.h.b16 %v2573
        %v4888 = vunpack.c.l.b16 %v2574
        %v4889 = vunpack.c.h.b16 %v2574
        %v4890 = vunpack.c.l.b16 %v2575
        %v4891 = vunpack.c.h.b16 %v2575
        %v4892 = vunpack.c.l.b16 %v2576
        %v4893 = vunpack.c.h.b16 %v2576
        %v4894 = vunpack.c.l.b16 %v2577
        %v4895 = vunpack.c.h.b16 %v2577
        %v4896 = vunpack.c.l.b16 %v2578
        %v4897 = vunpack.c.h.b16 %v2578
        %v4898 = vunpack.c.l.b16 %v2579
        %v4899 = vunpack.c.h.b16 %v2579
        %v4900 = vunpack.c.l.b16 %v2580
        %v4901 = vunpack.c.h.b16 %v2580
        %v4902 = vunpack.c.l.b16 %v2581
        %v4903 = vunpack.c.h.b16 %v2581
        %v4904 = vunpack.c.l.b16 %v2582
        %v4905 = vunpack.c.h.b16 %v2582
        %v4906 = vunpack.c.l.b16 %v2583
        %v4907 = vunpack.c.h.b16 %v2583
        %v4908 = vunpack.c.l.b16 %v2584
        %v4909 = vunpack.c.h.b16 %v2584
        %v4910 = vunpack.c.l.b16 %v2585
        %v4911 = vunpack.c.h.b16 %v2585
        %v4912 = vunpack.c.l.b16 %v2586
        %v4913 = vunpack.c.h.b16 %v2586
        %v4914 = vunpack.c.l.b16 %v2587
        %v4915 = vunpack.c.h.b16 %v2587
        %v4916 = vunpack.c.l.b16 %v2588
        %v4917 = vunpack.c.h.b16 %v2588
        %v4918 = vunpack.c.l.b16 %v2589
        %v4919 = vunpack.c.h.b16 %v2589
        %v4920 = vunpack.c.l.b16 %v2590
        %v4921 = vunpack.c.h.b16 %v2590
        %v4922 = vunpack.c.l.b16 %v2591
        %v4923 = vunpack.c.h.b16 %v2591
        %v4924 = vunpack.c.l.b16 %v2592
        %v4925 = vunpack.c.h.b16 %v2592
        %v4926 = vunpack.c.l.b16 %v2593
        %v4927 = vunpack.c.h.b16 %v2593
        %v4928 = vunpack.c.l.b16 %v2594
        %v4929 = vunpack.c.h.b16 %v2594
        %v4930 = vunpack.c.l.b16 %v2595
        %v4931 = vunpack.c.h.b16 %v2595
        %v4932 = vunpack.c.l.b16 %v2596
        %v4933 = vunpack.c.h.b16 %v2596
        %v4934 = vunpack.c.l.b16 %v2597
        %v4935 = vunpack.c.h.b16 %v2597
        %v4936 = vunpack.c.l.b16 %v2598
        %v4937 = vunpack.c.h.b16 %v2598
        %v4938 = vunpack.c.l.b16 %v2599
        %v4939 = vunpack.c.h.b16 %v2599
        %v4940 = vunpack.c.l.b16 %v2600
        %v4941 = vunpack.c.h.b16 %v2600
        %v4942 = vunpack.c.l.b16 %v2601
        %v4943 = vunpack.c.h.b16 %v2601
        %v4944 = vunpack.c.l.b16 %v2602
        %v4945 = vunpack.c.h.b16 %v2602
        %v4946 = vunpack.c.l.b16 %v2603
        %v4947 = vunpack.c.h.b16 %v2603
        %v4948 = vunpack.c.l.b16 %v2604
        %v4949 = vunpack.c.h.b16 %v2604
        %v4950 = vunpack.c.l.b16 %v2605
        %v4951 = vunpack.c.h.b16 %v2605
        %v4952 = vunpack.c.l.b16 %v2606
        %v4953 = vunpack.c.h.b16 %v2606
        %v4954 = vunpack.c.l.b16 %v2607
        %v4955 = vunpack.c.h.b16 %v2607
        %v4956 = vunpack.c.l.b16 %v2608
        %v4957 = vunpack.c.h.b16 %v2608
        %v4958 = vunpack.c.l.b16 %v2609
        %v4959 = vunpack.c.h.b16 %v2609
        %v4960 = vunpack.c.l.b16 %v2610
        %v4961 = vunpack.c.h.b16 %v2610
        %v4962 = vunpack.c.l.b16 %v2611
        %v4963 = vunpack.c.h.b16 %v2611
        %v4964 = vunpack.c.l.b16 %v2612
        %v4965 = vunpack.c.h.b16 %v2612
        %v4966 = vunpack.c.l.b16 %v2613
        %v4967 = vunpack.c.h.b16 %v2613
        %v4968 = vunpack.c.l.b16 %v2614
        %v4969 = vunpack.c.h.b16 %v2614
        %v4970 = vunpack.c.l.b16 %v2615
        %v4971 = vunpack.c.h.b16 %v2615
        %v4972 = vunpack.c.l.b16 %v2616
        %v4973 = vunpack.c.h.b16 %v2616
        %v4974 = vunpack.c.l.b16 %v2617
        %v4975 = vunpack.c.h.b16 %v2617
        %v4976 = vunpack.c.l.b16 %v2618
        %v4977 = vunpack.c.h.b16 %v2618
        %v4978 = vunpack.c.l.b16 %v2619
        %v4979 = vunpack.c.h.b16 %v2619
        %v4980 = vunpack.c.l.b16 %v2620
        %v4981 = vunpack.c.h.b16 %v2620
        %v4982 = vunpack.c.l.b16 %v2621
        %v4983 = vunpack.c.h.b16 %v2621
        %v4984 = vunpack.c.l.b16 %v2622
        %v4985 = vunpack.c.h.b16 %v2622
        %v4986 = vunpack.c.l.b16 %v2623
        %v4987 = vunpack.c.h.b16 %v2623
        %v4988 = vunpack.c.l.b16 %v2624
        %v4989 = vunpack.c.h.b16 %v2624
        %v4990 = vunpack.c.l.b16 %v2625
        %v4991 = vunpack.c.h.b16 %v2625
        %v4992 = vunpack.c.l.b16 %v2626
        %v4993 = vunpack.c.h.b16 %v2626
        %v4994 = vunpack.c.l.b16 %v2627
        %v4995 = vunpack.c.h.b16 %v2627
        %v4996 = vunpack.c.l.b16 %v2628
        %v4997 = vunpack.c.h.b16 %v2628
        %v4998 = vunpack.c.l.b16 %v2629
        %v4999 = vunpack.c.h.b16 %v2629
        %v5000 = vunpack.c.l.b16 %v2630
        %v5001 = vunpack.c.h.b16 %v2630
        %v5002 = vunpack.c.l.b16 %v2631
        %v5003 = vunpack.c.h.b16 %v2631
        %v5004 = vunpack.c.l.b16 %v2632
        %v5005 = vunpack.c.h.b16 %v2632
        %v5006 = vunpack.c.l.b16 %v2633
        %v5007 = vunpack.c.h.b16 %v2633
        %v5008 = vunpack.c.l.b16 %v2634
        %v5009 = vunpack.c.h.b16 %v2634
        %v5010 = vunpack.c.l.b16 %v2635
        %v5011 = vunpack.c.h.b16 %v2635
        %v5012 = vunpack.c.l.b16 %v2636
        %v5013 = vunpack.c.h.b16 %v2636
        %v5014 = vunpack.c.l.b16 %v2637
        %v5015 = vunpack.c.h.b16 %v2637
        %v5016 = vunpack.c.l.b16 %v2638
        %v5017 = vunpack.c.h.b16 %v2638
        %v5018 = vunpack.c.l.b16 %v2639
        %v5019 = vunpack.c.h.b16 %v2639
        %v5020 = vunpack.c.l.b16 %v2640
        %v5021 = vunpack.c.h.b16 %v2640
        %v5022 = vunpack.c.l.b16 %v2641
        %v5023 = vunpack.c.h.b16 %v2641
        %v5024 = vunpack.c.l.b16 %v2642
        %v5025 = vunpack.c.h.b16 %v2642
        %v5026 = vunpack.c.l.b16 %v2643
        %v5027 = vunpack.c.h.b16 %v2643
        %v5028 = vunpack.c.l.b16 %v2644
        %v5029 = vunpack.c.h.b16 %v2644
        %v5030 = vunpack.c.l.b16 %v2645
        %v5031 = vunpack.c.h.b16 %v2645
        %v5032 = vunpack.c.l.b16 %v2646
        %v5033 = vunpack.c.h.b16 %v2646
        %v5034 = vunpack.c.l.b16 %v2647
        %v5035 = vunpack.c.h.b16 %v2647
        %v5036 = vunpack.c.l.b16 %v2648
        %v5037 = vunpack.c.h.b16 %v2648
        %v5038 = vunpack.c.l.b16 %v2649
        %v5039 = vunpack.c.h.b16 %v2649
        %v5040 = vunpack.c.l.b16 %v2650
        %v5041 = vunpack.c.h.b16 %v2650
        %v5042 = vunpack.c.l.b16 %v2651
        %v5043 = vunpack.c.h.b16 %v2651
        %v5044 = vunpack.c.l.b16 %v2652
        %v5045 = vunpack.c.h.b16 %v2652
        %v5046 = vunpack.c.l.b16 %v2653
        %v5047 = vunpack.c.h.b16 %v2653
        %v5048 = vunpack.c.l.b16 %v2654
        %v5049 = vunpack.c.h.b16 %v2654
        %v5050 = vunpack.c.l.b16 %v2655
        %v5051 = vunpack.c.h.b16 %v2655
        %v5052 = vunpack.c.l.b16 %v2656
        %v5053 = vunpack.c.h.b16 %v2656
        %v5054 = vunpack.c.l.b16 %v2657
        %v5055 = vunpack.c.h.b16 %v2657
        %v5056 = vunpack.c.l.b16 %v2658
        %v5057 = vunpack.c.h.b16 %v2658
        %v5058 = vunpack.c.l.b16 %v2659
        %v5059 = vunpack.c.h.b16 %v2659
        %v5060 = vunpack.c.l.b16 %v2660
        %v5061 = vunpack.c.h.b16 %v2660
        %v5062 = vunpack.c.l.b16 %v2661
        %v5063 = vunpack.c.h.b16 %v2661
        %v5064 = vunpack.c.l.b16 %v2662
        %v5065 = vunpack.c.h.b16 %v2662
        %v5066 = vunpack.c.l.b16 %v2663
        %v5067 = vunpack.c.h.b16 %v2663
        %v5068 = vunpack.c.l.b16 %v2664
        %v5069 = vunpack.c.h.b16 %v2664
        %v5070 = vunpack.c.l.b16 %v2665
        %v5071 = vunpack.c.h.b16 %v2665
        %v5072 = vunpack.c.l.b16 %v2666
        %v5073 = vunpack.c.h.b16 %v2666
        %v5074 = vunpack.c.l.b16 %v2667
        %v5075 = vunpack.c.h.b16 %v2667
        %v5076 = vunpack.c.l.b16 %v2668
        %v5077 = vunpack.c.h.b16 %v2668
        %v5078 = vunpack.c.l.b16 %v2669
        %v5079 = vunpack.c.h.b16 %v2669
        %v5080 = vunpack.c.l.b16 %v2670
        %v5081 = vunpack.c.h.b16 %v2670
        %v5082 = vunpack.c.l.b16 %v2671
        %v5083 = vunpack.c.h.b16 %v2671
        %v5084 = vunpack.c.l.b16 %v2672
        %v5085 = vunpack.c.h.b16 %v2672
        %v5086 = vunpack.c.l.b16 %v2673
        %v5087 = vunpack.c.h.b16 %v2673
        %v5088 = vunpack.c.l.b16 %v2674
        %v5089 = vunpack.c.h.b16 %v2674
        %v5090 = vunpack.c.l.b16 %v2675
        %v5091 = vunpack.c.h.b16 %v2675
        %v5092 = vunpack.c.l.b16 %v2676
        %v5093 = vunpack.c.h.b16 %v2676
        %v5094 = vunpack.c.l.b16 %v2677
        %v5095 = vunpack.c.h.b16 %v2677
        %v5096 = vunpack.c.l.b16 %v2678
        %v5097 = vunpack.c.h.b16 %v2678
        %v5098 = vunpack.c.l.b16 %v2679
        %v5099 = vunpack.c.h.b16 %v2679
        %v5100 = vunpack.c.l.b16 %v2680
        %v5101 = vunpack.c.h.b16 %v2680
        %v5102 = vunpack.c.l.b16 %v2681
        %v5103 = vunpack.c.h.b16 %v2681
        %v5104 = vunpack.c.l.b16 %v2682
        %v5105 = vunpack.c.h.b16 %v2682
        %v5106 = vunpack.c.l.b16 %v2683
        %v5107 = vunpack.c.h.b16 %v2683
        %v5108 = vunpack.c.l.b16 %v2684
        %v5109 = vunpack.c.h.b16 %v2684
        %v5110 = vunpack.c.l.b16 %v2685
        %v5111 = vunpack.c.h.b16 %v2685
        %v5112 = vunpack.c.l.b16 %v2686
        %v5113 = vunpack.c.h.b16 %v2686
        %v5114 = vunpack.c.l.b16 %v2687
        %v5115 = vunpack.c.h.b16 %v2687
        %v5116 = vunpack.c.l.b16 %v2688
        %v5117 = vunpack.c.h.b16 %v2688
        %v5118 = vunpack.c.l.b16 %v2689
        %v5119 = vunpack.c.h.b16 %v2689
        %v5120 = vunpack.c.l.b16 %v2690
        %v5121 = vunpack.c.h.b16 %v2690
        %v5122 = vunpack.c.l.b16 %v2691
        %v5123 = vunpack.c.h.b16 %v2691
        %v5124 = vunpack.c.l.b16 %v2692
        %v5125 = vunpack.c.h.b16 %v2692
        %v5126 = vunpack.c.l.b16 %v2693
        %v5127 = vunpack.c.h.b16 %v2693
        %v5128 = vunpack.c.l.b16 %v2694
        %v5129 = vunpack.c.h.b16 %v2694
        %v5130 = vunpack.c.l.b16 %v2695
        %v5131 = vunpack.c.h.b16 %v2695
        %v5132 = vunpack.c.l.b16 %v2696
        %v5133 = vunpack.c.h.b16 %v2696
        %v5134 = vunpack.c.l.b16 %v2697
        %v5135 = vunpack.c.h.b16 %v2697
        %v5136 = vunpack.c.l.b16 %v2698
        %v5137 = vunpack.c.h.b16 %v2698
        %v5138 = vunpack.c.l.b16 %v2699
        %v5139 = vunpack.c.h.b16 %v2699
        %v5140 = vunpack.c.l.b16 %v2700
        %v5141 = vunpack.c.h.b16 %v2700
        %v5142 = vunpack.c.l.b16 %v2701
        %v5143 = vunpack.c.h.b16 %v2701
        %v5144 = vunpack.c.l.b16 %v2702
        %v5145 = vunpack.c.h.b16 %v2702
        %v5146 = vunpack.c.l.b16 %v2703
        %v5147 = vunpack.c.h.b16 %v2703
        %v5148 = vunpack.c.l.b16 %v2704
        %v5149 = vunpack.c.h.b16 %v2704
        %v5150 = vunpack.c.l.b16 %v2705
        %v5151 = vunpack.c.h.b16 %v2705
        %v5152 = vunpack.c.l.b16 %v2706
        %v5153 = vunpack.c.h.b16 %v2706
        %v5154 = vunpack.c.l.b16 %v2707
        %v5155 = vunpack.c.h.b16 %v2707
        %v5156 = vunpack.c.l.b16 %v2708
        %v5157 = vunpack.c.h.b16 %v2708
        %v5158 = vunpack.c.l.b16 %v2709
        %v5159 = vunpack.c.h.b16 %v2709
        %v5160 = vunpack.c.l.b16 %v2710
        %v5161 = vunpack.c.h.b16 %v2710
        %v5162 = vunpack.c.l.b16 %v2711
        %v5163 = vunpack.c.h.b16 %v2711
        %v5164 = vunpack.c.l.b16 %v2712
        %v5165 = vunpack.c.h.b16 %v2712
        %v5166 = vunpack.c.l.b16 %v2713
        %v5167 = vunpack.c.h.b16 %v2713
        %v5168 = vunpack.c.l.b16 %v2714
        %v5169 = vunpack.c.h.b16 %v2714
        %v5170 = vunpack.c.l.b16 %v2715
        %v5171 = vunpack.c.h.b16 %v2715
        %v5172 = vunpack.c.l.b16 %v2716
        %v5173 = vunpack.c.h.b16 %v2716
        %v5174 = vunpack.c.l.b16 %v2717
        %v5175 = vunpack.c.h.b16 %v2717
        %v5176 = vunpack.c.l.b16 %v2718
        %v5177 = vunpack.c.h.b16 %v2718
        %v5178 = vunpack.c.l.b16 %v2719
        %v5179 = vunpack.c.h.b16 %v2719
        %v5180 = vunpack.c.l.b16 %v2720
        %v5181 = vunpack.c.h.b16 %v2720
        %v5182 = vunpack.c.l.b16 %v2721
        %v5183 = vunpack.c.h.b16 %v2721
        %v5184 = vunpack.c.l.b16 %v2722
        %v5185 = vunpack.c.h.b16 %v2722
        %v5186 = vunpack.c.l.b16 %v2723
        %v5187 = vunpack.c.h.b16 %v2723
        %v5188 = vunpack.c.l.b16 %v2724
        %v5189 = vunpack.c.h.b16 %v2724
        %v5190 = vunpack.c.l.b16 %v2725
        %v5191 = vunpack.c.h.b16 %v2725
        %v5192 = vunpack.c.l.b16 %v2726
        %v5193 = vunpack.c.h.b16 %v2726
        %v5194 = vunpack.c.l.b16 %v2727
        %v5195 = vunpack.c.h.b16 %v2727
        %v5196 = vunpack.c.l.b16 %v2728
        %v5197 = vunpack.c.h.b16 %v2728
        %v5198 = vunpack.c.l.b16 %v2729
        %v5199 = vunpack.c.h.b16 %v2729
        %v5200 = vunpack.c.l.b16 %v2730
        %v5201 = vunpack.c.h.b16 %v2730
        %v5202 = vunpack.c.l.b16 %v2731
        %v5203 = vunpack.c.h.b16 %v2731
        %v5204 = vunpack.c.l.b16 %v2732
        %v5205 = vunpack.c.h.b16 %v2732
        %v5206 = vunpack.c.l.b16 %v2733
        %v5207 = vunpack.c.h.b16 %v2733
        %v5208 = vunpack.c.l.b16 %v2734
        %v5209 = vunpack.c.h.b16 %v2734
        %v5210 = vunpack.c.l.b16 %v2735
        %v5211 = vunpack.c.h.b16 %v2735
        %v5212 = vunpack.c.l.b16 %v2736
        %v5213 = vunpack.c.h.b16 %v2736
        %v5214 = vunpack.c.l.b16 %v2737
        %v5215 = vunpack.c.h.b16 %v2737
        %v5216 = vunpack.c.l.b16 %v2738
        %v5217 = vunpack.c.h.b16 %v2738
        %v5218 = vunpack.c.l.b16 %v2739
        %v5219 = vunpack.c.h.b16 %v2739
        %v5220 = vunpack.c.l.b16 %v2740
        %v5221 = vunpack.c.h.b16 %v2740
        %v5222 = vunpack.c.l.b16 %v2741
        %v5223 = vunpack.c.h.b16 %v2741
        %v5224 = vunpack.c.l.b16 %v2742
        %v5225 = vunpack.c.h.b16 %v2742
        %v5226 = vunpack.c.l.b16 %v2743
        %v5227 = vunpack.c.h.b16 %v2743
        %v5228 = vunpack.c.l.b16 %v2744
        %v5229 = vunpack.c.h.b16 %v2744
        %v5230 = vunpack.c.l.b16 %v2745
        %v5231 = vunpack.c.h.b16 %v2745
        %v5232 = vunpack.c.l.b16 %v2746
        %v5233 = vunpack.c.h.b16 %v2746
        %v5234 = vunpack.c.l.b16 %v2747
        %v5235 = vunpack.c.h.b16 %v2747
        %v5236 = vunpack.c.l.b16 %v2748
        %v5237 = vunpack.c.h.b16 %v2748
        %v5238 = vunpack.c.l.b16 %v2749
        %v5239 = vunpack.c.h.b16 %v2749
        %v5240 = vunpack.c.l.b16 %v2750
        %v5241 = vunpack.c.h.b16 %v2750
        %v5242 = vunpack.c.l.b16 %v2751
        %v5243 = vunpack.c.h.b16 %v2751
        %v5244 = vunpack.c.l.b16 %v2752
        %v5245 = vunpack.c.h.b16 %v2752
        %v5246 = vunpack.c.l.b16 %v2753
        %v5247 = vunpack.c.h.b16 %v2753
        %v5248 = vunpack.c.l.b16 %v2754
        %v5249 = vunpack.c.h.b16 %v2754
        %v5250 = vunpack.c.l.b16 %v2755
        %v5251 = vunpack.c.h.b16 %v2755
        %v5252 = vunpack.c.l.b16 %v2756
        %v5253 = vunpack.c.h.b16 %v2756
        %v5254 = vunpack.c.l.b16 %v2757
        %v5255 = vunpack.c.h.b16 %v2757
        %v5256 = vunpack.c.l.b16 %v2758
        %v5257 = vunpack.c.h.b16 %v2758
        %v5258 = vunpack.c.l.b16 %v2759
        %v5259 = vunpack.c.h.b16 %v2759
        %v5260 = vunpack.c.l.b16 %v2760
        %v5261 = vunpack.c.h.b16 %v2760
        %v5262 = vunpack.c.l.b16 %v2761
        %v5263 = vunpack.c.h.b16 %v2761
        %v5264 = vunpack.c.l.b16 %v2762
        %v5265 = vunpack.c.h.b16 %v2762
        %v5266 = vunpack.c.l.b16 %v2763
        %v5267 = vunpack.c.h.b16 %v2763
        %v5268 = vunpack.c.l.b16 %v2764
        %v5269 = vunpack.c.h.b16 %v2764
        %v5270 = vunpack.c.l.b16 %v2765
        %v5271 = vunpack.c.h.b16 %v2765
        %v5272 = vunpack.c.l.b16 %v2766
        %v5273 = vunpack.c.h.b16 %v2766
        %v5274 = vunpack.c.l.b16 %v2767
        %v5275 = vunpack.c.h.b16 %v2767
        %v5276 = vunpack.c.l.b16 %v2768
        %v5277 = vunpack.c.h.b16 %v2768
        %v5278 = vunpack.c.l.b16 %v2769
        %v5279 = vunpack.c.h.b16 %v2769
        %v5280 = vunpack.c.l.b16 %v2770
        %v5281 = vunpack.c.h.b16 %v2770
        %v5282 = vunpack.c.l.b16 %v2771
        %v5283 = vunpack.c.h.b16 %v2771
        %v5284 = vunpack.c.l.b16 %v2772
        %v5285 = vunpack.c.h.b16 %v2772
        %v5286 = vunpack.c.l.b16 %v2773
        %v5287 = vunpack.c.h.b16 %v2773
        %v5288 = vunpack.c.l.b16 %v2774
        %v5289 = vunpack.c.h.b16 %v2774
        %v5290 = vunpack.c.l.b16 %v2775
        %v5291 = vunpack.c.h.b16 %v2775
        %v5292 = vunpack.c.l.b16 %v2776
        %v5293 = vunpack.c.h.b16 %v2776
        %v5294 = vunpack.c.l.b16 %v2777
        %v5295 = vunpack.c.h.b16 %v2777
        %v5296 = vunpack.c.l.b16 %v2778
        %v5297 = vunpack.c.h.b16 %v2778
        %v5298 = vunpack.c.l.b16 %v2779
        %v5299 = vunpack.c.h.b16 %v2779
        %v5300 = vunpack.c.l.b16 %v2780
        %v5301 = vunpack.c.h.b16 %v2780
        %v5302 = vunpack.c.l.b16 %v2781
        %v5303 = vunpack.c.h.b16 %v2781
        %v5304 = vunpack.c.l.b16 %v2782
        %v5305 = vunpack.c.h.b16 %v2782
        %v5306 = vunpack.c.l.b16 %v2783
        %v5307 = vunpack.c.h.b16 %v2783
        %v5308 = vunpack.c.l.b16 %v2784
        %v5309 = vunpack.c.h.b16 %v2784
        %v5310 = vunpack.c.l.b16 %v2785
        %v5311 = vunpack.c.h.b16 %v2785
        %v5312 = vunpack.c.l.b16 %v2786
        %v5313 = vunpack.c.h.b16 %v2786
        %v5314 = vunpack.c.l.b16 %v2787
        %v5315 = vunpack.c.h.b16 %v2787
        %v5316 = vunpack.c.l.b16 %v2788
        %v5317 = vunpack.c.h.b16 %v2788
        %v5318 = vunpack.c.l.b16 %v2789
        %v5319 = vunpack.c.h.b16 %v2789
        %v5320 = vunpack.c.l.b16 %v2790
        %v5321 = vunpack.c.h.b16 %v2790
        %v5322 = vunpack.c.l.b16 %v2791
        %v5323 = vunpack.c.h.b16 %v2791
        %v5324 = vunpack.c.l.b16 %v2792
        %v5325 = vunpack.c.h.b16 %v2792
        %v5326 = vunpack.c.l.b16 %v2793
        %v5327 = vunpack.c.h.b16 %v2793
        %v5328 = vunpack.c.l.b16 %v2794
        %v5329 = vunpack.c.h.b16 %v2794
        %v5330 = vunpack.c.l.b16 %v2795
        %v5331 = vunpack.c.h.b16 %v2795
        %v5332 = vunpack.c.l.b16 %v2796
        %v5333 = vunpack.c.h.b16 %v2796
        %v5334 = vunpack.c.l.b16 %v2797
        %v5335 = vunpack.c.h.b16 %v2797
        %v5336 = vunpack.c.l.b16 %v2798
        %v5337 = vunpack.c.h.b16 %v2798
        %v5338 = vunpack.c.l.b16 %v2799
        %v5339 = vunpack.c.h.b16 %v2799
        %v5340 = vunpack.c.l.b16 %v2800
        %v5341 = vunpack.c.h.b16 %v2800
        %v5342 = vunpack.c.l.b16 %v2801
        %v5343 = vunpack.c.h.b16 %v2801
        %v5344 = vunpack.c.l.b16 %v2802
        %v5345 = vunpack.c.h.b16 %v2802
        %v5346 = vunpack.c.l.b16 %v2803
        %v5347 = vunpack.c.h.b16 %v2803
        %v5348 = vunpack.c.l.b16 %v2804
        %v5349 = vunpack.c.h.b16 %v2804
        %v5350 = vunpack.c.l.b16 %v2805
        %v5351 = vunpack.c.h.b16 %v2805
        %v5352 = vunpack.c.l.b16 %v2806
        %v5353 = vunpack.c.h.b16 %v2806
        %v5354 = vunpack.c.l.b16 %v2807
        %v5355 = vunpack.c.h.b16 %v2807
        %v5356 = vunpack.c.l.b16 %v2808
        %v5357 = vunpack.c.h.b16 %v2808
        %v5358 = vunpack.c.l.b16 %v2809
        %v5359 = vunpack.c.h.b16 %v2809
        %v5360 = vunpack.c.l.b16 %v2810
        %v5361 = vunpack.c.h.b16 %v2810
        %v5362 = vunpack.c.l.b16 %v2811
        %v5363 = vunpack.c.h.b16 %v2811
        %v5364 = vunpack.c.l.b16 %v2812
        %v5365 = vunpack.c.h.b16 %v2812
        %v5366 = vunpack.c.l.b16 %v2813
        %v5367 = vunpack.c.h.b16 %v2813
        %v5368 = vunpack.c.l.b16 %v2814
        %v5369 = vunpack.c.h.b16 %v2814
        %v5370 = vunpack.c.l.b16 %v2815
        %v5371 = vunpack.c.h.b16 %v2815
        %v5372 = vunpack.c.l.b16 %v2816
        %v5373 = vunpack.c.h.b16 %v2816
        %v5374 = vunpack.c.l.b16 %v2817
        %v5375 = vunpack.c.h.b16 %v2817
        %v5376 = vunpack.c.l.b16 %v2818
        %v5377 = vunpack.c.h.b16 %v2818
        %v5378 = vunpack.c.l.b16 %v2819
        %v5379 = vunpack.c.h.b16 %v2819
        %v5380 = vunpack.c.l.b16 %v2820
        %v5381 = vunpack.c.h.b16 %v2820
        %v5382 = vunpack.c.l.b16 %v2821
        %v5383 = vunpack.c.h.b16 %v2821
        %v5384 = vunpack.c.l.b16 %v2822
        %v5385 = vunpack.c.h.b16 %v2822
        %v5386 = vunpack.c.l.b16 %v2823
        %v5387 = vunpack.c.h.b16 %v2823
        %v5388 = vunpack.c.l.b16 %v2824
        %v5389 = vunpack.c.h.b16 %v2824
        %v5390 = vunpack.c.l.b16 %v2825
        %v5391 = vunpack.c.h.b16 %v2825
        %v5392 = vunpack.c.l.b16 %v2826
        %v5393 = vunpack.c.h.b16 %v2826
        %v5394 = vunpack.c.l.b16 %v2827
        %v5395 = vunpack.c.h.b16 %v2827
        %v5396 = vunpack.c.l.b16 %v2828
        %v5397 = vunpack.c.h.b16 %v2828
        %v5398 = vunpack.c.l.b16 %v2829
        %v5399 = vunpack.c.h.b16 %v2829
        %v5400 = vunpack.c.l.b16 %v2830
        %v5401 = vunpack.c.h.b16 %v2830
        %v5402 = vunpack.c.l.b16 %v2831
        %v5403 = vunpack.c.h.b16 %v2831
        %v5404 = vunpack.c.l.b16 %v2832
        %v5405 = vunpack.c.h.b16 %v2832
        %v5406 = vunpack.c.l.b16 %v2833
        %v5407 = vunpack.c.h.b16 %v2833
        %v5408 = vunpack.c.l.b16 %v2834
        %v5409 = vunpack.c.h.b16 %v2834
        %v5410 = vunpack.c.l.b16 %v2835
        %v5411 = vunpack.c.h.b16 %v2835
        %v5412 = vunpack.c.l.b16 %v2836
        %v5413 = vunpack.c.h.b16 %v2836
        %v5414 = vunpack.c.l.b16 %v2837
        %v5415 = vunpack.c.h.b16 %v2837
        %v5416 = vunpack.c.l.b16 %v2838
        %v5417 = vunpack.c.h.b16 %v2838
        %v5418 = vunpack.c.l.b16 %v2839
        %v5419 = vunpack.c.h.b16 %v2839
        %v5420 = vunpack.c.l.b16 %v2840
        %v5421 = vunpack.c.h.b16 %v2840
        %v5422 = vunpack.c.l.b16 %v2841
        %v5423 = vunpack.c.h.b16 %v2841
        %v5424 = vunpack.c.l.b16 %v2842
        %v5425 = vunpack.c.h.b16 %v2842
        %v5426 = vunpack.c.l.b16 %v2843
        %v5427 = vunpack.c.h.b16 %v2843
        %v5428 = vunpack.c.l.b16 %v2844
        %v5429 = vunpack.c.h.b16 %v2844
        %v5430 = vunpack.c.l.b16 %v2845
        %v5431 = vunpack.c.h.b16 %v2845
        %v5432 = vunpack.c.l.b16 %v2846
        %v5433 = vunpack.c.h.b16 %v2846
        %v5434 = vunpack.c.l.b16 %v2847
        %v5435 = vunpack.c.h.b16 %v2847
        %v5436 = vunpack.c.l.b16 %v2848
        %v5437 = vunpack.c.h.b16 %v2848
        %v5438 = vunpack.c.l.b16 %v2849
        %v5439 = vunpack.c.h.b16 %v2849
        %v5440 = vunpack.c.l.b16 %v2850
        %v5441 = vunpack.c.h.b16 %v2850
        %v5442 = vunpack.c.l.b16 %v2851
        %v5443 = vunpack.c.h.b16 %v2851
        %v5444 = vunpack.c.l.b16 %v2852
        %v5445 = vunpack.c.h.b16 %v2852
        %v5446 = vunpack.c.l.b16 %v2853
        %v5447 = vunpack.c.h.b16 %v2853
        %v5448 = vunpack.c.l.b16 %v2854
        %v5449 = vunpack.c.h.b16 %v2854
        %v5450 = vunpack.c.l.b16 %v2855
        %v5451 = vunpack.c.h.b16 %v2855
        %v5452 = vunpack.c.l.b16 %v2856
        %v5453 = vunpack.c.h.b16 %v2856
        %v5454 = vunpack.c.l.b16 %v2857
        %v5455 = vunpack.c.h.b16 %v2857
        %v5456 = vunpack.c.l.b16 %v2858
        %v5457 = vunpack.c.h.b16 %v2858
        %v5458 = vunpack.c.l.b16 %v2859
        %v5459 = vunpack.c.h.b16 %v2859
        %v5460 = vunpack.c.l.b16 %v2860
        %v5461 = vunpack.c.h.b16 %v2860
        %v5462 = vunpack.c.l.b16 %v2861
        %v5463 = vunpack.c.h.b16 %v2861
        %v5464 = vunpack.c.l.b16 %v2862
        %v5465 = vunpack.c.h.b16 %v2862
        %v5466 = vunpack.c.l.b16 %v2863
        %v5467 = vunpack.c.h.b16 %v2863
        %v5468 = vunpack.c.l.b16 %v2864
        %v5469 = vunpack.c.h.b16 %v2864
        %v5470 = vunpack.c.l.b16 %v2865
        %v5471 = vunpack.c.h.b16 %v2865
        %v5472 = vunpack.c.l.b16 %v2866
        %v5473 = vunpack.c.h.b16 %v2866
        %v5474 = vunpack.c.l.b16 %v2867
        %v5475 = vunpack.c.h.b16 %v2867
        %v5476 = vunpack.c.l.b16 %v2868
        %v5477 = vunpack.c.h.b16 %v2868
        %v5478 = vunpack.c.l.b16 %v2869
        %v5479 = vunpack.c.h.b16 %v2869
        %v5480 = vunpack.c.l.b16 %v2870
        %v5481 = vunpack.c.h.b16 %v2870
        %v5482 = vunpack.c.l.b16 %v2871
        %v5483 = vunpack.c.h.b16 %v2871
        %v5484 = vunpack.c.l.b16 %v2872
        %v5485 = vunpack.c.h.b16 %v2872
        %v5486 = vunpack.c.l.b16 %v2873
        %v5487 = vunpack.c.h.b16 %v2873
        %v5488 = vunpack.c.l.b16 %v2874
        %v5489 = vunpack.c.h.b16 %v2874
        %v5490 = vunpack.c.l.b16 %v2875
        %v5491 = vunpack.c.h.b16 %v2875
        %v5492 = vunpack.c.l.b16 %v2876
        %v5493 = vunpack.c.h.b16 %v2876
        %v5494 = vunpack.c.l.b16 %v2877
        %v5495 = vunpack.c.h.b16 %v2877
        %v5496 = vunpack.c.l.b16 %v2878
        %v5497 = vunpack.c.h.b16 %v2878
        %v5498 = vunpack.c.l.b16 %v2879
        %v5499 = vunpack.c.h.b16 %v2879
        %v5500 = vunpack.c.l.b16 %v2880
        %v5501 = vunpack.c.h.b16 %v2880
        %v5502 = vunpack.c.l.b16 %v2881
        %v5503 = vunpack.c.h.b16 %v2881
        %v5504 = vunpack.c.l.b16 %v2882
        %v5505 = vunpack.c.h.b16 %v2882
        %v5506 = vunpack.c.l.b16 %v2883
        %v5507 = vunpack.c.h.b16 %v2883
        %v5508 = vunpack.c.l.b16 %v2884
        %v5509 = vunpack.c.h.b16 %v2884
        %v5510 = vunpack.c.l.b16 %v2885
        %v5511 = vunpack.c.h.b16 %v2885
        %v5512 = vunpack.c.l.b16 %v2886
        %v5513 = vunpack.c.h.b16 %v2886
        %v5514 = vunpack.c.l.b16 %v2887
        %v5515 = vunpack.c.h.b16 %v2887
        %v5516 = vunpack.c.l.b16 %v2888
        %v5517 = vunpack.c.h.b16 %v2888
        %v5518 = vunpack.c.l.b16 %v2889
        %v5519 = vunpack.c.h.b16 %v2889
        %v5520 = vunpack.c.l.b16 %v2890
        %v5521 = vunpack.c.h.b16 %v2890
        %v5522 = vunpack.c.l.b16 %v2891
        %v5523 = vunpack.c.h.b16 %v2891
        %v5524 = vunpack.c.l.b16 %v2892
        %v5525 = vunpack.c.h.b16 %v2892
        %v5526 = vunpack.c.l.b16 %v2893
        %v5527 = vunpack.c.h.b16 %v2893
        %v5528 = vunpack.c.l.b16 %v2894
        %v5529 = vunpack.c.h.b16 %v2894
        %v5530 = vunpack.c.l.b16 %v2895
        %v5531 = vunpack.c.h.b16 %v2895
        %v5532 = vunpack.c.l.b16 %v2896
        %v5533 = vunpack.c.h.b16 %v2896
        %v5534 = vunpack.c.l.b16 %v2897
        %v5535 = vunpack.c.h.b16 %v2897
        %v5536 = vunpack.c.l.b16 %v2898
        %v5537 = vunpack.c.h.b16 %v2898
        %v5538 = vunpack.c.l.b16 %v2899
        %v5539 = vunpack.c.h.b16 %v2899
        %v5540 = vunpack.c.l.b16 %v2900
        %v5541 = vunpack.c.h.b16 %v2900
        %v5542 = vunpack.c.l.b16 %v2901
        %v5543 = vunpack.c.h.b16 %v2901
        %v5544 = vunpack.c.l.b16 %v2902
        %v5545 = vunpack.c.h.b16 %v2902
        %v5546 = vunpack.c.l.b16 %v2903
        %v5547 = vunpack.c.h.b16 %v2903
        %v5548 = vunpack.c.l.b16 %v2904
        %v5549 = vunpack.c.h.b16 %v2904
        %v5550 = vunpack.c.l.b16 %v2905
        %v5551 = vunpack.c.h.b16 %v2905
        %v5552 = vunpack.c.l.b16 %v2906
        %v5553 = vunpack.c.h.b16 %v2906
        %v5554 = vunpack.c.l.b16 %v2907
        %v5555 = vunpack.c.h.b16 %v2907
        %v5556 = vunpack.c.l.b16 %v2908
        %v5557 = vunpack.c.h.b16 %v2908
        %v5558 = vunpack.c.l.b16 %v2909
        %v5559 = vunpack.c.h.b16 %v2909
        %v5560 = vunpack.c.l.b16 %v2910
        %v5561 = vunpack.c.h.b16 %v2910
        %v5562 = vunpack.c.l.b16 %v2911
        %v5563 = vunpack.c.h.b16 %v2911
        %v5564 = vunpack.c.l.b16 %v2912
        %v5565 = vunpack.c.h.b16 %v2912
        %v5566 = vunpack.c.l.b16 %v2913
        %v5567 = vunpack.c.h.b16 %v2913
        %v5568 = vunpack.c.l.b16 %v2914
        %v5569 = vunpack.c.h.b16 %v2914
        %v5570 = vunpack.c.l.b16 %v2915
        %v5571 = vunpack.c.h.b16 %v2915
        %v5572 = vunpack.c.l.b16 %v2916
        %v5573 = vunpack.c.h.b16 %v2916
        %v5574 = vunpack.c.l.b16 %v2917
        %v5575 = vunpack.c.h.b16 %v2917
        %v5576 = vunpack.c.l.b16 %v2918
        %v5577 = vunpack.c.h.b16 %v2918
        %v5578 = vunpack.c.l.b16 %v2919
        %v5579 = vunpack.c.h.b16 %v2919
        %v5580 = vunpack.c.l.b16 %v2920
        %v5581 = vunpack.c.h.b16 %v2920
        %v5582 = vunpack.c.l.b16 %v2921
        %v5583 = vunpack.c.h.b16 %v2921
        %v5584 = vunpack.c.l.b16 %v2922
        %v5585 = vunpack.c.h.b16 %v2922
        %v5586 = vunpack.c.l.b16 %v2923
        %v5587 = vunpack.c.h.b16 %v2923
        %v5588 = vunpack.c.l.b16 %v2924
        %v5589 = vunpack.c.h.b16 %v2924
        %v5590 = vunpack.c.l.b16 %v2925
        %v5591 = vunpack.c.h.b16 %v2925
        %v5592 = vunpack.c.l.b16 %v2926
        %v5593 = vunpack.c.h.b16 %v2926
        %v5594 = vunpack.c.l.b16 %v2927
        %v5595 = vunpack.c.h.b16 %v2927
        %v5596 = vunpack.c.l.b16 %v2928
        %v5597 = vunpack.c.h.b16 %v2928
        %v5598 = vunpack.c.l.b16 %v2929
        %v5599 = vunpack.c.h.b16 %v2929
        %v5600 = vunpack.c.l.b16 %v2930
        %v5601 = vunpack.c.h.b16 %v2930
        %v5602 = vunpack.c.l.b16 %v2931
        %v5603 = vunpack.c.h.b16 %v2931
        %v5604 = vunpack.c.l.b16 %v2932
        %v5605 = vunpack.c.h.b16 %v2932
        %v5606 = vunpack.c.l.b16 %v2933
        %v5607 = vunpack.c.h.b16 %v2933
        %v5608 = vunpack.c.l.b16 %v2934
        %v5609 = vunpack.c.h.b16 %v2934
        %v5610 = vunpack.c.l.b16 %v2935
        %v5611 = vunpack.c.h.b16 %v2935
        %v5612 = vunpack.c.l.b16 %v2936
        %v5613 = vunpack.c.h.b16 %v2936
        %v5614 = vunpack.c.l.b16 %v2937
        %v5615 = vunpack.c.h.b16 %v2937
        %v5616 = vunpack.c.l.b16 %v2938
        %v5617 = vunpack.c.h.b16 %v2938
        %v5618 = vunpack.c.l.b16 %v2939
        %v5619 = vunpack.c.h.b16 %v2939
        %v5620 = vunpack.c.l.b16 %v2940
        %v5621 = vunpack.c.h.b16 %v2940
        %v5622 = vunpack.c.l.b16 %v2941
        %v5623 = vunpack.c.h.b16 %v2941
        %v5624 = vunpack.c.l.b16 %v2942
        %v5625 = vunpack.c.h.b16 %v2942
        %v5626 = vunpack.c.l.b16 %v2943
        %v5627 = vunpack.c.h.b16 %v2943
        %v5628 = vunpack.c.l.b16 %v2944
        %v5629 = vunpack.c.h.b16 %v2944
        %v5630 = vunpack.c.l.b16 %v2945
        %v5631 = vunpack.c.h.b16 %v2945
        %v5632 = vunpack.c.l.b16 %v2946
        %v5633 = vunpack.c.h.b16 %v2946
        %v5634 = vunpack.c.l.b16 %v2947
        %v5635 = vunpack.c.h.b16 %v2947
        %v5636 = vunpack.c.l.b16 %v2948
        %v5637 = vunpack.c.h.b16 %v2948
        %v5638 = vunpack.c.l.b16 %v2949
        %v5639 = vunpack.c.h.b16 %v2949
        %v5640 = vunpack.c.l.b16 %v2950
        %v5641 = vunpack.c.h.b16 %v2950
        %v5642 = vunpack.c.l.b16 %v2951
        %v5643 = vunpack.c.h.b16 %v2951
        %v5644 = vunpack.c.l.b16 %v2952
        %v5645 = vunpack.c.h.b16 %v2952
        %v5646 = vunpack.c.l.b16 %v2953
        %v5647 = vunpack.c.h.b16 %v2953
        %v5648 = vunpack.c.l.b16 %v2954
        %v5649 = vunpack.c.h.b16 %v2954
        %v5650 = vunpack.c.l.b16 %v2955
        %v5651 = vunpack.c.h.b16 %v2955
        %v5652 = vunpack.c.l.b16 %v2956
        %v5653 = vunpack.c.h.b16 %v2956
        %v5654 = vunpack.c.l.b16 %v2957
        %v5655 = vunpack.c.h.b16 %v2957
        %v5656 = vunpack.c.l.b16 %v2958
        %v5657 = vunpack.c.h.b16 %v2958
        %v5658 = vunpack.c.l.b16 %v2959
        %v5659 = vunpack.c.h.b16 %v2959
        %v5660 = vunpack.c.l.b16 %v2960
        %v5661 = vunpack.c.h.b16 %v2960
        %v5662 = vunpack.c.l.b16 %v2961
        %v5663 = vunpack.c.h.b16 %v2961
        %v5664 = vunpack.c.l.b16 %v2962
        %v5665 = vunpack.c.h.b16 %v2962
        %v5666 = vunpack.c.l.b16 %v2963
        %v5667 = vunpack.c.h.b16 %v2963
        %v5668 = vunpack.c.l.b16 %v2964
        %v5669 = vunpack.c.h.b16 %v2964
        %v5670 = vunpack.c.l.b16 %v2965
        %v5671 = vunpack.c.h.b16 %v2965
        %v5672 = vunpack.c.l.b16 %v2966
        %v5673 = vunpack.c.h.b16 %v2966
        %v5674 = vunpack.c.l.b16 %v2967
        %v5675 = vunpack.c.h.b16 %v2967
        %v5676 = vunpack.c.l.b16 %v2968
        %v5677 = vunpack.c.h.b16 %v2968
        %v5678 = vunpack.c.l.b16 %v2969
        %v5679 = vunpack.c.h.b16 %v2969
        %v5680 = vunpack.c.l.b16 %v2970
        %v5681 = vunpack.c.h.b16 %v2970
        %v5682 = vunpack.c.l.b16 %v2971
        %v5683 = vunpack.c.h.b16 %v2971
        %v5684 = vunpack.c.l.b16 %v2972
        %v5685 = vunpack.c.h.b16 %v2972
        %v5686 = vunpack.c.l.b16 %v2973
        %v5687 = vunpack.c.h.b16 %v2973
        %v5688 = vunpack.c.l.b16 %v2974
        %v5689 = vunpack.c.h.b16 %v2974
        %v5690 = vunpack.c.l.b16 %v2975
        %v5691 = vunpack.c.h.b16 %v2975
        %v5692 = vunpack.c.l.b16 %v2976
        %v5693 = vunpack.c.h.b16 %v2976
        %v5694 = vunpack.c.l.b16 %v2977
        %v5695 = vunpack.c.h.b16 %v2977
        %v5696 = vunpack.c.l.b16 %v2978
        %v5697 = vunpack.c.h.b16 %v2978
        %v5698 = vunpack.c.l.b16 %v2979
        %v5699 = vunpack.c.h.b16 %v2979
        %v5700 = vunpack.c.l.b16 %v2980
        %v5701 = vunpack.c.h.b16 %v2980
        %v5702 = vunpack.c.l.b16 %v2981
        %v5703 = vunpack.c.h.b16 %v2981
        %v5704 = vunpack.c.l.b16 %v2982
        %v5705 = vunpack.c.h.b16 %v2982
        %v5706 = vunpack.c.l.b16 %v2983
        %v5707 = vunpack.c.h.b16 %v2983
        %v5708 = vunpack.c.l.b16 %v2984
        %v5709 = vunpack.c.h.b16 %v2984
        %v5710 = vunpack.c.l.b16 %v2985
        %v5711 = vunpack.c.h.b16 %v2985
        %v5712 = vunpack.c.l.b16 %v2986
        %v5713 = vunpack.c.h.b16 %v2986
        %v5714 = vunpack.c.l.b16 %v2987
        %v5715 = vunpack.c.h.b16 %v2987
        %v5716 = vunpack.c.l.b16 %v2988
        %v5717 = vunpack.c.h.b16 %v2988
        %v5718 = vunpack.c.l.b16 %v2989
        %v5719 = vunpack.c.h.b16 %v2989
        %v5720 = vunpack.c.l.b16 %v2990
        %v5721 = vunpack.c.h.b16 %v2990
        %v5722 = vunpack.c.l.b16 %v2991
        %v5723 = vunpack.c.h.b16 %v2991
        %v5724 = vunpack.c.l.b16 %v2992
        %v5725 = vunpack.c.h.b16 %v2992
        %v5726 = vunpack.c.l.b16 %v2993
        %v5727 = vunpack.c.h.b16 %v2993
        %v5728 = vunpack.c.l.b16 %v2994
        %v5729 = vunpack.c.h.b16 %v2994
        %v5730 = vunpack.c.l.b16 %v2995
        %v5731 = vunpack.c.h.b16 %v2995
        %v5732 = vunpack.c.l.b16 %v2996
        %v5733 = vunpack.c.h.b16 %v2996
        %v5734 = vunpack.c.l.b16 %v2997
        %v5735 = vunpack.c.h.b16 %v2997
        %v5736 = vunpack.c.l.b16 %v2998
        %v5737 = vunpack.c.h.b16 %v2998
        %v5738 = vunpack.c.l.b16 %v2999
        %v5739 = vunpack.c.h.b16 %v2999
        %v5740 = vunpack.c.l.b16 %v3000
        %v5741 = vunpack.c.h.b16 %v3000
        %v5742 = vunpack.c.l.b16 %v3001
        %v5743 = vunpack.c.h.b16 %v3001
        %v5744 = vunpack.c.l.b16 %v3002
        %v5745 = vunpack.c.h.b16 %v3002
        %v5746 = vunpack.c.l.b16 %v3003
        %v5747 = vunpack.c.h.b16 %v3003
        %v5748 = vunpack.c.l.b16 %v3004
        %v5749 = vunpack.c.h.b16 %v3004
        %v5750 = vunpack.c.l.b16 %v3005
        %v5751 = vunpack.c.h.b16 %v3005
        %v5752 = vunpack.c.l.b16 %v3006
        %v5753 = vunpack.c.h.b16 %v3006
        %v5754 = vunpack.c.l.b16 %v3007
        %v5755 = vunpack.c.h.b16 %v3007
        %v5756 = vunpack.c.l.b16 %v3008
        %v5757 = vunpack.c.h.b16 %v3008
        %v5758 = vunpack.c.l.b16 %v3009
        %v5759 = vunpack.c.h.b16 %v3009
        %v5760 = vunpack.c.l.b16 %v3010
        %v5761 = vunpack.c.h.b16 %v3010
        %v5762 = vunpack.c.l.b16 %v3011
        %v5763 = vunpack.c.h.b16 %v3011
        %v5764 = vunpack.c.l.b16 %v3012
        %v5765 = vunpack.c.h.b16 %v3012
        %v5766 = vunpack.c.l.b16 %v3013
        %v5767 = vunpack.c.h.b16 %v3013
        %v5768 = vunpack.c.l.b16 %v3014
        %v5769 = vunpack.c.h.b16 %v3014
        %v5770 = vunpack.c.l.b16 %v3015
        %v5771 = vunpack.c.h.b16 %v3015
        %v5772 = vunpack.c.l.b16 %v3016
        %v5773 = vunpack.c.h.b16 %v3016
        %v5774 = vunpack.c.l.b16 %v3017
        %v5775 = vunpack.c.h.b16 %v3017
        %v5776 = vunpack.c.l.b16 %v3018
        %v5777 = vunpack.c.h.b16 %v3018
        %v5778 = vunpack.c.l.b16 %v3019
        %v5779 = vunpack.c.h.b16 %v3019
        %v5780 = vunpack.c.l.b16 %v3020
        %v5781 = vunpack.c.h.b16 %v3020
        %v5782 = vunpack.c.l.b16 %v3021
        %v5783 = vunpack.c.h.b16 %v3021
        %v5784 = vunpack.c.l.b16 %v3022
        %v5785 = vunpack.c.h.b16 %v3022
        %v5786 = vunpack.c.l.b16 %v3023
        %v5787 = vunpack.c.h.b16 %v3023
        %v5788 = vunpack.c.l.b16 %v3024
        %v5789 = vunpack.c.h.b16 %v3024
        %v5790 = vunpack.c.l.b16 %v3025
        %v5791 = vunpack.c.h.b16 %v3025
        %v5792 = vunpack.c.l.b16 %v3026
        %v5793 = vunpack.c.h.b16 %v3026
        %v5794 = vunpack.c.l.b16 %v3027
        %v5795 = vunpack.c.h.b16 %v3027
        %v5796 = vunpack.c.l.b16 %v3028
        %v5797 = vunpack.c.h.b16 %v3028
        %v5798 = vunpack.c.l.b16 %v3029
        %v5799 = vunpack.c.h.b16 %v3029
        %v5800 = vunpack.c.l.b16 %v3030
        %v5801 = vunpack.c.h.b16 %v3030
        %v5802 = vunpack.c.l.b16 %v3031
        %v5803 = vunpack.c.h.b16 %v3031
        %v5804 = vunpack.c.l.b16 %v3032
        %v5805 = vunpack.c.h.b16 %v3032
        %v5806 = vunpack.c.l.b16 %v3033
        %v5807 = vunpack.c.h.b16 %v3033
        %v5808 = vunpack.c.l.b16 %v3034
        %v5809 = vunpack.c.h.b16 %v3034
        %v5810 = vunpack.c.l.b16 %v3035
        %v5811 = vunpack.c.h.b16 %v3035
        %v5812 = vunpack.c.l.b16 %v3036
        %v5813 = vunpack.c.h.b16 %v3036
        %v5814 = vunpack.c.l.b16 %v3037
        %v5815 = vunpack.c.h.b16 %v3037
        %v5816 = vunpack.c.l.b16 %v3038
        %v5817 = vunpack.c.h.b16 %v3038
        %v5818 = vunpack.c.l.b16 %v3039
        %v5819 = vunpack.c.h.b16 %v3039
        %v5820 = vunpack.c.l.b16 %v3040
        %v5821 = vunpack.c.h.b16 %v3040
        %v5822 = vunpack.c.l.b16 %v3041
        %v5823 = vunpack.c.h.b16 %v3041
        %v5824 = vunpack.c.l.b16 %v3042
        %v5825 = vunpack.c.h.b16 %v3042
        %v5826 = vunpack.c.l.b16 %v3043
        %v5827 = vunpack.c.h.b16 %v3043
        %v5828 = vunpack.c.l.b16 %v3044
        %v5829 = vunpack.c.h.b16 %v3044
        %v5830 = vunpack.c.l.b16 %v3045
        %v5831 = vunpack.c.h.b16 %v3045
        %v5832 = vunpack.c.l.b16 %v3046
        %v5833 = vunpack.c.h.b16 %v3046
        %v5834 = vunpack.c.l.b16 %v3047
        %v5835 = vunpack.c.h.b16 %v3047
        %v5836 = vunpack.c.l.b16 %v3048
        %v5837 = vunpack.c.h.b16 %v3048
        %v5838 = vunpack.c.l.b16 %v3049
        %v5839 = vunpack.c.h.b16 %v3049
        %v5840 = vunpack.c.l.b16 %v3050
        %v5841 = vunpack.c.h.b16 %v3050
        %v5842 = vunpack.c.l.b16 %v3051
        %v5843 = vunpack.c.h.b16 %v3051
        %v5844 = vunpack.c.l.b16 %v3052
        %v5845 = vunpack.c.h.b16 %v3052
        %v5846 = vunpack.c.l.b16 %v3053
        %v5847 = vunpack.c.h.b16 %v3053
        %v5848 = vunpack.c.l.b16 %v3054
        %v5849 = vunpack.c.h.b16 %v3054
        %v5850 = vunpack.c.l.b16 %v3055
        %v5851 = vunpack.c.h.b16 %v3055
        %v5852 = vunpack.c.l.b16 %v3056
        %v5853 = vunpack.c.h.b16 %v3056
        %v5854 = vunpack.c.l.b16 %v3057
        %v5855 = vunpack.c.h.b16 %v3057
        %v5856 = vunpack.c.l.b16 %v3058
        %v5857 = vunpack.c.h.b16 %v3058
        %v5858 = vunpack.c.l.b16 %v3059
        %v5859 = vunpack.c.h.b16 %v3059
        %v5860 = vunpack.c.l.b16 %v3060
        %v5861 = vunpack.c.h.b16 %v3060
        %v5862 = vunpack.c.l.b16 %v3061
        %v5863 = vunpack.c.h.b16 %v3061
        %v5864 = vunpack.c.l.b16 %v3062
        %v5865 = vunpack.c.h.b16 %v3062
        %v5866 = vunpack.c.l.b16 %v3063
        %v5867 = vunpack.c.h.b16 %v3063
        %v5868 = vunpack.c.l.b16 %v3064
        %v5869 = vunpack.c.h.b16 %v3064
        %v5870 = vunpack.c.l.b16 %v3065
        %v5871 = vunpack.c.h.b16 %v3065
        %v5872 = vunpack.c.l.b16 %v3066
        %v5873 = vunpack.c.h.b16 %v3066
        %v5874 = vunpack.c.l.b16 %v3067
        %v5875 = vunpack.c.h.b16 %v3067
        %v5876 = vunpack.c.l.b16 %v3068
        %v5877 = vunpack.c.h.b16 %v3068
        %v5878 = vunpack.c.l.b16 %v3069
        %v5879 = vunpack.c.h.b16 %v3069
        %v5880 = vunpack.c.l.b16 %v3070
        %v5881 = vunpack.c.h.b16 %v3070
        %v5882 = vunpack.c.l.b16 %v3071
        %v5883 = vunpack.c.h.b16 %v3071
        %v5884 = vunpack.c.l.b16 %v3072
        %v5885 = vunpack.c.h.b16 %v3072
        %v5886 = vunpack.c.l.b16 %v3073
        %v5887 = vunpack.c.h.b16 %v3073
        %v5888 = vunpack.c.l.b16 %v3074
        %v5889 = vunpack.c.h.b16 %v3074
        %v5890 = vunpack.c.l.b16 %v3075
        %v5891 = vunpack.c.h.b16 %v3075
        %v5892 = vunpack.c.l.b16 %v3076
        %v5893 = vunpack.c.h.b16 %v3076
        %v5894 = vunpack.c.l.b16 %v3077
        %v5895 = vunpack.c.h.b16 %v3077
        %v5896 = vunpack.c.l.b16 %v3078
        %v5897 = vunpack.c.h.b16 %v3078
        %v5898 = vunpack.c.l.b16 %v3079
        %v5899 = vunpack.c.h.b16 %v3079
        %v5900 = vunpack.c.l.b16 %v3080
        %v5901 = vunpack.c.h.b16 %v3080
        %v5902 = vunpack.c.l.b16 %v3081
        %v5903 = vunpack.c.h.b16 %v3081
        %v5904 = vunpack.c.l.b16 %v3082
        %v5905 = vunpack.c.h.b16 %v3082
        %v5906 = vunpack.c.l.b16 %v3083
        %v5907 = vunpack.c.h.b16 %v3083
        %v5908 = vunpack.c.l.b16 %v3084
        %v5909 = vunpack.c.h.b16 %v3084
        %v5910 = vunpack.c.l.b16 %v3085
        %v5911 = vunpack.c.h.b16 %v3085
        %v5912 = vunpack.c.l.b16 %v3086
        %v5913 = vunpack.c.h.b16 %v3086
        %v5914 = vunpack.c.l.b16 %v3087
        %v5915 = vunpack.c.h.b16 %v3087
        %v5916 = vunpack.c.l.b16 %v3088
        %v5917 = vunpack.c.h.b16 %v3088
        %v5918 = vunpack.c.l.b16 %v3089
        %v5919 = vunpack.c.h.b16 %v3089
        %v5920 = vunpack.c.l.b16 %v3090
        %v5921 = vunpack.c.h.b16 %v3090
        %v5922 = vunpack.c.l.b16 %v3091
        %v5923 = vunpack.c.h.b16 %v3091
        %v5924 = vunpack.c.l.b16 %v3092
        %v5925 = vunpack.c.h.b16 %v3092
        %v5926 = vunpack.c.l.b16 %v3093
        %v5927 = vunpack.c.h.b16 %v3093
        %v5928 = vunpack.c.l.b16 %v3094
        %v5929 = vunpack.c.h.b16 %v3094
        %v5930 = vunpack.c.l.b16 %v3095
        %v5931 = vunpack.c.h.b16 %v3095
        %v5932 = vunpack.c.l.b16 %v3096
        %v5933 = vunpack.c.h.b16 %v3096
        %v5934 = vunpack.c.l.b16 %v3097
        %v5935 = vunpack.c.h.b16 %v3097
        %v5936 = vunpack.c.l.b16 %v3098
        %v5937 = vunpack.c.h.b16 %v3098
        %v5938 = vunpack.c.l.b16 %v3099
        %v5939 = vunpack.c.h.b16 %v3099
        %v5940 = vunpack.c.l.b16 %v3100
        %v5941 = vunpack.c.h.b16 %v3100
        %v5942 = vunpack.c.l.b16 %v3101
        %v5943 = vunpack.c.h.b16 %v3101
        %v5944 = vunpack.c.l.b16 %v3102
        %v5945 = vunpack.c.h.b16 %v3102
        %v5946 = vunpack.c.l.b16 %v3103
        %v5947 = vunpack.c.h.b16 %v3103
        %v5948 = vunpack.c.l.b16 %v3104
        %v5949 = vunpack.c.h.b16 %v3104
        %v5950 = vunpack.c.l.b16 %v3105
        %v5951 = vunpack.c.h.b16 %v3105
        %v5952 = vunpack.c.l.b16 %v3106
        %v5953 = vunpack.c.h.b16 %v3106
        %v5954 = vunpack.c.l.b16 %v3107
        %v5955 = vunpack.c.h.b16 %v3107
        %v5956 = vunpack.c.l.b16 %v3108
        %v5957 = vunpack.c.h.b16 %v3108
        %v5958 = vunpack.c.l.b16 %v3109
        %v5959 = vunpack.c.h.b16 %v3109
        %v5960 = vunpack.c.l.b16 %v3110
        %v5961 = vunpack.c.h.b16 %v3110
        %v5962 = vunpack.c.l.b16 %v3111
        %v5963 = vunpack.c.h.b16 %v3111
        %v5964 = vunpack.c.l.b16 %v3112
        %v5965 = vunpack.c.h.b16 %v3112
        %v5966 = vunpack.c.l.b16 %v3113
        %v5967 = vunpack.c.h.b16 %v3113
        %v5968 = vunpack.c.l.b16 %v3114
        %v5969 = vunpack.c.h.b16 %v3114
        %v5970 = vunpack.c.l.b16 %v3115
        %v5971 = vunpack.c.h.b16 %v3115
        %v5972 = vunpack.c.l.b16 %v3116
        %v5973 = vunpack.c.h.b16 %v3116
        %v5974 = vunpack.c.l.b16 %v3117
        %v5975 = vunpack.c.h.b16 %v3117
        %v5976 = vunpack.c.l.b16 %v3118
        %v5977 = vunpack.c.h.b16 %v3118
        %v5978 = vunpack.c.l.b16 %v3119
        %v5979 = vunpack.c.h.b16 %v3119
        %v5980 = vunpack.c.l.b16 %v3120
        %v5981 = vunpack.c.h.b16 %v3120
        %v5982 = vunpack.c.l.b16 %v3121
        %v5983 = vunpack.c.h.b16 %v3121
        %v5984 = vunpack.c.l.b16 %v3122
        %v5985 = vunpack.c.h.b16 %v3122
        %v5986 = vunpack.c.l.b16 %v3123
        %v5987 = vunpack.c.h.b16 %v3123
        %v5988 = vunpack.c.l.b16 %v3124
        %v5989 = vunpack.c.h.b16 %v3124
        %v5990 = vunpack.c.l.b16 %v3125
        %v5991 = vunpack.c.h.b16 %v3125
        %v5992 = vunpack.c.l.b16 %v3126
        %v5993 = vunpack.c.h.b16 %v3126
        %v5994 = vunpack.c.l.b16 %v3127
        %v5995 = vunpack.c.h.b16 %v3127
        %v5996 = vunpack.c.l.b16 %v3128
        %v5997 = vunpack.c.h.b16 %v3128
        %v5998 = vunpack.c.l.b16 %v3129
        %v5999 = vunpack.c.h.b16 %v3129
        %v6000 = vunpack.c.l.b16 %v3130
        %v6001 = vunpack.c.h.b16 %v3130
        %v6002 = vunpack.c.l.b16 %v3131
        %v6003 = vunpack.c.h.b16 %v3131
        %v6004 = vunpack.c.l.b16 %v3132
        %v6005 = vunpack.c.h.b16 %v3132
        %v6006 = vunpack.c.l.b16 %v3133
        %v6007 = vunpack.c.h.b16 %v3133
        %v6008 = vunpack.c.l.b16 %v3134
        %v6009 = vunpack.c.h.b16 %v3134
        %v6010 = vunpack.c.l.b16 %v3135
        %v6011 = vunpack.c.h.b16 %v3135
        %v6012 = vunpack.c.l.b16 %v3136
        %v6013 = vunpack.c.h.b16 %v3136
        %v6014 = vunpack.c.l.b16 %v3137
        %v6015 = vunpack.c.h.b16 %v3137
        %v6016 = vunpack.c.l.b16 %v3138
        %v6017 = vunpack.c.h.b16 %v3138
        %v6018 = vunpack.c.l.b16 %v3139
        %v6019 = vunpack.c.h.b16 %v3139
        %v6020 = vunpack.c.l.b16 %v3140
        %v6021 = vunpack.c.h.b16 %v3140
        %v6022 = vunpack.c.l.b16 %v3141
        %v6023 = vunpack.c.h.b16 %v3141
        %v6024 = vunpack.c.l.b16 %v3142
        %v6025 = vunpack.c.h.b16 %v3142
        %v6026 = vunpack.c.l.b16 %v3143
        %v6027 = vunpack.c.h.b16 %v3143
        %v6028 = vunpack.c.l.b16 %v3144
        %v6029 = vunpack.c.h.b16 %v3144
        %v6030 = vunpack.c.l.b16 %v3145
        %v6031 = vunpack.c.h.b16 %v3145
        %v6032 = vunpack.c.l.b16 %v3146
        %v6033 = vunpack.c.h.b16 %v3146
        %v6034 = vunpack.c.l.b16 %v3147
        %v6035 = vunpack.c.h.b16 %v3147
        %v6036 = vunpack.c.l.b16 %v3148
        %v6037 = vunpack.c.h.b16 %v3148
        %v6038 = vunpack.c.l.b16 %v3149
        %v6039 = vunpack.c.h.b16 %v3149
        %v6040 = vunpack.c.l.b16 %v3150
        %v6041 = vunpack.c.h.b16 %v3150
        %v6042 = vunpack.c.l.b16 %v3151
        %v6043 = vunpack.c.h.b16 %v3151
        %v6044 = vunpack.c.l.b16 %v3152
        %v6045 = vunpack.c.h.b16 %v3152
        %v6046 = vunpack.c.l.b16 %v3153
        %v6047 = vunpack.c.h.b16 %v3153
        %v6048 = vunpack.c.l.b16 %v3154
        %v6049 = vunpack.c.h.b16 %v3154
        %v6050 = vunpack.c.l.b16 %v3155
        %v6051 = vunpack.c.h.b16 %v3155
        %v6052 = vunpack.c.l.b16 %v3156
        %v6053 = vunpack.c.h.b16 %v3156
        %v6054 = vunpack.c.l.b16 %v3157
        %v6055 = vunpack.c.h.b16 %v3157
        %v6056 = vunpack.c.l.b16 %v3158
        %v6057 = vunpack.c.h.b16 %v3158
        %v6058 = vunpack.c.l.b16 %v3159
        %v6059 = vunpack.c.h.b16 %v3159
        %v6060 = vunpack.c.l.b16 %v3160
        %v6061 = vunpack.c.h.b16 %v3160
        %v6062 = vunpack.c.l.b16 %v3161
        %v6063 = vunpack.c.h.b16 %v3161
        %v6064 = vunpack.c.l.b16 %v3162
        %v6065 = vunpack.c.h.b16 %v3162
        %v6066 = vunpack.c.l.b16 %v3163
        %v6067 = vunpack.c.h.b16 %v3163
        %v6068 = vunpack.c.l.b16 %v3164
        %v6069 = vunpack.c.h.b16 %v3164
        %v6070 = vunpack.c.l.b16 %v3165
        %v6071 = vunpack.c.h.b16 %v3165
        %v6072 = vunpack.c.l.b16 %v3166
        %v6073 = vunpack.c.h.b16 %v3166
        %v6074 = vunpack.c.l.b16 %v3167
        %v6075 = vunpack.c.h.b16 %v3167
        %v6076 = vunpack.c.l.b16 %v3168
        %v6077 = vunpack.c.h.b16 %v3168
        %v6078 = vunpack.c.l.b16 %v3169
        %v6079 = vunpack.c.h.b16 %v3169
        %v6080 = vunpack.c.l.b16 %v3170
        %v6081 = vunpack.c.h.b16 %v3170
        %v6082 = vunpack.c.l.b16 %v3171
        %v6083 = vunpack.c.h.b16 %v3171
        %v6084 = vunpack.c.l.b16 %v3172
        %v6085 = vunpack.c.h.b16 %v3172
        %v6086 = vunpack.c.l.b16 %v3173
        %v6087 = vunpack.c.h.b16 %v3173
        %v6088 = vunpack.c.l.b16 %v3174
        %v6089 = vunpack.c.h.b16 %v3174
        %v6090 = vunpack.c.l.b16 %v3175
        %v6091 = vunpack.c.h.b16 %v3175
        %v6092 = vunpack.c.l.b16 %v3176
        %v6093 = vunpack.c.h.b16 %v3176
        %v6094 = vunpack.c.l.b16 %v3177
        %v6095 = vunpack.c.h.b16 %v3177
        %v6096 = vunpack.c.l.b16 %v3178
        %v6097 = vunpack.c.h.b16 %v3178
        %v6098 = vunpack.c.l.b16 %v3179
        %v6099 = vunpack.c.h.b16 %v3179
        %v6100 = vunpack.c.l.b16 %v3180
        %v6101 = vunpack.c.h.b16 %v3180
        %v6102 = vunpack.c.l.b16 %v3181
        %v6103 = vunpack.c.h.b16 %v3181
        %v6104 = vunpack.c.l.b16 %v3182
        %v6105 = vunpack.c.h.b16 %v3182
        %v6106 = vunpack.c.l.b16 %v3183
        %v6107 = vunpack.c.h.b16 %v3183
        %v6108 = vunpack.c.l.b16 %v3184
        %v6109 = vunpack.c.h.b16 %v3184
        %v6110 = vunpack.c.l.b16 %v3185
        %v6111 = vunpack.c.h.b16 %v3185
        %v6112 = vunpack.c.l.b16 %v3186
        %v6113 = vunpack.c.h.b16 %v3186
        %v6114 = vunpack.c.l.b16 %v3187
        %v6115 = vunpack.c.h.b16 %v3187
        %v6116 = vunpack.c.l.b16 %v3188
        %v6117 = vunpack.c.h.b16 %v3188
        %v6118 = vunpack.c.l.b16 %v3189
        %v6119 = vunpack.c.h.b16 %v3189
        %v6120 = vunpack.c.l.b16 %v3190
        %v6121 = vunpack.c.h.b16 %v3190
        %v6122 = vunpack.c.l.b16 %v3191
        %v6123 = vunpack.c.h.b16 %v3191
        %v6124 = vunpack.c.l.b16 %v3192
        %v6125 = vunpack.c.h.b16 %v3192
        %v6126 = vunpack.c.l.b16 %v3193
        %v6127 = vunpack.c.h.b16 %v3193
        %v6128 = vunpack.c.l.b16 %v3194
        %v6129 = vunpack.c.h.b16 %v3194
        %v6130 = vunpack.c.l.b16 %v3195
        %v6131 = vunpack.c.h.b16 %v3195
        %v6132 = vunpack.c.l.b16 %v3196
        %v6133 = vunpack.c.h.b16 %v3196
        %v6134 = vunpack.c.l.b16 %v3197
        %v6135 = vunpack.c.h.b16 %v3197
        %v6136 = vunpack.c.l.b16 %v3198
        %v6137 = vunpack.c.h.b16 %v3198
        %v6138 = vunpack.c.l.b16 %v3199
        %v6139 = vunpack.c.h.b16 %v3199
        %v6140 = vunpack.c.l.b16 %v3200
        %v6141 = vunpack.c.h.b16 %v3200
        %v6142 = vunpack.c.l.b16 %v3201
        %v6143 = vunpack.c.h.b16 %v3201
        %v6144 = vunpack.c.l.b16 %v3202
        %v6145 = vunpack.c.h.b16 %v3202
        %v6146 = vunpack.c.l.b16 %v3203
        %v6147 = vunpack.c.h.b16 %v3203
        %v6148 = vunpack.c.l.b16 %v3204
        %v6149 = vunpack.c.h.b16 %v3204
        %v6150 = vunpack.c.l.b16 %v3205
        %v6151 = vunpack.c.h.b16 %v3205
        %v6152 = vunpack.c.l.b16 %v3206
        %v6153 = vunpack.c.h.b16 %v3206
        %v6154 = vunpack.c.l.b16 %v3207
        %v6155 = vunpack.c.h.b16 %v3207
        %v6156 = vunpack.c.l.b16 %v3208
        %v6157 = vunpack.c.h.b16 %v3208
        %v6158 = vunpack.c.l.b16 %v3209
        %v6159 = vunpack.c.h.b16 %v3209
        %v6160 = vunpack.c.l.b16 %v3210
        %v6161 = vunpack.c.h.b16 %v3210
        %v6162 = vunpack.c.l.b16 %v3211
        %v6163 = vunpack.c.h.b16 %v3211
        %v6164 = vunpack.c.l.b16 %v3212
        %v6165 = vunpack.c.h.b16 %v3212
        %v6166 = vunpack.c.l.b16 %v3213
        %v6167 = vunpack.c.h.b16 %v3213
        %v6168 = vunpack.c.l.b16 %v3214
        %v6169 = vunpack.c.h.b16 %v3214
        %v6170 = vunpack.c.l.b16 %v3215
        %v6171 = vunpack.c.h.b16 %v3215
        %v6172 = vunpack.c.l.b16 %v3216
        %v6173 = vunpack.c.h.b16 %v3216
        %v6174 = vunpack.c.l.b16 %v3217
        %v6175 = vunpack.c.h.b16 %v3217
        %v6176 = vunpack.c.l.b16 %v3218
        %v6177 = vunpack.c.h.b16 %v3218
        %v6178 = vunpack.c.l.b16 %v3219
        %v6179 = vunpack.c.h.b16 %v3219
        %v6180 = vunpack.c.l.b16 %v3220
        %v6181 = vunpack.c.h.b16 %v3220
        %v6182 = vunpack.c.l.b16 %v3221
        %v6183 = vunpack.c.h.b16 %v3221
        %v6184 = vunpack.c.l.b16 %v3222
        %v6185 = vunpack.c.h.b16 %v3222
        %v6186 = vunpack.c.l.b16 %v3223
        %v6187 = vunpack.c.h.b16 %v3223
        %v6188 = vunpack.c.l.b16 %v3224
        %v6189 = vunpack.c.h.b16 %v3224
        %v6190 = vunpack.c.l.b16 %v3225
        %v6191 = vunpack.c.h.b16 %v3225
        %v6192 = vunpack.c.l.b16 %v3226
        %v6193 = vunpack.c.h.b16 %v3226
        %v6194 = vunpack.c.l.b16 %v3227
        %v6195 = vunpack.c.h.b16 %v3227
        %v6196 = vunpack.c.l.b16 %v3228
        %v6197 = vunpack.c.h.b16 %v3228
        %v6198 = vunpack.c.l.b16 %v3229
        %v6199 = vunpack.c.h.b16 %v3229
        %v6200 = vunpack.c.l.b16 %v3230
        %v6201 = vunpack.c.h.b16 %v3230
        %v6202 = vunpack.c.l.b16 %v3231
        %v6203 = vunpack.c.h.b16 %v3231
        %v6204 = vunpack.c.l.b16 %v3232
        %v6205 = vunpack.c.h.b16 %v3232
        %v6206 = vunpack.c.l.b16 %v3233
        %v6207 = vunpack.c.h.b16 %v3233
        %v6208 = vunpack.c.l.b16 %v3234
        %v6209 = vunpack.c.h.b16 %v3234
        %v6210 = vunpack.c.l.b16 %v3235
        %v6211 = vunpack.c.h.b16 %v3235
        %v6212 = vunpack.c.l.b16 %v3236
        %v6213 = vunpack.c.h.b16 %v3236
        %v6214 = vunpack.c.l.b16 %v3237
        %v6215 = vunpack.c.h.b16 %v3237
        %v6216 = vunpack.c.l.b16 %v3238
        %v6217 = vunpack.c.h.b16 %v3238
        %v6218 = vunpack.c.l.b16 %v3239
        %v6219 = vunpack.c.h.b16 %v3239
        %v6220 = vunpack.c.l.b16 %v3240
        %v6221 = vunpack.c.h.b16 %v3240
        %v6222 = vunpack.c.l.b16 %v3241
        %v6223 = vunpack.c.h.b16 %v3241
        %v6224 = vunpack.c.l.b16 %v3242
        %v6225 = vunpack.c.h.b16 %v3242
        %v6226 = vunpack.c.l.b16 %v3243
        %v6227 = vunpack.c.h.b16 %v3243
        %v6228 = vunpack.c.l.b16 %v3244
        %v6229 = vunpack.c.h.b16 %v3244
        %v6230 = vunpack.c.l.b16 %v3245
        %v6231 = vunpack.c.h.b16 %v3245
        %v6232 = vunpack.c.l.b16 %v3246
        %v6233 = vunpack.c.h.b16 %v3246
        %v6234 = vunpack.c.l.b16 %v3247
        %v6235 = vunpack.c.h.b16 %v3247
        %v6236 = vunpack.c.l.b16 %v3248
        %v6237 = vunpack.c.h.b16 %v3248
        %v6238 = vunpack.c.l.b16 %v3249
        %v6239 = vunpack.c.h.b16 %v3249
        %v6240 = vunpack.c.l.b16 %v3250
        %v6241 = vunpack.c.h.b16 %v3250
        %v6242 = vunpack.c.l.b16 %v3251
        %v6243 = vunpack.c.h.b16 %v3251
        %v6244 = vunpack.c.l.b16 %v3252
        %v6245 = vunpack.c.h.b16 %v3252
        %v6246 = vunpack.c.l.b16 %v3253
        %v6247 = vunpack.c.h.b16 %v3253
        %v6248 = vunpack.c.l.b16 %v3254
        %v6249 = vunpack.c.h.b16 %v3254
        %v6250 = vunpack.c.l.b16 %v3255
        %v6251 = vunpack.c.h.b16 %v3255
        %v6252 = vunpack.c.l.b16 %v3256
        %v6253 = vunpack.c.h.b16 %v3256
        %v6254 = vunpack.c.l.b16 %v3257
        %v6255 = vunpack.c.h.b16 %v3257
        %v6256 = vunpack.c.l.b16 %v3258
        %v6257 = vunpack.c.h.b16 %v3258
        %v6258 = vunpack.c.l.b16 %v3259
        %v6259 = vunpack.c.h.b16 %v3259
        %v6260 = vunpack.c.l.b16 %v3260
        %v6261 = vunpack.c.h.b16 %v3260
        %v6262 = vunpack.c.l.b16 %v3261
        %v6263 = vunpack.c.h.b16 %v3261
        %v6264 = vunpack.c.l.b16 %v3262
        %v6265 = vunpack.c.h.b16 %v3262
        %v6266 = vunpack.c.l.b16 %v3263
        %v6267 = vunpack.c.h.b16 %v3263
        %v6268 = vunpack.c.l.b16 %v3264
        %v6269 = vunpack.c.h.b16 %v3264
        %v6270 = vunpack.c.l.b16 %v3265
        %v6271 = vunpack.c.h.b16 %v3265
        %v6272 = vunpack.c.l.b16 %v3266
        %v6273 = vunpack.c.h.b16 %v3266
        %v6274 = vunpack.c.l.b16 %v3267
        %v6275 = vunpack.c.h.b16 %v3267
        %v6276 = vunpack.c.l.b16 %v3268
        %v6277 = vunpack.c.h.b16 %v3268
        %v6278 = vunpack.c.l.b16 %v3269
        %v6279 = vunpack.c.h.b16 %v3269
        %v6280 = vunpack.c.l.b16 %v3270
        %v6281 = vunpack.c.h.b16 %v3270
        %v6282 = vunpack.c.l.b16 %v3271
        %v6283 = vunpack.c.h.b16 %v3271
        %v6284 = vunpack.c.l.b16 %v3272
        %v6285 = vunpack.c.h.b16 %v3272
        %v6286 = vunpack.c.l.b16 %v3273
        %v6287 = vunpack.c.h.b16 %v3273
        %v6288 = vunpack.c.l.b16 %v3274
        %v6289 = vunpack.c.h.b16 %v3274
        %v6290 = vunpack.c.l.b16 %v3275
        %v6291 = vunpack.c.h.b16 %v3275
        %v6292 = vunpack.c.l.b16 %v3276
        %v6293 = vunpack.c.h.b16 %v3276
        %v6294 = vunpack.c.l.b16 %v3277
        %v6295 = vunpack.c.h.b16 %v3277
        %v6296 = vunpack.c.l.b16 %v3278
        %v6297 = vunpack.c.h.b16 %v3278
        %v6298 = vunpack.c.l.b16 %v3279
        %v6299 = vunpack.c.h.b16 %v3279
        %v6300 = vunpack.c.l.b16 %v3280
        %v6301 = vunpack.c.h.b16 %v3280
        %v6302 = vunpack.c.l.b16 %v3281
        %v6303 = vunpack.c.h.b16 %v3281
        %v6304 = vunpack.c.l.b16 %v3282
        %v6305 = vunpack.c.h.b16 %v3282
        %v6306 = vunpack.c.l.b16 %v3283
        %v6307 = vunpack.c.h.b16 %v3283
        %v6308 = vunpack.c.l.b16 %v3284
        %v6309 = vunpack.c.h.b16 %v3284
        %v6310 = vunpack.c.l.b16 %v3285
        %v6311 = vunpack.c.h.b16 %v3285
        %v6312 = vunpack.c.l.b16 %v3286
        %v6313 = vunpack.c.h.b16 %v3286
        %v6314 = vunpack.c.l.b16 %v3287
        %v6315 = vunpack.c.h.b16 %v3287
        %v6316 = vunpack.c.l.b16 %v3288
        %v6317 = vunpack.c.h.b16 %v3288
        %v6318 = vunpack.c.l.b16 %v3289
        %v6319 = vunpack.c.h.b16 %v3289
        %v6320 = vunpack.c.l.b16 %v3290
        %v6321 = vunpack.c.h.b16 %v3290
        %v6322 = vunpack.c.l.b16 %v3291
        %v6323 = vunpack.c.h.b16 %v3291
        %v6324 = vunpack.c.l.b16 %v3292
        %v6325 = vunpack.c.h.b16 %v3292
        %v6326 = vunpack.c.l.b16 %v3293
        %v6327 = vunpack.c.h.b16 %v3293
        %v6328 = vunpack.c.l.b16 %v3294
        %v6329 = vunpack.c.h.b16 %v3294
        %v6330 = vunpack.c.l.b16 %v3295
        %v6331 = vunpack.c.h.b16 %v3295
        %v6332 = vunpack.c.l.b16 %v3296
        %v6333 = vunpack.c.h.b16 %v3296
        %v6334 = vunpack.c.l.b16 %v3297
        %v6335 = vunpack.c.h.b16 %v3297
        %v6336 = vunpack.c.l.b16 %v3298
        %v6337 = vunpack.c.h.b16 %v3298
        %v6338 = vunpack.c.l.b16 %v3299
        %v6339 = vunpack.c.h.b16 %v3299
        %v6340 = vunpack.c.l.b16 %v3300
        %v6341 = vunpack.c.h.b16 %v3300
        %v6342 = vunpack.c.l.b16 %v3301
        %v6343 = vunpack.c.h.b16 %v3301
        %v6344 = vunpack.c.l.b16 %v3302
        %v6345 = vunpack.c.h.b16 %v3302
        %v6346 = vunpack.c.l.b16 %v3303
        %v6347 = vunpack.c.h.b16 %v3303
        %v6348 = vunpack.c.l.b16 %v3304
        %v6349 = vunpack.c.h.b16 %v3304
        %v6350 = vunpack.c.l.b16 %v3305
        %v6351 = vunpack.c.h.b16 %v3305
        %v6352 = vunpack.c.l.b16 %v3306
        %v6353 = vunpack.c.h.b16 %v3306
        %v6354 = vunpack.c.l.b16 %v3307
        %v6355 = vunpack.c.h.b16 %v3307
        %v6356 = vunpack.c.l.b16 %v3308
        %v6357 = vunpack.c.h.b16 %v3308
        %v6358 = vunpack.c.l.b16 %v3309
        %v6359 = vunpack.c.h.b16 %v3309
        %v6360 = vunpack.c.l.b16 %v3310
        %v6361 = vunpack.c.h.b16 %v3310
        %v6362 = vunpack.c.l.b16 %v3311
        %v6363 = vunpack.c.h.b16 %v3311
        %v6364 = vunpack.c.l.b16 %v3312
        %v6365 = vunpack.c.h.b16 %v3312
        %v6366 = vunpack.c.l.b16 %v3313
        %v6367 = vunpack.c.h.b16 %v3313
        %v6368 = vunpack.c.l.b16 %v3314
        %v6369 = vunpack.c.h.b16 %v3314
        %v6370 = vunpack.c.l.b16 %v3315
        %v6371 = vunpack.c.h.b16 %v3315
        %v6372 = vunpack.c.l.b16 %v3316
        %v6373 = vunpack.c.h.b16 %v3316
        %v6374 = vunpack.c.l.b16 %v3317
        %v6375 = vunpack.c.h.b16 %v3317
        %v6376 = vunpack.c.l.b16 %v3318
        %v6377 = vunpack.c.h.b16 %v3318
        %v6378 = vunpack.c.l.b16 %v3319
        %v6379 = vunpack.c.h.b16 %v3319
        %v6380 = vunpack.c.l.b16 %v3320
        %v6381 = vunpack.c.h.b16 %v3320
        %v6382 = vunpack.c.l.b16 %v3321
        %v6383 = vunpack.c.h.b16 %v3321
        %v6384 = vunpack.c.l.b16 %v3322
        %v6385 = vunpack.c.h.b16 %v3322
        %v6386 = vunpack.c.l.b16 %v3323
        %v6387 = vunpack.c.h.b16 %v3323
        %v6388 = vunpack.c.l.b16 %v3324
        %v6389 = vunpack.c.h.b16 %v3324
        %v6390 = vunpack.c.l.b16 %v3325
        %v6391 = vunpack.c.h.b16 %v3325
        %v6392 = vunpack.c.l.b16 %v3326
        %v6393 = vunpack.c.h.b16 %v3326
        %v6394 = vunpack.c.l.b16 %v3327
        %v6395 = vunpack.c.h.b16 %v3327
        %v6396 = vunpack.c.l.b16 %v3328
        %v6397 = vunpack.c.h.b16 %v3328
        %v6398 = vunpack.c.l.b16 %v3329
        %v6399 = vunpack.c.h.b16 %v3329
        %v6400 = vunpack.c.l.b16 %v3330
        %v6401 = vunpack.c.h.b16 %v3330
        %v6402 = vunpack.c.l.b16 %v3331
        %v6403 = vunpack.c.h.b16 %v3331
        %v6404 = vunpack.c.l.b16 %v3332
        %v6405 = vunpack.c.h.b16 %v3332
        %v6406 = vunpack.c.l.b16 %v3333
        %v6407 = vunpack.c.h.b16 %v3333
        %v6408 = vunpack.c.l.b16 %v3334
        %v6409 = vunpack.c.h.b16 %v3334
        %v6410 = vunpack.c.l.b16 %v3335
        %v6411 = vunpack.c.h.b16 %v3335
        %v6412 = vunpack.c.l.b16 %v3336
        %v6413 = vunpack.c.h.b16 %v3336
        %v6414 = vunpack.c.l.b16 %v3337
        %v6415 = vunpack.c.h.b16 %v3337
        %v6416 = vunpack.c.l.b16 %v3338
        %v6417 = vunpack.c.h.b16 %v3338
        %v6418 = vunpack.c.l.b16 %v3339
        %v6419 = vunpack.c.h.b16 %v3339
        %v6420 = vunpack.c.l.b16 %v3340
        %v6421 = vunpack.c.h.b16 %v3340
        %v6422 = vunpack.c.l.b16 %v3341
        %v6423 = vunpack.c.h.b16 %v3341
        %v6424 = vunpack.c.l.b16 %v3342
        %v6425 = vunpack.c.h.b16 %v3342
        %v6426 = vunpack.c.l.b16 %v3343
        %v6427 = vunpack.c.h.b16 %v3343
        %v6428 = vunpack.c.l.b16 %v3344
        %v6429 = vunpack.c.h.b16 %v3344
        %v6430 = vunpack.c.l.b16 %v3345
        %v6431 = vunpack.c.h.b16 %v3345
        %v6432 = vunpack.c.l.b16 %v3346
        %v6433 = vunpack.c.h.b16 %v3346
        %v6434 = vunpack.c.l.b16 %v3347
        %v6435 = vunpack.c.h.b16 %v3347
        %v6436 = vunpack.c.l.b16 %v3348
        %v6437 = vunpack.c.h.b16 %v3348
        %v6438 = vunpack.c.l.b16 %v3349
        %v6439 = vunpack.c.h.b16 %v3349
        %v6440 = vunpack.c.l.b16 %v3350
        %v6441 = vunpack.c.h.b16 %v3350
        %v6442 = vunpack.c.l.b16 %v3351
        %v6443 = vunpack.c.h.b16 %v3351
        %v6444 = vunpack.c.l.b16 %v3352
        %v6445 = vunpack.c.h.b16 %v3352
        %v6446 = vunpack.c.l.b16 %v3353
        %v6447 = vunpack.c.h.b16 %v3353
        %v6448 = vunpack.c.l.b16 %v3354
        %v6449 = vunpack.c.h.b16 %v3354
        %v6450 = vunpack.c.l.b16 %v3355
        %v6451 = vunpack.c.h.b16 %v3355
        %v6452 = vunpack.c.l.b16 %v3356
        %v6453 = vunpack.c.h.b16 %v3356
        %v6454 = vunpack.c.l.b16 %v3357
        %v6455 = vunpack.c.h.b16 %v3357
        %v6456 = vunpack.c.l.b16 %v3358
        %v6457 = vunpack.c.h.b16 %v3358
        %v6458 = vunpack.c.l.b16 %v3359
        %v6459 = vunpack.c.h.b16 %v3359
        %v6460 = vunpack.c.l.b16 %v3360
        %v6461 = vunpack.c.h.b16 %v3360
        %v6462 = vunpack.c.l.b16 %v3361
        %v6463 = vunpack.c.h.b16 %v3361
        %v6464 = vunpack.c.l.b16 %v3362
        %v6465 = vunpack.c.h.b16 %v3362
        %v6466 = vunpack.c.l.b16 %v3363
        %v6467 = vunpack.c.h.b16 %v3363
        %v6468 = vunpack.c.l.b16 %v3364
        %v6469 = vunpack.c.h.b16 %v3364
        %v6470 = vunpack.c.l.b16 %v3365
        %v6471 = vunpack.c.h.b16 %v3365
        %v6472 = vunpack.c.l.b16 %v3366
        %v6473 = vunpack.c.h.b16 %v3366
        %v6474 = vunpack.c.l.b16 %v3367
        %v6475 = vunpack.c.h.b16 %v3367
        %v6476 = vunpack.c.l.b16 %v3368
        %v6477 = vunpack.c.h.b16 %v3368
        %v6478 = vunpack.c.l.b16 %v3369
        %v6479 = vunpack.c.h.b16 %v3369
        %v6480 = vunpack.c.l.b16 %v3370
        %v6481 = vunpack.c.h.b16 %v3370
        %v6482 = vunpack.c.l.b16 %v3371
        %v6483 = vunpack.c.h.b16 %v3371
        %v6484 = vunpack.c.l.b16 %v3372
        %v6485 = vunpack.c.h.b16 %v3372
        %v6486 = vunpack.c.l.b16 %v3373
        %v6487 = vunpack.c.h.b16 %v3373
        %v6488 = vunpack.c.l.b16 %v3374
        %v6489 = vunpack.c.h.b16 %v3374
        %v6490 = vunpack.c.l.b16 %v3375
        %v6491 = vunpack.c.h.b16 %v3375
        %v6492 = vunpack.c.l.b16 %v3376
        %v6493 = vunpack.c.h.b16 %v3376
        %v6494 = vunpack.c.l.b16 %v3377
        %v6495 = vunpack.c.h.b16 %v3377
        %v6496 = vunpack.c.l.b16 %v3378
        %v6497 = vunpack.c.h.b16 %v3378
        %v6498 = vunpack.c.l.b16 %v3379
        %v6499 = vunpack.c.h.b16 %v3379
        %v6500 = vunpack.c.l.b16 %v3380
        %v6501 = vunpack.c.h.b16 %v3380
        %v6502 = vunpack.c.l.b16 %v3381
        %v6503 = vunpack.c.h.b16 %v3381
        %v6504 = vunpack.c.l.b16 %v3382
        %v6505 = vunpack.c.h.b16 %v3382
        %v6506 = vunpack.c.l.b16 %v3383
        %v6507 = vunpack.c.h.b16 %v3383
        %v6508 = vunpack.c.l.b16 %v3384
        %v6509 = vunpack.c.h.b16 %v3384
        %v6510 = vunpack.c.l.b16 %v3385
        %v6511 = vunpack.c.h.b16 %v3385
        %v6512 = vunpack.c.l.b16 %v3386
        %v6513 = vunpack.c.h.b16 %v3386
        %v6514 = vunpack.c.l.b16 %v3387
        %v6515 = vunpack.c.h.b16 %v3387
        %v6516 = vunpack.c.l.b16 %v3388
        %v6517 = vunpack.c.h.b16 %v3388
        %v6518 = vunpack.c.l.b16 %v3389
        %v6519 = vunpack.c.h.b16 %v3389
        %v6520 = vunpack.c.l.b16 %v3390
        %v6521 = vunpack.c.h.b16 %v3390
        %v6522 = vunpack.c.l.b16 %v3391
        %v6523 = vunpack.c.h.b16 %v3391
        %v6524 = vunpack.c.l.b16 %v3392
        %v6525 = vunpack.c.h.b16 %v3392
        %v6526 = vunpack.c.l.b16 %v3393
        %v6527 = vunpack.c.h.b16 %v3393
        %v6528 = vunpack.c.l.b16 %v3394
        %v6529 = vunpack.c.h.b16 %v3394
        %v6530 = vunpack.c.l.b16 %v3395
        %v6531 = vunpack.c.h.b16 %v3395
        %v6532 = vunpack.c.l.b16 %v3396
        %v6533 = vunpack.c.h.b16 %v3396
        %v6534 = vunpack.c.l.b16 %v3397
        %v6535 = vunpack.c.h.b16 %v3397
        %v6536 = vunpack.c.l.b16 %v3398
        %v6537 = vunpack.c.h.b16 %v3398
        %v6538 = vunpack.c.l.b16 %v3399
        %v6539 = vunpack.c.h.b16 %v3399
        %v6540 = vunpack.c.l.b16 %v3400
        %v6541 = vunpack.c.h.b16 %v3400
        %v6542 = vunpack.c.l.b16 %v3401
        %v6543 = vunpack.c.h.b16 %v3401
        %v6544 = vunpack.c.l.b16 %v3402
        %v6545 = vunpack.c.h.b16 %v3402
        %v6546 = vunpack.c.l.b16 %v3403
        %v6547 = vunpack.c.h.b16 %v3403
        %v6548 = vunpack.c.l.b16 %v3404
        %v6549 = vunpack.c.h.b16 %v3404
        %v6550 = vunpack.c.l.b16 %v3405
        %v6551 = vunpack.c.h.b16 %v3405
        %v6552 = vunpack.c.l.b16 %v3406
        %v6553 = vunpack.c.h.b16 %v3406
        %v6554 = vunpack.c.l.b16 %v3407
        %v6555 = vunpack.c.h.b16 %v3407
        %v6556 = vunpack.c.l.b16 %v3408
        %v6557 = vunpack.c.h.b16 %v3408
        %v6558 = vunpack.c.l.b16 %v3409
        %v6559 = vunpack.c.h.b16 %v3409
        %v6560 = vunpack.c.l.b16 %v3410
        %v6561 = vunpack.c.h.b16 %v3410
        %v6562 = vunpack.c.l.b16 %v3411
        %v6563 = vunpack.c.h.b16 %v3411
        %v6564 = vunpack.c.l.b16 %v3412
        %v6565 = vunpack.c.h.b16 %v3412
        %v6566 = vunpack.c.l.b16 %v3413
        %v6567 = vunpack.c.h.b16 %v3413
        %v6568 = vunpack.c.l.b16 %v3414
        %v6569 = vunpack.c.h.b16 %v3414
        %v6570 = vunpack.c.l.b16 %v3415
        %v6571 = vunpack.c.h.b16 %v3415
        %v6572 = vpack.c.b16 %v4540, %v4524
        %v6573 = vpack.c.b16 %v4541, %v4525
        %v6574 = vpack.c.b16 %v4542, %v4526
        %v6575 = vpack.c.b16 %v4543, %v4527
        %v6576 = vpack.c.b16 %v4544, %v4528
        %v6577 = vpack.c.b16 %v4545, %v4529
        %v6578 = vpack.c.b16 %v4546, %v4530
        %v6579 = vpack.c.b16 %v4547, %v4531
        %v6580 = vpack.c.b16 %v4548, %v4532
        %v6581 = vpack.c.b16 %v4549, %v4533
        %v6582 = vpack.c.b16 %v4550, %v4534
        %v6583 = vpack.c.b16 %v4551, %v4535
        %v6584 = vpack.c.b16 %v4552, %v4536
        %v6585 = vpack.c.b16 %v4553, %v4537
        %v6586 = vpack.c.b16 %v4554, %v4538
        %v6587 = vpack.c.b16 %v4555, %v4539
        %v6588 = vpack.c.b16 %v4572, %v4556
        %v6589 = vpack.c.b16 %v4573, %v4557
        %v6590 = vpack.c.b16 %v4574, %v4558
        %v6591 = vpack.c.b16 %v4575, %v4559
        %v6592 = vpack.c.b16 %v4576, %v4560
        %v6593 = vpack.c.b16 %v4577, %v4561
        %v6594 = vpack.c.b16 %v4578, %v4562
        %v6595 = vpack.c.b16 %v4579, %v4563
        %v6596 = vpack.c.b16 %v4580, %v4564
        %v6597 = vpack.c.b16 %v4581, %v4565
        %v6598 = vpack.c.b16 %v4582, %v4566
        %v6599 = vpack.c.b16 %v4583, %v4567
        %v6600 = vpack.c.b16 %v4584, %v4568
        %v6601 = vpack.c.b16 %v4585, %v4569
        %v6602 = vpack.c.b16 %v4586, %v4570
        %v6603 = vpack.c.b16 %v4587, %v4571
        %v6604 = vpack.c.b16 %v4604, %v4588
        %v6605 = vpack.c.b16 %v4605, %v4589
        %v6606 = vpack.c.b16 %v4606, %v4590
        %v6607 = vpack.c.b16 %v4607, %v4591
        %v6608 = vpack.c.b16 %v4608, %v4592
        %v6609 = vpack.c.b16 %v4609, %v4593
        %v6610 = vpack.c.b16 %v4610, %v4594
        %v6611 = vpack.c.b16 %v4611, %v4595
        %v6612 = vpack.c.b16 %v4612, %v4596
        %v6613 = vpack.c.b16 %v4613, %v4597
        %v6614 = vpack.c.b16 %v4614, %v4598
        %v6615 = vpack.c.b16 %v4615, %v4599
        %v6616 = vpack.c.b16 %v4616, %v4600
        %v6617 = vpack.c.b16 %v4617, %v4601
        %v6618 = vpack.c.b16 %v4618, %v4602
        %v6619 = vpack.c.b16 %v4619, %v4603
        %v6620 = vpack.c.b16 %v4636, %v4620
        %v6621 = vpack.c.b16 %v4637, %v4621
        %v6622 = vpack.c.b16 %v4638, %v4622
        %v6623 = vpack.c.b16 %v4639, %v4623
        %v6624 = vpack.c.b16 %v4640, %v4624
        %v6625 = vpack.c.b16 %v4641, %v4625
        %v6626 = vpack.c.b16 %v4642, %v4626
        %v6627 = vpack.c.b16 %v4643, %v4627
        %v6628 = vpack.c.b16 %v4644, %v4628
        %v6629 = vpack.c.b16 %v4645, %v4629
        %v6630 = vpack.c.b16 %v4646, %v4630
        %v6631 = vpack.c.b16 %v4647, %v4631
        %v6632 = vpack.c.b16 %v4648, %v4632
        %v6633 = vpack.c.b16 %v4649, %v4633
        %v6634 = vpack.c.b16 %v4650, %v4634
        %v6635 = vpack.c.b16 %v4651, %v4635
        %v6636 = vpack.c.b16 %v4668, %v4652
        %v6637 = vpack.c.b16 %v4669, %v4653
        %v6638 = vpack.c.b16 %v4670, %v4654
        %v6639 = vpack.c.b16 %v4671, %v4655
        %v6640 = vpack.c.b16 %v4672, %v4656
        %v6641 = vpack.c.b16 %v4673, %v4657
        %v6642 = vpack.c.b16 %v4674, %v4658
        %v6643 = vpack.c.b16 %v4675, %v4659
        %v6644 = vpack.c.b16 %v4676, %v4660
        %v6645 = vpack.c.b16 %v4677, %v4661
        %v6646 = vpack.c.b16 %v4678, %v4662
        %v6647 = vpack.c.b16 %v4679, %v4663
        %v6648 = vpack.c.b16 %v4680, %v4664
        %v6649 = vpack.c.b16 %v4681, %v4665
        %v6650 = vpack.c.b16 %v4682, %v4666
        %v6651 = vpack.c.b16 %v4683, %v4667
        %v6652 = vpack.c.b16 %v4700, %v4684
        %v6653 = vpack.c.b16 %v4701, %v4685
        %v6654 = vpack.c.b16 %v4702, %v4686
        %v6655 = vpack.c.b16 %v4703, %v4687
        %v6656 = vpack.c.b16 %v4704, %v4688
        %v6657 = vpack.c.b16 %v4705, %v4689
        %v6658 = vpack.c.b16 %v4706, %v4690
        %v6659 = vpack.c.b16 %v4707, %v4691
        %v6660 = vpack.c.b16 %v4708, %v4692
        %v6661 = vpack.c.b16 %v4709, %v4693
        %v6662 = vpack.c.b16 %v4710, %v4694
        %v6663 = vpack.c.b16 %v4711, %v4695
        %v6664 = vpack.c.b16 %v4712, %v4696
        %v6665 = vpack.c.b16 %v4713, %v4697
        %v6666 = vpack.c.b16 %v4714, %v4698
        %v6667 = vpack.c.b16 %v4715, %v4699
        %v6668 = vpack.c.b16 %v4732, %v4716
        %v6669 = vpack.c.b16 %v4733, %v4717
        %v6670 = vpack.c.b16 %v4734, %v4718
        %v6671 = vpack.c.b16 %v4735, %v4719
        %v6672 = vpack.c.b16 %v4736, %v4720
        %v6673 = vpack.c.b16 %v4737, %v4721
        %v6674 = vpack.c.b16 %v4738, %v4722
        %v6675 = vpack.c.b16 %v4739, %v4723
        %v6676 = vpack.c.b16 %v4740, %v4724
        %v6677 = vpack.c.b16 %v4741, %v4725
        %v6678 = vpack.c.b16 %v4742, %v4726
        %v6679 = vpack.c.b16 %v4743, %v4727
        %v6680 = vpack.c.b16 %v4744, %v4728
        %v6681 = vpack.c.b16 %v4745, %v4729
        %v6682 = vpack.c.b16 %v4746, %v4730
        %v6683 = vpack.c.b16 %v4747, %v4731
        %v6684 = vpack.c.b16 %v4764, %v4748
        %v6685 = vpack.c.b16 %v4765, %v4749
        %v6686 = vpack.c.b16 %v4766, %v4750
        %v6687 = vpack.c.b16 %v4767, %v4751
        %v6688 = vpack.c.b16 %v4768, %v4752
        %v6689 = vpack.c.b16 %v4769, %v4753
        %v6690 = vpack.c.b16 %v4770, %v4754
        %v6691 = vpack.c.b16 %v4771, %v4755
        %v6692 = vpack.c.b16 %v4772, %v4756
        %v6693 = vpack.c.b16 %v4773, %v4757
        %v6694 = vpack.c.b16 %v4774, %v4758
        %v6695 = vpack.c.b16 %v4775, %v4759
        %v6696 = vpack.c.b16 %v4776, %v4760
        %v6697 = vpack.c.b16 %v4777, %v4761
        %v6698 = vpack.c.b16 %v4778, %v4762
        %v6699 = vpack.c.b16 %v4779, %v4763
        %v6700 = vpack.c.b16 %v4796, %v4780
        %v6701 = vpack.c.b16 %v4797, %v4781
        %v6702 = vpack.c.b16 %v4798, %v4782
        %v6703 = vpack.c.b16 %v4799, %v4783
        %v6704 = vpack.c.b16 %v4800, %v4784
        %v6705 = vpack.c.b16 %v4801, %v4785
        %v6706 = vpack.c.b16 %v4802, %v4786
        %v6707 = vpack.c.b16 %v4803, %v4787
        %v6708 = vpack.c.b16 %v4804, %v4788
        %v6709 = vpack.c.b16 %v4805, %v4789
        %v6710 = vpack.c.b16 %v4806, %v4790
        %v6711 = vpack.c.b16 %v4807, %v4791
        %v6712 = vpack.c.b16 %v4808, %v4792
        %v6713 = vpack.c.b16 %v4809, %v4793
        %v6714 = vpack.c.b16 %v4810, %v4794
        %v6715 = vpack.c.b16 %v4811, %v4795
        %v6716 = vpack.c.b16 %v4828, %v4812
        %v6717 = vpack.c.b16 %v4829, %v4813
        %v6718 = vpack.c.b16 %v4830, %v4814
        %v6719 = vpack.c.b16 %v4831, %v4815
        %v6720 = vpack.c.b16 %v4832, %v4816
        %v6721 = vpack.c.b16 %v4833, %v4817
        %v6722 = vpack.c.b16 %v4834, %v4818
        %v6723 = vpack.c.b16 %v4835, %v4819
        %v6724 = vpack.c.b16 %v4836, %v4820
        %v6725 = vpack.c.b16 %v4837, %v4821
        %v6726 = vpack.c.b16 %v4838, %v4822
        %v6727 = vpack.c.b16 %v4839, %v4823
        %v6728 = vpack.c.b16 %v4840, %v4824
        %v6729 = vpack.c.b16 %v4841, %v4825
        %v6730 = vpack.c.b16 %v4842, %v4826
        %v6731 = vpack.c.b16 %v4843, %v4827
        %v6732 = vpack.c.b16 %v4860, %v4844
        %v6733 = vpack.c.b16 %v4861, %v4845
        %v6734 = vpack.c.b16 %v4862, %v4846
        %v6735 = vpack.c.b16 %v4863, %v4847
        %v6736 = vpack.c.b16 %v4864, %v4848
        %v6737 = vpack.c.b16 %v4865, %v4849
        %v6738 = vpack.c.b16 %v4866, %v4850
        %v6739 = vpack.c.b16 %v4867, %v4851
        %v6740 = vpack.c.b16 %v4868, %v4852
        %v6741 = vpack.c.b16 %v4869, %v4853
        %v6742 = vpack.c.b16 %v4870, %v4854
        %v6743 = vpack.c.b16 %v4871, %v4855
        %v6744 = vpack.c.b16 %v4872, %v4856
        %v6745 = vpack.c.b16 %v4873, %v4857
        %v6746 = vpack.c.b16 %v4874, %v4858
        %v6747 = vpack.c.b16 %v4875, %v4859
        %v6748 = vpack.c.b16 %v4892, %v4876
        %v6749 = vpack.c.b16 %v4893, %v4877
        %v6750 = vpack.c.b16 %v4894, %v4878
        %v6751 = vpack.c.b16 %v4895, %v4879
        %v6752 = vpack.c.b16 %v4896, %v4880
        %v6753 = vpack.c.b16 %v4897, %v4881
        %v6754 = vpack.c.b16 %v4898, %v4882
        %v6755 = vpack.c.b16 %v4899, %v4883
        %v6756 = vpack.c.b16 %v4900, %v4884
        %v6757 = vpack.c.b16 %v4901, %v4885
        %v6758 = vpack.c.b16 %v4902, %v4886
        %v6759 = vpack.c.b16 %v4903, %v4887
        %v6760 = vpack.c.b16 %v4904, %v4888
        %v6761 = vpack.c.b16 %v4905, %v4889
        %v6762 = vpack.c.b16 %v4906, %v4890
        %v6763 = vpack.c.b16 %v4907, %v4891
        %v6764 = vpack.c.b16 %v4924, %v4908
        %v6765 = vpack.c.b16 %v4925, %v4909
        %v6766 = vpack.c.b16 %v4926, %v4910
        %v6767 = vpack.c.b16 %v4927, %v4911
        %v6768 = vpack.c.b16 %v4928, %v4912
        %v6769 = vpack.c.b16 %v4929, %v4913
        %v6770 = vpack.c.b16 %v4930, %v4914
        %v6771 = vpack.c.b16 %v4931, %v4915
        %v6772 = vpack.c.b16 %v4932, %v4916
        %v6773 = vpack.c.b16 %v4933, %v4917
        %v6774 = vpack.c.b16 %v4934, %v4918
        %v6775 = vpack.c.b16 %v4935, %v4919
        %v6776 = vpack.c.b16 %v4936, %v4920
        %v6777 = vpack.c.b16 %v4937, %v4921
        %v6778 = vpack.c.b16 %v4938, %v4922
        %v6779 = vpack.c.b16 %v4939, %v4923
        %v6780 = vpack.c.b16 %v4956, %v4940
        %v6781 = vpack.c.b16 %v4957, %v4941
        %v6782 = vpack.c.b16 %v4958, %v4942
        %v6783 = vpack.c.b16 %v4959, %v4943
        %v6784 = vpack.c.b16 %v4960, %v4944
        %v6785 = vpack.c.b16 %v4961, %v4945
        %v6786 = vpack.c.b16 %v4962, %v4946
        %v6787 = vpack.c.b16 %v4963, %v4947
        %v6788 = vpack.c.b16 %v4964, %v4948
        %v6789 = vpack.c.b16 %v4965, %v4949
        %v6790 = vpack.c.b16 %v4966, %v4950
        %v6791 = vpack.c.b16 %v4967, %v4951
        %v6792 = vpack.c.b16 %v4968, %v4952
        %v6793 = vpack.c.b16 %v4969, %v4953
        %v6794 = vpack.c.b16 %v4970, %v4954
        %v6795 = vpack.c.b16 %v4971, %v4955
        %v6796 = vpack.c.b16 %v4988, %v4972
        %v6797 = vpack.c.b16 %v4989, %v4973
        %v6798 = vpack.c.b16 %v4990, %v4974
        %v6799 = vpack.c.b16 %v4991, %v4975
        %v6800 = vpack.c.b16 %v4992, %v4976
        %v6801 = vpack.c.b16 %v4993, %v4977
        %v6802 = vpack.c.b16 %v4994, %v4978
        %v6803 = vpack.c.b16 %v4995, %v4979
        %v6804 = vpack.c.b16 %v4996, %v4980
        %v6805 = vpack.c.b16 %v4997, %v4981
        %v6806 = vpack.c.b16 %v4998, %v4982
        %v6807 = vpack.c.b16 %v4999, %v4983
        %v6808 = vpack.c.b16 %v5000, %v4984
        %v6809 = vpack.c.b16 %v5001, %v4985
        %v6810 = vpack.c.b16 %v5002, %v4986
        %v6811 = vpack.c.b16 %v5003, %v4987
        %v6812 = vpack.c.b16 %v5020, %v5004
        %v6813 = vpack.c.b16 %v5021, %v5005
        %v6814 = vpack.c.b16 %v5022, %v5006
        %v6815 = vpack.c.b16 %v5023, %v5007
        %v6816 = vpack.c.b16 %v5024, %v5008
        %v6817 = vpack.c.b16 %v5025, %v5009
        %v6818 = vpack.c.b16 %v5026, %v5010
        %v6819 = vpack.c.b16 %v5027, %v5011
        %v6820 = vpack.c.b16 %v5028, %v5012
        %v6821 = vpack.c.b16 %v5029, %v5013
        %v6822 = vpack.c.b16 %v5030, %v5014
        %v6823 = vpack.c.b16 %v5031, %v5015
        %v6824 = vpack.c.b16 %v5032, %v5016
        %v6825 = vpack.c.b16 %v5033, %v5017
        %v6826 = vpack.c.b16 %v5034, %v5018
        %v6827 = vpack.c.b16 %v5035, %v5019
        %v6828 = vpack.c.b16 %v5052, %v5036
        %v6829 = vpack.c.b16 %v5053, %v5037
        %v6830 = vpack.c.b16 %v5054, %v5038
        %v6831 = vpack.c.b16 %v5055, %v5039
        %v6832 = vpack.c.b16 %v5056, %v5040
        %v6833 = vpack.c.b16 %v5057, %v5041
        %v6834 = vpack.c.b16 %v5058, %v5042
        %v6835 = vpack.c.b16 %v5059, %v5043
        %v6836 = vpack.c.b16 %v5060, %v5044
        %v6837 = vpack.c.b16 %v5061, %v5045
        %v6838 = vpack.c.b16 %v5062, %v5046
        %v6839 = vpack.c.b16 %v5063, %v5047
        %v6840 = vpack.c.b16 %v5064, %v5048
        %v6841 = vpack.c.b16 %v5065, %v5049
        %v6842 = vpack.c.b16 %v5066, %v5050
        %v6843 = vpack.c.b16 %v5067, %v5051
        %v6844 = vpack.c.b16 %v5084, %v5068
        %v6845 = vpack.c.b16 %v5085, %v5069
        %v6846 = vpack.c.b16 %v5086, %v5070
        %v6847 = vpack.c.b16 %v5087, %v5071
        %v6848 = vpack.c.b16 %v5088, %v5072
        %v6849 = vpack.c.b16 %v5089, %v5073
        %v6850 = vpack.c.b16 %v5090, %v5074
        %v6851 = vpack.c.b16 %v5091, %v5075
        %v6852 = vpack.c.b16 %v5092, %v5076
        %v6853 = vpack.c.b16 %v5093, %v5077
        %v6854 = vpack.c.b16 %v5094, %v5078
        %v6855 = vpack.c.b16 %v5095, %v5079
        %v6856 = vpack.c.b16 %v5096, %v5080
        %v6857 = vpack.c.b16 %v5097, %v5081
        %v6858 = vpack.c.b16 %v5098, %v5082
        %v6859 = vpack.c.b16 %v5099, %v5083
        %v6860 = vpack.c.b16 %v5116, %v5100
        %v6861 = vpack.c.b16 %v5117, %v5101
        %v6862 = vpack.c.b16 %v5118, %v5102
        %v6863 = vpack.c.b16 %v5119, %v5103
        %v6864 = vpack.c.b16 %v5120, %v5104
        %v6865 = vpack.c.b16 %v5121, %v5105
        %v6866 = vpack.c.b16 %v5122, %v5106
        %v6867 = vpack.c.b16 %v5123, %v5107
        %v6868 = vpack.c.b16 %v5124, %v5108
        %v6869 = vpack.c.b16 %v5125, %v5109
        %v6870 = vpack.c.b16 %v5126, %v5110
        %v6871 = vpack.c.b16 %v5127, %v5111
        %v6872 = vpack.c.b16 %v5128, %v5112
        %v6873 = vpack.c.b16 %v5129, %v5113
        %v6874 = vpack.c.b16 %v5130, %v5114
        %v6875 = vpack.c.b16 %v5131, %v5115
        %v6876 = vpack.c.b16 %v5148, %v5132
        %v6877 = vpack.c.b16 %v5149, %v5133
        %v6878 = vpack.c.b16 %v5150, %v5134
        %v6879 = vpack.c.b16 %v5151, %v5135
        %v6880 = vpack.c.b16 %v5152, %v5136
        %v6881 = vpack.c.b16 %v5153, %v5137
        %v6882 = vpack.c.b16 %v5154, %v5138
        %v6883 = vpack.c.b16 %v5155, %v5139
        %v6884 = vpack.c.b16 %v5156, %v5140
        %v6885 = vpack.c.b16 %v5157, %v5141
        %v6886 = vpack.c.b16 %v5158, %v5142
        %v6887 = vpack.c.b16 %v5159, %v5143
        %v6888 = vpack.c.b16 %v5160, %v5144
        %v6889 = vpack.c.b16 %v5161, %v5145
        %v6890 = vpack.c.b16 %v5162, %v5146
        %v6891 = vpack.c.b16 %v5163, %v5147
        %v6892 = vpack.c.b16 %v5180, %v5164
        %v6893 = vpack.c.b16 %v5181, %v5165
        %v6894 = vpack.c.b16 %v5182, %v5166
        %v6895 = vpack.c.b16 %v5183, %v5167
        %v6896 = vpack.c.b16 %v5184, %v5168
        %v6897 = vpack.c.b16 %v5185, %v5169
        %v6898 = vpack.c.b16 %v5186, %v5170
        %v6899 = vpack.c.b16 %v5187, %v5171
        %v6900 = vpack.c.b16 %v5188, %v5172
        %v6901 = vpack.c.b16 %v5189, %v5173
        %v6902 = vpack.c.b16 %v5190, %v5174
        %v6903 = vpack.c.b16 %v5191, %v5175
        %v6904 = vpack.c.b16 %v5192, %v5176
        %v6905 = vpack.c.b16 %v5193, %v5177
        %v6906 = vpack.c.b16 %v5194, %v5178
        %v6907 = vpack.c.b16 %v5195, %v5179
        %v6908 = vpack.c.b16 %v5212, %v5196
        %v6909 = vpack.c.b16 %v5213, %v5197
        %v6910 = vpack.c.b16 %v5214, %v5198
        %v6911 = vpack.c.b16 %v5215, %v5199
        %v6912 = vpack.c.b16 %v5216, %v5200
        %v6913 = vpack.c.b16 %v5217, %v5201
        %v6914 = vpack.c.b16 %v5218, %v5202
        %v6915 = vpack.c.b16 %v5219, %v5203
        %v6916 = vpack.c.b16 %v5220, %v5204
        %v6917 = vpack.c.b16 %v5221, %v5205
        %v6918 = vpack.c.b16 %v5222, %v5206
        %v6919 = vpack.c.b16 %v5223, %v5207
        %v6920 = vpack.c.b16 %v5224, %v5208
        %v6921 = vpack.c.b16 %v5225, %v5209
        %v6922 = vpack.c.b16 %v5226, %v5210
        %v6923 = vpack.c.b16 %v5227, %v5211
        %v6924 = vpack.c.b16 %v5244, %v5228
        %v6925 = vpack.c.b16 %v5245, %v5229
        %v6926 = vpack.c.b16 %v5246, %v5230
        %v6927 = vpack.c.b16 %v5247, %v5231
        %v6928 = vpack.c.b16 %v5248, %v5232
        %v6929 = vpack.c.b16 %v5249, %v5233
        %v6930 = vpack.c.b16 %v5250, %v5234
        %v6931 = vpack.c.b16 %v5251, %v5235
        %v6932 = vpack.c.b16 %v5252, %v5236
        %v6933 = vpack.c.b16 %v5253, %v5237
        %v6934 = vpack.c.b16 %v5254, %v5238
        %v6935 = vpack.c.b16 %v5255, %v5239
        %v6936 = vpack.c.b16 %v5256, %v5240
        %v6937 = vpack.c.b16 %v5257, %v5241
        %v6938 = vpack.c.b16 %v5258, %v5242
        %v6939 = vpack.c.b16 %v5259, %v5243
        %v6940 = vpack.c.b16 %v5276, %v5260
        %v6941 = vpack.c.b16 %v5277, %v5261
        %v6942 = vpack.c.b16 %v5278, %v5262
        %v6943 = vpack.c.b16 %v5279, %v5263
        %v6944 = vpack.c.b16 %v5280, %v5264
        %v6945 = vpack.c.b16 %v5281, %v5265
        %v6946 = vpack.c.b16 %v5282, %v5266
        %v6947 = vpack.c.b16 %v5283, %v5267
        %v6948 = vpack.c.b16 %v5284, %v5268
        %v6949 = vpack.c.b16 %v5285, %v5269
        %v6950 = vpack.c.b16 %v5286, %v5270
        %v6951 = vpack.c.b16 %v5287, %v5271
        %v6952 = vpack.c.b16 %v5288, %v5272
        %v6953 = vpack.c.b16 %v5289, %v5273
        %v6954 = vpack.c.b16 %v5290, %v5274
        %v6955 = vpack.c.b16 %v5291, %v5275
        %v6956 = vpack.c.b16 %v5308, %v5292
        %v6957 = vpack.c.b16 %v5309, %v5293
        %v6958 = vpack.c.b16 %v5310, %v5294
        %v6959 = vpack.c.b16 %v5311, %v5295
        %v6960 = vpack.c.b16 %v5312, %v5296
        %v6961 = vpack.c.b16 %v5313, %v5297
        %v6962 = vpack.c.b16 %v5314, %v5298
        %v6963 = vpack.c.b16 %v5315, %v5299
        %v6964 = vpack.c.b16 %v5316, %v5300
        %v6965 = vpack.c.b16 %v5317, %v5301
        %v6966 = vpack.c.b16 %v5318, %v5302
        %v6967 = vpack.c.b16 %v5319, %v5303
        %v6968 = vpack.c.b16 %v5320, %v5304
        %v6969 = vpack.c.b16 %v5321, %v5305
        %v6970 = vpack.c.b16 %v5322, %v5306
        %v6971 = vpack.c.b16 %v5323, %v5307
        %v6972 = vpack.c.b16 %v5340, %v5324
        %v6973 = vpack.c.b16 %v5341, %v5325
        %v6974 = vpack.c.b16 %v5342, %v5326
        %v6975 = vpack.c.b16 %v5343, %v5327
        %v6976 = vpack.c.b16 %v5344, %v5328
        %v6977 = vpack.c.b16 %v5345, %v5329
        %v6978 = vpack.c.b16 %v5346, %v5330
        %v6979 = vpack.c.b16 %v5347, %v5331
        %v6980 = vpack.c.b16 %v5348, %v5332
        %v6981 = vpack.c.b16 %v5349, %v5333
        %v6982 = vpack.c.b16 %v5350, %v5334
        %v6983 = vpack.c.b16 %v5351, %v5335
        %v6984 = vpack.c.b16 %v5352, %v5336
        %v6985 = vpack.c.b16 %v5353, %v5337
        %v6986 = vpack.c.b16 %v5354, %v5338
        %v6987 = vpack.c.b16 %v5355, %v5339
        %v6988 = vpack.c.b16 %v5372, %v5356
        %v6989 = vpack.c.b16 %v5373, %v5357
        %v6990 = vpack.c.b16 %v5374, %v5358
        %v6991 = vpack.c.b16 %v5375, %v5359
        %v6992 = vpack.c.b16 %v5376, %v5360
        %v6993 = vpack.c.b16 %v5377, %v5361
        %v6994 = vpack.c.b16 %v5378, %v5362
        %v6995 = vpack.c.b16 %v5379, %v5363
        %v6996 = vpack.c.b16 %v5380, %v5364
        %v6997 = vpack.c.b16 %v5381, %v5365
        %v6998 = vpack.c.b16 %v5382, %v5366
        %v6999 = vpack.c.b16 %v5383, %v5367
        %v7000 = vpack.c.b16 %v5384, %v5368
        %v7001 = vpack.c.b16 %v5385, %v5369
        %v7002 = vpack.c.b16 %v5386, %v5370
        %v7003 = vpack.c.b16 %v5387, %v5371
        %v7004 = vpack.c.b16 %v5404, %v5388
        %v7005 = vpack.c.b16 %v5405, %v5389
        %v7006 = vpack.c.b16 %v5406, %v5390
        %v7007 = vpack.c.b16 %v5407, %v5391
        %v7008 = vpack.c.b16 %v5408, %v5392
        %v7009 = vpack.c.b16 %v5409, %v5393
        %v7010 = vpack.c.b16 %v5410, %v5394
        %v7011 = vpack.c.b16 %v5411, %v5395
        %v7012 = vpack.c.b16 %v5412, %v5396
        %v7013 = vpack.c.b16 %v5413, %v5397
        %v7014 = vpack.c.b16 %v5414, %v5398
        %v7015 = vpack.c.b16 %v5415, %v5399
        %v7016 = vpack.c.b16 %v5416, %v5400
        %v7017 = vpack.c.b16 %v5417, %v5401
        %v7018 = vpack.c.b16 %v5418, %v5402
        %v7019 = vpack.c.b16 %v5419, %v5403
        %v7020 = vpack.c.b16 %v5436, %v5420
        %v7021 = vpack.c.b16 %v5437, %v5421
        %v7022 = vpack.c.b16 %v5438, %v5422
        %v7023 = vpack.c.b16 %v5439, %v5423
        %v7024 = vpack.c.b16 %v5440, %v5424
        %v7025 = vpack.c.b16 %v5441, %v5425
        %v7026 = vpack.c.b16 %v5442, %v5426
        %v7027 = vpack.c.b16 %v5443, %v5427
        %v7028 = vpack.c.b16 %v5444, %v5428
        %v7029 = vpack.c.b16 %v5445, %v5429
        %v7030 = vpack.c.b16 %v5446, %v5430
        %v7031 = vpack.c.b16 %v5447, %v5431
        %v7032 = vpack.c.b16 %v5448, %v5432
        %v7033 = vpack.c.b16 %v5449, %v5433
        %v7034 = vpack.c.b16 %v5450, %v5434
        %v7035 = vpack.c.b16 %v5451, %v5435
        %v7036 = vpack.c.b16 %v5468, %v5452
        %v7037 = vpack.c.b16 %v5469, %v5453
        %v7038 = vpack.c.b16 %v5470, %v5454
        %v7039 = vpack.c.b16 %v5471, %v5455
        %v7040 = vpack.c.b16 %v5472, %v5456
        %v7041 = vpack.c.b16 %v5473, %v5457
        %v7042 = vpack.c.b16 %v5474, %v5458
        %v7043 = vpack.c.b16 %v5475, %v5459
        %v7044 = vpack.c.b16 %v5476, %v5460
        %v7045 = vpack.c.b16 %v5477, %v5461
        %v7046 = vpack.c.b16 %v5478, %v5462
        %v7047 = vpack.c.b16 %v5479, %v5463
        %v7048 = vpack.c.b16 %v5480, %v5464
        %v7049 = vpack.c.b16 %v5481, %v5465
        %v7050 = vpack.c.b16 %v5482, %v5466
        %v7051 = vpack.c.b16 %v5483, %v5467
        %v7052 = vpack.c.b16 %v5500, %v5484
        %v7053 = vpack.c.b16 %v5501, %v5485
        %v7054 = vpack.c.b16 %v5502, %v5486
        %v7055 = vpack.c.b16 %v5503, %v5487
        %v7056 = vpack.c.b16 %v5504, %v5488
        %v7057 = vpack.c.b16 %v5505, %v5489
        %v7058 = vpack.c.b16 %v5506, %v5490
        %v7059 = vpack.c.b16 %v5507, %v5491
        %v7060 = vpack.c.b16 %v5508, %v5492
        %v7061 = vpack.c.b16 %v5509, %v5493
        %v7062 = vpack.c.b16 %v5510, %v5494
        %v7063 = vpack.c.b16 %v5511, %v5495
        %v7064 = vpack.c.b16 %v5512, %v5496
        %v7065 = vpack.c.b16 %v5513, %v5497
        %v7066 = vpack.c.b16 %v5514, %v5498
        %v7067 = vpack.c.b16 %v5515, %v5499
        %v7068 = vpack.c.b16 %v5532, %v5516
        %v7069 = vpack.c.b16 %v5533, %v5517
        %v7070 = vpack.c.b16 %v5534, %v5518
        %v7071 = vpack.c.b16 %v5535, %v5519
        %v7072 = vpack.c.b16 %v5536, %v5520
        %v7073 = vpack.c.b16 %v5537, %v5521
        %v7074 = vpack.c.b16 %v5538, %v5522
        %v7075 = vpack.c.b16 %v5539, %v5523
        %v7076 = vpack.c.b16 %v5540, %v5524
        %v7077 = vpack.c.b16 %v5541, %v5525
        %v7078 = vpack.c.b16 %v5542, %v5526
        %v7079 = vpack.c.b16 %v5543, %v5527
        %v7080 = vpack.c.b16 %v5544, %v5528
        %v7081 = vpack.c.b16 %v5545, %v5529
        %v7082 = vpack.c.b16 %v5546, %v5530
        %v7083 = vpack.c.b16 %v5547, %v5531
        %v7084 = vpack.c.b16 %v5564, %v5548
        %v7085 = vpack.c.b16 %v5565, %v5549
        %v7086 = vpack.c.b16 %v5566, %v5550
        %v7087 = vpack.c.b16 %v5567, %v5551
        %v7088 = vpack.c.b16 %v5568, %v5552
        %v7089 = vpack.c.b16 %v5569, %v5553
        %v7090 = vpack.c.b16 %v5570, %v5554
        %v7091 = vpack.c.b16 %v5571, %v5555
        %v7092 = vpack.c.b16 %v5572, %v5556
        %v7093 = vpack.c.b16 %v5573, %v5557
        %v7094 = vpack.c.b16 %v5574, %v5558
        %v7095 = vpack.c.b16 %v5575, %v5559
        %v7096 = vpack.c.b16 %v5576, %v5560
        %v7097 = vpack.c.b16 %v5577, %v5561
        %v7098 = vpack.c.b16 %v5578, %v5562
        %v7099 = vpack.c.b16 %v5579, %v5563
        %v7100 = vpack.c.b16 %v5596, %v5580
        %v7101 = vpack.c.b16 %v5597, %v5581
        %v7102 = vpack.c.b16 %v5598, %v5582
        %v7103 = vpack.c.b16 %v5599, %v5583
        %v7104 = vpack.c.b16 %v5600, %v5584
        %v7105 = vpack.c.b16 %v5601, %v5585
        %v7106 = vpack.c.b16 %v5602, %v5586
        %v7107 = vpack.c.b16 %v5603, %v5587
        %v7108 = vpack.c.b16 %v5604, %v5588
        %v7109 = vpack.c.b16 %v5605, %v5589
        %v7110 = vpack.c.b16 %v5606, %v5590
        %v7111 = vpack.c.b16 %v5607, %v5591
        %v7112 = vpack.c.b16 %v5608, %v5592
        %v7113 = vpack.c.b16 %v5609, %v5593
        %v7114 = vpack.c.b16 %v5610, %v5594
        %v7115 = vpack.c.b16 %v5611, %v5595
        %v7116 = vpack.c.b16 %v5628, %v5612
        %v7117 = vpack.c.b16 %v5629, %v5613
        %v7118 = vpack.c.b16 %v5630, %v5614
        %v7119 = vpack.c.b16 %v5631, %v5615
        %v7120 = vpack.c.b16 %v5632, %v5616
        %v7121 = vpack.c.b16 %v5633, %v5617
        %v7122 = vpack.c.b16 %v5634, %v5618
        %v7123 = vpack.c.b16 %v5635, %v5619
        %v7124 = vpack.c.b16 %v5636, %v5620
        %v7125 = vpack.c.b16 %v5637, %v5621
        %v7126 = vpack.c.b16 %v5638, %v5622
        %v7127 = vpack.c.b16 %v5639, %v5623
        %v7128 = vpack.c.b16 %v5640, %v5624
        %v7129 = vpack.c.b16 %v5641, %v5625
        %v7130 = vpack.c.b16 %v5642, %v5626
        %v7131 = vpack.c.b16 %v5643, %v5627
        %v7132 = vpack.c.b16 %v5660, %v5644
        %v7133 = vpack.c.b16 %v5661, %v5645
        %v7134 = vpack.c.b16 %v5662, %v5646
        %v7135 = vpack.c.b16 %v5663, %v5647
        %v7136 = vpack.c.b16 %v5664, %v5648
        %v7137 = vpack.c.b16 %v5665, %v5649
        %v7138 = vpack.c.b16 %v5666, %v5650
        %v7139 = vpack.c.b16 %v5667, %v5651
        %v7140 = vpack.c.b16 %v5668, %v5652
        %v7141 = vpack.c.b16 %v5669, %v5653
        %v7142 = vpack.c.b16 %v5670, %v5654
        %v7143 = vpack.c.b16 %v5671, %v5655
        %v7144 = vpack.c.b16 %v5672, %v5656
        %v7145 = vpack.c.b16 %v5673, %v5657
        %v7146 = vpack.c.b16 %v5674, %v5658
        %v7147 = vpack.c.b16 %v5675, %v5659
        %v7148 = vpack.c.b16 %v5692, %v5676
        %v7149 = vpack.c.b16 %v5693, %v5677
        %v7150 = vpack.c.b16 %v5694, %v5678
        %v7151 = vpack.c.b16 %v5695, %v5679
        %v7152 = vpack.c.b16 %v5696, %v5680
        %v7153 = vpack.c.b16 %v5697, %v5681
        %v7154 = vpack.c.b16 %v5698, %v5682
        %v7155 = vpack.c.b16 %v5699, %v5683
        %v7156 = vpack.c.b16 %v5700, %v5684
        %v7157 = vpack.c.b16 %v5701, %v5685
        %v7158 = vpack.c.b16 %v5702, %v5686
        %v7159 = vpack.c.b16 %v5703, %v5687
        %v7160 = vpack.c.b16 %v5704, %v5688
        %v7161 = vpack.c.b16 %v5705, %v5689
        %v7162 = vpack.c.b16 %v5706, %v5690
        %v7163 = vpack.c.b16 %v5707, %v5691
        %v7164 = vpack.c.b16 %v5724, %v5708
        %v7165 = vpack.c.b16 %v5725, %v5709
        %v7166 = vpack.c.b16 %v5726, %v5710
        %v7167 = vpack.c.b16 %v5727, %v5711
        %v7168 = vpack.c.b16 %v5728, %v5712
        %v7169 = vpack.c.b16 %v5729, %v5713
        %v7170 = vpack.c.b16 %v5730, %v5714
        %v7171 = vpack.c.b16 %v5731, %v5715
        %v7172 = vpack.c.b16 %v5732, %v5716
        %v7173 = vpack.c.b16 %v5733, %v5717
        %v7174 = vpack.c.b16 %v5734, %v5718
        %v7175 = vpack.c.b16 %v5735, %v5719
        %v7176 = vpack.c.b16 %v5736, %v5720
        %v7177 = vpack.c.b16 %v5737, %v5721
        %v7178 = vpack.c.b16 %v5738, %v5722
        %v7179 = vpack.c.b16 %v5739, %v5723
        %v7180 = vpack.c.b16 %v5756, %v5740
        %v7181 = vpack.c.b16 %v5757, %v5741
        %v7182 = vpack.c.b16 %v5758, %v5742
        %v7183 = vpack.c.b16 %v5759, %v5743
        %v7184 = vpack.c.b16 %v5760, %v5744
        %v7185 = vpack.c.b16 %v5761, %v5745
        %v7186 = vpack.c.b16 %v5762, %v5746
        %v7187 = vpack.c.b16 %v5763, %v5747
        %v7188 = vpack.c.b16 %v5764, %v5748
        %v7189 = vpack.c.b16 %v5765, %v5749
        %v7190 = vpack.c.b16 %v5766, %v5750
        %v7191 = vpack.c.b16 %v5767, %v5751
        %v7192 = vpack.c.b16 %v5768, %v5752
        %v7193 = vpack.c.b16 %v5769, %v5753
        %v7194 = vpack.c.b16 %v5770, %v5754
        %v7195 = vpack.c.b16 %v5771, %v5755
        %v7196 = vpack.c.b16 %v5788, %v5772
        %v7197 = vpack.c.b16 %v5789, %v5773
        %v7198 = vpack.c.b16 %v5790, %v5774
        %v7199 = vpack.c.b16 %v5791, %v5775
        %v7200 = vpack.c.b16 %v5792, %v5776
        %v7201 = vpack.c.b16 %v5793, %v5777
        %v7202 = vpack.c.b16 %v5794, %v5778
        %v7203 = vpack.c.b16 %v5795, %v5779
        %v7204 = vpack.c.b16 %v5796, %v5780
        %v7205 = vpack.c.b16 %v5797, %v5781
        %v7206 = vpack.c.b16 %v5798, %v5782
        %v7207 = vpack.c.b16 %v5799, %v5783
        %v7208 = vpack.c.b16 %v5800, %v5784
        %v7209 = vpack.c.b16 %v5801, %v5785
        %v7210 = vpack.c.b16 %v5802, %v5786
        %v7211 = vpack.c.b16 %v5803, %v5787
        %v7212 = vpack.c.b16 %v5820, %v5804
        %v7213 = vpack.c.b16 %v5821, %v5805
        %v7214 = vpack.c.b16 %v5822, %v5806
        %v7215 = vpack.c.b16 %v5823, %v5807
        %v7216 = vpack.c.b16 %v5824, %v5808
        %v7217 = vpack.c.b16 %v5825, %v5809
        %v7218 = vpack.c.b16 %v5826, %v5810
        %v7219 = vpack.c.b16 %v5827, %v5811
        %v7220 = vpack.c.b16 %v5828, %v5812
        %v7221 = vpack.c.b16 %v5829, %v5813
        %v7222 = vpack.c.b16 %v5830, %v5814
        %v7223 = vpack.c.b16 %v5831, %v5815
        %v7224 = vpack.c.b16 %v5832, %v5816
        %v7225 = vpack.c.b16 %v5833, %v5817
        %v7226 = vpack.c.b16 %v5834, %v5818
        %v7227 = vpack.c.b16 %v5835, %v5819
        %v7228 = vpack.c.b16 %v5852, %v5836
        %v7229 = vpack.c.b16 %v5853, %v5837
        %v7230 = vpack.c.b16 %v5854, %v5838
        %v7231 = vpack.c.b16 %v5855, %v5839
        %v7232 = vpack.c.b16 %v5856, %v5840
        %v7233 = vpack.c.b16 %v5857, %v5841
        %v7234 = vpack.c.b16 %v5858, %v5842
        %v7235 = vpack.c.b16 %v5859, %v5843
        %v7236 = vpack.c.b16 %v5860, %v5844
        %v7237 = vpack.c.b16 %v5861, %v5845
        %v7238 = vpack.c.b16 %v5862, %v5846
        %v7239 = vpack.c.b16 %v5863, %v5847
        %v7240 = vpack.c.b16 %v5864, %v5848
        %v7241 = vpack.c.b16 %v5865, %v5849
        %v7242 = vpack.c.b16 %v5866, %v5850
        %v7243 = vpack.c.b16 %v5867, %v5851
        %v7244 = vpack.c.b16 %v5884, %v5868
        %v7245 = vpack.c.b16 %v5885, %v5869
        %v7246 = vpack.c.b16 %v5886, %v5870
        %v7247 = vpack.c.b16 %v5887, %v5871
        %v7248 = vpack.c.b16 %v5888, %v5872
        %v7249 = vpack.c.b16 %v5889, %v5873
        %v7250 = vpack.c.b16 %v5890, %v5874
        %v7251 = vpack.c.b16 %v5891, %v5875
        %v7252 = vpack.c.b16 %v5892, %v5876
        %v7253 = vpack.c.b16 %v5893, %v5877
        %v7254 = vpack.c.b16 %v5894, %v5878
        %v7255 = vpack.c.b16 %v5895, %v5879
        %v7256 = vpack.c.b16 %v5896, %v5880
        %v7257 = vpack.c.b16 %v5897, %v5881
        %v7258 = vpack.c.b16 %v5898, %v5882
        %v7259 = vpack.c.b16 %v5899, %v5883
        %v7260 = vpack.c.b16 %v5916, %v5900
        %v7261 = vpack.c.b16 %v5917, %v5901
        %v7262 = vpack.c.b16 %v5918, %v5902
        %v7263 = vpack.c.b16 %v5919, %v5903
        %v7264 = vpack.c.b16 %v5920, %v5904
        %v7265 = vpack.c.b16 %v5921, %v5905
        %v7266 = vpack.c.b16 %v5922, %v5906
        %v7267 = vpack.c.b16 %v5923, %v5907
        %v7268 = vpack.c.b16 %v5924, %v5908
        %v7269 = vpack.c.b16 %v5925, %v5909
        %v7270 = vpack.c.b16 %v5926, %v5910
        %v7271 = vpack.c.b16 %v5927, %v5911
        %v7272 = vpack.c.b16 %v5928, %v5912
        %v7273 = vpack.c.b16 %v5929, %v5913
        %v7274 = vpack.c.b16 %v5930, %v5914
        %v7275 = vpack.c.b16 %v5931, %v5915
        %v7276 = vpack.c.b16 %v5948, %v5932
        %v7277 = vpack.c.b16 %v5949, %v5933
        %v7278 = vpack.c.b16 %v5950, %v5934
        %v7279 = vpack.c.b16 %v5951, %v5935
        %v7280 = vpack.c.b16 %v5952, %v5936
        %v7281 = vpack.c.b16 %v5953, %v5937
        %v7282 = vpack.c.b16 %v5954, %v5938
        %v7283 = vpack.c.b16 %v5955, %v5939
        %v7284 = vpack.c.b16 %v5956, %v5940
        %v7285 = vpack.c.b16 %v5957, %v5941
        %v7286 = vpack.c.b16 %v5958, %v5942
        %v7287 = vpack.c.b16 %v5959, %v5943
        %v7288 = vpack.c.b16 %v5960, %v5944
        %v7289 = vpack.c.b16 %v5961, %v5945
        %v7290 = vpack.c.b16 %v5962, %v5946
        %v7291 = vpack.c.b16 %v5963, %v5947
        %v7292 = vpack.c.b16 %v5980, %v5964
        %v7293 = vpack.c.b16 %v5981, %v5965
        %v7294 = vpack.c.b16 %v5982, %v5966
        %v7295 = vpack.c.b16 %v5983, %v5967
        %v7296 = vpack.c.b16 %v5984, %v5968
        %v7297 = vpack.c.b16 %v5985, %v5969
        %v7298 = vpack.c.b16 %v5986, %v5970
        %v7299 = vpack.c.b16 %v5987, %v5971
        %v7300 = vpack.c.b16 %v5988, %v5972
        %v7301 = vpack.c.b16 %v5989, %v5973
        %v7302 = vpack.c.b16 %v5990, %v5974
        %v7303 = vpack.c.b16 %v5991, %v5975
        %v7304 = vpack.c.b16 %v5992, %v5976
        %v7305 = vpack.c.b16 %v5993, %v5977
        %v7306 = vpack.c.b16 %v5994, %v5978
        %v7307 = vpack.c.b16 %v5995, %v5979
        %v7308 = vpack.c.b16 %v6012, %v5996
        %v7309 = vpack.c.b16 %v6013, %v5997
        %v7310 = vpack.c.b16 %v6014, %v5998
        %v7311 = vpack.c.b16 %v6015, %v5999
        %v7312 = vpack.c.b16 %v6016, %v6000
        %v7313 = vpack.c.b16 %v6017, %v6001
        %v7314 = vpack.c.b16 %v6018, %v6002
        %v7315 = vpack.c.b16 %v6019, %v6003
        %v7316 = vpack.c.b16 %v6020, %v6004
        %v7317 = vpack.c.b16 %v6021, %v6005
        %v7318 = vpack.c.b16 %v6022, %v6006
        %v7319 = vpack.c.b16 %v6023, %v6007
        %v7320 = vpack.c.b16 %v6024, %v6008
        %v7321 = vpack.c.b16 %v6025, %v6009
        %v7322 = vpack.c.b16 %v6026, %v6010
        %v7323 = vpack.c.b16 %v6027, %v6011
        %v7324 = vpack.c.b16 %v6044, %v6028
        %v7325 = vpack.c.b16 %v6045, %v6029
        %v7326 = vpack.c.b16 %v6046, %v6030
        %v7327 = vpack.c.b16 %v6047, %v6031
        %v7328 = vpack.c.b16 %v6048, %v6032
        %v7329 = vpack.c.b16 %v6049, %v6033
        %v7330 = vpack.c.b16 %v6050, %v6034
        %v7331 = vpack.c.b16 %v6051, %v6035
        %v7332 = vpack.c.b16 %v6052, %v6036
        %v7333 = vpack.c.b16 %v6053, %v6037
        %v7334 = vpack.c.b16 %v6054, %v6038
        %v7335 = vpack.c.b16 %v6055, %v6039
        %v7336 = vpack.c.b16 %v6056, %v6040
        %v7337 = vpack.c.b16 %v6057, %v6041
        %v7338 = vpack.c.b16 %v6058, %v6042
        %v7339 = vpack.c.b16 %v6059, %v6043
        %v7340 = vpack.c.b16 %v6076, %v6060
        %v7341 = vpack.c.b16 %v6077, %v6061
        %v7342 = vpack.c.b16 %v6078, %v6062
        %v7343 = vpack.c.b16 %v6079, %v6063
        %v7344 = vpack.c.b16 %v6080, %v6064
        %v7345 = vpack.c.b16 %v6081, %v6065
        %v7346 = vpack.c.b16 %v6082, %v6066
        %v7347 = vpack.c.b16 %v6083, %v6067
        %v7348 = vpack.c.b16 %v6084, %v6068
        %v7349 = vpack.c.b16 %v6085, %v6069
        %v7350 = vpack.c.b16 %v6086, %v6070
        %v7351 = vpack.c.b16 %v6087, %v6071
        %v7352 = vpack.c.b16 %v6088, %v6072
        %v7353 = vpack.c.b16 %v6089, %v6073
        %v7354 = vpack.c.b16 %v6090, %v6074
        %v7355 = vpack.c.b16 %v6091, %v6075
        %v7356 = vpack.c.b16 %v6108, %v6092
        %v7357 = vpack.c.b16 %v6109, %v6093
        %v7358 = vpack.c.b16 %v6110, %v6094
        %v7359 = vpack.c.b16 %v6111, %v6095
        %v7360 = vpack.c.b16 %v6112, %v6096
        %v7361 = vpack.c.b16 %v6113, %v6097
        %v7362 = vpack.c.b16 %v6114, %v6098
        %v7363 = vpack.c.b16 %v6115, %v6099
        %v7364 = vpack.c.b16 %v6116, %v6100
        %v7365 = vpack.c.b16 %v6117, %v6101
        %v7366 = vpack.c.b16 %v6118, %v6102
        %v7367 = vpack.c.b16 %v6119, %v6103
        %v7368 = vpack.c.b16 %v6120, %v6104
        %v7369 = vpack.c.b16 %v6121, %v6105
        %v7370 = vpack.c.b16 %v6122, %v6106
        %v7371 = vpack.c.b16 %v6123, %v6107
        %v7372 = vpack.c.b16 %v6140, %v6124
        %v7373 = vpack.c.b16 %v6141, %v6125
        %v7374 = vpack.c.b16 %v6142, %v6126
        %v7375 = vpack.c.b16 %v6143, %v6127
        %v7376 = vpack.c.b16 %v6144, %v6128
        %v7377 = vpack.c.b16 %v6145, %v6129
        %v7378 = vpack.c.b16 %v6146, %v6130
        %v7379 = vpack.c.b16 %v6147, %v6131
        %v7380 = vpack.c.b16 %v6148, %v6132
        %v7381 = vpack.c.b16 %v6149, %v6133
        %v7382 = vpack.c.b16 %v6150, %v6134
        %v7383 = vpack.c.b16 %v6151, %v6135
        %v7384 = vpack.c.b16 %v6152, %v6136
        %v7385 = vpack.c.b16 %v6153, %v6137
        %v7386 = vpack.c.b16 %v6154, %v6138
        %v7387 = vpack.c.b16 %v6155, %v6139
        %v7388 = vpack.c.b16 %v6172, %v6156
        %v7389 = vpack.c.b16 %v6173, %v6157
        %v7390 = vpack.c.b16 %v6174, %v6158
        %v7391 = vpack.c.b16 %v6175, %v6159
        %v7392 = vpack.c.b16 %v6176, %v6160
        %v7393 = vpack.c.b16 %v6177, %v6161
        %v7394 = vpack.c.b16 %v6178, %v6162
        %v7395 = vpack.c.b16 %v6179, %v6163
        %v7396 = vpack.c.b16 %v6180, %v6164
        %v7397 = vpack.c.b16 %v6181, %v6165
        %v7398 = vpack.c.b16 %v6182, %v6166
        %v7399 = vpack.c.b16 %v6183, %v6167
        %v7400 = vpack.c.b16 %v6184, %v6168
        %v7401 = vpack.c.b16 %v6185, %v6169
        %v7402 = vpack.c.b16 %v6186, %v6170
        %v7403 = vpack.c.b16 %v6187, %v6171
        %v7404 = vpack.c.b16 %v6204, %v6188
        %v7405 = vpack.c.b16 %v6205, %v6189
        %v7406 = vpack.c.b16 %v6206, %v6190
        %v7407 = vpack.c.b16 %v6207, %v6191
        %v7408 = vpack.c.b16 %v6208, %v6192
        %v7409 = vpack.c.b16 %v6209, %v6193
        %v7410 = vpack.c.b16 %v6210, %v6194
        %v7411 = vpack.c.b16 %v6211, %v6195
        %v7412 = vpack.c.b16 %v6212, %v6196
        %v7413 = vpack.c.b16 %v6213, %v6197
        %v7414 = vpack.c.b16 %v6214, %v6198
        %v7415 = vpack.c.b16 %v6215, %v6199
        %v7416 = vpack.c.b16 %v6216, %v6200
        %v7417 = vpack.c.b16 %v6217, %v6201
        %v7418 = vpack.c.b16 %v6218, %v6202
        %v7419 = vpack.c.b16 %v6219, %v6203
        %v7420 = vpack.c.b16 %v6236, %v6220
        %v7421 = vpack.c.b16 %v6237, %v6221
        %v7422 = vpack.c.b16 %v6238, %v6222
        %v7423 = vpack.c.b16 %v6239, %v6223
        %v7424 = vpack.c.b16 %v6240, %v6224
        %v7425 = vpack.c.b16 %v6241, %v6225
        %v7426 = vpack.c.b16 %v6242, %v6226
        %v7427 = vpack.c.b16 %v6243, %v6227
        %v7428 = vpack.c.b16 %v6244, %v6228
        %v7429 = vpack.c.b16 %v6245, %v6229
        %v7430 = vpack.c.b16 %v6246, %v6230
        %v7431 = vpack.c.b16 %v6247, %v6231
        %v7432 = vpack.c.b16 %v6248, %v6232
        %v7433 = vpack.c.b16 %v6249, %v6233
        %v7434 = vpack.c.b16 %v6250, %v6234
        %v7435 = vpack.c.b16 %v6251, %v6235
        %v7436 = vpack.c.b16 %v6268, %v6252
        %v7437 = vpack.c.b16 %v6269, %v6253
        %v7438 = vpack.c.b16 %v6270, %v6254
        %v7439 = vpack.c.b16 %v6271, %v6255
        %v7440 = vpack.c.b16 %v6272, %v6256
        %v7441 = vpack.c.b16 %v6273, %v6257
        %v7442 = vpack.c.b16 %v6274, %v6258
        %v7443 = vpack.c.b16 %v6275, %v6259
        %v7444 = vpack.c.b16 %v6276, %v6260
        %v7445 = vpack.c.b16 %v6277, %v6261
        %v7446 = vpack.c.b16 %v6278, %v6262
        %v7447 = vpack.c.b16 %v6279, %v6263
        %v7448 = vpack.c.b16 %v6280, %v6264
        %v7449 = vpack.c.b16 %v6281, %v6265
        %v7450 = vpack.c.b16 %v6282, %v6266
        %v7451 = vpack.c.b16 %v6283, %v6267
        %v7452 = vpack.c.b16 %v6300, %v6284
        %v7453 = vpack.c.b16 %v6301, %v6285
        %v7454 = vpack.c.b16 %v6302, %v6286
        %v7455 = vpack.c.b16 %v6303, %v6287
        %v7456 = vpack.c.b16 %v6304, %v6288
        %v7457 = vpack.c.b16 %v6305, %v6289
        %v7458 = vpack.c.b16 %v6306, %v6290
        %v7459 = vpack.c.b16 %v6307, %v6291
        %v7460 = vpack.c.b16 %v6308, %v6292
        %v7461 = vpack.c.b16 %v6309, %v6293
        %v7462 = vpack.c.b16 %v6310, %v6294
        %v7463 = vpack.c.b16 %v6311, %v6295
        %v7464 = vpack.c.b16 %v6312, %v6296
        %v7465 = vpack.c.b16 %v6313, %v6297
        %v7466 = vpack.c.b16 %v6314, %v6298
        %v7467 = vpack.c.b16 %v6315, %v6299
        %v7468 = vpack.c.b16 %v6332, %v6316
        %v7469 = vpack.c.b16 %v6333, %v6317
        %v7470 = vpack.c.b16 %v6334, %v6318
        %v7471 = vpack.c.b16 %v6335, %v6319
        %v7472 = vpack.c.b16 %v6336, %v6320
        %v7473 = vpack.c.b16 %v6337, %v6321
        %v7474 = vpack.c.b16 %v6338, %v6322
        %v7475 = vpack.c.b16 %v6339, %v6323
        %v7476 = vpack.c.b16 %v6340, %v6324
        %v7477 = vpack.c.b16 %v6341, %v6325
        %v7478 = vpack.c.b16 %v6342, %v6326
        %v7479 = vpack.c.b16 %v6343, %v6327
        %v7480 = vpack.c.b16 %v6344, %v6328
        %v7481 = vpack.c.b16 %v6345, %v6329
        %v7482 = vpack.c.b16 %v6346, %v6330
        %v7483 = vpack.c.b16 %v6347, %v6331
        %v7484 = vpack.c.b16 %v6364, %v6348
        %v7485 = vpack.c.b16 %v6365, %v6349
        %v7486 = vpack.c.b16 %v6366, %v6350
        %v7487 = vpack.c.b16 %v6367, %v6351
        %v7488 = vpack.c.b16 %v6368, %v6352
        %v7489 = vpack.c.b16 %v6369, %v6353
        %v7490 = vpack.c.b16 %v6370, %v6354
        %v7491 = vpack.c.b16 %v6371, %v6355
        %v7492 = vpack.c.b16 %v6372, %v6356
        %v7493 = vpack.c.b16 %v6373, %v6357
        %v7494 = vpack.c.b16 %v6374, %v6358
        %v7495 = vpack.c.b16 %v6375, %v6359
        %v7496 = vpack.c.b16 %v6376, %v6360
        %v7497 = vpack.c.b16 %v6377, %v6361
        %v7498 = vpack.c.b16 %v6378, %v6362
        %v7499 = vpack.c.b16 %v6379, %v6363
        %v7500 = vpack.c.b16 %v6396, %v6380
        %v7501 = vpack.c.b16 %v6397, %v6381
        %v7502 = vpack.c.b16 %v6398, %v6382
        %v7503 = vpack.c.b16 %v6399, %v6383
        %v7504 = vpack.c.b16 %v6400, %v6384
        %v7505 = vpack.c.b16 %v6401, %v6385
        %v7506 = vpack.c.b16 %v6402, %v6386
        %v7507 = vpack.c.b16 %v6403, %v6387
        %v7508 = vpack.c.b16 %v6404, %v6388
        %v7509 = vpack.c.b16 %v6405, %v6389
        %v7510 = vpack.c.b16 %v6406, %v6390
        %v7511 = vpack.c.b16 %v6407, %v6391
        %v7512 = vpack.c.b16 %v6408, %v6392
        %v7513 = vpack.c.b16 %v6409, %v6393
        %v7514 = vpack.c.b16 %v6410, %v6394
        %v7515 = vpack.c.b16 %v6411, %v6395
        %v7516 = vpack.c.b16 %v6428, %v6412
        %v7517 = vpack.c.b16 %v6429, %v6413
        %v7518 = vpack.c.b16 %v6430, %v6414
        %v7519 = vpack.c.b16 %v6431, %v6415
        %v7520 = vpack.c.b16 %v6432, %v6416
        %v7521 = vpack.c.b16 %v6433, %v6417
        %v7522 = vpack.c.b16 %v6434, %v6418
        %v7523 = vpack.c.b16 %v6435, %v6419
        %v7524 = vpack.c.b16 %v6436, %v6420
        %v7525 = vpack.c.b16 %v6437, %v6421
        %v7526 = vpack.c.b16 %v6438, %v6422
        %v7527 = vpack.c.b16 %v6439, %v6423
        %v7528 = vpack.c.b16 %v6440, %v6424
        %v7529 = vpack.c.b16 %v6441, %v6425
        %v7530 = vpack.c.b16 %v6442, %v6426
        %v7531 = vpack.c.b16 %v6443, %v6427
        %v7532 = vpack.c.b16 %v6460, %v6444
        %v7533 = vpack.c.b16 %v6461, %v6445
        %v7534 = vpack.c.b16 %v6462, %v6446
        %v7535 = vpack.c.b16 %v6463, %v6447
        %v7536 = vpack.c.b16 %v6464, %v6448
        %v7537 = vpack.c.b16 %v6465, %v6449
        %v7538 = vpack.c.b16 %v6466, %v6450
        %v7539 = vpack.c.b16 %v6467, %v6451
        %v7540 = vpack.c.b16 %v6468, %v6452
        %v7541 = vpack.c.b16 %v6469, %v6453
        %v7542 = vpack.c.b16 %v6470, %v6454
        %v7543 = vpack.c.b16 %v6471, %v6455
        %v7544 = vpack.c.b16 %v6472, %v6456
        %v7545 = vpack.c.b16 %v6473, %v6457
        %v7546 = vpack.c.b16 %v6474, %v6458
        %v7547 = vpack.c.b16 %v6475, %v6459
        %v7548 = vpack.c.b16 %v6492, %v6476
        %v7549 = vpack.c.b16 %v6493, %v6477
        %v7550 = vpack.c.b16 %v6494, %v6478
        %v7551 = vpack.c.b16 %v6495, %v6479
        %v7552 = vpack.c.b16 %v6496, %v6480
        %v7553 = vpack.c.b16 %v6497, %v6481
        %v7554 = vpack.c.b16 %v6498, %v6482
        %v7555 = vpack.c.b16 %v6499, %v6483
        %v7556 = vpack.c.b16 %v6500, %v6484
        %v7557 = vpack.c.b16 %v6501, %v6485
        %v7558 = vpack.c.b16 %v6502, %v6486
        %v7559 = vpack.c.b16 %v6503, %v6487
        %v7560 = vpack.c.b16 %v6504, %v6488
        %v7561 = vpack.c.b16 %v6505, %v6489
        %v7562 = vpack.c.b16 %v6506, %v6490
        %v7563 = vpack.c.b16 %v6507, %v6491
        %v7564 = vpack.c.b16 %v6524, %v6508
        %v7565 = vpack.c.b16 %v6525, %v6509
        %v7566 = vpack.c.b16 %v6526, %v6510
        %v7567 = vpack.c.b16 %v6527, %v6511
        %v7568 = vpack.c.b16 %v6528, %v6512
        %v7569 = vpack.c.b16 %v6529, %v6513
        %v7570 = vpack.c.b16 %v6530, %v6514
        %v7571 = vpack.c.b16 %v6531, %v6515
        %v7572 = vpack.c.b16 %v6532, %v6516
        %v7573 = vpack.c.b16 %v6533, %v6517
        %v7574 = vpack.c.b16 %v6534, %v6518
        %v7575 = vpack.c.b16 %v6535, %v6519
        %v7576 = vpack.c.b16 %v6536, %v6520
        %v7577 = vpack.c.b16 %v6537, %v6521
        %v7578 = vpack.c.b16 %v6538, %v6522
        %v7579 = vpack.c.b16 %v6539, %v6523
        %v7580 = vpack.c.b16 %v6556, %v6540
        %v7581 = vpack.c.b16 %v6557, %v6541
        %v7582 = vpack.c.b16 %v6558, %v6542
        %v7583 = vpack.c.b16 %v6559, %v6543
        %v7584 = vpack.c.b16 %v6560, %v6544
        %v7585 = vpack.c.b16 %v6561, %v6545
        %v7586 = vpack.c.b16 %v6562, %v6546
        %v7587 = vpack.c.b16 %v6563, %v6547
        %v7588 = vpack.c.b16 %v6564, %v6548
        %v7589 = vpack.c.b16 %v6565, %v6549
        %v7590 = vpack.c.b16 %v6566, %v6550
        %v7591 = vpack.c.b16 %v6567, %v6551
        %v7592 = vpack.c.b16 %v6568, %v6552
        %v7593 = vpack.c.b16 %v6569, %v6553
        %v7594 = vpack.c.b16 %v6570, %v6554
        %v7595 = vpack.c.b16 %v6571, %v6555
        %8620 = vmatprep.subr.bf16.mxu0 %v6685
        %8621 = vmatpush1.bf16.msra.mxu0 %v6684
        %8622 = vmatprep.subr.bf16.mxu0 %v6669
        %8623 = vmatpush1.bf16.msra.mxu0 %v6668
        %8624 = vmatprep.subr.bf16.mxu0 %v6653
        %8625 = vmatpush1.bf16.msra.mxu0 %v6652
        %8626 = vmatprep.subr.bf16.mxu0 %v6637
        %8627 = vmatpush1.bf16.msra.mxu0 %v6636
        %8628 = vmatprep.subr.bf16.mxu0 %v6621
        %8629 = vmatpush1.bf16.msra.mxu0 %v6620
        %8630 = vmatprep.subr.bf16.mxu0 %v6605
        %8631 = vmatpush1.bf16.msra.mxu0 %v6604
        %8632 = vmatprep.subr.bf16.mxu0 %v6589
        %8633 = vmatpush1.bf16.msra.mxu0 %v6588
        %8634 = vmatprep.subr.bf16.mxu0 %v6573
        %8635 = vmatpush1.bf16.msra.mxu0 %v6572
        %8636 = vmatprep.subr.bf16.mxu0 %v6813
        %8637 = vmatpush2.bf16.msra.mxu0 %v6812
        %8638 = vmatprep.subr.bf16.mxu0 %v6797
        %8639 = vmatpush2.bf16.msra.mxu0 %v6796
        %8640 = vmatprep.subr.bf16.mxu0 %v6781
        %8641 = vmatpush2.bf16.msra.mxu0 %v6780
        %8642 = vmatprep.subr.bf16.mxu0 %v6765
        %8643 = vmatpush2.bf16.msra.mxu0 %v6764
        %8644 = vmatprep.subr.bf16.mxu0 %v6749
        %8645 = vmatpush2.bf16.msra.mxu0 %v6748
        %8646 = vmatprep.subr.bf16.mxu0 %v6733
        %8647 = vmatpush2.bf16.msra.mxu0 %v6732
        %8648 = vmatprep.subr.bf16.mxu0 %v6717
        %8649 = vmatpush2.bf16.msra.mxu0 %v6716
        %8650 = vmatprep.subr.bf16.mxu0 %v6701
        %8651 = vmatpush2.bf16.msra.mxu0 %v6700
        %8652 = vmatprep.mubr.bf16.mxu0 %v2385
        %8653 = vmatmul.mubr.bf16.gmra.mxu0 %v2384
        %v8654 = vpop.f32.mrf.mxu0
        %v8655 = vadd.f32 %v3423, %v8654
        %v8656 = vpop.f32.mrf.mxu0
        %v8657 = vadd.f32 %v3427, %v8656
        %v8658 = vpop.f32.mrf.mxu0
        %v8659 = vadd.f32 %v3423, %v8658
        %v8660 = vpop.f32.mrf.mxu0
        %v8661 = vadd.f32 %v3427, %v8660
        %8662 = vdwg.mxu0
        %8663 = vmatprep.subr.bf16.mxu0 %v6941
        %8664 = vmatpush1.bf16.msra.mxu0 %v6940
        %8665 = vmatprep.subr.bf16.mxu0 %v6925
        %8666 = vmatpush1.bf16.msra.mxu0 %v6924
        %8667 = vmatprep.subr.bf16.mxu0 %v6909
        %8668 = vmatpush1.bf16.msra.mxu0 %v6908
        %8669 = vmatprep.subr.bf16.mxu0 %v6893
        %8670 = vmatpush1.bf16.msra.mxu0 %v6892
        %8671 = vmatprep.subr.bf16.mxu0 %v6877
        %8672 = vmatpush1.bf16.msra.mxu0 %v6876
        %8673 = vmatprep.subr.bf16.mxu0 %v6861
        %8674 = vmatpush1.bf16.msra.mxu0 %v6860
        %8675 = vmatprep.subr.bf16.mxu0 %v6845
        %8676 = vmatpush1.bf16.msra.mxu0 %v6844
        %8677 = vmatprep.subr.bf16.mxu0 %v6829
        %8678 = vmatpush1.bf16.msra.mxu0 %v6828
        %8679 = vmatprep.subr.bf16.mxu0 %v7069
        %8680 = vmatpush2.bf16.msra.mxu0 %v7068
        %8681 = vmatprep.subr.bf16.mxu0 %v7053
        %8682 = vmatpush2.bf16.msra.mxu0 %v7052
        %8683 = vmatprep.subr.bf16.mxu0 %v7037
        %8684 = vmatpush2.bf16.msra.mxu0 %v7036
        %8685 = vmatprep.subr.bf16.mxu0 %v7021
        %8686 = vmatpush2.bf16.msra.mxu0 %v7020
        %8687 = vmatprep.subr.bf16.mxu0 %v7005
        %8688 = vmatpush2.bf16.msra.mxu0 %v7004
        %8689 = vmatprep.subr.bf16.mxu0 %v6989
        %8690 = vmatpush2.bf16.msra.mxu0 %v6988
        %8691 = vmatprep.subr.bf16.mxu0 %v6973
        %8692 = vmatpush2.bf16.msra.mxu0 %v6972
        %8693 = vmatprep.subr.bf16.mxu0 %v6957
        %8694 = vmatpush2.bf16.msra.mxu0 %v6956
        %8695 = vmatprep.mubr.bf16.mxu0 %v2387
        %8696 = vmatmul.mubr.bf16.gmra.mxu0 %v2386
        %v8697 = vpop.f32.mrf.mxu0
        %v8698 = vadd.f32 %v8655, %v8697
        %v8699 = vpop.f32.mrf.mxu0
        %v8700 = vadd.f32 %v8657, %v8699
        %v8701 = vpop.f32.mrf.mxu0
        %v8702 = vadd.f32 %v8659, %v8701
        %v8703 = vpop.f32.mrf.mxu0
        %v8704 = vadd.f32 %v8661, %v8703
        %8705 = vdwg.mxu0
        %8706 = vmatprep.subr.bf16.mxu0 %v7197
        %8707 = vmatpush1.bf16.msra.mxu0 %v7196
        %8708 = vmatprep.subr.bf16.mxu0 %v7181
        %8709 = vmatpush1.bf16.msra.mxu0 %v7180
        %8710 = vmatprep.subr.bf16.mxu0 %v7165
        %8711 = vmatpush1.bf16.msra.mxu0 %v7164
        %8712 = vmatprep.subr.bf16.mxu0 %v7149
        %8713 = vmatpush1.bf16.msra.mxu0 %v7148
        %8714 = vmatprep.subr.bf16.mxu0 %v7133
        %8715 = vmatpush1.bf16.msra.mxu0 %v7132
        %8716 = vmatprep.subr.bf16.mxu0 %v7117
        %8717 = vmatpush1.bf16.msra.mxu0 %v7116
        %8718 = vmatprep.subr.bf16.mxu0 %v7101
        %8719 = vmatpush1.bf16.msra.mxu0 %v7100
        %8720 = vmatprep.subr.bf16.mxu0 %v7085
        %8721 = vmatpush1.bf16.msra.mxu0 %v7084
        %8722 = vmatprep.subr.bf16.mxu0 %v7325
        %8723 = vmatpush2.bf16.msra.mxu0 %v7324
        %8724 = vmatprep.subr.bf16.mxu0 %v7309
        %8725 = vmatpush2.bf16.msra.mxu0 %v7308
        %8726 = vmatprep.subr.bf16.mxu0 %v7293
        %8727 = vmatpush2.bf16.msra.mxu0 %v7292
        %8728 = vmatprep.subr.bf16.mxu0 %v7277
        %8729 = vmatpush2.bf16.msra.mxu0 %v7276
        %8730 = vmatprep.subr.bf16.mxu0 %v7261
        %8731 = vmatpush2.bf16.msra.mxu0 %v7260
        %8732 = vmatprep.subr.bf16.mxu0 %v7245
        %8733 = vmatpush2.bf16.msra.mxu0 %v7244
        %8734 = vmatprep.subr.bf16.mxu0 %v7229
        %8735 = vmatpush2.bf16.msra.mxu0 %v7228
        %8736 = vmatprep.subr.bf16.mxu0 %v7213
        %8737 = vmatpush2.bf16.msra.mxu0 %v7212
        %8738 = vmatprep.mubr.bf16.mxu0 %v2389
        %8739 = vmatmul.mubr.bf16.gmra.mxu0 %v2388
        %v8740 = vpop.f32.mrf.mxu0
        %v8741 = vadd.f32 %v8698, %v8740
        %v8742 = vpop.f32.mrf.mxu0
        %v8743 = vadd.f32 %v8700, %v8742
        %v8744 = vpop.f32.mrf.mxu0
        %v8745 = vadd.f32 %v8702, %v8744
        %v8746 = vpop.f32.mrf.mxu0
        %v8747 = vadd.f32 %v8704, %v8746
        %8748 = vdwg.mxu0
        %8749 = vmatprep.subr.bf16.mxu0 %v7453
        %8750 = vmatpush1.bf16.msra.mxu0 %v7452
        %8751 = vmatprep.subr.bf16.mxu0 %v7437
        %8752 = vmatpush1.bf16.msra.mxu0 %v7436
        %8753 = vmatprep.subr.bf16.mxu0 %v7421
        %8754 = vmatpush1.bf16.msra.mxu0 %v7420
        %8755 = vmatprep.subr.bf16.mxu0 %v7405
        %8756 = vmatpush1.bf16.msra.mxu0 %v7404
        %8757 = vmatprep.subr.bf16.mxu0 %v7389
        %8758 = vmatpush1.bf16.msra.mxu0 %v7388
        %8759 = vmatprep.subr.bf16.mxu0 %v7373
        %8760 = vmatpush1.bf16.msra.mxu0 %v7372
        %8761 = vmatprep.subr.bf16.mxu0 %v7357
        %8762 = vmatpush1.bf16.msra.mxu0 %v7356
        %8763 = vmatprep.subr.bf16.mxu0 %v7341
        %8764 = vmatpush1.bf16.msra.mxu0 %v7340
        %8765 = vmatprep.subr.bf16.mxu0 %v7581
        %8766 = vmatpush2.bf16.msra.mxu0 %v7580
        %8767 = vmatprep.subr.bf16.mxu0 %v7565
        %8768 = vmatpush2.bf16.msra.mxu0 %v7564
        %8769 = vmatprep.subr.bf16.mxu0 %v7549
        %8770 = vmatpush2.bf16.msra.mxu0 %v7548
        %8771 = vmatprep.subr.bf16.mxu0 %v7533
        %8772 = vmatpush2.bf16.msra.mxu0 %v7532
        %8773 = vmatprep.subr.bf16.mxu0 %v7517
        %8774 = vmatpush2.bf16.msra.mxu0 %v7516
        %8775 = vmatprep.subr.bf16.mxu0 %v7501
        %8776 = vmatpush2.bf16.msra.mxu0 %v7500
        %8777 = vmatprep.subr.bf16.mxu0 %v7485
        %8778 = vmatpush2.bf16.msra.mxu0 %v7484
        %8779 = vmatprep.subr.bf16.mxu0 %v7469
        %8780 = vmatpush2.bf16.msra.mxu0 %v7468
        %8781 = vmatprep.mubr.bf16.mxu0 %v2391
        %8782 = vmatmul.mubr.bf16.gmra.mxu0 %v2390
        %v8783 = vpop.f32.mrf.mxu0
        %v8784 = vadd.f32 %v8741, %v8783
        %v8785 = vpop.f32.mrf.mxu0
        %v8786 = vadd.f32 %v8743, %v8785
        %v8787 = vpop.f32.mrf.mxu0
        %v8788 = vadd.f32 %v8745, %v8787
        %v8789 = vpop.f32.mrf.mxu0
        %v8790 = vadd.f32 %v8747, %v8789
        %8791 = vdwg.mxu0
        %8792 = vmatprep.subr.bf16.mxu0 %v6687
        %8793 = vmatpush1.bf16.msra.mxu0 %v6686
        %8794 = vmatprep.subr.bf16.mxu0 %v6671
        %8795 = vmatpush1.bf16.msra.mxu0 %v6670
        %8796 = vmatprep.subr.bf16.mxu0 %v6655
        %8797 = vmatpush1.bf16.msra.mxu0 %v6654
        %8798 = vmatprep.subr.bf16.mxu0 %v6639
        %8799 = vmatpush1.bf16.msra.mxu0 %v6638
        %8800 = vmatprep.subr.bf16.mxu0 %v6623
        %8801 = vmatpush1.bf16.msra.mxu0 %v6622
        %8802 = vmatprep.subr.bf16.mxu0 %v6607
        %8803 = vmatpush1.bf16.msra.mxu0 %v6606
        %8804 = vmatprep.subr.bf16.mxu0 %v6591
        %8805 = vmatpush1.bf16.msra.mxu0 %v6590
        %8806 = vmatprep.subr.bf16.mxu0 %v6575
        %8807 = vmatpush1.bf16.msra.mxu0 %v6574
        %8808 = vmatprep.subr.bf16.mxu0 %v6815
        %8809 = vmatpush2.bf16.msra.mxu0 %v6814
        %8810 = vmatprep.subr.bf16.mxu0 %v6799
        %8811 = vmatpush2.bf16.msra.mxu0 %v6798
        %8812 = vmatprep.subr.bf16.mxu0 %v6783
        %8813 = vmatpush2.bf16.msra.mxu0 %v6782
        %8814 = vmatprep.subr.bf16.mxu0 %v6767
        %8815 = vmatpush2.bf16.msra.mxu0 %v6766
        %8816 = vmatprep.subr.bf16.mxu0 %v6751
        %8817 = vmatpush2.bf16.msra.mxu0 %v6750
        %8818 = vmatprep.subr.bf16.mxu0 %v6735
        %8819 = vmatpush2.bf16.msra.mxu0 %v6734
        %8820 = vmatprep.subr.bf16.mxu0 %v6719
        %8821 = vmatpush2.bf16.msra.mxu0 %v6718
        %8822 = vmatprep.subr.bf16.mxu0 %v6703
        %8823 = vmatpush2.bf16.msra.mxu0 %v6702
        %8824 = vmatprep.mubr.bf16.mxu0 %v2385
        %8825 = vmatmul.mubr.bf16.gmra.mxu0 %v2384
        %v8826 = vpop.f32.mrf.mxu0
        %v8827 = vadd.f32 %v3431, %v8826
        %v8828 = vpop.f32.mrf.mxu0
        %v8829 = vadd.f32 %v3435, %v8828
        %v8830 = vpop.f32.mrf.mxu0
        %v8831 = vadd.f32 %v3431, %v8830
        %v8832 = vpop.f32.mrf.mxu0
        %v8833 = vadd.f32 %v3435, %v8832
        %8834 = vdwg.mxu0
        %8835 = vmatprep.subr.bf16.mxu0 %v6943
        %8836 = vmatpush1.bf16.msra.mxu0 %v6942
        %8837 = vmatprep.subr.bf16.mxu0 %v6927
        %8838 = vmatpush1.bf16.msra.mxu0 %v6926
        %8839 = vmatprep.subr.bf16.mxu0 %v6911
        %8840 = vmatpush1.bf16.msra.mxu0 %v6910
        %8841 = vmatprep.subr.bf16.mxu0 %v6895
        %8842 = vmatpush1.bf16.msra.mxu0 %v6894
        %8843 = vmatprep.subr.bf16.mxu0 %v6879
        %8844 = vmatpush1.bf16.msra.mxu0 %v6878
        %8845 = vmatprep.subr.bf16.mxu0 %v6863
        %8846 = vmatpush1.bf16.msra.mxu0 %v6862
        %8847 = vmatprep.subr.bf16.mxu0 %v6847
        %8848 = vmatpush1.bf16.msra.mxu0 %v6846
        %8849 = vmatprep.subr.bf16.mxu0 %v6831
        %8850 = vmatpush1.bf16.msra.mxu0 %v6830
        %8851 = vmatprep.subr.bf16.mxu0 %v7071
        %8852 = vmatpush2.bf16.msra.mxu0 %v7070
        %8853 = vmatprep.subr.bf16.mxu0 %v7055
        %8854 = vmatpush2.bf16.msra.mxu0 %v7054
        %8855 = vmatprep.subr.bf16.mxu0 %v7039
        %8856 = vmatpush2.bf16.msra.mxu0 %v7038
        %8857 = vmatprep.subr.bf16.mxu0 %v7023
        %8858 = vmatpush2.bf16.msra.mxu0 %v7022
        %8859 = vmatprep.subr.bf16.mxu0 %v7007
        %8860 = vmatpush2.bf16.msra.mxu0 %v7006
        %8861 = vmatprep.subr.bf16.mxu0 %v6991
        %8862 = vmatpush2.bf16.msra.mxu0 %v6990
        %8863 = vmatprep.subr.bf16.mxu0 %v6975
        %8864 = vmatpush2.bf16.msra.mxu0 %v6974
        %8865 = vmatprep.subr.bf16.mxu0 %v6959
        %8866 = vmatpush2.bf16.msra.mxu0 %v6958
        %8867 = vmatprep.mubr.bf16.mxu0 %v2387
        %8868 = vmatmul.mubr.bf16.gmra.mxu0 %v2386
        %v8869 = vpop.f32.mrf.mxu0
        %v8870 = vadd.f32 %v8827, %v8869
        %v8871 = vpop.f32.mrf.mxu0
        %v8872 = vadd.f32 %v8829, %v8871
        %v8873 = vpop.f32.mrf.mxu0
        %v8874 = vadd.f32 %v8831, %v8873
        %v8875 = vpop.f32.mrf.mxu0
        %v8876 = vadd.f32 %v8833, %v8875
        %8877 = vdwg.mxu0
        %8878 = vmatprep.subr.bf16.mxu0 %v7199
        %8879 = vmatpush1.bf16.msra.mxu0 %v7198
        %8880 = vmatprep.subr.bf16.mxu0 %v7183
        %8881 = vmatpush1.bf16.msra.mxu0 %v7182
        %8882 = vmatprep.subr.bf16.mxu0 %v7167
        %8883 = vmatpush1.bf16.msra.mxu0 %v7166
        %8884 = vmatprep.subr.bf16.mxu0 %v7151
        %8885 = vmatpush1.bf16.msra.mxu0 %v7150
        %8886 = vmatprep.subr.bf16.mxu0 %v7135
        %8887 = vmatpush1.bf16.msra.mxu0 %v7134
        %8888 = vmatprep.subr.bf16.mxu0 %v7119
        %8889 = vmatpush1.bf16.msra.mxu0 %v7118
        %8890 = vmatprep.subr.bf16.mxu0 %v7103
        %8891 = vmatpush1.bf16.msra.mxu0 %v7102
        %8892 = vmatprep.subr.bf16.mxu0 %v7087
        %8893 = vmatpush1.bf16.msra.mxu0 %v7086
        %8894 = vmatprep.subr.bf16.mxu0 %v7327
        %8895 = vmatpush2.bf16.msra.mxu0 %v7326
        %8896 = vmatprep.subr.bf16.mxu0 %v7311
        %8897 = vmatpush2.bf16.msra.mxu0 %v7310
        %8898 = vmatprep.subr.bf16.mxu0 %v7295
        %8899 = vmatpush2.bf16.msra.mxu0 %v7294
        %8900 = vmatprep.subr.bf16.mxu0 %v7279
        %8901 = vmatpush2.bf16.msra.mxu0 %v7278
        %8902 = vmatprep.subr.bf16.mxu0 %v7263
        %8903 = vmatpush2.bf16.msra.mxu0 %v7262
        %8904 = vmatprep.subr.bf16.mxu0 %v7247
        %8905 = vmatpush2.bf16.msra.mxu0 %v7246
        %8906 = vmatprep.subr.bf16.mxu0 %v7231
        %8907 = vmatpush2.bf16.msra.mxu0 %v7230
        %8908 = vmatprep.subr.bf16.mxu0 %v7215
        %8909 = vmatpush2.bf16.msra.mxu0 %v7214
        %8910 = vmatprep.mubr.bf16.mxu0 %v2389
        %8911 = vmatmul.mubr.bf16.gmra.mxu0 %v2388
        %v8912 = vpop.f32.mrf.mxu0
        %v8913 = vadd.f32 %v8870, %v8912
        %v8914 = vpop.f32.mrf.mxu0
        %v8915 = vadd.f32 %v8872, %v8914
        %v8916 = vpop.f32.mrf.mxu0
        %v8917 = vadd.f32 %v8874, %v8916
        %v8918 = vpop.f32.mrf.mxu0
        %v8919 = vadd.f32 %v8876, %v8918
        %8920 = vdwg.mxu0
        %8921 = vmatprep.subr.bf16.mxu0 %v7455
        %8922 = vmatpush1.bf16.msra.mxu0 %v7454
        %8923 = vmatprep.subr.bf16.mxu0 %v7439
        %8924 = vmatpush1.bf16.msra.mxu0 %v7438
        %8925 = vmatprep.subr.bf16.mxu0 %v7423
        %8926 = vmatpush1.bf16.msra.mxu0 %v7422
        %8927 = vmatprep.subr.bf16.mxu0 %v7407
        %8928 = vmatpush1.bf16.msra.mxu0 %v7406
        %8929 = vmatprep.subr.bf16.mxu0 %v7391
        %8930 = vmatpush1.bf16.msra.mxu0 %v7390
        %8931 = vmatprep.subr.bf16.mxu0 %v7375
        %8932 = vmatpush1.bf16.msra.mxu0 %v7374
        %8933 = vmatprep.subr.bf16.mxu0 %v7359
        %8934 = vmatpush1.bf16.msra.mxu0 %v7358
        %8935 = vmatprep.subr.bf16.mxu0 %v7343
        %8936 = vmatpush1.bf16.msra.mxu0 %v7342
        %8937 = vmatprep.subr.bf16.mxu0 %v7583
        %8938 = vmatpush2.bf16.msra.mxu0 %v7582
        %8939 = vmatprep.subr.bf16.mxu0 %v7567
        %8940 = vmatpush2.bf16.msra.mxu0 %v7566
        %8941 = vmatprep.subr.bf16.mxu0 %v7551
        %8942 = vmatpush2.bf16.msra.mxu0 %v7550
        %8943 = vmatprep.subr.bf16.mxu0 %v7535
        %8944 = vmatpush2.bf16.msra.mxu0 %v7534
        %8945 = vmatprep.subr.bf16.mxu0 %v7519
        %8946 = vmatpush2.bf16.msra.mxu0 %v7518
        %8947 = vmatprep.subr.bf16.mxu0 %v7503
        %8948 = vmatpush2.bf16.msra.mxu0 %v7502
        %8949 = vmatprep.subr.bf16.mxu0 %v7487
        %8950 = vmatpush2.bf16.msra.mxu0 %v7486
        %8951 = vmatprep.subr.bf16.mxu0 %v7471
        %8952 = vmatpush2.bf16.msra.mxu0 %v7470
        %8953 = vmatprep.mubr.bf16.mxu0 %v2391
        %8954 = vmatmul.mubr.bf16.gmra.mxu0 %v2390
        %v8955 = vpop.f32.mrf.mxu0
        %v8956 = vadd.f32 %v8913, %v8955
        %v8957 = vpop.f32.mrf.mxu0
        %v8958 = vadd.f32 %v8915, %v8957
        %v8959 = vpop.f32.mrf.mxu0
        %v8960 = vadd.f32 %v8917, %v8959
        %v8961 = vpop.f32.mrf.mxu0
        %v8962 = vadd.f32 %v8919, %v8961
        %8963 = vdwg.mxu0
        %8964 = vmatprep.subr.bf16.mxu0 %v6689
        %8965 = vmatpush1.bf16.msra.mxu0 %v6688
        %8966 = vmatprep.subr.bf16.mxu0 %v6673
        %8967 = vmatpush1.bf16.msra.mxu0 %v6672
        %8968 = vmatprep.subr.bf16.mxu0 %v6657
        %8969 = vmatpush1.bf16.msra.mxu0 %v6656
        %8970 = vmatprep.subr.bf16.mxu0 %v6641
        %8971 = vmatpush1.bf16.msra.mxu0 %v6640
        %8972 = vmatprep.subr.bf16.mxu0 %v6625
        %8973 = vmatpush1.bf16.msra.mxu0 %v6624
        %8974 = vmatprep.subr.bf16.mxu0 %v6609
        %8975 = vmatpush1.bf16.msra.mxu0 %v6608
        %8976 = vmatprep.subr.bf16.mxu0 %v6593
        %8977 = vmatpush1.bf16.msra.mxu0 %v6592
        %8978 = vmatprep.subr.bf16.mxu0 %v6577
        %8979 = vmatpush1.bf16.msra.mxu0 %v6576
        %8980 = vmatprep.subr.bf16.mxu0 %v6817
        %8981 = vmatpush2.bf16.msra.mxu0 %v6816
        %8982 = vmatprep.subr.bf16.mxu0 %v6801
        %8983 = vmatpush2.bf16.msra.mxu0 %v6800
        %8984 = vmatprep.subr.bf16.mxu0 %v6785
        %8985 = vmatpush2.bf16.msra.mxu0 %v6784
        %8986 = vmatprep.subr.bf16.mxu0 %v6769
        %8987 = vmatpush2.bf16.msra.mxu0 %v6768
        %8988 = vmatprep.subr.bf16.mxu0 %v6753
        %8989 = vmatpush2.bf16.msra.mxu0 %v6752
        %8990 = vmatprep.subr.bf16.mxu0 %v6737
        %8991 = vmatpush2.bf16.msra.mxu0 %v6736
        %8992 = vmatprep.subr.bf16.mxu0 %v6721
        %8993 = vmatpush2.bf16.msra.mxu0 %v6720
        %8994 = vmatprep.subr.bf16.mxu0 %v6705
        %8995 = vmatpush2.bf16.msra.mxu0 %v6704
        %8996 = vmatprep.mubr.bf16.mxu0 %v2385
        %8997 = vmatmul.mubr.bf16.gmra.mxu0 %v2384
        %v8998 = vpop.f32.mrf.mxu0
        %v8999 = vadd.f32 %v3439, %v8998
        %v9000 = vpop.f32.mrf.mxu0
        %v9001 = vadd.f32 %v3443, %v9000
        %v9002 = vpop.f32.mrf.mxu0
        %v9003 = vadd.f32 %v3439, %v9002
        %v9004 = vpop.f32.mrf.mxu0
        %v9005 = vadd.f32 %v3443, %v9004
        %9006 = vdwg.mxu0
        %9007 = vmatprep.subr.bf16.mxu0 %v6945
        %9008 = vmatpush1.bf16.msra.mxu0 %v6944
        %9009 = vmatprep.subr.bf16.mxu0 %v6929
        %9010 = vmatpush1.bf16.msra.mxu0 %v6928
        %9011 = vmatprep.subr.bf16.mxu0 %v6913
        %9012 = vmatpush1.bf16.msra.mxu0 %v6912
        %9013 = vmatprep.subr.bf16.mxu0 %v6897
        %9014 = vmatpush1.bf16.msra.mxu0 %v6896
        %9015 = vmatprep.subr.bf16.mxu0 %v6881
        %9016 = vmatpush1.bf16.msra.mxu0 %v6880
        %9017 = vmatprep.subr.bf16.mxu0 %v6865
        %9018 = vmatpush1.bf16.msra.mxu0 %v6864
        %9019 = vmatprep.subr.bf16.mxu0 %v6849
        %9020 = vmatpush1.bf16.msra.mxu0 %v6848
        %9021 = vmatprep.subr.bf16.mxu0 %v6833
        %9022 = vmatpush1.bf16.msra.mxu0 %v6832
        %9023 = vmatprep.subr.bf16.mxu0 %v7073
        %9024 = vmatpush2.bf16.msra.mxu0 %v7072
        %9025 = vmatprep.subr.bf16.mxu0 %v7057
        %9026 = vmatpush2.bf16.msra.mxu0 %v7056
        %9027 = vmatprep.subr.bf16.mxu0 %v7041
        %9028 = vmatpush2.bf16.msra.mxu0 %v7040
        %9029 = vmatprep.subr.bf16.mxu0 %v7025
        %9030 = vmatpush2.bf16.msra.mxu0 %v7024
        %9031 = vmatprep.subr.bf16.mxu0 %v7009
        %9032 = vmatpush2.bf16.msra.mxu0 %v7008
        %9033 = vmatprep.subr.bf16.mxu0 %v6993
        %9034 = vmatpush2.bf16.msra.mxu0 %v6992
        %9035 = vmatprep.subr.bf16.mxu0 %v6977
        %9036 = vmatpush2.bf16.msra.mxu0 %v6976
        %9037 = vmatprep.subr.bf16.mxu0 %v6961
        %9038 = vmatpush2.bf16.msra.mxu0 %v6960
        %9039 = vmatprep.mubr.bf16.mxu0 %v2387
        %9040 = vmatmul.mubr.bf16.gmra.mxu0 %v2386
        %v9041 = vpop.f32.mrf.mxu0
        %v9042 = vadd.f32 %v8999, %v9041
        %v9043 = vpop.f32.mrf.mxu0
        %v9044 = vadd.f32 %v9001, %v9043
        %v9045 = vpop.f32.mrf.mxu0
        %v9046 = vadd.f32 %v9003, %v9045
        %v9047 = vpop.f32.mrf.mxu0
        %v9048 = vadd.f32 %v9005, %v9047
        %9049 = vdwg.mxu0
        %9050 = vmatprep.subr.bf16.mxu0 %v7201
        %9051 = vmatpush1.bf16.msra.mxu0 %v7200
        %9052 = vmatprep.subr.bf16.mxu0 %v7185
        %9053 = vmatpush1.bf16.msra.mxu0 %v7184
        %9054 = vmatprep.subr.bf16.mxu0 %v7169
        %9055 = vmatpush1.bf16.msra.mxu0 %v7168
        %9056 = vmatprep.subr.bf16.mxu0 %v7153
        %9057 = vmatpush1.bf16.msra.mxu0 %v7152
        %9058 = vmatprep.subr.bf16.mxu0 %v7137
        %9059 = vmatpush1.bf16.msra.mxu0 %v7136
        %9060 = vmatprep.subr.bf16.mxu0 %v7121
        %9061 = vmatpush1.bf16.msra.mxu0 %v7120
        %9062 = vmatprep.subr.bf16.mxu0 %v7105
        %9063 = vmatpush1.bf16.msra.mxu0 %v7104
        %9064 = vmatprep.subr.bf16.mxu0 %v7089
        %9065 = vmatpush1.bf16.msra.mxu0 %v7088
        %9066 = vmatprep.subr.bf16.mxu0 %v7329
        %9067 = vmatpush2.bf16.msra.mxu0 %v7328
        %9068 = vmatprep.subr.bf16.mxu0 %v7313
        %9069 = vmatpush2.bf16.msra.mxu0 %v7312
        %9070 = vmatprep.subr.bf16.mxu0 %v7297
        %9071 = vmatpush2.bf16.msra.mxu0 %v7296
        %9072 = vmatprep.subr.bf16.mxu0 %v7281
        %9073 = vmatpush2.bf16.msra.mxu0 %v7280
        %9074 = vmatprep.subr.bf16.mxu0 %v7265
        %9075 = vmatpush2.bf16.msra.mxu0 %v7264
        %9076 = vmatprep.subr.bf16.mxu0 %v7249
        %9077 = vmatpush2.bf16.msra.mxu0 %v7248
        %9078 = vmatprep.subr.bf16.mxu0 %v7233
        %9079 = vmatpush2.bf16.msra.mxu0 %v7232
        %9080 = vmatprep.subr.bf16.mxu0 %v7217
        %9081 = vmatpush2.bf16.msra.mxu0 %v7216
        %9082 = vmatprep.mubr.bf16.mxu0 %v2389
        %9083 = vmatmul.mubr.bf16.gmra.mxu0 %v2388
        %v9084 = vpop.f32.mrf.mxu0
        %v9085 = vadd.f32 %v9042, %v9084
        %v9086 = vpop.f32.mrf.mxu0
        %v9087 = vadd.f32 %v9044, %v9086
        %v9088 = vpop.f32.mrf.mxu0
        %v9089 = vadd.f32 %v9046, %v9088
        %v9090 = vpop.f32.mrf.mxu0
        %v9091 = vadd.f32 %v9048, %v9090
        %9092 = vdwg.mxu0
        %9093 = vmatprep.subr.bf16.mxu0 %v7457
        %9094 = vmatpush1.bf16.msra.mxu0 %v7456
        %9095 = vmatprep.subr.bf16.mxu0 %v7441
        %9096 = vmatpush1.bf16.msra.mxu0 %v7440
        %9097 = vmatprep.subr.bf16.mxu0 %v7425
        %9098 = vmatpush1.bf16.msra.mxu0 %v7424
        %9099 = vmatprep.subr.bf16.mxu0 %v7409
        %9100 = vmatpush1.bf16.msra.mxu0 %v7408
        %9101 = vmatprep.subr.bf16.mxu0 %v7393
        %9102 = vmatpush1.bf16.msra.mxu0 %v7392
        %9103 = vmatprep.subr.bf16.mxu0 %v7377
        %9104 = vmatpush1.bf16.msra.mxu0 %v7376
        %9105 = vmatprep.subr.bf16.mxu0 %v7361
        %9106 = vmatpush1.bf16.msra.mxu0 %v7360
        %9107 = vmatprep.subr.bf16.mxu0 %v7345
        %9108 = vmatpush1.bf16.msra.mxu0 %v7344
        %9109 = vmatprep.subr.bf16.mxu0 %v7585
        %9110 = vmatpush2.bf16.msra.mxu0 %v7584
        %9111 = vmatprep.subr.bf16.mxu0 %v7569
        %9112 = vmatpush2.bf16.msra.mxu0 %v7568
        %9113 = vmatprep.subr.bf16.mxu0 %v7553
        %9114 = vmatpush2.bf16.msra.mxu0 %v7552
        %9115 = vmatprep.subr.bf16.mxu0 %v7537
        %9116 = vmatpush2.bf16.msra.mxu0 %v7536
        %9117 = vmatprep.subr.bf16.mxu0 %v7521
        %9118 = vmatpush2.bf16.msra.mxu0 %v7520
        %9119 = vmatprep.subr.bf16.mxu0 %v7505
        %9120 = vmatpush2.bf16.msra.mxu0 %v7504
        %9121 = vmatprep.subr.bf16.mxu0 %v7489
        %9122 = vmatpush2.bf16.msra.mxu0 %v7488
        %9123 = vmatprep.subr.bf16.mxu0 %v7473
        %9124 = vmatpush2.bf16.msra.mxu0 %v7472
        %9125 = vmatprep.mubr.bf16.mxu0 %v2391
        %9126 = vmatmul.mubr.bf16.gmra.mxu0 %v2390
        %v9127 = vpop.f32.mrf.mxu0
        %v9128 = vadd.f32 %v9085, %v9127
        %v9129 = vpop.f32.mrf.mxu0
        %v9130 = vadd.f32 %v9087, %v9129
        %v9131 = vpop.f32.mrf.mxu0
        %v9132 = vadd.f32 %v9089, %v9131
        %v9133 = vpop.f32.mrf.mxu0
        %v9134 = vadd.f32 %v9091, %v9133
        %9135 = vdwg.mxu0
        %9136 = vmatprep.subr.bf16.mxu0 %v6691
        %9137 = vmatpush1.bf16.msra.mxu0 %v6690
        %9138 = vmatprep.subr.bf16.mxu0 %v6675
        %9139 = vmatpush1.bf16.msra.mxu0 %v6674
        %9140 = vmatprep.subr.bf16.mxu0 %v6659
        %9141 = vmatpush1.bf16.msra.mxu0 %v6658
        %9142 = vmatprep.subr.bf16.mxu0 %v6643
        %9143 = vmatpush1.bf16.msra.mxu0 %v6642
        %9144 = vmatprep.subr.bf16.mxu0 %v6627
        %9145 = vmatpush1.bf16.msra.mxu0 %v6626
        %9146 = vmatprep.subr.bf16.mxu0 %v6611
        %9147 = vmatpush1.bf16.msra.mxu0 %v6610
        %9148 = vmatprep.subr.bf16.mxu0 %v6595
        %9149 = vmatpush1.bf16.msra.mxu0 %v6594
        %9150 = vmatprep.subr.bf16.mxu0 %v6579
        %9151 = vmatpush1.bf16.msra.mxu0 %v6578
        %9152 = vmatprep.subr.bf16.mxu0 %v6819
        %9153 = vmatpush2.bf16.msra.mxu0 %v6818
        %9154 = vmatprep.subr.bf16.mxu0 %v6803
        %9155 = vmatpush2.bf16.msra.mxu0 %v6802
        %9156 = vmatprep.subr.bf16.mxu0 %v6787
        %9157 = vmatpush2.bf16.msra.mxu0 %v6786
        %9158 = vmatprep.subr.bf16.mxu0 %v6771
        %9159 = vmatpush2.bf16.msra.mxu0 %v6770
        %9160 = vmatprep.subr.bf16.mxu0 %v6755
        %9161 = vmatpush2.bf16.msra.mxu0 %v6754
        %9162 = vmatprep.subr.bf16.mxu0 %v6739
        %9163 = vmatpush2.bf16.msra.mxu0 %v6738
        %9164 = vmatprep.subr.bf16.mxu0 %v6723
        %9165 = vmatpush2.bf16.msra.mxu0 %v6722
        %9166 = vmatprep.subr.bf16.mxu0 %v6707
        %9167 = vmatpush2.bf16.msra.mxu0 %v6706
        %9168 = vmatprep.mubr.bf16.mxu0 %v2385
        %9169 = vmatmul.mubr.bf16.gmra.mxu0 %v2384
        %v9170 = vpop.f32.mrf.mxu0
        %v9171 = vadd.f32 %v3447, %v9170
        %v9172 = vpop.f32.mrf.mxu0
        %v9173 = vadd.f32 %v3451, %v9172
        %v9174 = vpop.f32.mrf.mxu0
        %v9175 = vadd.f32 %v3447, %v9174
        %v9176 = vpop.f32.mrf.mxu0
        %v9177 = vadd.f32 %v3451, %v9176
        %9178 = vdwg.mxu0
        %9179 = vmatprep.subr.bf16.mxu0 %v6947
        %9180 = vmatpush1.bf16.msra.mxu0 %v6946
        %9181 = vmatprep.subr.bf16.mxu0 %v6931
        %9182 = vmatpush1.bf16.msra.mxu0 %v6930
        %9183 = vmatprep.subr.bf16.mxu0 %v6915
        %9184 = vmatpush1.bf16.msra.mxu0 %v6914
        %9185 = vmatprep.subr.bf16.mxu0 %v6899
        %9186 = vmatpush1.bf16.msra.mxu0 %v6898
        %9187 = vmatprep.subr.bf16.mxu0 %v6883
        %9188 = vmatpush1.bf16.msra.mxu0 %v6882
        %9189 = vmatprep.subr.bf16.mxu0 %v6867
        %9190 = vmatpush1.bf16.msra.mxu0 %v6866
        %9191 = vmatprep.subr.bf16.mxu0 %v6851
        %9192 = vmatpush1.bf16.msra.mxu0 %v6850
        %9193 = vmatprep.subr.bf16.mxu0 %v6835
        %9194 = vmatpush1.bf16.msra.mxu0 %v6834
        %9195 = vmatprep.subr.bf16.mxu0 %v7075
        %9196 = vmatpush2.bf16.msra.mxu0 %v7074
        %9197 = vmatprep.subr.bf16.mxu0 %v7059
        %9198 = vmatpush2.bf16.msra.mxu0 %v7058
        %9199 = vmatprep.subr.bf16.mxu0 %v7043
        %9200 = vmatpush2.bf16.msra.mxu0 %v7042
        %9201 = vmatprep.subr.bf16.mxu0 %v7027
        %9202 = vmatpush2.bf16.msra.mxu0 %v7026
        %9203 = vmatprep.subr.bf16.mxu0 %v7011
        %9204 = vmatpush2.bf16.msra.mxu0 %v7010
        %9205 = vmatprep.subr.bf16.mxu0 %v6995
        %9206 = vmatpush2.bf16.msra.mxu0 %v6994
        %9207 = vmatprep.subr.bf16.mxu0 %v6979
        %9208 = vmatpush2.bf16.msra.mxu0 %v6978
        %9209 = vmatprep.subr.bf16.mxu0 %v6963
        %9210 = vmatpush2.bf16.msra.mxu0 %v6962
        %9211 = vmatprep.mubr.bf16.mxu0 %v2387
        %9212 = vmatmul.mubr.bf16.gmra.mxu0 %v2386
        %v9213 = vpop.f32.mrf.mxu0
        %v9214 = vadd.f32 %v9171, %v9213
        %v9215 = vpop.f32.mrf.mxu0
        %v9216 = vadd.f32 %v9173, %v9215
        %v9217 = vpop.f32.mrf.mxu0
        %v9218 = vadd.f32 %v9175, %v9217
        %v9219 = vpop.f32.mrf.mxu0
        %v9220 = vadd.f32 %v9177, %v9219
        %9221 = vdwg.mxu0
        %9222 = vmatprep.subr.bf16.mxu0 %v7203
        %9223 = vmatpush1.bf16.msra.mxu0 %v7202
        %9224 = vmatprep.subr.bf16.mxu0 %v7187
        %9225 = vmatpush1.bf16.msra.mxu0 %v7186
        %9226 = vmatprep.subr.bf16.mxu0 %v7171
        %9227 = vmatpush1.bf16.msra.mxu0 %v7170
        %9228 = vmatprep.subr.bf16.mxu0 %v7155
        %9229 = vmatpush1.bf16.msra.mxu0 %v7154
        %9230 = vmatprep.subr.bf16.mxu0 %v7139
        %9231 = vmatpush1.bf16.msra.mxu0 %v7138
        %9232 = vmatprep.subr.bf16.mxu0 %v7123
        %9233 = vmatpush1.bf16.msra.mxu0 %v7122
        %9234 = vmatprep.subr.bf16.mxu0 %v7107
        %9235 = vmatpush1.bf16.msra.mxu0 %v7106
        %9236 = vmatprep.subr.bf16.mxu0 %v7091
        %9237 = vmatpush1.bf16.msra.mxu0 %v7090
        %9238 = vmatprep.subr.bf16.mxu0 %v7331
        %9239 = vmatpush2.bf16.msra.mxu0 %v7330
        %9240 = vmatprep.subr.bf16.mxu0 %v7315
        %9241 = vmatpush2.bf16.msra.mxu0 %v7314
        %9242 = vmatprep.subr.bf16.mxu0 %v7299
        %9243 = vmatpush2.bf16.msra.mxu0 %v7298
        %9244 = vmatprep.subr.bf16.mxu0 %v7283
        %9245 = vmatpush2.bf16.msra.mxu0 %v7282
        %9246 = vmatprep.subr.bf16.mxu0 %v7267
        %9247 = vmatpush2.bf16.msra.mxu0 %v7266
        %9248 = vmatprep.subr.bf16.mxu0 %v7251
        %9249 = vmatpush2.bf16.msra.mxu0 %v7250
        %9250 = vmatprep.subr.bf16.mxu0 %v7235
        %9251 = vmatpush2.bf16.msra.mxu0 %v7234
        %9252 = vmatprep.subr.bf16.mxu0 %v7219
        %9253 = vmatpush2.bf16.msra.mxu0 %v7218
        %9254 = vmatprep.mubr.bf16.mxu0 %v2389
        %9255 = vmatmul.mubr.bf16.gmra.mxu0 %v2388
        %v9256 = vpop.f32.mrf.mxu0
        %v9257 = vadd.f32 %v9214, %v9256
        %v9258 = vpop.f32.mrf.mxu0
        %v9259 = vadd.f32 %v9216, %v9258
        %v9260 = vpop.f32.mrf.mxu0
        %v9261 = vadd.f32 %v9218, %v9260
        %v9262 = vpop.f32.mrf.mxu0
        %v9263 = vadd.f32 %v9220, %v9262
        %9264 = vdwg.mxu0
        %9265 = vmatprep.subr.bf16.mxu0 %v7459
        %9266 = vmatpush1.bf16.msra.mxu0 %v7458
        %9267 = vmatprep.subr.bf16.mxu0 %v7443
        %9268 = vmatpush1.bf16.msra.mxu0 %v7442
        %9269 = vmatprep.subr.bf16.mxu0 %v7427
        %9270 = vmatpush1.bf16.msra.mxu0 %v7426
        %9271 = vmatprep.subr.bf16.mxu0 %v7411
        %9272 = vmatpush1.bf16.msra.mxu0 %v7410
        %9273 = vmatprep.subr.bf16.mxu0 %v7395
        %9274 = vmatpush1.bf16.msra.mxu0 %v7394
        %9275 = vmatprep.subr.bf16.mxu0 %v7379
        %9276 = vmatpush1.bf16.msra.mxu0 %v7378
        %9277 = vmatprep.subr.bf16.mxu0 %v7363
        %9278 = vmatpush1.bf16.msra.mxu0 %v7362
        %9279 = vmatprep.subr.bf16.mxu0 %v7347
        %9280 = vmatpush1.bf16.msra.mxu0 %v7346
        %9281 = vmatprep.subr.bf16.mxu0 %v7587
        %9282 = vmatpush2.bf16.msra.mxu0 %v7586
        %9283 = vmatprep.subr.bf16.mxu0 %v7571
        %9284 = vmatpush2.bf16.msra.mxu0 %v7570
        %9285 = vmatprep.subr.bf16.mxu0 %v7555
        %9286 = vmatpush2.bf16.msra.mxu0 %v7554
        %9287 = vmatprep.subr.bf16.mxu0 %v7539
        %9288 = vmatpush2.bf16.msra.mxu0 %v7538
        %9289 = vmatprep.subr.bf16.mxu0 %v7523
        %9290 = vmatpush2.bf16.msra.mxu0 %v7522
        %9291 = vmatprep.subr.bf16.mxu0 %v7507
        %9292 = vmatpush2.bf16.msra.mxu0 %v7506
        %9293 = vmatprep.subr.bf16.mxu0 %v7491
        %9294 = vmatpush2.bf16.msra.mxu0 %v7490
        %9295 = vmatprep.subr.bf16.mxu0 %v7475
        %9296 = vmatpush2.bf16.msra.mxu0 %v7474
        %9297 = vmatprep.mubr.bf16.mxu0 %v2391
        %9298 = vmatmul.mubr.bf16.gmra.mxu0 %v2390
        %v9299 = vpop.f32.mrf.mxu0
        %v9300 = vadd.f32 %v9257, %v9299
        %v9301 = vpop.f32.mrf.mxu0
        %v9302 = vadd.f32 %v9259, %v9301
        %v9303 = vpop.f32.mrf.mxu0
        %v9304 = vadd.f32 %v9261, %v9303
        %v9305 = vpop.f32.mrf.mxu0
        %v9306 = vadd.f32 %v9263, %v9305
        %9307 = vdwg.mxu0
        %9308 = vmatprep.subr.bf16.mxu0 %v6693
        %9309 = vmatpush1.bf16.msra.mxu0 %v6692
        %9310 = vmatprep.subr.bf16.mxu0 %v6677
        %9311 = vmatpush1.bf16.msra.mxu0 %v6676
        %9312 = vmatprep.subr.bf16.mxu0 %v6661
        %9313 = vmatpush1.bf16.msra.mxu0 %v6660
        %9314 = vmatprep.subr.bf16.mxu0 %v6645
        %9315 = vmatpush1.bf16.msra.mxu0 %v6644
        %9316 = vmatprep.subr.bf16.mxu0 %v6629
        %9317 = vmatpush1.bf16.msra.mxu0 %v6628
        %9318 = vmatprep.subr.bf16.mxu0 %v6613
        %9319 = vmatpush1.bf16.msra.mxu0 %v6612
        %9320 = vmatprep.subr.bf16.mxu0 %v6597
        %9321 = vmatpush1.bf16.msra.mxu0 %v6596
        %9322 = vmatprep.subr.bf16.mxu0 %v6581
        %9323 = vmatpush1.bf16.msra.mxu0 %v6580
        %9324 = vmatprep.subr.bf16.mxu0 %v6821
        %9325 = vmatpush2.bf16.msra.mxu0 %v6820
        %9326 = vmatprep.subr.bf16.mxu0 %v6805
        %9327 = vmatpush2.bf16.msra.mxu0 %v6804
        %9328 = vmatprep.subr.bf16.mxu0 %v6789
        %9329 = vmatpush2.bf16.msra.mxu0 %v6788
        %9330 = vmatprep.subr.bf16.mxu0 %v6773
        %9331 = vmatpush2.bf16.msra.mxu0 %v6772
        %9332 = vmatprep.subr.bf16.mxu0 %v6757
        %9333 = vmatpush2.bf16.msra.mxu0 %v6756
        %9334 = vmatprep.subr.bf16.mxu0 %v6741
        %9335 = vmatpush2.bf16.msra.mxu0 %v6740
        %9336 = vmatprep.subr.bf16.mxu0 %v6725
        %9337 = vmatpush2.bf16.msra.mxu0 %v6724
        %9338 = vmatprep.subr.bf16.mxu0 %v6709
        %9339 = vmatpush2.bf16.msra.mxu0 %v6708
        %9340 = vmatprep.mubr.bf16.mxu0 %v2385
        %9341 = vmatmul.mubr.bf16.gmra.mxu0 %v2384
        %v9342 = vpop.f32.mrf.mxu0
        %v9343 = vadd.f32 %v3455, %v9342
        %v9344 = vpop.f32.mrf.mxu0
        %v9345 = vadd.f32 %v3459, %v9344
        %v9346 = vpop.f32.mrf.mxu0
        %v9347 = vadd.f32 %v3455, %v9346
        %v9348 = vpop.f32.mrf.mxu0
        %v9349 = vadd.f32 %v3459, %v9348
        %9350 = vdwg.mxu0
        %9351 = vmatprep.subr.bf16.mxu0 %v6949
        %9352 = vmatpush1.bf16.msra.mxu0 %v6948
        %9353 = vmatprep.subr.bf16.mxu0 %v6933
        %9354 = vmatpush1.bf16.msra.mxu0 %v6932
        %9355 = vmatprep.subr.bf16.mxu0 %v6917
        %9356 = vmatpush1.bf16.msra.mxu0 %v6916
        %9357 = vmatprep.subr.bf16.mxu0 %v6901
        %9358 = vmatpush1.bf16.msra.mxu0 %v6900
        %9359 = vmatprep.subr.bf16.mxu0 %v6885
        %9360 = vmatpush1.bf16.msra.mxu0 %v6884
        %9361 = vmatprep.subr.bf16.mxu0 %v6869
        %9362 = vmatpush1.bf16.msra.mxu0 %v6868
        %9363 = vmatprep.subr.bf16.mxu0 %v6853
        %9364 = vmatpush1.bf16.msra.mxu0 %v6852
        %9365 = vmatprep.subr.bf16.mxu0 %v6837
        %9366 = vmatpush1.bf16.msra.mxu0 %v6836
        %9367 = vmatprep.subr.bf16.mxu0 %v7077
        %9368 = vmatpush2.bf16.msra.mxu0 %v7076
        %9369 = vmatprep.subr.bf16.mxu0 %v7061
        %9370 = vmatpush2.bf16.msra.mxu0 %v7060
        %9371 = vmatprep.subr.bf16.mxu0 %v7045
        %9372 = vmatpush2.bf16.msra.mxu0 %v7044
        %9373 = vmatprep.subr.bf16.mxu0 %v7029
        %9374 = vmatpush2.bf16.msra.mxu0 %v7028
        %9375 = vmatprep.subr.bf16.mxu0 %v7013
        %9376 = vmatpush2.bf16.msra.mxu0 %v7012
        %9377 = vmatprep.subr.bf16.mxu0 %v6997
        %9378 = vmatpush2.bf16.msra.mxu0 %v6996
        %9379 = vmatprep.subr.bf16.mxu0 %v6981
        %9380 = vmatpush2.bf16.msra.mxu0 %v6980
        %9381 = vmatprep.subr.bf16.mxu0 %v6965
        %9382 = vmatpush2.bf16.msra.mxu0 %v6964
        %9383 = vmatprep.mubr.bf16.mxu0 %v2387
        %9384 = vmatmul.mubr.bf16.gmra.mxu0 %v2386
        %v9385 = vpop.f32.mrf.mxu0
        %v9386 = vadd.f32 %v9343, %v9385
        %v9387 = vpop.f32.mrf.mxu0
        %v9388 = vadd.f32 %v9345, %v9387
        %v9389 = vpop.f32.mrf.mxu0
        %v9390 = vadd.f32 %v9347, %v9389
        %v9391 = vpop.f32.mrf.mxu0
        %v9392 = vadd.f32 %v9349, %v9391
        %9393 = vdwg.mxu0
        %9394 = vmatprep.subr.bf16.mxu0 %v7205
        %9395 = vmatpush1.bf16.msra.mxu0 %v7204
        %9396 = vmatprep.subr.bf16.mxu0 %v7189
        %9397 = vmatpush1.bf16.msra.mxu0 %v7188
        %9398 = vmatprep.subr.bf16.mxu0 %v7173
        %9399 = vmatpush1.bf16.msra.mxu0 %v7172
        %9400 = vmatprep.subr.bf16.mxu0 %v7157
        %9401 = vmatpush1.bf16.msra.mxu0 %v7156
        %9402 = vmatprep.subr.bf16.mxu0 %v7141
        %9403 = vmatpush1.bf16.msra.mxu0 %v7140
        %9404 = vmatprep.subr.bf16.mxu0 %v7125
        %9405 = vmatpush1.bf16.msra.mxu0 %v7124
        %9406 = vmatprep.subr.bf16.mxu0 %v7109
        %9407 = vmatpush1.bf16.msra.mxu0 %v7108
        %9408 = vmatprep.subr.bf16.mxu0 %v7093
        %9409 = vmatpush1.bf16.msra.mxu0 %v7092
        %9410 = vmatprep.subr.bf16.mxu0 %v7333
        %9411 = vmatpush2.bf16.msra.mxu0 %v7332
        %9412 = vmatprep.subr.bf16.mxu0 %v7317
        %9413 = vmatpush2.bf16.msra.mxu0 %v7316
        %9414 = vmatprep.subr.bf16.mxu0 %v7301
        %9415 = vmatpush2.bf16.msra.mxu0 %v7300
        %9416 = vmatprep.subr.bf16.mxu0 %v7285
        %9417 = vmatpush2.bf16.msra.mxu0 %v7284
        %9418 = vmatprep.subr.bf16.mxu0 %v7269
        %9419 = vmatpush2.bf16.msra.mxu0 %v7268
        %9420 = vmatprep.subr.bf16.mxu0 %v7253
        %9421 = vmatpush2.bf16.msra.mxu0 %v7252
        %9422 = vmatprep.subr.bf16.mxu0 %v7237
        %9423 = vmatpush2.bf16.msra.mxu0 %v7236
        %9424 = vmatprep.subr.bf16.mxu0 %v7221
        %9425 = vmatpush2.bf16.msra.mxu0 %v7220
        %9426 = vmatprep.mubr.bf16.mxu0 %v2389
        %9427 = vmatmul.mubr.bf16.gmra.mxu0 %v2388
        %v9428 = vpop.f32.mrf.mxu0
        %v9429 = vadd.f32 %v9386, %v9428
        %v9430 = vpop.f32.mrf.mxu0
        %v9431 = vadd.f32 %v9388, %v9430
        %v9432 = vpop.f32.mrf.mxu0
        %v9433 = vadd.f32 %v9390, %v9432
        %v9434 = vpop.f32.mrf.mxu0
        %v9435 = vadd.f32 %v9392, %v9434
        %9436 = vdwg.mxu0
        %9437 = vmatprep.subr.bf16.mxu0 %v7461
        %9438 = vmatpush1.bf16.msra.mxu0 %v7460
        %9439 = vmatprep.subr.bf16.mxu0 %v7445
        %9440 = vmatpush1.bf16.msra.mxu0 %v7444
        %9441 = vmatprep.subr.bf16.mxu0 %v7429
        %9442 = vmatpush1.bf16.msra.mxu0 %v7428
        %9443 = vmatprep.subr.bf16.mxu0 %v7413
        %9444 = vmatpush1.bf16.msra.mxu0 %v7412
        %9445 = vmatprep.subr.bf16.mxu0 %v7397
        %9446 = vmatpush1.bf16.msra.mxu0 %v7396
        %9447 = vmatprep.subr.bf16.mxu0 %v7381
        %9448 = vmatpush1.bf16.msra.mxu0 %v7380
        %9449 = vmatprep.subr.bf16.mxu0 %v7365
        %9450 = vmatpush1.bf16.msra.mxu0 %v7364
        %9451 = vmatprep.subr.bf16.mxu0 %v7349
        %9452 = vmatpush1.bf16.msra.mxu0 %v7348
        %9453 = vmatprep.subr.bf16.mxu0 %v7589
        %9454 = vmatpush2.bf16.msra.mxu0 %v7588
        %9455 = vmatprep.subr.bf16.mxu0 %v7573
        %9456 = vmatpush2.bf16.msra.mxu0 %v7572
        %9457 = vmatprep.subr.bf16.mxu0 %v7557
        %9458 = vmatpush2.bf16.msra.mxu0 %v7556
        %9459 = vmatprep.subr.bf16.mxu0 %v7541
        %9460 = vmatpush2.bf16.msra.mxu0 %v7540
        %9461 = vmatprep.subr.bf16.mxu0 %v7525
        %9462 = vmatpush2.bf16.msra.mxu0 %v7524
        %9463 = vmatprep.subr.bf16.mxu0 %v7509
        %9464 = vmatpush2.bf16.msra.mxu0 %v7508
        %9465 = vmatprep.subr.bf16.mxu0 %v7493
        %9466 = vmatpush2.bf16.msra.mxu0 %v7492
        %9467 = vmatprep.subr.bf16.mxu0 %v7477
        %9468 = vmatpush2.bf16.msra.mxu0 %v7476
        %9469 = vmatprep.mubr.bf16.mxu0 %v2391
        %9470 = vmatmul.mubr.bf16.gmra.mxu0 %v2390
        %v9471 = vpop.f32.mrf.mxu0
        %v9472 = vadd.f32 %v9429, %v9471
        %v9473 = vpop.f32.mrf.mxu0
        %v9474 = vadd.f32 %v9431, %v9473
        %v9475 = vpop.f32.mrf.mxu0
        %v9476 = vadd.f32 %v9433, %v9475
        %v9477 = vpop.f32.mrf.mxu0
        %v9478 = vadd.f32 %v9435, %v9477
        %9479 = vdwg.mxu0
        %9480 = vmatprep.subr.bf16.mxu0 %v6695
        %9481 = vmatpush1.bf16.msra.mxu0 %v6694
        %9482 = vmatprep.subr.bf16.mxu0 %v6679
        %9483 = vmatpush1.bf16.msra.mxu0 %v6678
        %9484 = vmatprep.subr.bf16.mxu0 %v6663
        %9485 = vmatpush1.bf16.msra.mxu0 %v6662
        %9486 = vmatprep.subr.bf16.mxu0 %v6647
        %9487 = vmatpush1.bf16.msra.mxu0 %v6646
        %9488 = vmatprep.subr.bf16.mxu0 %v6631
        %9489 = vmatpush1.bf16.msra.mxu0 %v6630
        %9490 = vmatprep.subr.bf16.mxu0 %v6615
        %9491 = vmatpush1.bf16.msra.mxu0 %v6614
        %9492 = vmatprep.subr.bf16.mxu0 %v6599
        %9493 = vmatpush1.bf16.msra.mxu0 %v6598
        %9494 = vmatprep.subr.bf16.mxu0 %v6583
        %9495 = vmatpush1.bf16.msra.mxu0 %v6582
        %9496 = vmatprep.subr.bf16.mxu0 %v6823
        %9497 = vmatpush2.bf16.msra.mxu0 %v6822
        %9498 = vmatprep.subr.bf16.mxu0 %v6807
        %9499 = vmatpush2.bf16.msra.mxu0 %v6806
        %9500 = vmatprep.subr.bf16.mxu0 %v6791
        %9501 = vmatpush2.bf16.msra.mxu0 %v6790
        %9502 = vmatprep.subr.bf16.mxu0 %v6775
        %9503 = vmatpush2.bf16.msra.mxu0 %v6774
        %9504 = vmatprep.subr.bf16.mxu0 %v6759
        %9505 = vmatpush2.bf16.msra.mxu0 %v6758
        %9506 = vmatprep.subr.bf16.mxu0 %v6743
        %9507 = vmatpush2.bf16.msra.mxu0 %v6742
        %9508 = vmatprep.subr.bf16.mxu0 %v6727
        %9509 = vmatpush2.bf16.msra.mxu0 %v6726
        %9510 = vmatprep.subr.bf16.mxu0 %v6711
        %9511 = vmatpush2.bf16.msra.mxu0 %v6710
        %9512 = vmatprep.mubr.bf16.mxu0 %v2385
        %9513 = vmatmul.mubr.bf16.gmra.mxu0 %v2384
        %v9514 = vpop.f32.mrf.mxu0
        %v9515 = vadd.f32 %v3463, %v9514
        %v9516 = vpop.f32.mrf.mxu0
        %v9517 = vadd.f32 %v3467, %v9516
        %v9518 = vpop.f32.mrf.mxu0
        %v9519 = vadd.f32 %v3463, %v9518
        %v9520 = vpop.f32.mrf.mxu0
        %v9521 = vadd.f32 %v3467, %v9520
        %9522 = vdwg.mxu0
        %9523 = vmatprep.subr.bf16.mxu0 %v6951
        %9524 = vmatpush1.bf16.msra.mxu0 %v6950
        %9525 = vmatprep.subr.bf16.mxu0 %v6935
        %9526 = vmatpush1.bf16.msra.mxu0 %v6934
        %9527 = vmatprep.subr.bf16.mxu0 %v6919
        %9528 = vmatpush1.bf16.msra.mxu0 %v6918
        %9529 = vmatprep.subr.bf16.mxu0 %v6903
        %9530 = vmatpush1.bf16.msra.mxu0 %v6902
        %9531 = vmatprep.subr.bf16.mxu0 %v6887
        %9532 = vmatpush1.bf16.msra.mxu0 %v6886
        %9533 = vmatprep.subr.bf16.mxu0 %v6871
        %9534 = vmatpush1.bf16.msra.mxu0 %v6870
        %9535 = vmatprep.subr.bf16.mxu0 %v6855
        %9536 = vmatpush1.bf16.msra.mxu0 %v6854
        %9537 = vmatprep.subr.bf16.mxu0 %v6839
        %9538 = vmatpush1.bf16.msra.mxu0 %v6838
        %9539 = vmatprep.subr.bf16.mxu0 %v7079
        %9540 = vmatpush2.bf16.msra.mxu0 %v7078
        %9541 = vmatprep.subr.bf16.mxu0 %v7063
        %9542 = vmatpush2.bf16.msra.mxu0 %v7062
        %9543 = vmatprep.subr.bf16.mxu0 %v7047
        %9544 = vmatpush2.bf16.msra.mxu0 %v7046
        %9545 = vmatprep.subr.bf16.mxu0 %v7031
        %9546 = vmatpush2.bf16.msra.mxu0 %v7030
        %9547 = vmatprep.subr.bf16.mxu0 %v7015
        %9548 = vmatpush2.bf16.msra.mxu0 %v7014
        %9549 = vmatprep.subr.bf16.mxu0 %v6999
        %9550 = vmatpush2.bf16.msra.mxu0 %v6998
        %9551 = vmatprep.subr.bf16.mxu0 %v6983
        %9552 = vmatpush2.bf16.msra.mxu0 %v6982
        %9553 = vmatprep.subr.bf16.mxu0 %v6967
        %9554 = vmatpush2.bf16.msra.mxu0 %v6966
        %9555 = vmatprep.mubr.bf16.mxu0 %v2387
        %9556 = vmatmul.mubr.bf16.gmra.mxu0 %v2386
        %v9557 = vpop.f32.mrf.mxu0
        %v9558 = vadd.f32 %v9515, %v9557
        %v9559 = vpop.f32.mrf.mxu0
        %v9560 = vadd.f32 %v9517, %v9559
        %v9561 = vpop.f32.mrf.mxu0
        %v9562 = vadd.f32 %v9519, %v9561
        %v9563 = vpop.f32.mrf.mxu0
        %v9564 = vadd.f32 %v9521, %v9563
        %9565 = vdwg.mxu0
        %9566 = vmatprep.subr.bf16.mxu0 %v7207
        %9567 = vmatpush1.bf16.msra.mxu0 %v7206
        %9568 = vmatprep.subr.bf16.mxu0 %v7191
        %9569 = vmatpush1.bf16.msra.mxu0 %v7190
        %9570 = vmatprep.subr.bf16.mxu0 %v7175
        %9571 = vmatpush1.bf16.msra.mxu0 %v7174
        %9572 = vmatprep.subr.bf16.mxu0 %v7159
        %9573 = vmatpush1.bf16.msra.mxu0 %v7158
        %9574 = vmatprep.subr.bf16.mxu0 %v7143
        %9575 = vmatpush1.bf16.msra.mxu0 %v7142
        %9576 = vmatprep.subr.bf16.mxu0 %v7127
        %9577 = vmatpush1.bf16.msra.mxu0 %v7126
        %9578 = vmatprep.subr.bf16.mxu0 %v7111
        %9579 = vmatpush1.bf16.msra.mxu0 %v7110
        %9580 = vmatprep.subr.bf16.mxu0 %v7095
        %9581 = vmatpush1.bf16.msra.mxu0 %v7094
        %9582 = vmatprep.subr.bf16.mxu0 %v7335
        %9583 = vmatpush2.bf16.msra.mxu0 %v7334
        %9584 = vmatprep.subr.bf16.mxu0 %v7319
        %9585 = vmatpush2.bf16.msra.mxu0 %v7318
        %9586 = vmatprep.subr.bf16.mxu0 %v7303
        %9587 = vmatpush2.bf16.msra.mxu0 %v7302
        %9588 = vmatprep.subr.bf16.mxu0 %v7287
        %9589 = vmatpush2.bf16.msra.mxu0 %v7286
        %9590 = vmatprep.subr.bf16.mxu0 %v7271
        %9591 = vmatpush2.bf16.msra.mxu0 %v7270
        %9592 = vmatprep.subr.bf16.mxu0 %v7255
        %9593 = vmatpush2.bf16.msra.mxu0 %v7254
        %9594 = vmatprep.subr.bf16.mxu0 %v7239
        %9595 = vmatpush2.bf16.msra.mxu0 %v7238
        %9596 = vmatprep.subr.bf16.mxu0 %v7223
        %9597 = vmatpush2.bf16.msra.mxu0 %v7222
        %9598 = vmatprep.mubr.bf16.mxu0 %v2389
        %9599 = vmatmul.mubr.bf16.gmra.mxu0 %v2388
        %v9600 = vpop.f32.mrf.mxu0
        %v9601 = vadd.f32 %v9558, %v9600
        %v9602 = vpop.f32.mrf.mxu0
        %v9603 = vadd.f32 %v9560, %v9602
        %v9604 = vpop.f32.mrf.mxu0
        %v9605 = vadd.f32 %v9562, %v9604
        %v9606 = vpop.f32.mrf.mxu0
        %v9607 = vadd.f32 %v9564, %v9606
        %9608 = vdwg.mxu0
        %9609 = vmatprep.subr.bf16.mxu0 %v7463
        %9610 = vmatpush1.bf16.msra.mxu0 %v7462
        %9611 = vmatprep.subr.bf16.mxu0 %v7447
        %9612 = vmatpush1.bf16.msra.mxu0 %v7446
        %9613 = vmatprep.subr.bf16.mxu0 %v7431
        %9614 = vmatpush1.bf16.msra.mxu0 %v7430
        %9615 = vmatprep.subr.bf16.mxu0 %v7415
        %9616 = vmatpush1.bf16.msra.mxu0 %v7414
        %9617 = vmatprep.subr.bf16.mxu0 %v7399
        %9618 = vmatpush1.bf16.msra.mxu0 %v7398
        %9619 = vmatprep.subr.bf16.mxu0 %v7383
        %9620 = vmatpush1.bf16.msra.mxu0 %v7382
        %9621 = vmatprep.subr.bf16.mxu0 %v7367
        %9622 = vmatpush1.bf16.msra.mxu0 %v7366
        %9623 = vmatprep.subr.bf16.mxu0 %v7351
        %9624 = vmatpush1.bf16.msra.mxu0 %v7350
        %9625 = vmatprep.subr.bf16.mxu0 %v7591
        %9626 = vmatpush2.bf16.msra.mxu0 %v7590
        %9627 = vmatprep.subr.bf16.mxu0 %v7575
        %9628 = vmatpush2.bf16.msra.mxu0 %v7574
        %9629 = vmatprep.subr.bf16.mxu0 %v7559
        %9630 = vmatpush2.bf16.msra.mxu0 %v7558
        %9631 = vmatprep.subr.bf16.mxu0 %v7543
        %9632 = vmatpush2.bf16.msra.mxu0 %v7542
        %9633 = vmatprep.subr.bf16.mxu0 %v7527
        %9634 = vmatpush2.bf16.msra.mxu0 %v7526
        %9635 = vmatprep.subr.bf16.mxu0 %v7511
        %9636 = vmatpush2.bf16.msra.mxu0 %v7510
        %9637 = vmatprep.subr.bf16.mxu0 %v7495
        %9638 = vmatpush2.bf16.msra.mxu0 %v7494
        %9639 = vmatprep.subr.bf16.mxu0 %v7479
        %9640 = vmatpush2.bf16.msra.mxu0 %v7478
        %9641 = vmatprep.mubr.bf16.mxu0 %v2391
        %9642 = vmatmul.mubr.bf16.gmra.mxu0 %v2390
        %v9643 = vpop.f32.mrf.mxu0
        %v9644 = vadd.f32 %v9601, %v9643
        %v9645 = vpop.f32.mrf.mxu0
        %v9646 = vadd.f32 %v9603, %v9645
        %v9647 = vpop.f32.mrf.mxu0
        %v9648 = vadd.f32 %v9605, %v9647
        %v9649 = vpop.f32.mrf.mxu0
        %v9650 = vadd.f32 %v9607, %v9649
        %9651 = vdwg.mxu0
        %9652 = vmatprep.subr.bf16.mxu0 %v6697
        %9653 = vmatpush1.bf16.msra.mxu0 %v6696
        %9654 = vmatprep.subr.bf16.mxu0 %v6681
        %9655 = vmatpush1.bf16.msra.mxu0 %v6680
        %9656 = vmatprep.subr.bf16.mxu0 %v6665
        %9657 = vmatpush1.bf16.msra.mxu0 %v6664
        %9658 = vmatprep.subr.bf16.mxu0 %v6649
        %9659 = vmatpush1.bf16.msra.mxu0 %v6648
        %9660 = vmatprep.subr.bf16.mxu0 %v6633
        %9661 = vmatpush1.bf16.msra.mxu0 %v6632
        %9662 = vmatprep.subr.bf16.mxu0 %v6617
        %9663 = vmatpush1.bf16.msra.mxu0 %v6616
        %9664 = vmatprep.subr.bf16.mxu0 %v6601
        %9665 = vmatpush1.bf16.msra.mxu0 %v6600
        %9666 = vmatprep.subr.bf16.mxu0 %v6585
        %9667 = vmatpush1.bf16.msra.mxu0 %v6584
        %9668 = vmatprep.subr.bf16.mxu0 %v6825
        %9669 = vmatpush2.bf16.msra.mxu0 %v6824
        %9670 = vmatprep.subr.bf16.mxu0 %v6809
        %9671 = vmatpush2.bf16.msra.mxu0 %v6808
        %9672 = vmatprep.subr.bf16.mxu0 %v6793
        %9673 = vmatpush2.bf16.msra.mxu0 %v6792
        %9674 = vmatprep.subr.bf16.mxu0 %v6777
        %9675 = vmatpush2.bf16.msra.mxu0 %v6776
        %9676 = vmatprep.subr.bf16.mxu0 %v6761
        %9677 = vmatpush2.bf16.msra.mxu0 %v6760
        %9678 = vmatprep.subr.bf16.mxu0 %v6745
        %9679 = vmatpush2.bf16.msra.mxu0 %v6744
        %9680 = vmatprep.subr.bf16.mxu0 %v6729
        %9681 = vmatpush2.bf16.msra.mxu0 %v6728
        %9682 = vmatprep.subr.bf16.mxu0 %v6713
        %9683 = vmatpush2.bf16.msra.mxu0 %v6712
        %9684 = vmatprep.mubr.bf16.mxu0 %v2385
        %9685 = vmatmul.mubr.bf16.gmra.mxu0 %v2384
        %v9686 = vpop.f32.mrf.mxu0
        %v9687 = vadd.f32 %v3471, %v9686
        %v9688 = vpop.f32.mrf.mxu0
        %v9689 = vadd.f32 %v3475, %v9688
        %v9690 = vpop.f32.mrf.mxu0
        %v9691 = vadd.f32 %v3471, %v9690
        %v9692 = vpop.f32.mrf.mxu0
        %v9693 = vadd.f32 %v3475, %v9692
        %9694 = vdwg.mxu0
        %9695 = vmatprep.subr.bf16.mxu0 %v6953
        %9696 = vmatpush1.bf16.msra.mxu0 %v6952
        %9697 = vmatprep.subr.bf16.mxu0 %v6937
        %9698 = vmatpush1.bf16.msra.mxu0 %v6936
        %9699 = vmatprep.subr.bf16.mxu0 %v6921
        %9700 = vmatpush1.bf16.msra.mxu0 %v6920
        %9701 = vmatprep.subr.bf16.mxu0 %v6905
        %9702 = vmatpush1.bf16.msra.mxu0 %v6904
        %9703 = vmatprep.subr.bf16.mxu0 %v6889
        %9704 = vmatpush1.bf16.msra.mxu0 %v6888
        %9705 = vmatprep.subr.bf16.mxu0 %v6873
        %9706 = vmatpush1.bf16.msra.mxu0 %v6872
        %9707 = vmatprep.subr.bf16.mxu0 %v6857
        %9708 = vmatpush1.bf16.msra.mxu0 %v6856
        %9709 = vmatprep.subr.bf16.mxu0 %v6841
        %9710 = vmatpush1.bf16.msra.mxu0 %v6840
        %9711 = vmatprep.subr.bf16.mxu0 %v7081
        %9712 = vmatpush2.bf16.msra.mxu0 %v7080
        %9713 = vmatprep.subr.bf16.mxu0 %v7065
        %9714 = vmatpush2.bf16.msra.mxu0 %v7064
        %9715 = vmatprep.subr.bf16.mxu0 %v7049
        %9716 = vmatpush2.bf16.msra.mxu0 %v7048
        %9717 = vmatprep.subr.bf16.mxu0 %v7033
        %9718 = vmatpush2.bf16.msra.mxu0 %v7032
        %9719 = vmatprep.subr.bf16.mxu0 %v7017
        %9720 = vmatpush2.bf16.msra.mxu0 %v7016
        %9721 = vmatprep.subr.bf16.mxu0 %v7001
        %9722 = vmatpush2.bf16.msra.mxu0 %v7000
        %9723 = vmatprep.subr.bf16.mxu0 %v6985
        %9724 = vmatpush2.bf16.msra.mxu0 %v6984
        %9725 = vmatprep.subr.bf16.mxu0 %v6969
        %9726 = vmatpush2.bf16.msra.mxu0 %v6968
        %9727 = vmatprep.mubr.bf16.mxu0 %v2387
        %9728 = vmatmul.mubr.bf16.gmra.mxu0 %v2386
        %v9729 = vpop.f32.mrf.mxu0
        %v9730 = vadd.f32 %v9687, %v9729
        %v9731 = vpop.f32.mrf.mxu0
        %v9732 = vadd.f32 %v9689, %v9731
        %v9733 = vpop.f32.mrf.mxu0
        %v9734 = vadd.f32 %v9691, %v9733
        %v9735 = vpop.f32.mrf.mxu0
        %v9736 = vadd.f32 %v9693, %v9735
        %9737 = vdwg.mxu0
        %9738 = vmatprep.subr.bf16.mxu0 %v7209
        %9739 = vmatpush1.bf16.msra.mxu0 %v7208
        %9740 = vmatprep.subr.bf16.mxu0 %v7193
        %9741 = vmatpush1.bf16.msra.mxu0 %v7192
        %9742 = vmatprep.subr.bf16.mxu0 %v7177
        %9743 = vmatpush1.bf16.msra.mxu0 %v7176
        %9744 = vmatprep.subr.bf16.mxu0 %v7161
        %9745 = vmatpush1.bf16.msra.mxu0 %v7160
        %9746 = vmatprep.subr.bf16.mxu0 %v7145
        %9747 = vmatpush1.bf16.msra.mxu0 %v7144
        %9748 = vmatprep.subr.bf16.mxu0 %v7129
        %9749 = vmatpush1.bf16.msra.mxu0 %v7128
        %9750 = vmatprep.subr.bf16.mxu0 %v7113
        %9751 = vmatpush1.bf16.msra.mxu0 %v7112
        %9752 = vmatprep.subr.bf16.mxu0 %v7097
        %9753 = vmatpush1.bf16.msra.mxu0 %v7096
        %9754 = vmatprep.subr.bf16.mxu0 %v7337
        %9755 = vmatpush2.bf16.msra.mxu0 %v7336
        %9756 = vmatprep.subr.bf16.mxu0 %v7321
        %9757 = vmatpush2.bf16.msra.mxu0 %v7320
        %9758 = vmatprep.subr.bf16.mxu0 %v7305
        %9759 = vmatpush2.bf16.msra.mxu0 %v7304
        %9760 = vmatprep.subr.bf16.mxu0 %v7289
        %9761 = vmatpush2.bf16.msra.mxu0 %v7288
        %9762 = vmatprep.subr.bf16.mxu0 %v7273
        %9763 = vmatpush2.bf16.msra.mxu0 %v7272
        %9764 = vmatprep.subr.bf16.mxu0 %v7257
        %9765 = vmatpush2.bf16.msra.mxu0 %v7256
        %9766 = vmatprep.subr.bf16.mxu0 %v7241
        %9767 = vmatpush2.bf16.msra.mxu0 %v7240
        %9768 = vmatprep.subr.bf16.mxu0 %v7225
        %9769 = vmatpush2.bf16.msra.mxu0 %v7224
        %9770 = vmatprep.mubr.bf16.mxu0 %v2389
        %9771 = vmatmul.mubr.bf16.gmra.mxu0 %v2388
        %v9772 = vpop.f32.mrf.mxu0
        %v9773 = vadd.f32 %v9730, %v9772
        %v9774 = vpop.f32.mrf.mxu0
        %v9775 = vadd.f32 %v9732, %v9774
        %v9776 = vpop.f32.mrf.mxu0
        %v9777 = vadd.f32 %v9734, %v9776
        %v9778 = vpop.f32.mrf.mxu0
        %v9779 = vadd.f32 %v9736, %v9778
        %9780 = vdwg.mxu0
        %9781 = vmatprep.subr.bf16.mxu0 %v7465
        %9782 = vmatpush1.bf16.msra.mxu0 %v7464
        %9783 = vmatprep.subr.bf16.mxu0 %v7449
        %9784 = vmatpush1.bf16.msra.mxu0 %v7448
        %9785 = vmatprep.subr.bf16.mxu0 %v7433
        %9786 = vmatpush1.bf16.msra.mxu0 %v7432
        %9787 = vmatprep.subr.bf16.mxu0 %v7417
        %9788 = vmatpush1.bf16.msra.mxu0 %v7416
        %9789 = vmatprep.subr.bf16.mxu0 %v7401
        %9790 = vmatpush1.bf16.msra.mxu0 %v7400
        %9791 = vmatprep.subr.bf16.mxu0 %v7385
        %9792 = vmatpush1.bf16.msra.mxu0 %v7384
        %9793 = vmatprep.subr.bf16.mxu0 %v7369
        %9794 = vmatpush1.bf16.msra.mxu0 %v7368
        %9795 = vmatprep.subr.bf16.mxu0 %v7353
        %9796 = vmatpush1.bf16.msra.mxu0 %v7352
        %9797 = vmatprep.subr.bf16.mxu0 %v7593
        %9798 = vmatpush2.bf16.msra.mxu0 %v7592
        %9799 = vmatprep.subr.bf16.mxu0 %v7577
        %9800 = vmatpush2.bf16.msra.mxu0 %v7576
        %9801 = vmatprep.subr.bf16.mxu0 %v7561
        %9802 = vmatpush2.bf16.msra.mxu0 %v7560
        %9803 = vmatprep.subr.bf16.mxu0 %v7545
        %9804 = vmatpush2.bf16.msra.mxu0 %v7544
        %9805 = vmatprep.subr.bf16.mxu0 %v7529
        %9806 = vmatpush2.bf16.msra.mxu0 %v7528
        %9807 = vmatprep.subr.bf16.mxu0 %v7513
        %9808 = vmatpush2.bf16.msra.mxu0 %v7512
        %9809 = vmatprep.subr.bf16.mxu0 %v7497
        %9810 = vmatpush2.bf16.msra.mxu0 %v7496
        %9811 = vmatprep.subr.bf16.mxu0 %v7481
        %9812 = vmatpush2.bf16.msra.mxu0 %v7480
        %9813 = vmatprep.mubr.bf16.mxu0 %v2391
        %9814 = vmatmul.mubr.bf16.gmra.mxu0 %v2390
        %v9815 = vpop.f32.mrf.mxu0
        %v9816 = vadd.f32 %v9773, %v9815
        %v9817 = vpop.f32.mrf.mxu0
        %v9818 = vadd.f32 %v9775, %v9817
        %v9819 = vpop.f32.mrf.mxu0
        %v9820 = vadd.f32 %v9777, %v9819
        %v9821 = vpop.f32.mrf.mxu0
        %v9822 = vadd.f32 %v9779, %v9821
        %9823 = vdwg.mxu0
        %9824 = vmatprep.subr.bf16.mxu0 %v6699
        %9825 = vmatpush1.bf16.msra.mxu0 %v6698
        %9826 = vmatprep.subr.bf16.mxu0 %v6683
        %9827 = vmatpush1.bf16.msra.mxu0 %v6682
        %9828 = vmatprep.subr.bf16.mxu0 %v6667
        %9829 = vmatpush1.bf16.msra.mxu0 %v6666
        %9830 = vmatprep.subr.bf16.mxu0 %v6651
        %9831 = vmatpush1.bf16.msra.mxu0 %v6650
        %9832 = vmatprep.subr.bf16.mxu0 %v6635
        %9833 = vmatpush1.bf16.msra.mxu0 %v6634
        %9834 = vmatprep.subr.bf16.mxu0 %v6619
        %9835 = vmatpush1.bf16.msra.mxu0 %v6618
        %9836 = vmatprep.subr.bf16.mxu0 %v6603
        %9837 = vmatpush1.bf16.msra.mxu0 %v6602
        %9838 = vmatprep.subr.bf16.mxu0 %v6587
        %9839 = vmatpush1.bf16.msra.mxu0 %v6586
        %9840 = vmatprep.subr.bf16.mxu0 %v6827
        %9841 = vmatpush2.bf16.msra.mxu0 %v6826
        %9842 = vmatprep.subr.bf16.mxu0 %v6811
        %9843 = vmatpush2.bf16.msra.mxu0 %v6810
        %9844 = vmatprep.subr.bf16.mxu0 %v6795
        %9845 = vmatpush2.bf16.msra.mxu0 %v6794
        %9846 = vmatprep.subr.bf16.mxu0 %v6779
        %9847 = vmatpush2.bf16.msra.mxu0 %v6778
        %9848 = vmatprep.subr.bf16.mxu0 %v6763
        %9849 = vmatpush2.bf16.msra.mxu0 %v6762
        %9850 = vmatprep.subr.bf16.mxu0 %v6747
        %9851 = vmatpush2.bf16.msra.mxu0 %v6746
        %9852 = vmatprep.subr.bf16.mxu0 %v6731
        %9853 = vmatpush2.bf16.msra.mxu0 %v6730
        %9854 = vmatprep.subr.bf16.mxu0 %v6715
        %9855 = vmatpush2.bf16.msra.mxu0 %v6714
        %9856 = vmatprep.mubr.bf16.mxu0 %v2385
        %9857 = vmatmul.mubr.bf16.gmra.mxu0 %v2384
        %v9858 = vpop.f32.mrf.mxu0
        %v9859 = vadd.f32 %v3479, %v9858
        %v9860 = vpop.f32.mrf.mxu0
        %v9861 = vadd.f32 %v3483, %v9860
        %v9862 = vpop.f32.mrf.mxu0
        %v9863 = vadd.f32 %v3479, %v9862
        %v9864 = vpop.f32.mrf.mxu0
        %v9865 = vadd.f32 %v3483, %v9864
        %9866 = vdwg.mxu0
        %9867 = vmatprep.subr.bf16.mxu0 %v6955
        %9868 = vmatpush1.bf16.msra.mxu0 %v6954
        %9869 = vmatprep.subr.bf16.mxu0 %v6939
        %9870 = vmatpush1.bf16.msra.mxu0 %v6938
        %9871 = vmatprep.subr.bf16.mxu0 %v6923
        %9872 = vmatpush1.bf16.msra.mxu0 %v6922
        %9873 = vmatprep.subr.bf16.mxu0 %v6907
        %9874 = vmatpush1.bf16.msra.mxu0 %v6906
        %9875 = vmatprep.subr.bf16.mxu0 %v6891
        %9876 = vmatpush1.bf16.msra.mxu0 %v6890
        %9877 = vmatprep.subr.bf16.mxu0 %v6875
        %9878 = vmatpush1.bf16.msra.mxu0 %v6874
        %9879 = vmatprep.subr.bf16.mxu0 %v6859
        %9880 = vmatpush1.bf16.msra.mxu0 %v6858
        %9881 = vmatprep.subr.bf16.mxu0 %v6843
        %9882 = vmatpush1.bf16.msra.mxu0 %v6842
        %9883 = vmatprep.subr.bf16.mxu0 %v7083
        %9884 = vmatpush2.bf16.msra.mxu0 %v7082
        %9885 = vmatprep.subr.bf16.mxu0 %v7067
        %9886 = vmatpush2.bf16.msra.mxu0 %v7066
        %9887 = vmatprep.subr.bf16.mxu0 %v7051
        %9888 = vmatpush2.bf16.msra.mxu0 %v7050
        %9889 = vmatprep.subr.bf16.mxu0 %v7035
        %9890 = vmatpush2.bf16.msra.mxu0 %v7034
        %9891 = vmatprep.subr.bf16.mxu0 %v7019
        %9892 = vmatpush2.bf16.msra.mxu0 %v7018
        %9893 = vmatprep.subr.bf16.mxu0 %v7003
        %9894 = vmatpush2.bf16.msra.mxu0 %v7002
        %9895 = vmatprep.subr.bf16.mxu0 %v6987
        %9896 = vmatpush2.bf16.msra.mxu0 %v6986
        %9897 = vmatprep.subr.bf16.mxu0 %v6971
        %9898 = vmatpush2.bf16.msra.mxu0 %v6970
        %9899 = vmatprep.mubr.bf16.mxu0 %v2387
        %9900 = vmatmul.mubr.bf16.gmra.mxu0 %v2386
        %v9901 = vpop.f32.mrf.mxu0
        %v9902 = vadd.f32 %v9859, %v9901
        %v9903 = vpop.f32.mrf.mxu0
        %v9904 = vadd.f32 %v9861, %v9903
        %v9905 = vpop.f32.mrf.mxu0
        %v9906 = vadd.f32 %v9863, %v9905
        %v9907 = vpop.f32.mrf.mxu0
        %v9908 = vadd.f32 %v9865, %v9907
        %9909 = vdwg.mxu0
        %9910 = vmatprep.subr.bf16.mxu0 %v7211
        %9911 = vmatpush1.bf16.msra.mxu0 %v7210
        %9912 = vmatprep.subr.bf16.mxu0 %v7195
        %9913 = vmatpush1.bf16.msra.mxu0 %v7194
        %9914 = vmatprep.subr.bf16.mxu0 %v7179
        %9915 = vmatpush1.bf16.msra.mxu0 %v7178
        %9916 = vmatprep.subr.bf16.mxu0 %v7163
        %9917 = vmatpush1.bf16.msra.mxu0 %v7162
        %9918 = vmatprep.subr.bf16.mxu0 %v7147
        %9919 = vmatpush1.bf16.msra.mxu0 %v7146
        %9920 = vmatprep.subr.bf16.mxu0 %v7131
        %9921 = vmatpush1.bf16.msra.mxu0 %v7130
        %9922 = vmatprep.subr.bf16.mxu0 %v7115
        %9923 = vmatpush1.bf16.msra.mxu0 %v7114
        %9924 = vmatprep.subr.bf16.mxu0 %v7099
        %9925 = vmatpush1.bf16.msra.mxu0 %v7098
        %9926 = vmatprep.subr.bf16.mxu0 %v7339
        %9927 = vmatpush2.bf16.msra.mxu0 %v7338
        %9928 = vmatprep.subr.bf16.mxu0 %v7323
        %9929 = vmatpush2.bf16.msra.mxu0 %v7322
        %9930 = vmatprep.subr.bf16.mxu0 %v7307
        %9931 = vmatpush2.bf16.msra.mxu0 %v7306
        %9932 = vmatprep.subr.bf16.mxu0 %v7291
        %9933 = vmatpush2.bf16.msra.mxu0 %v7290
        %9934 = vmatprep.subr.bf16.mxu0 %v7275
        %9935 = vmatpush2.bf16.msra.mxu0 %v7274
        %9936 = vmatprep.subr.bf16.mxu0 %v7259
        %9937 = vmatpush2.bf16.msra.mxu0 %v7258
        %9938 = vmatprep.subr.bf16.mxu0 %v7243
        %9939 = vmatpush2.bf16.msra.mxu0 %v7242
        %9940 = vmatprep.subr.bf16.mxu0 %v7227
        %9941 = vmatpush2.bf16.msra.mxu0 %v7226
        %9942 = vmatprep.mubr.bf16.mxu0 %v2389
        %9943 = vmatmul.mubr.bf16.gmra.mxu0 %v2388
        %v9944 = vpop.f32.mrf.mxu0
        %v9945 = vadd.f32 %v9902, %v9944
        %v9946 = vpop.f32.mrf.mxu0
        %v9947 = vadd.f32 %v9904, %v9946
        %v9948 = vpop.f32.mrf.mxu0
        %v9949 = vadd.f32 %v9906, %v9948
        %v9950 = vpop.f32.mrf.mxu0
        %v9951 = vadd.f32 %v9908, %v9950
        %9952 = vdwg.mxu0
        %9953 = vmatprep.subr.bf16.mxu0 %v7467
        %9954 = vmatpush1.bf16.msra.mxu0 %v7466
        %9955 = vmatprep.subr.bf16.mxu0 %v7451
        %9956 = vmatpush1.bf16.msra.mxu0 %v7450
        %9957 = vmatprep.subr.bf16.mxu0 %v7435
        %9958 = vmatpush1.bf16.msra.mxu0 %v7434
        %9959 = vmatprep.subr.bf16.mxu0 %v7419
        %9960 = vmatpush1.bf16.msra.mxu0 %v7418
        %9961 = vmatprep.subr.bf16.mxu0 %v7403
        %9962 = vmatpush1.bf16.msra.mxu0 %v7402
        %9963 = vmatprep.subr.bf16.mxu0 %v7387
        %9964 = vmatpush1.bf16.msra.mxu0 %v7386
        %9965 = vmatprep.subr.bf16.mxu0 %v7371
        %9966 = vmatpush1.bf16.msra.mxu0 %v7370
        %9967 = vmatprep.subr.bf16.mxu0 %v7355
        %9968 = vmatpush1.bf16.msra.mxu0 %v7354
        %9969 = vmatprep.subr.bf16.mxu0 %v7595
        %9970 = vmatpush2.bf16.msra.mxu0 %v7594
        %9971 = vmatprep.subr.bf16.mxu0 %v7579
        %9972 = vmatpush2.bf16.msra.mxu0 %v7578
        %9973 = vmatprep.subr.bf16.mxu0 %v7563
        %9974 = vmatpush2.bf16.msra.mxu0 %v7562
        %9975 = vmatprep.subr.bf16.mxu0 %v7547
        %9976 = vmatpush2.bf16.msra.mxu0 %v7546
        %9977 = vmatprep.subr.bf16.mxu0 %v7531
        %9978 = vmatpush2.bf16.msra.mxu0 %v7530
        %9979 = vmatprep.subr.bf16.mxu0 %v7515
        %9980 = vmatpush2.bf16.msra.mxu0 %v7514
        %9981 = vmatprep.subr.bf16.mxu0 %v7499
        %9982 = vmatpush2.bf16.msra.mxu0 %v7498
        %9983 = vmatprep.subr.bf16.mxu0 %v7483
        %9984 = vmatpush2.bf16.msra.mxu0 %v7482
        %9985 = vmatprep.mubr.bf16.mxu0 %v2391
        %9986 = vmatmul.mubr.bf16.gmra.mxu0 %v2390
        %v9987 = vpop.f32.mrf.mxu0
        %v9988 = vadd.f32 %v9945, %v9987
        %v9989 = vpop.f32.mrf.mxu0
        %v9990 = vadd.f32 %v9947, %v9989
        %v9991 = vpop.f32.mrf.mxu0
        %v9992 = vadd.f32 %v9949, %v9991
        %v9993 = vpop.f32.mrf.mxu0
        %v9994 = vadd.f32 %v9951, %v9993
        %9995 = vdwg.mxu0
        %vm9996 = vcmp.ge.f32.partialorder %v8784, 0.0
        %vm9997 = vcmp.ge.f32.partialorder %v8786, 0.0
        %vm9998 = vcmp.ge.f32.partialorder %v8956, 0.0
        %vm9999 = vcmp.ge.f32.partialorder %v8958, 0.0
        %vm10000 = vcmp.ge.f32.partialorder %v9128, 0.0
        %vm10001 = vcmp.ge.f32.partialorder %v9130, 0.0
        %vm10002 = vcmp.ge.f32.partialorder %v9300, 0.0
        %vm10003 = vcmp.ge.f32.partialorder %v9302, 0.0
        %vm10004 = vcmp.ge.f32.partialorder %v9472, 0.0
        %vm10005 = vcmp.ge.f32.partialorder %v9474, 0.0
        %vm10006 = vcmp.ge.f32.partialorder %v9644, 0.0
        %vm10007 = vcmp.ge.f32.partialorder %v9646, 0.0
        %vm10008 = vcmp.ge.f32.partialorder %v9816, 0.0
        %vm10009 = vcmp.ge.f32.partialorder %v9818, 0.0
        %vm10010 = vcmp.ge.f32.partialorder %v9988, 0.0
        %vm10011 = vcmp.ge.f32.partialorder %v9990, 0.0
        %vm10012 = vcmp.ge.f32.partialorder %v8788, 0.0
        %vm10013 = vcmp.ge.f32.partialorder %v8790, 0.0
        %vm10014 = vcmp.ge.f32.partialorder %v8960, 0.0
        %vm10015 = vcmp.ge.f32.partialorder %v8962, 0.0
        %vm10016 = vcmp.ge.f32.partialorder %v9132, 0.0
        %vm10017 = vcmp.ge.f32.partialorder %v9134, 0.0
        %vm10018 = vcmp.ge.f32.partialorder %v9304, 0.0
        %vm10019 = vcmp.ge.f32.partialorder %v9306, 0.0
        %vm10020 = vcmp.ge.f32.partialorder %v9476, 0.0
        %vm10021 = vcmp.ge.f32.partialorder %v9478, 0.0
        %vm10022 = vcmp.ge.f32.partialorder %v9648, 0.0
        %vm10023 = vcmp.ge.f32.partialorder %v9650, 0.0
        %vm10024 = vcmp.ge.f32.partialorder %v9820, 0.0
        %vm10025 = vcmp.ge.f32.partialorder %v9822, 0.0
        %vm10026 = vcmp.ge.f32.partialorder %v9992, 0.0
        %vm10027 = vcmp.ge.f32.partialorder %v9994, 0.0
        %v10028 = vmul.f32 %v8784, 0.01
        %v10029 = vmul.f32 %v8786, 0.01
        %v10030 = vmul.f32 %v8956, 0.01
        %v10031 = vmul.f32 %v8958, 0.01
        %v10032 = vmul.f32 %v9128, 0.01
        %v10033 = vmul.f32 %v9130, 0.01
        %v10034 = vmul.f32 %v9300, 0.01
        %v10035 = vmul.f32 %v9302, 0.01
        %v10036 = vmul.f32 %v9472, 0.01
        %v10037 = vmul.f32 %v9474, 0.01
        %v10038 = vmul.f32 %v9644, 0.01
        %v10039 = vmul.f32 %v9646, 0.01
        %v10040 = vmul.f32 %v9816, 0.01
        %v10041 = vmul.f32 %v9818, 0.01
        %v10042 = vmul.f32 %v9988, 0.01
        %v10043 = vmul.f32 %v9990, 0.01
        %v10044 = vmul.f32 %v8788, 0.01
        %v10045 = vmul.f32 %v8790, 0.01
        %v10046 = vmul.f32 %v8960, 0.01
        %v10047 = vmul.f32 %v8962, 0.01
        %v10048 = vmul.f32 %v9132, 0.01
        %v10049 = vmul.f32 %v9134, 0.01
        %v10050 = vmul.f32 %v9304, 0.01
        %v10051 = vmul.f32 %v9306, 0.01
        %v10052 = vmul.f32 %v9476, 0.01
        %v10053 = vmul.f32 %v9478, 0.01
        %v10054 = vmul.f32 %v9648, 0.01
        %v10055 = vmul.f32 %v9650, 0.01
        %v10056 = vmul.f32 %v9820, 0.01
        %v10057 = vmul.f32 %v9822, 0.01
        %v10058 = vmul.f32 %v9992, 0.01
        %v10059 = vmul.f32 %v9994, 0.01
        %v10060 = vsel %vm9996, %v8784, %v10028
        %v10061 = vsel %vm9997, %v8786, %v10029
        %v10062 = vsel %vm9998, %v8956, %v10030
        %v10063 = vsel %vm9999, %v8958, %v10031
        %v10064 = vsel %vm10000, %v9128, %v10032
        %v10065 = vsel %vm10001, %v9130, %v10033
        %v10066 = vsel %vm10002, %v9300, %v10034
        %v10067 = vsel %vm10003, %v9302, %v10035
        %v10068 = vsel %vm10004, %v9472, %v10036
        %v10069 = vsel %vm10005, %v9474, %v10037
        %v10070 = vsel %vm10006, %v9644, %v10038
        %v10071 = vsel %vm10007, %v9646, %v10039
        %v10072 = vsel %vm10008, %v9816, %v10040
        %v10073 = vsel %vm10009, %v9818, %v10041
        %v10074 = vsel %vm10010, %v9988, %v10042
        %v10075 = vsel %vm10011, %v9990, %v10043
        %v10076 = vsel %vm10012, %v8788, %v10044
        %v10077 = vsel %vm10013, %v8790, %v10045
        %v10078 = vsel %vm10014, %v8960, %v10046
        %v10079 = vsel %vm10015, %v8962, %v10047
        %v10080 = vsel %vm10016, %v9132, %v10048
        %v10081 = vsel %vm10017, %v9134, %v10049
        %v10082 = vsel %vm10018, %v9304, %v10050
        %v10083 = vsel %vm10019, %v9306, %v10051
        %v10084 = vsel %vm10020, %v9476, %v10052
        %v10085 = vsel %vm10021, %v9478, %v10053
        %v10086 = vsel %vm10022, %v9648, %v10054
        %v10087 = vsel %vm10023, %v9650, %v10055
        %v10088 = vsel %vm10024, %v9820, %v10056
        %v10089 = vsel %vm10025, %v9822, %v10057
        %v10090 = vsel %vm10026, %v9992, %v10058
        %v10091 = vsel %vm10027, %v9994, %v10059
        %v10092 = vpack.c.bf16 %v10076, %v10060
        %v10093 = vpack.c.bf16 %v10077, %v10061
        %v10094 = vpack.c.bf16 %v10078, %v10062
        %v10095 = vpack.c.bf16 %v10079, %v10063
        %v10096 = vpack.c.bf16 %v10080, %v10064
        %v10097 = vpack.c.bf16 %v10081, %v10065
        %v10098 = vpack.c.bf16 %v10082, %v10066
        %v10099 = vpack.c.bf16 %v10083, %v10067
        %v10100 = vpack.c.bf16 %v10084, %v10068
        %v10101 = vpack.c.bf16 %v10085, %v10069
        %v10102 = vpack.c.bf16 %v10086, %v10070
        %v10103 = vpack.c.bf16 %v10087, %v10071
        %v10104 = vpack.c.bf16 %v10088, %v10072
        %v10105 = vpack.c.bf16 %v10089, %v10073
        %v10106 = vpack.c.bf16 %v10090, %v10074
        %v10107 = vpack.c.bf16 %v10091, %v10075
        %v10108 = vld [vmem:[%s349] sm:$0xff]
        %v10109 = vld [vmem:[%s349 + $0x8] sm:$0xff]
        %v10110 = vld [vmem:[%s349 + $0x10] sm:$0xff]
        %v10111 = vld [vmem:[%s349 + $0x18] sm:$0xff]
        %v10112 = vld [vmem:[%s349 + $0x20] sm:$0xff]
        %v10113 = vld [vmem:[%s349 + $0x28] sm:$0xff]
        %v10114 = vld [vmem:[%s349 + $0x30] sm:$0xff]
        %v10115 = vld [vmem:[%s349 + $0x38] sm:$0xff]
        %v10116 = vld [vmem:[%s349 + $0x40] sm:$0xff]
        %v10117 = vld [vmem:[%s349 + $0x48] sm:$0xff]
        %v10118 = vld [vmem:[%s349 + $0x50] sm:$0xff]
        %v10119 = vld [vmem:[%s349 + $0x58] sm:$0xff]
        %v10120 = vld [vmem:[%s349 + $0x60] sm:$0xff]
        %v10121 = vld [vmem:[%s349 + $0x68] sm:$0xff]
        %v10122 = vld [vmem:[%s349 + $0x70] sm:$0xff]
        %v10123 = vld [vmem:[%s349 + $0x78] sm:$0xff]
        %v10124 = vld [vmem:[%s349 + $0x80] sm:$0xff]
        %v10125 = vld [vmem:[%s349 + $0x88] sm:$0xff]
        %v10126 = vld [vmem:[%s349 + $0x90] sm:$0xff]
        %v10127 = vld [vmem:[%s349 + $0x98] sm:$0xff]
        %v10128 = vld [vmem:[%s349 + $0xa0] sm:$0xff]
        %v10129 = vld [vmem:[%s349 + $0xa8] sm:$0xff]
        %v10130 = vld [vmem:[%s349 + $0xb0] sm:$0xff]
        %v10131 = vld [vmem:[%s349 + $0xb8] sm:$0xff]
        %v10132 = vld [vmem:[%s349 + $0xc0] sm:$0xff]
        %v10133 = vld [vmem:[%s349 + $0xc8] sm:$0xff]
        %v10134 = vld [vmem:[%s349 + $0xd0] sm:$0xff]
        %v10135 = vld [vmem:[%s349 + $0xd8] sm:$0xff]
        %v10136 = vld [vmem:[%s349 + $0xe0] sm:$0xff]
        %v10137 = vld [vmem:[%s349 + $0xe8] sm:$0xff]
        %v10138 = vld [vmem:[%s349 + $0xf0] sm:$0xff]
        %v10139 = vld [vmem:[%s349 + $0xf8] sm:$0xff]
        %v10140 = vld [vmem:[%s349 + $0x100] sm:$0xff]
        %v10141 = vld [vmem:[%s349 + $0x108] sm:$0xff]
        %v10142 = vld [vmem:[%s349 + $0x110] sm:$0xff]
        %v10143 = vld [vmem:[%s349 + $0x118] sm:$0xff]
        %v10144 = vld [vmem:[%s349 + $0x120] sm:$0xff]
        %v10145 = vld [vmem:[%s349 + $0x128] sm:$0xff]
        %v10146 = vld [vmem:[%s349 + $0x130] sm:$0xff]
        %v10147 = vld [vmem:[%s349 + $0x138] sm:$0xff]
        %v10148 = vld [vmem:[%s349 + $0x140] sm:$0xff]
        %v10149 = vld [vmem:[%s349 + $0x148] sm:$0xff]
        %v10150 = vld [vmem:[%s349 + $0x150] sm:$0xff]
        %v10151 = vld [vmem:[%s349 + $0x158] sm:$0xff]
        %v10152 = vld [vmem:[%s349 + $0x160] sm:$0xff]
        %v10153 = vld [vmem:[%s349 + $0x168] sm:$0xff]
        %v10154 = vld [vmem:[%s349 + $0x170] sm:$0xff]
        %v10155 = vld [vmem:[%s349 + $0x178] sm:$0xff]
        %v10156 = vld [vmem:[%s349 + $0x180] sm:$0xff]
        %v10157 = vld [vmem:[%s349 + $0x188] sm:$0xff]
        %v10158 = vld [vmem:[%s349 + $0x190] sm:$0xff]
        %v10159 = vld [vmem:[%s349 + $0x198] sm:$0xff]
        %v10160 = vld [vmem:[%s349 + $0x1a0] sm:$0xff]
        %v10161 = vld [vmem:[%s349 + $0x1a8] sm:$0xff]
        %v10162 = vld [vmem:[%s349 + $0x1b0] sm:$0xff]
        %v10163 = vld [vmem:[%s349 + $0x1b8] sm:$0xff]
        %v10164 = vld [vmem:[%s349 + $0x1c0] sm:$0xff]
        %v10165 = vld [vmem:[%s349 + $0x1c8] sm:$0xff]
        %v10166 = vld [vmem:[%s349 + $0x1d0] sm:$0xff]
        %v10167 = vld [vmem:[%s349 + $0x1d8] sm:$0xff]
        %v10168 = vld [vmem:[%s349 + $0x1e0] sm:$0xff]
        %v10169 = vld [vmem:[%s349 + $0x1e8] sm:$0xff]
        %v10170 = vld [vmem:[%s349 + $0x1f0] sm:$0xff]
        %v10171 = vld [vmem:[%s349 + $0x1f8] sm:$0xff]
        %v10172 = vld [vmem:[%s349 + $0x200] sm:$0xff]
        %v10173 = vld [vmem:[%s349 + $0x208] sm:$0xff]
        %v10174 = vld [vmem:[%s349 + $0x210] sm:$0xff]
        %v10175 = vld [vmem:[%s349 + $0x218] sm:$0xff]
        %v10176 = vld [vmem:[%s349 + $0x220] sm:$0xff]
        %v10177 = vld [vmem:[%s349 + $0x228] sm:$0xff]
        %v10178 = vld [vmem:[%s349 + $0x230] sm:$0xff]
        %v10179 = vld [vmem:[%s349 + $0x238] sm:$0xff]
        %v10180 = vld [vmem:[%s349 + $0x240] sm:$0xff]
        %v10181 = vld [vmem:[%s349 + $0x248] sm:$0xff]
        %v10182 = vld [vmem:[%s349 + $0x250] sm:$0xff]
        %v10183 = vld [vmem:[%s349 + $0x258] sm:$0xff]
        %v10184 = vld [vmem:[%s349 + $0x260] sm:$0xff]
        %v10185 = vld [vmem:[%s349 + $0x268] sm:$0xff]
        %v10186 = vld [vmem:[%s349 + $0x270] sm:$0xff]
        %v10187 = vld [vmem:[%s349 + $0x278] sm:$0xff]
        %v10188 = vld [vmem:[%s349 + $0x280] sm:$0xff]
        %v10189 = vld [vmem:[%s349 + $0x288] sm:$0xff]
        %v10190 = vld [vmem:[%s349 + $0x290] sm:$0xff]
        %v10191 = vld [vmem:[%s349 + $0x298] sm:$0xff]
        %v10192 = vld [vmem:[%s349 + $0x2a0] sm:$0xff]
        %v10193 = vld [vmem:[%s349 + $0x2a8] sm:$0xff]
        %v10194 = vld [vmem:[%s349 + $0x2b0] sm:$0xff]
        %v10195 = vld [vmem:[%s349 + $0x2b8] sm:$0xff]
        %v10196 = vld [vmem:[%s349 + $0x2c0] sm:$0xff]
        %v10197 = vld [vmem:[%s349 + $0x2c8] sm:$0xff]
        %v10198 = vld [vmem:[%s349 + $0x2d0] sm:$0xff]
        %v10199 = vld [vmem:[%s349 + $0x2d8] sm:$0xff]
        %v10200 = vld [vmem:[%s349 + $0x2e0] sm:$0xff]
        %v10201 = vld [vmem:[%s349 + $0x2e8] sm:$0xff]
        %v10202 = vld [vmem:[%s349 + $0x2f0] sm:$0xff]
        %v10203 = vld [vmem:[%s349 + $0x2f8] sm:$0xff]
        %v10204 = vld [vmem:[%s349 + $0x300] sm:$0xff]
        %v10205 = vld [vmem:[%s349 + $0x308] sm:$0xff]
        %v10206 = vld [vmem:[%s349 + $0x310] sm:$0xff]
        %v10207 = vld [vmem:[%s349 + $0x318] sm:$0xff]
        %v10208 = vld [vmem:[%s349 + $0x320] sm:$0xff]
        %v10209 = vld [vmem:[%s349 + $0x328] sm:$0xff]
        %v10210 = vld [vmem:[%s349 + $0x330] sm:$0xff]
        %v10211 = vld [vmem:[%s349 + $0x338] sm:$0xff]
        %v10212 = vld [vmem:[%s349 + $0x340] sm:$0xff]
        %v10213 = vld [vmem:[%s349 + $0x348] sm:$0xff]
        %v10214 = vld [vmem:[%s349 + $0x350] sm:$0xff]
        %v10215 = vld [vmem:[%s349 + $0x358] sm:$0xff]
        %v10216 = vld [vmem:[%s349 + $0x360] sm:$0xff]
        %v10217 = vld [vmem:[%s349 + $0x368] sm:$0xff]
        %v10218 = vld [vmem:[%s349 + $0x370] sm:$0xff]
        %v10219 = vld [vmem:[%s349 + $0x378] sm:$0xff]
        %v10220 = vld [vmem:[%s349 + $0x380] sm:$0xff]
        %v10221 = vld [vmem:[%s349 + $0x388] sm:$0xff]
        %v10222 = vld [vmem:[%s349 + $0x390] sm:$0xff]
        %v10223 = vld [vmem:[%s349 + $0x398] sm:$0xff]
        %v10224 = vld [vmem:[%s349 + $0x3a0] sm:$0xff]
        %v10225 = vld [vmem:[%s349 + $0x3a8] sm:$0xff]
        %v10226 = vld [vmem:[%s349 + $0x3b0] sm:$0xff]
        %v10227 = vld [vmem:[%s349 + $0x3b8] sm:$0xff]
        %v10228 = vld [vmem:[%s349 + $0x3c0] sm:$0xff]
        %v10229 = vld [vmem:[%s349 + $0x3c8] sm:$0xff]
        %v10230 = vld [vmem:[%s349 + $0x3d0] sm:$0xff]
        %v10231 = vld [vmem:[%s349 + $0x3d8] sm:$0xff]
        %v10232 = vld [vmem:[%s349 + $0x3e0] sm:$0xff]
        %v10233 = vld [vmem:[%s349 + $0x3e8] sm:$0xff]
        %v10234 = vld [vmem:[%s349 + $0x3f0] sm:$0xff]
        %v10235 = vld [vmem:[%s349 + $0x3f8] sm:$0xff]
        %v10236 = vld [vmem:[%s349 + $0x400] sm:$0xff]
        %v10237 = vld [vmem:[%s349 + $0x408] sm:$0xff]
        %v10238 = vld [vmem:[%s349 + $0x410] sm:$0xff]
        %v10239 = vld [vmem:[%s349 + $0x418] sm:$0xff]
        %v10240 = vld [vmem:[%s349 + $0x420] sm:$0xff]
        %v10241 = vld [vmem:[%s349 + $0x428] sm:$0xff]
        %v10242 = vld [vmem:[%s349 + $0x430] sm:$0xff]
        %v10243 = vld [vmem:[%s349 + $0x438] sm:$0xff]
        %v10244 = vld [vmem:[%s349 + $0x440] sm:$0xff]
        %v10245 = vld [vmem:[%s349 + $0x448] sm:$0xff]
        %v10246 = vld [vmem:[%s349 + $0x450] sm:$0xff]
        %v10247 = vld [vmem:[%s349 + $0x458] sm:$0xff]
        %v10248 = vld [vmem:[%s349 + $0x460] sm:$0xff]
        %v10249 = vld [vmem:[%s349 + $0x468] sm:$0xff]
        %v10250 = vld [vmem:[%s349 + $0x470] sm:$0xff]
        %v10251 = vld [vmem:[%s349 + $0x478] sm:$0xff]
        %v10252 = vld [vmem:[%s349 + $0x480] sm:$0xff]
        %v10253 = vld [vmem:[%s349 + $0x488] sm:$0xff]
        %v10254 = vld [vmem:[%s349 + $0x490] sm:$0xff]
        %v10255 = vld [vmem:[%s349 + $0x498] sm:$0xff]
        %v10256 = vld [vmem:[%s349 + $0x4a0] sm:$0xff]
        %v10257 = vld [vmem:[%s349 + $0x4a8] sm:$0xff]
        %v10258 = vld [vmem:[%s349 + $0x4b0] sm:$0xff]
        %v10259 = vld [vmem:[%s349 + $0x4b8] sm:$0xff]
        %v10260 = vld [vmem:[%s349 + $0x4c0] sm:$0xff]
        %v10261 = vld [vmem:[%s349 + $0x4c8] sm:$0xff]
        %v10262 = vld [vmem:[%s349 + $0x4d0] sm:$0xff]
        %v10263 = vld [vmem:[%s349 + $0x4d8] sm:$0xff]
        %v10264 = vld [vmem:[%s349 + $0x4e0] sm:$0xff]
        %v10265 = vld [vmem:[%s349 + $0x4e8] sm:$0xff]
        %v10266 = vld [vmem:[%s349 + $0x4f0] sm:$0xff]
        %v10267 = vld [vmem:[%s349 + $0x4f8] sm:$0xff]
        %v10268 = vld [vmem:[%s349 + $0x500] sm:$0xff]
        %v10269 = vld [vmem:[%s349 + $0x508] sm:$0xff]
        %v10270 = vld [vmem:[%s349 + $0x510] sm:$0xff]
        %v10271 = vld [vmem:[%s349 + $0x518] sm:$0xff]
        %v10272 = vld [vmem:[%s349 + $0x520] sm:$0xff]
        %v10273 = vld [vmem:[%s349 + $0x528] sm:$0xff]
        %v10274 = vld [vmem:[%s349 + $0x530] sm:$0xff]
        %v10275 = vld [vmem:[%s349 + $0x538] sm:$0xff]
        %v10276 = vld [vmem:[%s349 + $0x540] sm:$0xff]
        %v10277 = vld [vmem:[%s349 + $0x548] sm:$0xff]
        %v10278 = vld [vmem:[%s349 + $0x550] sm:$0xff]
        %v10279 = vld [vmem:[%s349 + $0x558] sm:$0xff]
        %v10280 = vld [vmem:[%s349 + $0x560] sm:$0xff]
        %v10281 = vld [vmem:[%s349 + $0x568] sm:$0xff]
        %v10282 = vld [vmem:[%s349 + $0x570] sm:$0xff]
        %v10283 = vld [vmem:[%s349 + $0x578] sm:$0xff]
        %v10284 = vld [vmem:[%s349 + $0x580] sm:$0xff]
        %v10285 = vld [vmem:[%s349 + $0x588] sm:$0xff]
        %v10286 = vld [vmem:[%s349 + $0x590] sm:$0xff]
        %v10287 = vld [vmem:[%s349 + $0x598] sm:$0xff]
        %v10288 = vld [vmem:[%s349 + $0x5a0] sm:$0xff]
        %v10289 = vld [vmem:[%s349 + $0x5a8] sm:$0xff]
        %v10290 = vld [vmem:[%s349 + $0x5b0] sm:$0xff]
        %v10291 = vld [vmem:[%s349 + $0x5b8] sm:$0xff]
        %v10292 = vld [vmem:[%s349 + $0x5c0] sm:$0xff]
        %v10293 = vld [vmem:[%s349 + $0x5c8] sm:$0xff]
        %v10294 = vld [vmem:[%s349 + $0x5d0] sm:$0xff]
        %v10295 = vld [vmem:[%s349 + $0x5d8] sm:$0xff]
        %v10296 = vld [vmem:[%s349 + $0x5e0] sm:$0xff]
        %v10297 = vld [vmem:[%s349 + $0x5e8] sm:$0xff]
        %v10298 = vld [vmem:[%s349 + $0x5f0] sm:$0xff]
        %v10299 = vld [vmem:[%s349 + $0x5f8] sm:$0xff]
        %v10300 = vld [vmem:[%s349 + $0x600] sm:$0xff]
        %v10301 = vld [vmem:[%s349 + $0x608] sm:$0xff]
        %v10302 = vld [vmem:[%s349 + $0x610] sm:$0xff]
        %v10303 = vld [vmem:[%s349 + $0x618] sm:$0xff]
        %v10304 = vld [vmem:[%s349 + $0x620] sm:$0xff]
        %v10305 = vld [vmem:[%s349 + $0x628] sm:$0xff]
        %v10306 = vld [vmem:[%s349 + $0x630] sm:$0xff]
        %v10307 = vld [vmem:[%s349 + $0x638] sm:$0xff]
        %v10308 = vld [vmem:[%s349 + $0x640] sm:$0xff]
        %v10309 = vld [vmem:[%s349 + $0x648] sm:$0xff]
        %v10310 = vld [vmem:[%s349 + $0x650] sm:$0xff]
        %v10311 = vld [vmem:[%s349 + $0x658] sm:$0xff]
        %v10312 = vld [vmem:[%s349 + $0x660] sm:$0xff]
        %v10313 = vld [vmem:[%s349 + $0x668] sm:$0xff]
        %v10314 = vld [vmem:[%s349 + $0x670] sm:$0xff]
        %v10315 = vld [vmem:[%s349 + $0x678] sm:$0xff]
        %v10316 = vld [vmem:[%s349 + $0x680] sm:$0xff]
        %v10317 = vld [vmem:[%s349 + $0x688] sm:$0xff]
        %v10318 = vld [vmem:[%s349 + $0x690] sm:$0xff]
        %v10319 = vld [vmem:[%s349 + $0x698] sm:$0xff]
        %v10320 = vld [vmem:[%s349 + $0x6a0] sm:$0xff]
        %v10321 = vld [vmem:[%s349 + $0x6a8] sm:$0xff]
        %v10322 = vld [vmem:[%s349 + $0x6b0] sm:$0xff]
        %v10323 = vld [vmem:[%s349 + $0x6b8] sm:$0xff]
        %v10324 = vld [vmem:[%s349 + $0x6c0] sm:$0xff]
        %v10325 = vld [vmem:[%s349 + $0x6c8] sm:$0xff]
        %v10326 = vld [vmem:[%s349 + $0x6d0] sm:$0xff]
        %v10327 = vld [vmem:[%s349 + $0x6d8] sm:$0xff]
        %v10328 = vld [vmem:[%s349 + $0x6e0] sm:$0xff]
        %v10329 = vld [vmem:[%s349 + $0x6e8] sm:$0xff]
        %v10330 = vld [vmem:[%s349 + $0x6f0] sm:$0xff]
        %v10331 = vld [vmem:[%s349 + $0x6f8] sm:$0xff]
        %v10332 = vld [vmem:[%s349 + $0x700] sm:$0xff]
        %v10333 = vld [vmem:[%s349 + $0x708] sm:$0xff]
        %v10334 = vld [vmem:[%s349 + $0x710] sm:$0xff]
        %v10335 = vld [vmem:[%s349 + $0x718] sm:$0xff]
        %v10336 = vld [vmem:[%s349 + $0x720] sm:$0xff]
        %v10337 = vld [vmem:[%s349 + $0x728] sm:$0xff]
        %v10338 = vld [vmem:[%s349 + $0x730] sm:$0xff]
        %v10339 = vld [vmem:[%s349 + $0x738] sm:$0xff]
        %v10340 = vld [vmem:[%s349 + $0x740] sm:$0xff]
        %v10341 = vld [vmem:[%s349 + $0x748] sm:$0xff]
        %v10342 = vld [vmem:[%s349 + $0x750] sm:$0xff]
        %v10343 = vld [vmem:[%s349 + $0x758] sm:$0xff]
        %v10344 = vld [vmem:[%s349 + $0x760] sm:$0xff]
        %v10345 = vld [vmem:[%s349 + $0x768] sm:$0xff]
        %v10346 = vld [vmem:[%s349 + $0x770] sm:$0xff]
        %v10347 = vld [vmem:[%s349 + $0x778] sm:$0xff]
        %v10348 = vld [vmem:[%s349 + $0x780] sm:$0xff]
        %v10349 = vld [vmem:[%s349 + $0x788] sm:$0xff]
        %v10350 = vld [vmem:[%s349 + $0x790] sm:$0xff]
        %v10351 = vld [vmem:[%s349 + $0x798] sm:$0xff]
        %v10352 = vld [vmem:[%s349 + $0x7a0] sm:$0xff]
        %v10353 = vld [vmem:[%s349 + $0x7a8] sm:$0xff]
        %v10354 = vld [vmem:[%s349 + $0x7b0] sm:$0xff]
        %v10355 = vld [vmem:[%s349 + $0x7b8] sm:$0xff]
        %v10356 = vld [vmem:[%s349 + $0x7c0] sm:$0xff]
        %v10357 = vld [vmem:[%s349 + $0x7c8] sm:$0xff]
        %v10358 = vld [vmem:[%s349 + $0x7d0] sm:$0xff]
        %v10359 = vld [vmem:[%s349 + $0x7d8] sm:$0xff]
        %v10360 = vld [vmem:[%s349 + $0x7e0] sm:$0xff]
        %v10361 = vld [vmem:[%s349 + $0x7e8] sm:$0xff]
        %v10362 = vld [vmem:[%s349 + $0x7f0] sm:$0xff]
        %v10363 = vld [vmem:[%s349 + $0x7f8] sm:$0xff]
        %v10620 = vunpack.c.l.b16 %v10108
        %v10621 = vunpack.c.h.b16 %v10108
        %v10622 = vunpack.c.l.b16 %v10109
        %v10623 = vunpack.c.h.b16 %v10109
        %v10624 = vunpack.c.l.b16 %v10110
        %v10625 = vunpack.c.h.b16 %v10110
        %v10626 = vunpack.c.l.b16 %v10111
        %v10627 = vunpack.c.h.b16 %v10111
        %v10628 = vunpack.c.l.b16 %v10112
        %v10629 = vunpack.c.h.b16 %v10112
        %v10630 = vunpack.c.l.b16 %v10113
        %v10631 = vunpack.c.h.b16 %v10113
        %v10632 = vunpack.c.l.b16 %v10114
        %v10633 = vunpack.c.h.b16 %v10114
        %v10634 = vunpack.c.l.b16 %v10115
        %v10635 = vunpack.c.h.b16 %v10115
        %v10636 = vunpack.c.l.b16 %v10116
        %v10637 = vunpack.c.h.b16 %v10116
        %v10638 = vunpack.c.l.b16 %v10117
        %v10639 = vunpack.c.h.b16 %v10117
        %v10640 = vunpack.c.l.b16 %v10118
        %v10641 = vunpack.c.h.b16 %v10118
        %v10642 = vunpack.c.l.b16 %v10119
        %v10643 = vunpack.c.h.b16 %v10119
        %v10644 = vunpack.c.l.b16 %v10120
        %v10645 = vunpack.c.h.b16 %v10120
        %v10646 = vunpack.c.l.b16 %v10121
        %v10647 = vunpack.c.h.b16 %v10121
        %v10648 = vunpack.c.l.b16 %v10122
        %v10649 = vunpack.c.h.b16 %v10122
        %v10650 = vunpack.c.l.b16 %v10123
        %v10651 = vunpack.c.h.b16 %v10123
        %v10652 = vunpack.c.l.b16 %v10124
        %v10653 = vunpack.c.h.b16 %v10124
        %v10654 = vunpack.c.l.b16 %v10125
        %v10655 = vunpack.c.h.b16 %v10125
        %v10656 = vunpack.c.l.b16 %v10126
        %v10657 = vunpack.c.h.b16 %v10126
        %v10658 = vunpack.c.l.b16 %v10127
        %v10659 = vunpack.c.h.b16 %v10127
        %v10660 = vunpack.c.l.b16 %v10128
        %v10661 = vunpack.c.h.b16 %v10128
        %v10662 = vunpack.c.l.b16 %v10129
        %v10663 = vunpack.c.h.b16 %v10129
        %v10664 = vunpack.c.l.b16 %v10130
        %v10665 = vunpack.c.h.b16 %v10130
        %v10666 = vunpack.c.l.b16 %v10131
        %v10667 = vunpack.c.h.b16 %v10131
        %v10668 = vunpack.c.l.b16 %v10132
        %v10669 = vunpack.c.h.b16 %v10132
        %v10670 = vunpack.c.l.b16 %v10133
        %v10671 = vunpack.c.h.b16 %v10133
        %v10672 = vunpack.c.l.b16 %v10134
        %v10673 = vunpack.c.h.b16 %v10134
        %v10674 = vunpack.c.l.b16 %v10135
        %v10675 = vunpack.c.h.b16 %v10135
        %v10676 = vunpack.c.l.b16 %v10136
        %v10677 = vunpack.c.h.b16 %v10136
        %v10678 = vunpack.c.l.b16 %v10137
        %v10679 = vunpack.c.h.b16 %v10137
        %v10680 = vunpack.c.l.b16 %v10138
        %v10681 = vunpack.c.h.b16 %v10138
        %v10682 = vunpack.c.l.b16 %v10139
        %v10683 = vunpack.c.h.b16 %v10139
        %v10684 = vunpack.c.l.b16 %v10140
        %v10685 = vunpack.c.h.b16 %v10140
        %v10686 = vunpack.c.l.b16 %v10141
        %v10687 = vunpack.c.h.b16 %v10141
        %v10688 = vunpack.c.l.b16 %v10142
        %v10689 = vunpack.c.h.b16 %v10142
        %v10690 = vunpack.c.l.b16 %v10143
        %v10691 = vunpack.c.h.b16 %v10143
        %v10692 = vunpack.c.l.b16 %v10144
        %v10693 = vunpack.c.h.b16 %v10144
        %v10694 = vunpack.c.l.b16 %v10145
        %v10695 = vunpack.c.h.b16 %v10145
        %v10696 = vunpack.c.l.b16 %v10146
        %v10697 = vunpack.c.h.b16 %v10146
        %v10698 = vunpack.c.l.b16 %v10147
        %v10699 = vunpack.c.h.b16 %v10147
        %v10700 = vunpack.c.l.b16 %v10148
        %v10701 = vunpack.c.h.b16 %v10148
        %v10702 = vunpack.c.l.b16 %v10149
        %v10703 = vunpack.c.h.b16 %v10149
        %v10704 = vunpack.c.l.b16 %v10150
        %v10705 = vunpack.c.h.b16 %v10150
        %v10706 = vunpack.c.l.b16 %v10151
        %v10707 = vunpack.c.h.b16 %v10151
        %v10708 = vunpack.c.l.b16 %v10152
        %v10709 = vunpack.c.h.b16 %v10152
        %v10710 = vunpack.c.l.b16 %v10153
        %v10711 = vunpack.c.h.b16 %v10153
        %v10712 = vunpack.c.l.b16 %v10154
        %v10713 = vunpack.c.h.b16 %v10154
        %v10714 = vunpack.c.l.b16 %v10155
        %v10715 = vunpack.c.h.b16 %v10155
        %v10716 = vunpack.c.l.b16 %v10156
        %v10717 = vunpack.c.h.b16 %v10156
        %v10718 = vunpack.c.l.b16 %v10157
        %v10719 = vunpack.c.h.b16 %v10157
        %v10720 = vunpack.c.l.b16 %v10158
        %v10721 = vunpack.c.h.b16 %v10158
        %v10722 = vunpack.c.l.b16 %v10159
        %v10723 = vunpack.c.h.b16 %v10159
        %v10724 = vunpack.c.l.b16 %v10160
        %v10725 = vunpack.c.h.b16 %v10160
        %v10726 = vunpack.c.l.b16 %v10161
        %v10727 = vunpack.c.h.b16 %v10161
        %v10728 = vunpack.c.l.b16 %v10162
        %v10729 = vunpack.c.h.b16 %v10162
        %v10730 = vunpack.c.l.b16 %v10163
        %v10731 = vunpack.c.h.b16 %v10163
        %v10732 = vunpack.c.l.b16 %v10164
        %v10733 = vunpack.c.h.b16 %v10164
        %v10734 = vunpack.c.l.b16 %v10165
        %v10735 = vunpack.c.h.b16 %v10165
        %v10736 = vunpack.c.l.b16 %v10166
        %v10737 = vunpack.c.h.b16 %v10166
        %v10738 = vunpack.c.l.b16 %v10167
        %v10739 = vunpack.c.h.b16 %v10167
        %v10740 = vunpack.c.l.b16 %v10168
        %v10741 = vunpack.c.h.b16 %v10168
        %v10742 = vunpack.c.l.b16 %v10169
        %v10743 = vunpack.c.h.b16 %v10169
        %v10744 = vunpack.c.l.b16 %v10170
        %v10745 = vunpack.c.h.b16 %v10170
        %v10746 = vunpack.c.l.b16 %v10171
        %v10747 = vunpack.c.h.b16 %v10171
        %v10748 = vunpack.c.l.b16 %v10172
        %v10749 = vunpack.c.h.b16 %v10172
        %v10750 = vunpack.c.l.b16 %v10173
        %v10751 = vunpack.c.h.b16 %v10173
        %v10752 = vunpack.c.l.b16 %v10174
        %v10753 = vunpack.c.h.b16 %v10174
        %v10754 = vunpack.c.l.b16 %v10175
        %v10755 = vunpack.c.h.b16 %v10175
        %v10756 = vunpack.c.l.b16 %v10176
        %v10757 = vunpack.c.h.b16 %v10176
        %v10758 = vunpack.c.l.b16 %v10177
        %v10759 = vunpack.c.h.b16 %v10177
        %v10760 = vunpack.c.l.b16 %v10178
        %v10761 = vunpack.c.h.b16 %v10178
        %v10762 = vunpack.c.l.b16 %v10179
        %v10763 = vunpack.c.h.b16 %v10179
        %v10764 = vunpack.c.l.b16 %v10180
        %v10765 = vunpack.c.h.b16 %v10180
        %v10766 = vunpack.c.l.b16 %v10181
        %v10767 = vunpack.c.h.b16 %v10181
        %v10768 = vunpack.c.l.b16 %v10182
        %v10769 = vunpack.c.h.b16 %v10182
        %v10770 = vunpack.c.l.b16 %v10183
        %v10771 = vunpack.c.h.b16 %v10183
        %v10772 = vunpack.c.l.b16 %v10184
        %v10773 = vunpack.c.h.b16 %v10184
        %v10774 = vunpack.c.l.b16 %v10185
        %v10775 = vunpack.c.h.b16 %v10185
        %v10776 = vunpack.c.l.b16 %v10186
        %v10777 = vunpack.c.h.b16 %v10186
        %v10778 = vunpack.c.l.b16 %v10187
        %v10779 = vunpack.c.h.b16 %v10187
        %v10780 = vunpack.c.l.b16 %v10188
        %v10781 = vunpack.c.h.b16 %v10188
        %v10782 = vunpack.c.l.b16 %v10189
        %v10783 = vunpack.c.h.b16 %v10189
        %v10784 = vunpack.c.l.b16 %v10190
        %v10785 = vunpack.c.h.b16 %v10190
        %v10786 = vunpack.c.l.b16 %v10191
        %v10787 = vunpack.c.h.b16 %v10191
        %v10788 = vunpack.c.l.b16 %v10192
        %v10789 = vunpack.c.h.b16 %v10192
        %v10790 = vunpack.c.l.b16 %v10193
        %v10791 = vunpack.c.h.b16 %v10193
        %v10792 = vunpack.c.l.b16 %v10194
        %v10793 = vunpack.c.h.b16 %v10194
        %v10794 = vunpack.c.l.b16 %v10195
        %v10795 = vunpack.c.h.b16 %v10195
        %v10796 = vunpack.c.l.b16 %v10196
        %v10797 = vunpack.c.h.b16 %v10196
        %v10798 = vunpack.c.l.b16 %v10197
        %v10799 = vunpack.c.h.b16 %v10197
        %v10800 = vunpack.c.l.b16 %v10198
        %v10801 = vunpack.c.h.b16 %v10198
        %v10802 = vunpack.c.l.b16 %v10199
        %v10803 = vunpack.c.h.b16 %v10199
        %v10804 = vunpack.c.l.b16 %v10200
        %v10805 = vunpack.c.h.b16 %v10200
        %v10806 = vunpack.c.l.b16 %v10201
        %v10807 = vunpack.c.h.b16 %v10201
        %v10808 = vunpack.c.l.b16 %v10202
        %v10809 = vunpack.c.h.b16 %v10202
        %v10810 = vunpack.c.l.b16 %v10203
        %v10811 = vunpack.c.h.b16 %v10203
        %v10812 = vunpack.c.l.b16 %v10204
        %v10813 = vunpack.c.h.b16 %v10204
        %v10814 = vunpack.c.l.b16 %v10205
        %v10815 = vunpack.c.h.b16 %v10205
        %v10816 = vunpack.c.l.b16 %v10206
        %v10817 = vunpack.c.h.b16 %v10206
        %v10818 = vunpack.c.l.b16 %v10207
        %v10819 = vunpack.c.h.b16 %v10207
        %v10820 = vunpack.c.l.b16 %v10208
        %v10821 = vunpack.c.h.b16 %v10208
        %v10822 = vunpack.c.l.b16 %v10209
        %v10823 = vunpack.c.h.b16 %v10209
        %v10824 = vunpack.c.l.b16 %v10210
        %v10825 = vunpack.c.h.b16 %v10210
        %v10826 = vunpack.c.l.b16 %v10211
        %v10827 = vunpack.c.h.b16 %v10211
        %v10828 = vunpack.c.l.b16 %v10212
        %v10829 = vunpack.c.h.b16 %v10212
        %v10830 = vunpack.c.l.b16 %v10213
        %v10831 = vunpack.c.h.b16 %v10213
        %v10832 = vunpack.c.l.b16 %v10214
        %v10833 = vunpack.c.h.b16 %v10214
        %v10834 = vunpack.c.l.b16 %v10215
        %v10835 = vunpack.c.h.b16 %v10215
        %v10836 = vunpack.c.l.b16 %v10216
        %v10837 = vunpack.c.h.b16 %v10216
        %v10838 = vunpack.c.l.b16 %v10217
        %v10839 = vunpack.c.h.b16 %v10217
        %v10840 = vunpack.c.l.b16 %v10218
        %v10841 = vunpack.c.h.b16 %v10218
        %v10842 = vunpack.c.l.b16 %v10219
        %v10843 = vunpack.c.h.b16 %v10219
        %v10844 = vunpack.c.l.b16 %v10220
        %v10845 = vunpack.c.h.b16 %v10220
        %v10846 = vunpack.c.l.b16 %v10221
        %v10847 = vunpack.c.h.b16 %v10221
        %v10848 = vunpack.c.l.b16 %v10222
        %v10849 = vunpack.c.h.b16 %v10222
        %v10850 = vunpack.c.l.b16 %v10223
        %v10851 = vunpack.c.h.b16 %v10223
        %v10852 = vunpack.c.l.b16 %v10224
        %v10853 = vunpack.c.h.b16 %v10224
        %v10854 = vunpack.c.l.b16 %v10225
        %v10855 = vunpack.c.h.b16 %v10225
        %v10856 = vunpack.c.l.b16 %v10226
        %v10857 = vunpack.c.h.b16 %v10226
        %v10858 = vunpack.c.l.b16 %v10227
        %v10859 = vunpack.c.h.b16 %v10227
        %v10860 = vunpack.c.l.b16 %v10228
        %v10861 = vunpack.c.h.b16 %v10228
        %v10862 = vunpack.c.l.b16 %v10229
        %v10863 = vunpack.c.h.b16 %v10229
        %v10864 = vunpack.c.l.b16 %v10230
        %v10865 = vunpack.c.h.b16 %v10230
        %v10866 = vunpack.c.l.b16 %v10231
        %v10867 = vunpack.c.h.b16 %v10231
        %v10868 = vunpack.c.l.b16 %v10232
        %v10869 = vunpack.c.h.b16 %v10232
        %v10870 = vunpack.c.l.b16 %v10233
        %v10871 = vunpack.c.h.b16 %v10233
        %v10872 = vunpack.c.l.b16 %v10234
        %v10873 = vunpack.c.h.b16 %v10234
        %v10874 = vunpack.c.l.b16 %v10235
        %v10875 = vunpack.c.h.b16 %v10235
        %v10876 = vunpack.c.l.b16 %v10236
        %v10877 = vunpack.c.h.b16 %v10236
        %v10878 = vunpack.c.l.b16 %v10237
        %v10879 = vunpack.c.h.b16 %v10237
        %v10880 = vunpack.c.l.b16 %v10238
        %v10881 = vunpack.c.h.b16 %v10238
        %v10882 = vunpack.c.l.b16 %v10239
        %v10883 = vunpack.c.h.b16 %v10239
        %v10884 = vunpack.c.l.b16 %v10240
        %v10885 = vunpack.c.h.b16 %v10240
        %v10886 = vunpack.c.l.b16 %v10241
        %v10887 = vunpack.c.h.b16 %v10241
        %v10888 = vunpack.c.l.b16 %v10242
        %v10889 = vunpack.c.h.b16 %v10242
        %v10890 = vunpack.c.l.b16 %v10243
        %v10891 = vunpack.c.h.b16 %v10243
        %v10892 = vunpack.c.l.b16 %v10244
        %v10893 = vunpack.c.h.b16 %v10244
        %v10894 = vunpack.c.l.b16 %v10245
        %v10895 = vunpack.c.h.b16 %v10245
        %v10896 = vunpack.c.l.b16 %v10246
        %v10897 = vunpack.c.h.b16 %v10246
        %v10898 = vunpack.c.l.b16 %v10247
        %v10899 = vunpack.c.h.b16 %v10247
        %v10900 = vunpack.c.l.b16 %v10248
        %v10901 = vunpack.c.h.b16 %v10248
        %v10902 = vunpack.c.l.b16 %v10249
        %v10903 = vunpack.c.h.b16 %v10249
        %v10904 = vunpack.c.l.b16 %v10250
        %v10905 = vunpack.c.h.b16 %v10250
        %v10906 = vunpack.c.l.b16 %v10251
        %v10907 = vunpack.c.h.b16 %v10251
        %v10908 = vunpack.c.l.b16 %v10252
        %v10909 = vunpack.c.h.b16 %v10252
        %v10910 = vunpack.c.l.b16 %v10253
        %v10911 = vunpack.c.h.b16 %v10253
        %v10912 = vunpack.c.l.b16 %v10254
        %v10913 = vunpack.c.h.b16 %v10254
        %v10914 = vunpack.c.l.b16 %v10255
        %v10915 = vunpack.c.h.b16 %v10255
        %v10916 = vunpack.c.l.b16 %v10256
        %v10917 = vunpack.c.h.b16 %v10256
        %v10918 = vunpack.c.l.b16 %v10257
        %v10919 = vunpack.c.h.b16 %v10257
        %v10920 = vunpack.c.l.b16 %v10258
        %v10921 = vunpack.c.h.b16 %v10258
        %v10922 = vunpack.c.l.b16 %v10259
        %v10923 = vunpack.c.h.b16 %v10259
        %v10924 = vunpack.c.l.b16 %v10260
        %v10925 = vunpack.c.h.b16 %v10260
        %v10926 = vunpack.c.l.b16 %v10261
        %v10927 = vunpack.c.h.b16 %v10261
        %v10928 = vunpack.c.l.b16 %v10262
        %v10929 = vunpack.c.h.b16 %v10262
        %v10930 = vunpack.c.l.b16 %v10263
        %v10931 = vunpack.c.h.b16 %v10263
        %v10932 = vunpack.c.l.b16 %v10264
        %v10933 = vunpack.c.h.b16 %v10264
        %v10934 = vunpack.c.l.b16 %v10265
        %v10935 = vunpack.c.h.b16 %v10265
        %v10936 = vunpack.c.l.b16 %v10266
        %v10937 = vunpack.c.h.b16 %v10266
        %v10938 = vunpack.c.l.b16 %v10267
        %v10939 = vunpack.c.h.b16 %v10267
        %v10940 = vunpack.c.l.b16 %v10268
        %v10941 = vunpack.c.h.b16 %v10268
        %v10942 = vunpack.c.l.b16 %v10269
        %v10943 = vunpack.c.h.b16 %v10269
        %v10944 = vunpack.c.l.b16 %v10270
        %v10945 = vunpack.c.h.b16 %v10270
        %v10946 = vunpack.c.l.b16 %v10271
        %v10947 = vunpack.c.h.b16 %v10271
        %v10948 = vunpack.c.l.b16 %v10272
        %v10949 = vunpack.c.h.b16 %v10272
        %v10950 = vunpack.c.l.b16 %v10273
        %v10951 = vunpack.c.h.b16 %v10273
        %v10952 = vunpack.c.l.b16 %v10274
        %v10953 = vunpack.c.h.b16 %v10274
        %v10954 = vunpack.c.l.b16 %v10275
        %v10955 = vunpack.c.h.b16 %v10275
        %v10956 = vunpack.c.l.b16 %v10276
        %v10957 = vunpack.c.h.b16 %v10276
        %v10958 = vunpack.c.l.b16 %v10277
        %v10959 = vunpack.c.h.b16 %v10277
        %v10960 = vunpack.c.l.b16 %v10278
        %v10961 = vunpack.c.h.b16 %v10278
        %v10962 = vunpack.c.l.b16 %v10279
        %v10963 = vunpack.c.h.b16 %v10279
        %v10964 = vunpack.c.l.b16 %v10280
        %v10965 = vunpack.c.h.b16 %v10280
        %v10966 = vunpack.c.l.b16 %v10281
        %v10967 = vunpack.c.h.b16 %v10281
        %v10968 = vunpack.c.l.b16 %v10282
        %v10969 = vunpack.c.h.b16 %v10282
        %v10970 = vunpack.c.l.b16 %v10283
        %v10971 = vunpack.c.h.b16 %v10283
        %v10972 = vunpack.c.l.b16 %v10284
        %v10973 = vunpack.c.h.b16 %v10284
        %v10974 = vunpack.c.l.b16 %v10285
        %v10975 = vunpack.c.h.b16 %v10285
        %v10976 = vunpack.c.l.b16 %v10286
        %v10977 = vunpack.c.h.b16 %v10286
        %v10978 = vunpack.c.l.b16 %v10287
        %v10979 = vunpack.c.h.b16 %v10287
        %v10980 = vunpack.c.l.b16 %v10288
        %v10981 = vunpack.c.h.b16 %v10288
        %v10982 = vunpack.c.l.b16 %v10289
        %v10983 = vunpack.c.h.b16 %v10289
        %v10984 = vunpack.c.l.b16 %v10290
        %v10985 = vunpack.c.h.b16 %v10290
        %v10986 = vunpack.c.l.b16 %v10291
        %v10987 = vunpack.c.h.b16 %v10291
        %v10988 = vunpack.c.l.b16 %v10292
        %v10989 = vunpack.c.h.b16 %v10292
        %v10990 = vunpack.c.l.b16 %v10293
        %v10991 = vunpack.c.h.b16 %v10293
        %v10992 = vunpack.c.l.b16 %v10294
        %v10993 = vunpack.c.h.b16 %v10294
        %v10994 = vunpack.c.l.b16 %v10295
        %v10995 = vunpack.c.h.b16 %v10295
        %v10996 = vunpack.c.l.b16 %v10296
        %v10997 = vunpack.c.h.b16 %v10296
        %v10998 = vunpack.c.l.b16 %v10297
        %v10999 = vunpack.c.h.b16 %v10297
        %v11000 = vunpack.c.l.b16 %v10298
        %v11001 = vunpack.c.h.b16 %v10298
        %v11002 = vunpack.c.l.b16 %v10299
        %v11003 = vunpack.c.h.b16 %v10299
        %v11004 = vunpack.c.l.b16 %v10300
        %v11005 = vunpack.c.h.b16 %v10300
        %v11006 = vunpack.c.l.b16 %v10301
        %v11007 = vunpack.c.h.b16 %v10301
        %v11008 = vunpack.c.l.b16 %v10302
        %v11009 = vunpack.c.h.b16 %v10302
        %v11010 = vunpack.c.l.b16 %v10303
        %v11011 = vunpack.c.h.b16 %v10303
        %v11012 = vunpack.c.l.b16 %v10304
        %v11013 = vunpack.c.h.b16 %v10304
        %v11014 = vunpack.c.l.b16 %v10305
        %v11015 = vunpack.c.h.b16 %v10305
        %v11016 = vunpack.c.l.b16 %v10306
        %v11017 = vunpack.c.h.b16 %v10306
        %v11018 = vunpack.c.l.b16 %v10307
        %v11019 = vunpack.c.h.b16 %v10307
        %v11020 = vunpack.c.l.b16 %v10308
        %v11021 = vunpack.c.h.b16 %v10308
        %v11022 = vunpack.c.l.b16 %v10309
        %v11023 = vunpack.c.h.b16 %v10309
        %v11024 = vunpack.c.l.b16 %v10310
        %v11025 = vunpack.c.h.b16 %v10310
        %v11026 = vunpack.c.l.b16 %v10311
        %v11027 = vunpack.c.h.b16 %v10311
        %v11028 = vunpack.c.l.b16 %v10312
        %v11029 = vunpack.c.h.b16 %v10312
        %v11030 = vunpack.c.l.b16 %v10313
        %v11031 = vunpack.c.h.b16 %v10313
        %v11032 = vunpack.c.l.b16 %v10314
        %v11033 = vunpack.c.h.b16 %v10314
        %v11034 = vunpack.c.l.b16 %v10315
        %v11035 = vunpack.c.h.b16 %v10315
        %v11036 = vunpack.c.l.b16 %v10316
        %v11037 = vunpack.c.h.b16 %v10316
        %v11038 = vunpack.c.l.b16 %v10317
        %v11039 = vunpack.c.h.b16 %v10317
        %v11040 = vunpack.c.l.b16 %v10318
        %v11041 = vunpack.c.h.b16 %v10318
        %v11042 = vunpack.c.l.b16 %v10319
        %v11043 = vunpack.c.h.b16 %v10319
        %v11044 = vunpack.c.l.b16 %v10320
        %v11045 = vunpack.c.h.b16 %v10320
        %v11046 = vunpack.c.l.b16 %v10321
        %v11047 = vunpack.c.h.b16 %v10321
        %v11048 = vunpack.c.l.b16 %v10322
        %v11049 = vunpack.c.h.b16 %v10322
        %v11050 = vunpack.c.l.b16 %v10323
        %v11051 = vunpack.c.h.b16 %v10323
        %v11052 = vunpack.c.l.b16 %v10324
        %v11053 = vunpack.c.h.b16 %v10324
        %v11054 = vunpack.c.l.b16 %v10325
        %v11055 = vunpack.c.h.b16 %v10325
        %v11056 = vunpack.c.l.b16 %v10326
        %v11057 = vunpack.c.h.b16 %v10326
        %v11058 = vunpack.c.l.b16 %v10327
        %v11059 = vunpack.c.h.b16 %v10327
        %v11060 = vunpack.c.l.b16 %v10328
        %v11061 = vunpack.c.h.b16 %v10328
        %v11062 = vunpack.c.l.b16 %v10329
        %v11063 = vunpack.c.h.b16 %v10329
        %v11064 = vunpack.c.l.b16 %v10330
        %v11065 = vunpack.c.h.b16 %v10330
        %v11066 = vunpack.c.l.b16 %v10331
        %v11067 = vunpack.c.h.b16 %v10331
        %v11068 = vunpack.c.l.b16 %v10332
        %v11069 = vunpack.c.h.b16 %v10332
        %v11070 = vunpack.c.l.b16 %v10333
        %v11071 = vunpack.c.h.b16 %v10333
        %v11072 = vunpack.c.l.b16 %v10334
        %v11073 = vunpack.c.h.b16 %v10334
        %v11074 = vunpack.c.l.b16 %v10335
        %v11075 = vunpack.c.h.b16 %v10335
        %v11076 = vunpack.c.l.b16 %v10336
        %v11077 = vunpack.c.h.b16 %v10336
        %v11078 = vunpack.c.l.b16 %v10337
        %v11079 = vunpack.c.h.b16 %v10337
        %v11080 = vunpack.c.l.b16 %v10338
        %v11081 = vunpack.c.h.b16 %v10338
        %v11082 = vunpack.c.l.b16 %v10339
        %v11083 = vunpack.c.h.b16 %v10339
        %v11084 = vunpack.c.l.b16 %v10340
        %v11085 = vunpack.c.h.b16 %v10340
        %v11086 = vunpack.c.l.b16 %v10341
        %v11087 = vunpack.c.h.b16 %v10341
        %v11088 = vunpack.c.l.b16 %v10342
        %v11089 = vunpack.c.h.b16 %v10342
        %v11090 = vunpack.c.l.b16 %v10343
        %v11091 = vunpack.c.h.b16 %v10343
        %v11092 = vunpack.c.l.b16 %v10344
        %v11093 = vunpack.c.h.b16 %v10344
        %v11094 = vunpack.c.l.b16 %v10345
        %v11095 = vunpack.c.h.b16 %v10345
        %v11096 = vunpack.c.l.b16 %v10346
        %v11097 = vunpack.c.h.b16 %v10346
        %v11098 = vunpack.c.l.b16 %v10347
        %v11099 = vunpack.c.h.b16 %v10347
        %v11100 = vunpack.c.l.b16 %v10348
        %v11101 = vunpack.c.h.b16 %v10348
        %v11102 = vunpack.c.l.b16 %v10349
        %v11103 = vunpack.c.h.b16 %v10349
        %v11104 = vunpack.c.l.b16 %v10350
        %v11105 = vunpack.c.h.b16 %v10350
        %v11106 = vunpack.c.l.b16 %v10351
        %v11107 = vunpack.c.h.b16 %v10351
        %v11108 = vunpack.c.l.b16 %v10352
        %v11109 = vunpack.c.h.b16 %v10352
        %v11110 = vunpack.c.l.b16 %v10353
        %v11111 = vunpack.c.h.b16 %v10353
        %v11112 = vunpack.c.l.b16 %v10354
        %v11113 = vunpack.c.h.b16 %v10354
        %v11114 = vunpack.c.l.b16 %v10355
        %v11115 = vunpack.c.h.b16 %v10355
        %v11116 = vunpack.c.l.b16 %v10356
        %v11117 = vunpack.c.h.b16 %v10356
        %v11118 = vunpack.c.l.b16 %v10357
        %v11119 = vunpack.c.h.b16 %v10357
        %v11120 = vunpack.c.l.b16 %v10358
        %v11121 = vunpack.c.h.b16 %v10358
        %v11122 = vunpack.c.l.b16 %v10359
        %v11123 = vunpack.c.h.b16 %v10359
        %v11124 = vunpack.c.l.b16 %v10360
        %v11125 = vunpack.c.h.b16 %v10360
        %v11126 = vunpack.c.l.b16 %v10361
        %v11127 = vunpack.c.h.b16 %v10361
        %v11128 = vunpack.c.l.b16 %v10362
        %v11129 = vunpack.c.h.b16 %v10362
        %v11130 = vunpack.c.l.b16 %v10363
        %v11131 = vunpack.c.h.b16 %v10363
        %v11132 = vpack.c.b16 %v10622, %v10620
        %v11133 = vpack.c.b16 %v10623, %v10621
        %v11134 = vpack.c.b16 %v10626, %v10624
        %v11135 = vpack.c.b16 %v10627, %v10625
        %v11136 = vpack.c.b16 %v10630, %v10628
        %v11137 = vpack.c.b16 %v10631, %v10629
        %v11138 = vpack.c.b16 %v10634, %v10632
        %v11139 = vpack.c.b16 %v10635, %v10633
        %v11140 = vpack.c.b16 %v10638, %v10636
        %v11141 = vpack.c.b16 %v10639, %v10637
        %v11142 = vpack.c.b16 %v10642, %v10640
        %v11143 = vpack.c.b16 %v10643, %v10641
        %v11144 = vpack.c.b16 %v10646, %v10644
        %v11145 = vpack.c.b16 %v10647, %v10645
        %v11146 = vpack.c.b16 %v10650, %v10648
        %v11147 = vpack.c.b16 %v10651, %v10649
        %v11148 = vpack.c.b16 %v10654, %v10652
        %v11149 = vpack.c.b16 %v10655, %v10653
        %v11150 = vpack.c.b16 %v10658, %v10656
        %v11151 = vpack.c.b16 %v10659, %v10657
        %v11152 = vpack.c.b16 %v10662, %v10660
        %v11153 = vpack.c.b16 %v10663, %v10661
        %v11154 = vpack.c.b16 %v10666, %v10664
        %v11155 = vpack.c.b16 %v10667, %v10665
        %v11156 = vpack.c.b16 %v10670, %v10668
        %v11157 = vpack.c.b16 %v10671, %v10669
        %v11158 = vpack.c.b16 %v10674, %v10672
        %v11159 = vpack.c.b16 %v10675, %v10673
        %v11160 = vpack.c.b16 %v10678, %v10676
        %v11161 = vpack.c.b16 %v10679, %v10677
        %v11162 = vpack.c.b16 %v10682, %v10680
        %v11163 = vpack.c.b16 %v10683, %v10681
        %v11164 = vpack.c.b16 %v10686, %v10684
        %v11165 = vpack.c.b16 %v10687, %v10685
        %v11166 = vpack.c.b16 %v10690, %v10688
        %v11167 = vpack.c.b16 %v10691, %v10689
        %v11168 = vpack.c.b16 %v10694, %v10692
        %v11169 = vpack.c.b16 %v10695, %v10693
        %v11170 = vpack.c.b16 %v10698, %v10696
        %v11171 = vpack.c.b16 %v10699, %v10697
        %v11172 = vpack.c.b16 %v10702, %v10700
        %v11173 = vpack.c.b16 %v10703, %v10701
        %v11174 = vpack.c.b16 %v10706, %v10704
        %v11175 = vpack.c.b16 %v10707, %v10705
        %v11176 = vpack.c.b16 %v10710, %v10708
        %v11177 = vpack.c.b16 %v10711, %v10709
        %v11178 = vpack.c.b16 %v10714, %v10712
        %v11179 = vpack.c.b16 %v10715, %v10713
        %v11180 = vpack.c.b16 %v10718, %v10716
        %v11181 = vpack.c.b16 %v10719, %v10717
        %v11182 = vpack.c.b16 %v10722, %v10720
        %v11183 = vpack.c.b16 %v10723, %v10721
        %v11184 = vpack.c.b16 %v10726, %v10724
        %v11185 = vpack.c.b16 %v10727, %v10725
        %v11186 = vpack.c.b16 %v10730, %v10728
        %v11187 = vpack.c.b16 %v10731, %v10729
        %v11188 = vpack.c.b16 %v10734, %v10732
        %v11189 = vpack.c.b16 %v10735, %v10733
        %v11190 = vpack.c.b16 %v10738, %v10736
        %v11191 = vpack.c.b16 %v10739, %v10737
        %v11192 = vpack.c.b16 %v10742, %v10740
        %v11193 = vpack.c.b16 %v10743, %v10741
        %v11194 = vpack.c.b16 %v10746, %v10744
        %v11195 = vpack.c.b16 %v10747, %v10745
        %v11196 = vpack.c.b16 %v10750, %v10748
        %v11197 = vpack.c.b16 %v10751, %v10749
        %v11198 = vpack.c.b16 %v10754, %v10752
        %v11199 = vpack.c.b16 %v10755, %v10753
        %v11200 = vpack.c.b16 %v10758, %v10756
        %v11201 = vpack.c.b16 %v10759, %v10757
        %v11202 = vpack.c.b16 %v10762, %v10760
        %v11203 = vpack.c.b16 %v10763, %v10761
        %v11204 = vpack.c.b16 %v10766, %v10764
        %v11205 = vpack.c.b16 %v10767, %v10765
        %v11206 = vpack.c.b16 %v10770, %v10768
        %v11207 = vpack.c.b16 %v10771, %v10769
        %v11208 = vpack.c.b16 %v10774, %v10772
        %v11209 = vpack.c.b16 %v10775, %v10773
        %v11210 = vpack.c.b16 %v10778, %v10776
        %v11211 = vpack.c.b16 %v10779, %v10777
        %v11212 = vpack.c.b16 %v10782, %v10780
        %v11213 = vpack.c.b16 %v10783, %v10781
        %v11214 = vpack.c.b16 %v10786, %v10784
        %v11215 = vpack.c.b16 %v10787, %v10785
        %v11216 = vpack.c.b16 %v10790, %v10788
        %v11217 = vpack.c.b16 %v10791, %v10789
        %v11218 = vpack.c.b16 %v10794, %v10792
        %v11219 = vpack.c.b16 %v10795, %v10793
        %v11220 = vpack.c.b16 %v10798, %v10796
        %v11221 = vpack.c.b16 %v10799, %v10797
        %v11222 = vpack.c.b16 %v10802, %v10800
        %v11223 = vpack.c.b16 %v10803, %v10801
        %v11224 = vpack.c.b16 %v10806, %v10804
        %v11225 = vpack.c.b16 %v10807, %v10805
        %v11226 = vpack.c.b16 %v10810, %v10808
        %v11227 = vpack.c.b16 %v10811, %v10809
        %v11228 = vpack.c.b16 %v10814, %v10812
        %v11229 = vpack.c.b16 %v10815, %v10813
        %v11230 = vpack.c.b16 %v10818, %v10816
        %v11231 = vpack.c.b16 %v10819, %v10817
        %v11232 = vpack.c.b16 %v10822, %v10820
        %v11233 = vpack.c.b16 %v10823, %v10821
        %v11234 = vpack.c.b16 %v10826, %v10824
        %v11235 = vpack.c.b16 %v10827, %v10825
        %v11236 = vpack.c.b16 %v10830, %v10828
        %v11237 = vpack.c.b16 %v10831, %v10829
        %v11238 = vpack.c.b16 %v10834, %v10832
        %v11239 = vpack.c.b16 %v10835, %v10833
        %v11240 = vpack.c.b16 %v10838, %v10836
        %v11241 = vpack.c.b16 %v10839, %v10837
        %v11242 = vpack.c.b16 %v10842, %v10840
        %v11243 = vpack.c.b16 %v10843, %v10841
        %v11244 = vpack.c.b16 %v10846, %v10844
        %v11245 = vpack.c.b16 %v10847, %v10845
        %v11246 = vpack.c.b16 %v10850, %v10848
        %v11247 = vpack.c.b16 %v10851, %v10849
        %v11248 = vpack.c.b16 %v10854, %v10852
        %v11249 = vpack.c.b16 %v10855, %v10853
        %v11250 = vpack.c.b16 %v10858, %v10856
        %v11251 = vpack.c.b16 %v10859, %v10857
        %v11252 = vpack.c.b16 %v10862, %v10860
        %v11253 = vpack.c.b16 %v10863, %v10861
        %v11254 = vpack.c.b16 %v10866, %v10864
        %v11255 = vpack.c.b16 %v10867, %v10865
        %v11256 = vpack.c.b16 %v10870, %v10868
        %v11257 = vpack.c.b16 %v10871, %v10869
        %v11258 = vpack.c.b16 %v10874, %v10872
        %v11259 = vpack.c.b16 %v10875, %v10873
        %v11260 = vpack.c.b16 %v10878, %v10876
        %v11261 = vpack.c.b16 %v10879, %v10877
        %v11262 = vpack.c.b16 %v10882, %v10880
        %v11263 = vpack.c.b16 %v10883, %v10881
        %v11264 = vpack.c.b16 %v10886, %v10884
        %v11265 = vpack.c.b16 %v10887, %v10885
        %v11266 = vpack.c.b16 %v10890, %v10888
        %v11267 = vpack.c.b16 %v10891, %v10889
        %v11268 = vpack.c.b16 %v10894, %v10892
        %v11269 = vpack.c.b16 %v10895, %v10893
        %v11270 = vpack.c.b16 %v10898, %v10896
        %v11271 = vpack.c.b16 %v10899, %v10897
        %v11272 = vpack.c.b16 %v10902, %v10900
        %v11273 = vpack.c.b16 %v10903, %v10901
        %v11274 = vpack.c.b16 %v10906, %v10904
        %v11275 = vpack.c.b16 %v10907, %v10905
        %v11276 = vpack.c.b16 %v10910, %v10908
        %v11277 = vpack.c.b16 %v10911, %v10909
        %v11278 = vpack.c.b16 %v10914, %v10912
        %v11279 = vpack.c.b16 %v10915, %v10913
        %v11280 = vpack.c.b16 %v10918, %v10916
        %v11281 = vpack.c.b16 %v10919, %v10917
        %v11282 = vpack.c.b16 %v10922, %v10920
        %v11283 = vpack.c.b16 %v10923, %v10921
        %v11284 = vpack.c.b16 %v10926, %v10924
        %v11285 = vpack.c.b16 %v10927, %v10925
        %v11286 = vpack.c.b16 %v10930, %v10928
        %v11287 = vpack.c.b16 %v10931, %v10929
        %v11288 = vpack.c.b16 %v10934, %v10932
        %v11289 = vpack.c.b16 %v10935, %v10933
        %v11290 = vpack.c.b16 %v10938, %v10936
        %v11291 = vpack.c.b16 %v10939, %v10937
        %v11292 = vpack.c.b16 %v10942, %v10940
        %v11293 = vpack.c.b16 %v10943, %v10941
        %v11294 = vpack.c.b16 %v10946, %v10944
        %v11295 = vpack.c.b16 %v10947, %v10945
        %v11296 = vpack.c.b16 %v10950, %v10948
        %v11297 = vpack.c.b16 %v10951, %v10949
        %v11298 = vpack.c.b16 %v10954, %v10952
        %v11299 = vpack.c.b16 %v10955, %v10953
        %v11300 = vpack.c.b16 %v10958, %v10956
        %v11301 = vpack.c.b16 %v10959, %v10957
        %v11302 = vpack.c.b16 %v10962, %v10960
        %v11303 = vpack.c.b16 %v10963, %v10961
        %v11304 = vpack.c.b16 %v10966, %v10964
        %v11305 = vpack.c.b16 %v10967, %v10965
        %v11306 = vpack.c.b16 %v10970, %v10968
        %v11307 = vpack.c.b16 %v10971, %v10969
        %v11308 = vpack.c.b16 %v10974, %v10972
        %v11309 = vpack.c.b16 %v10975, %v10973
        %v11310 = vpack.c.b16 %v10978, %v10976
        %v11311 = vpack.c.b16 %v10979, %v10977
        %v11312 = vpack.c.b16 %v10982, %v10980
        %v11313 = vpack.c.b16 %v10983, %v10981
        %v11314 = vpack.c.b16 %v10986, %v10984
        %v11315 = vpack.c.b16 %v10987, %v10985
        %v11316 = vpack.c.b16 %v10990, %v10988
        %v11317 = vpack.c.b16 %v10991, %v10989
        %v11318 = vpack.c.b16 %v10994, %v10992
        %v11319 = vpack.c.b16 %v10995, %v10993
        %v11320 = vpack.c.b16 %v10998, %v10996
        %v11321 = vpack.c.b16 %v10999, %v10997
        %v11322 = vpack.c.b16 %v11002, %v11000
        %v11323 = vpack.c.b16 %v11003, %v11001
        %v11324 = vpack.c.b16 %v11006, %v11004
        %v11325 = vpack.c.b16 %v11007, %v11005
        %v11326 = vpack.c.b16 %v11010, %v11008
        %v11327 = vpack.c.b16 %v11011, %v11009
        %v11328 = vpack.c.b16 %v11014, %v11012
        %v11329 = vpack.c.b16 %v11015, %v11013
        %v11330 = vpack.c.b16 %v11018, %v11016
        %v11331 = vpack.c.b16 %v11019, %v11017
        %v11332 = vpack.c.b16 %v11022, %v11020
        %v11333 = vpack.c.b16 %v11023, %v11021
        %v11334 = vpack.c.b16 %v11026, %v11024
        %v11335 = vpack.c.b16 %v11027, %v11025
        %v11336 = vpack.c.b16 %v11030, %v11028
        %v11337 = vpack.c.b16 %v11031, %v11029
        %v11338 = vpack.c.b16 %v11034, %v11032
        %v11339 = vpack.c.b16 %v11035, %v11033
        %v11340 = vpack.c.b16 %v11038, %v11036
        %v11341 = vpack.c.b16 %v11039, %v11037
        %v11342 = vpack.c.b16 %v11042, %v11040
        %v11343 = vpack.c.b16 %v11043, %v11041
        %v11344 = vpack.c.b16 %v11046, %v11044
        %v11345 = vpack.c.b16 %v11047, %v11045
        %v11346 = vpack.c.b16 %v11050, %v11048
        %v11347 = vpack.c.b16 %v11051, %v11049
        %v11348 = vpack.c.b16 %v11054, %v11052
        %v11349 = vpack.c.b16 %v11055, %v11053
        %v11350 = vpack.c.b16 %v11058, %v11056
        %v11351 = vpack.c.b16 %v11059, %v11057
        %v11352 = vpack.c.b16 %v11062, %v11060
        %v11353 = vpack.c.b16 %v11063, %v11061
        %v11354 = vpack.c.b16 %v11066, %v11064
        %v11355 = vpack.c.b16 %v11067, %v11065
        %v11356 = vpack.c.b16 %v11070, %v11068
        %v11357 = vpack.c.b16 %v11071, %v11069
        %v11358 = vpack.c.b16 %v11074, %v11072
        %v11359 = vpack.c.b16 %v11075, %v11073
        %v11360 = vpack.c.b16 %v11078, %v11076
        %v11361 = vpack.c.b16 %v11079, %v11077
        %v11362 = vpack.c.b16 %v11082, %v11080
        %v11363 = vpack.c.b16 %v11083, %v11081
        %v11364 = vpack.c.b16 %v11086, %v11084
        %v11365 = vpack.c.b16 %v11087, %v11085
        %v11366 = vpack.c.b16 %v11090, %v11088
        %v11367 = vpack.c.b16 %v11091, %v11089
        %v11368 = vpack.c.b16 %v11094, %v11092
        %v11369 = vpack.c.b16 %v11095, %v11093
        %v11370 = vpack.c.b16 %v11098, %v11096
        %v11371 = vpack.c.b16 %v11099, %v11097
        %v11372 = vpack.c.b16 %v11102, %v11100
        %v11373 = vpack.c.b16 %v11103, %v11101
        %v11374 = vpack.c.b16 %v11106, %v11104
        %v11375 = vpack.c.b16 %v11107, %v11105
        %v11376 = vpack.c.b16 %v11110, %v11108
        %v11377 = vpack.c.b16 %v11111, %v11109
        %v11378 = vpack.c.b16 %v11114, %v11112
        %v11379 = vpack.c.b16 %v11115, %v11113
        %v11380 = vpack.c.b16 %v11118, %v11116
        %v11381 = vpack.c.b16 %v11119, %v11117
        %v11382 = vpack.c.b16 %v11122, %v11120
        %v11383 = vpack.c.b16 %v11123, %v11121
        %v11384 = vpack.c.b16 %v11126, %v11124
        %v11385 = vpack.c.b16 %v11127, %v11125
        %v11386 = vpack.c.b16 %v11130, %v11128
        %v11387 = vpack.c.b16 %v11131, %v11129
        %11644 = vmatprep.subr.bf16.mxu0 %v11147
        %11645 = vmatpush1.bf16.msra.mxu0 %v11146
        %11646 = vmatprep.subr.bf16.mxu0 %v11145
        %11647 = vmatpush1.bf16.msra.mxu0 %v11144
        %11648 = vmatprep.subr.bf16.mxu0 %v11143
        %11649 = vmatpush1.bf16.msra.mxu0 %v11142
        %11650 = vmatprep.subr.bf16.mxu0 %v11141
        %11651 = vmatpush1.bf16.msra.mxu0 %v11140
        %11652 = vmatprep.subr.bf16.mxu0 %v11139
        %11653 = vmatpush1.bf16.msra.mxu0 %v11138
        %11654 = vmatprep.subr.bf16.mxu0 %v11137
        %11655 = vmatpush1.bf16.msra.mxu0 %v11136
        %11656 = vmatprep.subr.bf16.mxu0 %v11135
        %11657 = vmatpush1.bf16.msra.mxu0 %v11134
        %11658 = vmatprep.subr.bf16.mxu0 %v11133
        %11659 = vmatpush1.bf16.msra.mxu0 %v11132
        %11660 = vmatprep.subr.bf16.mxu0 %v11163
        %11661 = vmatpush2.bf16.msra.mxu0 %v11162
        %11662 = vmatprep.subr.bf16.mxu0 %v11161
        %11663 = vmatpush2.bf16.msra.mxu0 %v11160
        %11664 = vmatprep.subr.bf16.mxu0 %v11159
        %11665 = vmatpush2.bf16.msra.mxu0 %v11158
        %11666 = vmatprep.subr.bf16.mxu0 %v11157
        %11667 = vmatpush2.bf16.msra.mxu0 %v11156
        %11668 = vmatprep.subr.bf16.mxu0 %v11155
        %11669 = vmatpush2.bf16.msra.mxu0 %v11154
        %11670 = vmatprep.subr.bf16.mxu0 %v11153
        %11671 = vmatpush2.bf16.msra.mxu0 %v11152
        %11672 = vmatprep.subr.bf16.mxu0 %v11151
        %11673 = vmatpush2.bf16.msra.mxu0 %v11150
        %11674 = vmatprep.subr.bf16.mxu0 %v11149
        %11675 = vmatpush2.bf16.msra.mxu0 %v11148
        %11676 = vmatprep.mubr.bf16.mxu0 %v10093
        %11677 = vmatmul.mubr.bf16.gmra.mxu0 %v10092
        %v11678 = vpop.f32.mrf.mxu0
        %v11679 = vadd.f32 0.0, %v11678
        %v11680 = vpop.f32.mrf.mxu0
        %v11681 = vadd.f32 0.0, %v11680
        %v11682 = vpop.f32.mrf.mxu0
        %v11683 = vadd.f32 0.0, %v11682
        %v11684 = vpop.f32.mrf.mxu0
        %v11685 = vadd.f32 0.0, %v11684
        %11686 = vdwg.mxu0
        %11687 = vmatprep.subr.bf16.mxu0 %v11179
        %11688 = vmatpush1.bf16.msra.mxu0 %v11178
        %11689 = vmatprep.subr.bf16.mxu0 %v11177
        %11690 = vmatpush1.bf16.msra.mxu0 %v11176
        %11691 = vmatprep.subr.bf16.mxu0 %v11175
        %11692 = vmatpush1.bf16.msra.mxu0 %v11174
        %11693 = vmatprep.subr.bf16.mxu0 %v11173
        %11694 = vmatpush1.bf16.msra.mxu0 %v11172
        %11695 = vmatprep.subr.bf16.mxu0 %v11171
        %11696 = vmatpush1.bf16.msra.mxu0 %v11170
        %11697 = vmatprep.subr.bf16.mxu0 %v11169
        %11698 = vmatpush1.bf16.msra.mxu0 %v11168
        %11699 = vmatprep.subr.bf16.mxu0 %v11167
        %11700 = vmatpush1.bf16.msra.mxu0 %v11166
        %11701 = vmatprep.subr.bf16.mxu0 %v11165
        %11702 = vmatpush1.bf16.msra.mxu0 %v11164
        %11703 = vmatprep.subr.bf16.mxu0 %v11195
        %11704 = vmatpush2.bf16.msra.mxu0 %v11194
        %11705 = vmatprep.subr.bf16.mxu0 %v11193
        %11706 = vmatpush2.bf16.msra.mxu0 %v11192
        %11707 = vmatprep.subr.bf16.mxu0 %v11191
        %11708 = vmatpush2.bf16.msra.mxu0 %v11190
        %11709 = vmatprep.subr.bf16.mxu0 %v11189
        %11710 = vmatpush2.bf16.msra.mxu0 %v11188
        %11711 = vmatprep.subr.bf16.mxu0 %v11187
        %11712 = vmatpush2.bf16.msra.mxu0 %v11186
        %11713 = vmatprep.subr.bf16.mxu0 %v11185
        %11714 = vmatpush2.bf16.msra.mxu0 %v11184
        %11715 = vmatprep.subr.bf16.mxu0 %v11183
        %11716 = vmatpush2.bf16.msra.mxu0 %v11182
        %11717 = vmatprep.subr.bf16.mxu0 %v11181
        %11718 = vmatpush2.bf16.msra.mxu0 %v11180
        %11719 = vmatprep.mubr.bf16.mxu0 %v10095
        %11720 = vmatmul.mubr.bf16.gmra.mxu0 %v10094
        %v11721 = vpop.f32.mrf.mxu0
        %v11722 = vadd.f32 %v11679, %v11721
        %v11723 = vpop.f32.mrf.mxu0
        %v11724 = vadd.f32 %v11681, %v11723
        %v11725 = vpop.f32.mrf.mxu0
        %v11726 = vadd.f32 %v11683, %v11725
        %v11727 = vpop.f32.mrf.mxu0
        %v11728 = vadd.f32 %v11685, %v11727
        %11729 = vdwg.mxu0
        %11730 = vmatprep.subr.bf16.mxu0 %v11211
        %11731 = vmatpush1.bf16.msra.mxu0 %v11210
        %11732 = vmatprep.subr.bf16.mxu0 %v11209
        %11733 = vmatpush1.bf16.msra.mxu0 %v11208
        %11734 = vmatprep.subr.bf16.mxu0 %v11207
        %11735 = vmatpush1.bf16.msra.mxu0 %v11206
        %11736 = vmatprep.subr.bf16.mxu0 %v11205
        %11737 = vmatpush1.bf16.msra.mxu0 %v11204
        %11738 = vmatprep.subr.bf16.mxu0 %v11203
        %11739 = vmatpush1.bf16.msra.mxu0 %v11202
        %11740 = vmatprep.subr.bf16.mxu0 %v11201
        %11741 = vmatpush1.bf16.msra.mxu0 %v11200
        %11742 = vmatprep.subr.bf16.mxu0 %v11199
        %11743 = vmatpush1.bf16.msra.mxu0 %v11198
        %11744 = vmatprep.subr.bf16.mxu0 %v11197
        %11745 = vmatpush1.bf16.msra.mxu0 %v11196
        %11746 = vmatprep.subr.bf16.mxu0 %v11227
        %11747 = vmatpush2.bf16.msra.mxu0 %v11226
        %11748 = vmatprep.subr.bf16.mxu0 %v11225
        %11749 = vmatpush2.bf16.msra.mxu0 %v11224
        %11750 = vmatprep.subr.bf16.mxu0 %v11223
        %11751 = vmatpush2.bf16.msra.mxu0 %v11222
        %11752 = vmatprep.subr.bf16.mxu0 %v11221
        %11753 = vmatpush2.bf16.msra.mxu0 %v11220
        %11754 = vmatprep.subr.bf16.mxu0 %v11219
        %11755 = vmatpush2.bf16.msra.mxu0 %v11218
        %11756 = vmatprep.subr.bf16.mxu0 %v11217
        %11757 = vmatpush2.bf16.msra.mxu0 %v11216
        %11758 = vmatprep.subr.bf16.mxu0 %v11215
        %11759 = vmatpush2.bf16.msra.mxu0 %v11214
        %11760 = vmatprep.subr.bf16.mxu0 %v11213
        %11761 = vmatpush2.bf16.msra.mxu0 %v11212
        %11762 = vmatprep.mubr.bf16.mxu0 %v10097
        %11763 = vmatmul.mubr.bf16.gmra.mxu0 %v10096
        %v11764 = vpop.f32.mrf.mxu0
        %v11765 = vadd.f32 %v11722, %v11764
        %v11766 = vpop.f32.mrf.mxu0
        %v11767 = vadd.f32 %v11724, %v11766
        %v11768 = vpop.f32.mrf.mxu0
        %v11769 = vadd.f32 %v11726, %v11768
        %v11770 = vpop.f32.mrf.mxu0
        %v11771 = vadd.f32 %v11728, %v11770
        %11772 = vdwg.mxu0
        %11773 = vmatprep.subr.bf16.mxu0 %v11243
        %11774 = vmatpush1.bf16.msra.mxu0 %v11242
        %11775 = vmatprep.subr.bf16.mxu0 %v11241
        %11776 = vmatpush1.bf16.msra.mxu0 %v11240
        %11777 = vmatprep.subr.bf16.mxu0 %v11239
        %11778 = vmatpush1.bf16.msra.mxu0 %v11238
        %11779 = vmatprep.subr.bf16.mxu0 %v11237
        %11780 = vmatpush1.bf16.msra.mxu0 %v11236
        %11781 = vmatprep.subr.bf16.mxu0 %v11235
        %11782 = vmatpush1.bf16.msra.mxu0 %v11234
        %11783 = vmatprep.subr.bf16.mxu0 %v11233
        %11784 = vmatpush1.bf16.msra.mxu0 %v11232
        %11785 = vmatprep.subr.bf16.mxu0 %v11231
        %11786 = vmatpush1.bf16.msra.mxu0 %v11230
        %11787 = vmatprep.subr.bf16.mxu0 %v11229
        %11788 = vmatpush1.bf16.msra.mxu0 %v11228
        %11789 = vmatprep.subr.bf16.mxu0 %v11259
        %11790 = vmatpush2.bf16.msra.mxu0 %v11258
        %11791 = vmatprep.subr.bf16.mxu0 %v11257
        %11792 = vmatpush2.bf16.msra.mxu0 %v11256
        %11793 = vmatprep.subr.bf16.mxu0 %v11255
        %11794 = vmatpush2.bf16.msra.mxu0 %v11254
        %11795 = vmatprep.subr.bf16.mxu0 %v11253
        %11796 = vmatpush2.bf16.msra.mxu0 %v11252
        %11797 = vmatprep.subr.bf16.mxu0 %v11251
        %11798 = vmatpush2.bf16.msra.mxu0 %v11250
        %11799 = vmatprep.subr.bf16.mxu0 %v11249
        %11800 = vmatpush2.bf16.msra.mxu0 %v11248
        %11801 = vmatprep.subr.bf16.mxu0 %v11247
        %11802 = vmatpush2.bf16.msra.mxu0 %v11246
        %11803 = vmatprep.subr.bf16.mxu0 %v11245
        %11804 = vmatpush2.bf16.msra.mxu0 %v11244
        %11805 = vmatprep.mubr.bf16.mxu0 %v10099
        %11806 = vmatmul.mubr.bf16.gmra.mxu0 %v10098
        %v11807 = vpop.f32.mrf.mxu0
        %v11808 = vadd.f32 %v11765, %v11807
        %v11809 = vpop.f32.mrf.mxu0
        %v11810 = vadd.f32 %v11767, %v11809
        %v11811 = vpop.f32.mrf.mxu0
        %v11812 = vadd.f32 %v11769, %v11811
        %v11813 = vpop.f32.mrf.mxu0
        %v11814 = vadd.f32 %v11771, %v11813
        %11815 = vdwg.mxu0
        %11816 = vmatprep.subr.bf16.mxu0 %v11275
        %11817 = vmatpush1.bf16.msra.mxu0 %v11274
        %11818 = vmatprep.subr.bf16.mxu0 %v11273
        %11819 = vmatpush1.bf16.msra.mxu0 %v11272
        %11820 = vmatprep.subr.bf16.mxu0 %v11271
        %11821 = vmatpush1.bf16.msra.mxu0 %v11270
        %11822 = vmatprep.subr.bf16.mxu0 %v11269
        %11823 = vmatpush1.bf16.msra.mxu0 %v11268
        %11824 = vmatprep.subr.bf16.mxu0 %v11267
        %11825 = vmatpush1.bf16.msra.mxu0 %v11266
        %11826 = vmatprep.subr.bf16.mxu0 %v11265
        %11827 = vmatpush1.bf16.msra.mxu0 %v11264
        %11828 = vmatprep.subr.bf16.mxu0 %v11263
        %11829 = vmatpush1.bf16.msra.mxu0 %v11262
        %11830 = vmatprep.subr.bf16.mxu0 %v11261
        %11831 = vmatpush1.bf16.msra.mxu0 %v11260
        %11832 = vmatprep.subr.bf16.mxu0 %v11291
        %11833 = vmatpush2.bf16.msra.mxu0 %v11290
        %11834 = vmatprep.subr.bf16.mxu0 %v11289
        %11835 = vmatpush2.bf16.msra.mxu0 %v11288
        %11836 = vmatprep.subr.bf16.mxu0 %v11287
        %11837 = vmatpush2.bf16.msra.mxu0 %v11286
        %11838 = vmatprep.subr.bf16.mxu0 %v11285
        %11839 = vmatpush2.bf16.msra.mxu0 %v11284
        %11840 = vmatprep.subr.bf16.mxu0 %v11283
        %11841 = vmatpush2.bf16.msra.mxu0 %v11282
        %11842 = vmatprep.subr.bf16.mxu0 %v11281
        %11843 = vmatpush2.bf16.msra.mxu0 %v11280
        %11844 = vmatprep.subr.bf16.mxu0 %v11279
        %11845 = vmatpush2.bf16.msra.mxu0 %v11278
        %11846 = vmatprep.subr.bf16.mxu0 %v11277
        %11847 = vmatpush2.bf16.msra.mxu0 %v11276
        %11848 = vmatprep.mubr.bf16.mxu0 %v10101
        %11849 = vmatmul.mubr.bf16.gmra.mxu0 %v10100
        %v11850 = vpop.f32.mrf.mxu0
        %v11851 = vadd.f32 %v11808, %v11850
        %v11852 = vpop.f32.mrf.mxu0
        %v11853 = vadd.f32 %v11810, %v11852
        %v11854 = vpop.f32.mrf.mxu0
        %v11855 = vadd.f32 %v11812, %v11854
        %v11856 = vpop.f32.mrf.mxu0
        %v11857 = vadd.f32 %v11814, %v11856
        %11858 = vdwg.mxu0
        %11859 = vmatprep.subr.bf16.mxu0 %v11307
        %11860 = vmatpush1.bf16.msra.mxu0 %v11306
        %11861 = vmatprep.subr.bf16.mxu0 %v11305
        %11862 = vmatpush1.bf16.msra.mxu0 %v11304
        %11863 = vmatprep.subr.bf16.mxu0 %v11303
        %11864 = vmatpush1.bf16.msra.mxu0 %v11302
        %11865 = vmatprep.subr.bf16.mxu0 %v11301
        %11866 = vmatpush1.bf16.msra.mxu0 %v11300
        %11867 = vmatprep.subr.bf16.mxu0 %v11299
        %11868 = vmatpush1.bf16.msra.mxu0 %v11298
        %11869 = vmatprep.subr.bf16.mxu0 %v11297
        %11870 = vmatpush1.bf16.msra.mxu0 %v11296
        %11871 = vmatprep.subr.bf16.mxu0 %v11295
        %11872 = vmatpush1.bf16.msra.mxu0 %v11294
        %11873 = vmatprep.subr.bf16.mxu0 %v11293
        %11874 = vmatpush1.bf16.msra.mxu0 %v11292
        %11875 = vmatprep.subr.bf16.mxu0 %v11323
        %11876 = vmatpush2.bf16.msra.mxu0 %v11322
        %11877 = vmatprep.subr.bf16.mxu0 %v11321
        %11878 = vmatpush2.bf16.msra.mxu0 %v11320
        %11879 = vmatprep.subr.bf16.mxu0 %v11319
        %11880 = vmatpush2.bf16.msra.mxu0 %v11318
        %11881 = vmatprep.subr.bf16.mxu0 %v11317
        %11882 = vmatpush2.bf16.msra.mxu0 %v11316
        %11883 = vmatprep.subr.bf16.mxu0 %v11315
        %11884 = vmatpush2.bf16.msra.mxu0 %v11314
        %11885 = vmatprep.subr.bf16.mxu0 %v11313
        %11886 = vmatpush2.bf16.msra.mxu0 %v11312
        %11887 = vmatprep.subr.bf16.mxu0 %v11311
        %11888 = vmatpush2.bf16.msra.mxu0 %v11310
        %11889 = vmatprep.subr.bf16.mxu0 %v11309
        %11890 = vmatpush2.bf16.msra.mxu0 %v11308
        %11891 = vmatprep.mubr.bf16.mxu0 %v10103
        %11892 = vmatmul.mubr.bf16.gmra.mxu0 %v10102
        %v11893 = vpop.f32.mrf.mxu0
        %v11894 = vadd.f32 %v11851, %v11893
        %v11895 = vpop.f32.mrf.mxu0
        %v11896 = vadd.f32 %v11853, %v11895
        %v11897 = vpop.f32.mrf.mxu0
        %v11898 = vadd.f32 %v11855, %v11897
        %v11899 = vpop.f32.mrf.mxu0
        %v11900 = vadd.f32 %v11857, %v11899
        %11901 = vdwg.mxu0
        %11902 = vmatprep.subr.bf16.mxu0 %v11339
        %11903 = vmatpush1.bf16.msra.mxu0 %v11338
        %11904 = vmatprep.subr.bf16.mxu0 %v11337
        %11905 = vmatpush1.bf16.msra.mxu0 %v11336
        %11906 = vmatprep.subr.bf16.mxu0 %v11335
        %11907 = vmatpush1.bf16.msra.mxu0 %v11334
        %11908 = vmatprep.subr.bf16.mxu0 %v11333
        %11909 = vmatpush1.bf16.msra.mxu0 %v11332
        %11910 = vmatprep.subr.bf16.mxu0 %v11331
        %11911 = vmatpush1.bf16.msra.mxu0 %v11330
        %11912 = vmatprep.subr.bf16.mxu0 %v11329
        %11913 = vmatpush1.bf16.msra.mxu0 %v11328
        %11914 = vmatprep.subr.bf16.mxu0 %v11327
        %11915 = vmatpush1.bf16.msra.mxu0 %v11326
        %11916 = vmatprep.subr.bf16.mxu0 %v11325
        %11917 = vmatpush1.bf16.msra.mxu0 %v11324
        %11918 = vmatprep.subr.bf16.mxu0 %v11355
        %11919 = vmatpush2.bf16.msra.mxu0 %v11354
        %11920 = vmatprep.subr.bf16.mxu0 %v11353
        %11921 = vmatpush2.bf16.msra.mxu0 %v11352
        %11922 = vmatprep.subr.bf16.mxu0 %v11351
        %11923 = vmatpush2.bf16.msra.mxu0 %v11350
        %11924 = vmatprep.subr.bf16.mxu0 %v11349
        %11925 = vmatpush2.bf16.msra.mxu0 %v11348
        %11926 = vmatprep.subr.bf16.mxu0 %v11347
        %11927 = vmatpush2.bf16.msra.mxu0 %v11346
        %11928 = vmatprep.subr.bf16.mxu0 %v11345
        %11929 = vmatpush2.bf16.msra.mxu0 %v11344
        %11930 = vmatprep.subr.bf16.mxu0 %v11343
        %11931 = vmatpush2.bf16.msra.mxu0 %v11342
        %11932 = vmatprep.subr.bf16.mxu0 %v11341
        %11933 = vmatpush2.bf16.msra.mxu0 %v11340
        %11934 = vmatprep.mubr.bf16.mxu0 %v10105
        %11935 = vmatmul.mubr.bf16.gmra.mxu0 %v10104
        %v11936 = vpop.f32.mrf.mxu0
        %v11937 = vadd.f32 %v11894, %v11936
        %v11938 = vpop.f32.mrf.mxu0
        %v11939 = vadd.f32 %v11896, %v11938
        %v11940 = vpop.f32.mrf.mxu0
        %v11941 = vadd.f32 %v11898, %v11940
        %v11942 = vpop.f32.mrf.mxu0
        %v11943 = vadd.f32 %v11900, %v11942
        %11944 = vdwg.mxu0
        %11945 = vmatprep.subr.bf16.mxu0 %v11371
        %11946 = vmatpush1.bf16.msra.mxu0 %v11370
        %11947 = vmatprep.subr.bf16.mxu0 %v11369
        %11948 = vmatpush1.bf16.msra.mxu0 %v11368
        %11949 = vmatprep.subr.bf16.mxu0 %v11367
        %11950 = vmatpush1.bf16.msra.mxu0 %v11366
        %11951 = vmatprep.subr.bf16.mxu0 %v11365
        %11952 = vmatpush1.bf16.msra.mxu0 %v11364
        %11953 = vmatprep.subr.bf16.mxu0 %v11363
        %11954 = vmatpush1.bf16.msra.mxu0 %v11362
        %11955 = vmatprep.subr.bf16.mxu0 %v11361
        %11956 = vmatpush1.bf16.msra.mxu0 %v11360
        %11957 = vmatprep.subr.bf16.mxu0 %v11359
        %11958 = vmatpush1.bf16.msra.mxu0 %v11358
        %11959 = vmatprep.subr.bf16.mxu0 %v11357
        %11960 = vmatpush1.bf16.msra.mxu0 %v11356
        %11961 = vmatprep.subr.bf16.mxu0 %v11387
        %11962 = vmatpush2.bf16.msra.mxu0 %v11386
        %11963 = vmatprep.subr.bf16.mxu0 %v11385
        %11964 = vmatpush2.bf16.msra.mxu0 %v11384
        %11965 = vmatprep.subr.bf16.mxu0 %v11383
        %11966 = vmatpush2.bf16.msra.mxu0 %v11382
        %11967 = vmatprep.subr.bf16.mxu0 %v11381
        %11968 = vmatpush2.bf16.msra.mxu0 %v11380
        %11969 = vmatprep.subr.bf16.mxu0 %v11379
        %11970 = vmatpush2.bf16.msra.mxu0 %v11378
        %11971 = vmatprep.subr.bf16.mxu0 %v11377
        %11972 = vmatpush2.bf16.msra.mxu0 %v11376
        %11973 = vmatprep.subr.bf16.mxu0 %v11375
        %11974 = vmatpush2.bf16.msra.mxu0 %v11374
        %11975 = vmatprep.subr.bf16.mxu0 %v11373
        %11976 = vmatpush2.bf16.msra.mxu0 %v11372
        %11977 = vmatprep.mubr.bf16.mxu0 %v10107
        %11978 = vmatmul.mubr.bf16.gmra.mxu0 %v10106
        %v11979 = vpop.f32.mrf.mxu0
        %v11980 = vadd.f32 %v11937, %v11979
        %v11981 = vpop.f32.mrf.mxu0
        %v11982 = vadd.f32 %v11939, %v11981
        %v11983 = vpop.f32.mrf.mxu0
        %v11984 = vadd.f32 %v11941, %v11983
        %v11985 = vpop.f32.mrf.mxu0
        %v11986 = vadd.f32 %v11943, %v11985
        %11987 = vdwg.mxu0
        %11988 = vst [vmem:[%s387] sm:$0xff] %v11980
        %11989 = vst [vmem:[%s387 + $0x8] sm:$0xff] %v11982
        %11990 = vst [vmem:[%s387 + $0x10] sm:$0xff] %v11984
        %11991 = vst [vmem:[%s387 + $0x18] sm:$0xff] %v11986
        %s11992 = sand.u32 %s177, 1
        %s11993 = scalar_lea.sflag [#allocation4], %s11992
        %s11994 = sand.u32 %s177, 1
        %s11995 = smul.addr %s11994, 32
        %s11996 = scalar_lea.vmem [#allocation13], %s11995
        // Predicated region
        $region69: #{tpu_custom_call.1} parent=43 // pred_check
          %p11997 = pneg %p187
        $region70: #{tpu_custom_call.1} parent=43 // pred_check_branch
          %11999 = sbr.rel (%p11997) target = $region72
        $region71: #{tpu_custom_call.1} parent=43 // pred_region
          %s12001 = ssub.s32 512, 512
          %12002 = vsyncadd %s11993, %s12001
          %s12003 = smul.addr %s28, 4
          %s12004 = smul.addr %s12003, 128
          %s12005 = scalar_lea.hbm %s6, %s12004
          %s12006 = sshll.u32 %s11996, 4
          %s12007 = int_to_ptr.vmem [resolvable:$true] %s12006
          %12012 = dma.vmem_to_hbm [thread:$0]  %s12007, 512, %s12005, %s11993, 256, 256, 16
        $region72: #{tpu_custom_call.1} parent=43 // pred_fallthru
          _
      $region44: #{tpu_custom_call.1} parent=5 // pred_fallthru
        _
      %p12013 = scmp.le.s32.totalorder 2, %s23
      // Predicated region
      $region73: #{tpu_custom_call.1} parent=5 // pred_check
        %p12014 = pneg %p12013
      $region74: #{tpu_custom_call.1} parent=5 // pred_check_branch
        %12016 = sbr.rel (%p12014) target = $region76
      $region75: #{tpu_custom_call.1} parent=5 // pred_region
        %s12017 = ssub.s32 %s23, 2
        // Predicated region
        $region77: #{tpu_custom_call.1} parent=75 // pred_check
          %p12018 = pneg %p193
        $region78: #{tpu_custom_call.1} parent=75 // pred_check_branch
          %12020 = sbr.rel (%p12018) target = $region80
        $region79: #{tpu_custom_call.1} parent=75 // pred_region
          %s12021 = sand.u32 %s178, 1
          %s12022 = scalar_lea.sflag [#allocation4], %s12021
          %s12023 = sand.u32 %s178, 1
          %s12024 = smul.addr %s12023, 32
          %s12025 = scalar_lea.vmem [#allocation13], %s12024
          %12026 = dma.done %s12022, 512
        $region80: #{tpu_custom_call.1} parent=75 // pred_fallthru
          _
      $region76: #{tpu_custom_call.1} parent=5 // pred_fallthru
        _
    $region6: #{tpu_custom_call.1} parent=1 // loop_footer
      %s27 = sadd.s32 1, %s23
    $region7: #{tpu_custom_call.1} parent=1 // loop_footer_branch
      %22 = sbr.rel target = $region3
    $region8: #{tpu_custom_call.1} parent=1 // loop_exit
      _
    %12027 = vsyncpa [#allocation3], 1
    %s12028 = scalar_lea.sflag [#allocation3], 1
    %12029 = vsyncpa %s12028, 1
    %12030 = vsyncpa [#allocation6], 1
    %12031 = vsyncpa [#allocation9], 1
    %s12032 = scalar_lea.sflag [#allocation9], 1
    %12033 = vsyncpa %s12032, 1
    %12034 = vsyncpa [#allocation12], 1
    %s12035 = scalar_lea.sflag [#allocation12], 1
    %12036 = vsyncpa %s12035, 1
    %12037 = vsyncpa [#allocation4], 1
    %s12038 = scalar_lea.sflag [#allocation4], 1
    %12039 = vsyncpa %s12038, 1

</llo_original>
